<compile_context>
chip_gen: v7x
topology: tpu7x:2x2x1
jax: 0.10.0
libtpu: 0.0.40
codegen_flags: <defaults>
</compile_context>

<pallas_src>
import functools

import jax
import jax.numpy as jnp
from jax import lax
from jax.experimental import pallas as pl
from jax.experimental.pallas import tpu as pltpu


def _relu(x):
    # negative_slope == 0.0  =>  LeakyReLU == ReLU
    return jnp.maximum(x, 0.0)


def _pick_tile(n, candidates):
    """Largest candidate dividing n, else n itself (full-dim block is legal)."""
    for c in candidates:
        if n % c == 0:
            return c
    return n


_PW_TILES = (1024, 512, 256, 128, 64, 32, 16, 8)
_KNN_TILES = (256, 128, 64, 32, 16, 8)      # score block (tile_r, N) stays small
_EDGE_TILES = (512, 256, 128, 64, 32, 16, 8)


# ----------------------------------------------------------------------------
# Kernel 1: conv1_lpd + conv2_lpd (+ReLU) fused with the convDG1 linearity
# precompute:  f = relu(relu(x W1 + b1) W2 + b2),  A = f Wa,  Ct = f Wc + b.
# ----------------------------------------------------------------------------
def _pw_head_kernel(x_ref, w1_ref, b1_ref, w2_ref, b2_ref,
                    wa_ref, wc_ref, bdg_ref,
                    f_ref, a_ref, ct_ref):
    h = _relu(jnp.dot(x_ref[...], w1_ref[...],
                      preferred_element_type=jnp.float32) + b1_ref[...])
    f = _relu(jnp.dot(h, w2_ref[...],
                      preferred_element_type=jnp.float32) + b2_ref[...])
    f_ref[...] = f
    a_ref[...] = jnp.dot(f, wa_ref[...], preferred_element_type=jnp.float32)
    ct_ref[...] = jnp.dot(f, wc_ref[...],
                          preferred_element_type=jnp.float32) + bdg_ref[...]


def pw_head(pts2d, w1, b1, w2, b2, wa, wc, bdg):
    m, cin = pts2d.shape
    c0 = w1.shape[1]
    c1 = wa.shape[1]
    tile_m = _pick_tile(m, _PW_TILES)
    return pl.pallas_call(
        _pw_head_kernel,
        out_shape=(jax.ShapeDtypeStruct((m, c0), jnp.float32),
                   jax.ShapeDtypeStruct((m, c1), jnp.float32),
                   jax.ShapeDtypeStruct((m, c1), jnp.float32)),
        grid_spec=pltpu.PrefetchScalarGridSpec(
            num_scalar_prefetch=0,
            grid=(m // tile_m,),
            in_specs=[
                pl.BlockSpec((tile_m, cin), lambda i: (i, 0)),
                pl.BlockSpec((cin, c0), lambda i: (0, 0)),
                pl.BlockSpec((1, c0), lambda i: (0, 0)),
                pl.BlockSpec((c0, c0), lambda i: (0, 0)),
                pl.BlockSpec((1, c0), lambda i: (0, 0)),
                pl.BlockSpec((c0, c1), lambda i: (0, 0)),
                pl.BlockSpec((c0, c1), lambda i: (0, 0)),
                pl.BlockSpec((1, c1), lambda i: (0, 0)),
            ],
            out_specs=(pl.BlockSpec((tile_m, c0), lambda i: (i, 0)),
                       pl.BlockSpec((tile_m, c1), lambda i: (i, 0)),
                       pl.BlockSpec((tile_m, c1), lambda i: (i, 0))),
        ),
        compiler_params=pltpu.CompilerParams(dimension_semantics=("parallel",)),
    )(pts2d, w1, b1, w2, b2, wa, wc, bdg)


# ----------------------------------------------------------------------------
# Kernel 2: fused pairwise distance + top-k.
# Per row tile: scores = 2 f_r . f_c - ||f_c||^2  (row-constant term dropped),
# then k iterative max-selections -> (B, N, k) int32 indices, no (B,N,N) HBM.
# ----------------------------------------------------------------------------
def _knn_kernel(fr_ref, fc_ref, idx_ref, sc_ref, *, k):
    ri = pl.program_id(1)

    @pl.when(ri == 0)
    def _():
        fc0 = fc_ref[...]                                     # (N, C)
        sq = fc0 * fc0
        # column norms as a (1, N) row via a tiny MXU contraction (once/batch)
        sc_ref[...] = lax.dot_general(
            jnp.ones((1, sq.shape[1]), jnp.float32), sq,
            (((1,), (1,)), ((), ())), preferred_element_type=jnp.float32)

    fr = fr_ref[...]                                          # (tr, C)
    fc = fc_ref[...]                                          # (N, C)
    tr = fr.shape[0]
    n = fc.shape[0]
    g = lax.dot_general(fr, fc, (((1,), (1,)), ((), ())),
                        preferred_element_type=jnp.float32)   # (tr, N)
    s0 = 2.0 * g - sc_ref[...]                                # (tr, N)

    colf = lax.broadcasted_iota(jnp.int32, (tr, n), 1).astype(jnp.float32)
    colkf = lax.broadcasted_iota(jnp.int32, (tr, k), 1).astype(jnp.float32)

    def select(t, carry):
        s_cur, out = carry
        m = jnp.max(s_cur, axis=-1, keepdims=True)            # (tr, 1)
        jf = jnp.min(jnp.where(s_cur == m, colf, jnp.float32(n)),
                     axis=-1, keepdims=True)                  # (tr, 1) first hit
        out = jnp.where(colkf == t.astype(jnp.float32), jf, out)
        s_cur = jnp.where(colf == jf, -jnp.inf, s_cur)
        return s_cur, out

    _, out = lax.fori_loop(0, k, select, (s0, jnp.zeros((tr, k), jnp.float32)))
    idx_ref[...] = out.astype(jnp.int32)


def knn_topk(f, k):
    """f: (B, N, C) -> idx (B, N, k) int32 of the k nearest (self included)."""
    b, n, c = f.shape
    tile_r = _pick_tile(n, _KNN_TILES)
    kern = functools.partial(_knn_kernel, k=k)
    return pl.pallas_call(
        kern,
        out_shape=jax.ShapeDtypeStruct((b, n, k), jnp.int32),
        grid_spec=pltpu.PrefetchScalarGridSpec(
            num_scalar_prefetch=0,
            grid=(b, n // tile_r),
            in_specs=[
                pl.BlockSpec((None, tile_r, c), lambda bi, ri: (bi, ri, 0)),
                pl.BlockSpec((None, n, c), lambda bi, ri: (bi, 0, 0)),
            ],
            out_specs=pl.BlockSpec((None, tile_r, k), lambda bi, ri: (bi, ri, 0)),
            scratch_shapes=[pltpu.VMEM((1, n), jnp.float32)],
        ),
        compiler_params=pltpu.CompilerParams(
            dimension_semantics=("parallel", "arbitrary")),
    )(f, f)


# ----------------------------------------------------------------------------
# Kernel 3: convDG1 -> max_k, convDG2 -> max_k, + convSN1 linearity precompute.
# A slab (one batch) resident in VMEM, idx scalar-prefetched in SMEM, neighbor
# rows gathered in-kernel with dynamic row slices.
# ----------------------------------------------------------------------------
def _edge_dg_kernel(idx_ref, a_ref, ct_ref, w2_ref, b2_ref,
                    wasn_ref, wcsn_ref, bsn_ref,
                    x1_ref, x2_ref, asn_ref, ctsn_ref, g_ref, *, k):
    bi = pl.program_id(0)
    ni = pl.program_id(1)
    n = a_ref.shape[0]
    tile_n, c1 = g_ref.shape
    base = bi * n + ni * tile_n
    ct = ct_ref[...]                                          # (tile_n, c1)

    def k_step(kk, carry):
        m1, m2 = carry

        def gather_row(i, c):
            j = idx_ref[base + i, kk]
            g_ref[pl.ds(i, 1), :] = a_ref[pl.ds(j, 1), :]
            return c

        lax.fori_loop(0, tile_n, gather_row, 0)
        y1 = _relu(g_ref[...] + ct)                           # convDG1 edge out
        y2 = _relu(jnp.dot(y1, w2_ref[...],
                           preferred_element_type=jnp.float32) + b2_ref[...])
        return jnp.maximum(m1, y1), jnp.maximum(m2, y2)

    zero = jnp.zeros((tile_n, c1), jnp.float32)               # post-ReLU >= 0
    m1, m2 = lax.fori_loop(0, k, k_step, (zero, zero))
    x1_ref[...] = m1
    x2_ref[...] = m2
    # convSN1 linearity precompute on x2 (saves one HBM re-read of x2)
    asn_ref[...] = jnp.dot(m2, wasn_ref[...], preferred_element_type=jnp.float32)
    ctsn_ref[...] = jnp.dot(m2, wcsn_ref[...],
                            preferred_element_type=jnp.float32) + bsn_ref[...]


def edge_conv_dg(idx_flat, a_dg, ct_dg, w2, b2, wasn, wcsn, bsn, k):
    b, n, c1 = a_dg.shape
    c2 = wasn.shape[1]
    tile_n = _pick_tile(n, _EDGE_TILES)
    kern = functools.partial(_edge_dg_kernel, k=k)
    return pl.pallas_call(
        kern,
        out_shape=(jax.ShapeDtypeStruct((b, n, c1), jnp.float32),
                   jax.ShapeDtypeStruct((b, n, c1), jnp.float32),
                   jax.ShapeDtypeStruct((b, n, c2), jnp.float32),
                   jax.ShapeDtypeStruct((b, n, c2), jnp.float32)),
        grid_spec=pltpu.PrefetchScalarGridSpec(
            num_scalar_prefetch=1,
            grid=(b, n // tile_n),
            in_specs=[
                pl.BlockSpec((None, n, c1), lambda bi, ni, idx: (bi, 0, 0)),
                pl.BlockSpec((None, tile_n, c1), lambda bi, ni, idx: (bi, ni, 0)),
                pl.BlockSpec((c1, c1), lambda bi, ni, idx: (0, 0)),
                pl.BlockSpec((1, c1), lambda bi, ni, idx: (0, 0)),
                pl.BlockSpec((c1, c2), lambda bi, ni, idx: (0, 0)),
                pl.BlockSpec((c1, c2), lambda bi, ni, idx: (0, 0)),
                pl.BlockSpec((1, c2), lambda bi, ni, idx: (0, 0)),
            ],
            out_specs=(
                pl.BlockSpec((None, tile_n, c1), lambda bi, ni, idx: (bi, ni, 0)),
                pl.BlockSpec((None, tile_n, c1), lambda bi, ni, idx: (bi, ni, 0)),
                pl.BlockSpec((None, tile_n, c2), lambda bi, ni, idx: (bi, ni, 0)),
                pl.BlockSpec((None, tile_n, c2), lambda bi, ni, idx: (bi, ni, 0))),
            scratch_shapes=[pltpu.VMEM((tile_n, c1), jnp.float32)],
        ),
        compiler_params=pltpu.CompilerParams(
            dimension_semantics=("parallel", "parallel")),
    )(idx_flat, a_dg, ct_dg, w2, b2, wasn, wcsn, bsn)


# ----------------------------------------------------------------------------
# Kernel 4: convSN1 -> max_k fused with conv3_lpd (split weight, no concat),
# output written directly in (B, emb, N) layout via in-kernel transpose.
# ----------------------------------------------------------------------------
def _edge_sn_out_kernel(idx_ref, a_ref, ct_ref, x1_ref, x2_ref,
                        w3a_ref, w3b_ref, w3c_ref, b3_ref,
                        o_ref, g_ref, *, k):
    bi = pl.program_id(0)
    ni = pl.program_id(1)
    n = a_ref.shape[0]
    tile_n, c2 = g_ref.shape
    base = bi * n + ni * tile_n

    def k_step(kk, m):
        def gather_row(i, c):
            j = idx_ref[base + i, kk]
            g_ref[pl.ds(i, 1), :] = a_ref[pl.ds(j, 1), :]
            return c

        lax.fori_loop(0, tile_n, gather_row, 0)
        return jnp.maximum(m, g_ref[...])

    m = lax.fori_loop(0, k, k_step,
                      jnp.full((tile_n, c2), -jnp.inf, jnp.float32))
    # max_k relu(A[j_k] + Ct) == relu(max_k A[j_k] + Ct)  (ReLU is monotone)
    x3 = _relu(m + ct_ref[...])                               # (tile_n, c2)

    y = jnp.dot(x1_ref[...], w3a_ref[...], preferred_element_type=jnp.float32)
    y = y + jnp.dot(x2_ref[...], w3b_ref[...], preferred_element_type=jnp.float32)
    y = y + jnp.dot(x3, w3c_ref[...], preferred_element_type=jnp.float32)
    y = _relu(y + b3_ref[...])                                # (tile_n, emb)
    o_ref[...] = jnp.transpose(y)                             # (emb, tile_n)


def edge_conv_sn_out(idx_flat, a_sn, ct_sn, x1, x2, w3a, w3b, w3c, b3, k):
    b, n, c2 = a_sn.shape
    c1 = x1.shape[-1]
    emb = w3a.shape[1]
    tile_n = _pick_tile(n, _EDGE_TILES)
    kern = functools.partial(_edge_sn_out_kernel, k=k)
    return pl.pallas_call(
        kern,
        out_shape=jax.ShapeDtypeStruct((b, emb, n), jnp.float32),
        grid_spec=pltpu.PrefetchScalarGridSpec(
            num_scalar_prefetch=1,
            grid=(b, n // tile_n),
            in_specs=[
                pl.BlockSpec((None, n, c2), lambda bi, ni, idx: (bi, 0, 0)),
                pl.BlockSpec((None, tile_n, c2), lambda bi, ni, idx: (bi, ni, 0)),
                pl.BlockSpec((None, tile_n, c1), lambda bi, ni, idx: (bi, ni, 0)),
                pl.BlockSpec((None, tile_n, c1), lambda bi, ni, idx: (bi, ni, 0)),
                pl.BlockSpec((c1, emb), lambda bi, ni, idx: (0, 0)),
                pl.BlockSpec((c1, emb), lambda bi, ni, idx: (0, 0)),
                pl.BlockSpec((c2, emb), lambda bi, ni, idx: (0, 0)),
                pl.BlockSpec((1, emb), lambda bi, ni, idx: (0, 0)),
            ],
            out_specs=pl.BlockSpec((None, emb, tile_n),
                                   lambda bi, ni, idx: (bi, 0, ni)),
            scratch_shapes=[pltpu.VMEM((tile_n, c2), jnp.float32)],
        ),
        compiler_params=pltpu.CompilerParams(
            dimension_semantics=("parallel", "parallel")),
    )(idx_flat, a_sn, ct_sn, x1, x2, w3a, w3b, w3c, b3)


# ----------------------------------------------------------------------------
# Parameters + forward pass
# ----------------------------------------------------------------------------
def init_params(key, emb_dims=1024, channels=(64, 128, 256)):
    c0, c1, c2 = channels

    def dense(kk, cin, cout):
        kw, kb = jax.random.split(kk)
        bound = 1.0 / jnp.sqrt(jnp.float32(cin))
        w = jax.random.uniform(kw, (cin, cout), jnp.float32, -bound, bound)
        bb = jax.random.uniform(kb, (1, cout), jnp.float32, -bound, bound)
        return w, bb

    keys = jax.random.split(key, 6)
    return {
        "conv1": dense(keys[0], 3, c0),
        "conv2": dense(keys[1], c0, c0),
        "dg1": dense(keys[2], c0 * 2, c1),
        "dg2": dense(keys[3], c1, c1),
        "sn1": dense(keys[4], c1 * 2, c2),
        "conv3": dense(keys[5], c1 + c1 + c2, emb_dims),
    }


def lpdnet_forward(x, params, k=20):
    """x: (B, 1, N, 3) float32 -> (B, emb_dims, N, 1) float32."""
    pts = jnp.squeeze(x, axis=1).astype(jnp.float32)          # (B, N, 3)
    b, n, _ = pts.shape

    (w1, b1), (w2, b2) = params["conv1"], params["conv2"]
    wdg1, bdg1 = params["dg1"]
    c0 = w1.shape[1]
    # Edge feature is cat([f_j - f_i, f_i]); linearity gives
    # pre = f_j @ Wa + f_i @ (Wb - Wa) + b, with Wa = wdg1[:c0], Wb = wdg1[c0:].
    wa_dg, wb_dg = wdg1[:c0], wdg1[c0:]
    f2d, a_dg2d, ct_dg2d = pw_head(pts.reshape(b * n, 3),
                                   w1, b1, w2, b2, wa_dg, wb_dg - wa_dg, bdg1)
    c1 = wa_dg.shape[1]
    f = f2d.reshape(b, n, c0)
    a_dg = a_dg2d.reshape(b, n, c1)
    ct_dg = ct_dg2d.reshape(b, n, c1)

    # kNN graph on the 64-d conv2 features (fused distance + top-k kernel)
    idx_dg = knn_topk(f, k)                                   # (B, N, k) int32

    # convDG1 -> max_k, convDG2 -> max_k (+ convSN1 linearity precompute)
    wdg2, bdg2 = params["dg2"]
    wsn, bsn = params["sn1"]
    wa_sn, wb_sn = wsn[:c1], wsn[c1:]
    x1, x2, a_sn, ct_sn = edge_conv_dg(
        idx_dg.reshape(b * n, k), a_dg, ct_dg, wdg2, bdg2,
        wa_sn, wb_sn - wa_sn, bsn, k)

    # Second kNN graph on the raw xyz coordinates (xInit3d)
    idx_sn = knn_topk(pts, k)                                 # (B, N, k)

    # convSN1 -> max_k fused with conv3_lpd; output already (B, emb, N)
    w3, b3 = params["conv3"]
    w3a, w3b, w3c = w3[:c1], w3[c1:2 * c1], w3[2 * c1:]
    out = edge_conv_sn_out(idx_sn.reshape(b * n, k), a_sn, ct_sn, x1, x2,
                           w3a, w3b, w3c, b3, k)              # (B, emb, N)

    return out[..., None]                                     # (B, emb, N, 1)


if __name__ == "__main__":
    key = jax.random.PRNGKey(0)
    kx, kp = jax.random.split(key)

    B, N, EMB, K = 2, 32, 1024, 20
    x = jax.random.normal(kx, (B, 1, N, 3), jnp.float32)
    params = init_params(kp, emb_dims=EMB, channels=(64, 128, 256))

    fwd = jax.jit(functools.partial(lpdnet_forward, k=K))
    out = fwd(x, params)
    jax.block_until_ready(out)

    assert out.shape == (B, EMB, N, 1), out.shape
    assert out.dtype == jnp.float32
    print("KERNEL_OK")
</pallas_src>

<mosaic_0001>
module attributes {stable_mosaic.version = 11 : i64} {
  func.func @_pw_head_kernel(%arg0: i32, %arg1: memref<64x3xf32, #tpu.memory_space<vmem>>, %arg2: memref<3x64xf32, #tpu.memory_space<vmem>>, %arg3: memref<1x64xf32, #tpu.memory_space<vmem>>, %arg4: memref<64x64xf32, #tpu.memory_space<vmem>>, %arg5: memref<1x64xf32, #tpu.memory_space<vmem>>, %arg6: memref<64x128xf32, #tpu.memory_space<vmem>>, %arg7: memref<64x128xf32, #tpu.memory_space<vmem>>, %arg8: memref<1x128xf32, #tpu.memory_space<vmem>>, %arg9: memref<64x64xf32, #tpu.memory_space<vmem>>, %arg10: memref<64x128xf32, #tpu.memory_space<vmem>>, %arg11: memref<64x128xf32, #tpu.memory_space<vmem>>) attributes {dimension_semantics = [#tpu.dimension_semantics<parallel>], iteration_bounds = array<i64: 1>, scalar_prefetch = 0 : i64, scratch_operands = 0 : i64, tpu.core_type = #tpu.core_type<tc>, window_params = [{transform_indices = @transform_0, window_bounds = array<i64: 64, 3>}, {pipeline_mode = #tpu.pipeline_mode<synchronous>, transform_indices = @transform_1, window_bounds = array<i64: 3, 64>}, {pipeline_mode = #tpu.pipeline_mode<synchronous>, transform_indices = @transform_2, window_bounds = array<i64: 1, 64>}, {pipeline_mode = #tpu.pipeline_mode<synchronous>, transform_indices = @transform_3, window_bounds = array<i64: 64, 64>}, {pipeline_mode = #tpu.pipeline_mode<synchronous>, transform_indices = @transform_4, window_bounds = array<i64: 1, 64>}, {pipeline_mode = #tpu.pipeline_mode<synchronous>, transform_indices = @transform_5, window_bounds = array<i64: 64, 128>}, {pipeline_mode = #tpu.pipeline_mode<synchronous>, transform_indices = @transform_6, window_bounds = array<i64: 64, 128>}, {pipeline_mode = #tpu.pipeline_mode<synchronous>, transform_indices = @transform_7, window_bounds = array<i64: 1, 128>}, {transform_indices = @transform_8, window_bounds = array<i64: 64, 64>}, {transform_indices = @transform_9, window_bounds = array<i64: 64, 128>}, {transform_indices = @transform_10, window_bounds = array<i64: 64, 128>}]} {
    %c0 = arith.constant 0 : index
    %c0_0 = arith.constant 0 : index
    %0 = vector.load %arg1[%c0, %c0_0] : memref<64x3xf32, #tpu.memory_space<vmem>>, vector<64x3xf32>
    %c0_1 = arith.constant 0 : index
    %c0_2 = arith.constant 0 : index
    %1 = vector.load %arg2[%c0_1, %c0_2] : memref<3x64xf32, #tpu.memory_space<vmem>>, vector<3x64xf32>
    %cst = arith.constant dense<0.000000e+00> : vector<64x64xf32>
    %2 = tpu.matmul %0, %1, %cst {dimension_numbers = #tpu.dot_dimension_numbers<[1], [0], [0], [1], [0, 0, 1, 1], [], []>} : vector<64x3xf32>, vector<3x64xf32>, vector<64x64xf32> -> vector<64x64xf32>
    %c0_3 = arith.constant 0 : index
    %c0_4 = arith.constant 0 : index
    %3 = vector.load %arg3[%c0_3, %c0_4] : memref<1x64xf32, #tpu.memory_space<vmem>>, vector<1x64xf32>
    %4 = vector.broadcast %3 : vector<1x64xf32> to vector<64x64xf32>
    %5 = arith.addf %2, %4 : vector<64x64xf32>
    %cst_5 = arith.constant 0.000000e+00 : f32
    %6 = vector.broadcast %cst_5 : f32 to vector<64x64xf32>
    %7 = arith.maximumf %5, %6 : vector<64x64xf32>
    %c0_6 = arith.constant 0 : index
    %c0_7 = arith.constant 0 : index
    %8 = vector.load %arg4[%c0_6, %c0_7] : memref<64x64xf32, #tpu.memory_space<vmem>>, vector<64x64xf32>
    %cst_8 = arith.constant dense<0.000000e+00> : vector<64x64xf32>
    %9 = tpu.matmul %7, %8, %cst_8 {dimension_numbers = #tpu.dot_dimension_numbers<[1], [0], [0], [1], [0, 0, 1, 1], [], []>} : vector<64x64xf32>, vector<64x64xf32>, vector<64x64xf32> -> vector<64x64xf32>
    %c0_9 = arith.constant 0 : index
    %c0_10 = arith.constant 0 : index
    %10 = vector.load %arg5[%c0_9, %c0_10] : memref<1x64xf32, #tpu.memory_space<vmem>>, vector<1x64xf32>
    %11 = vector.broadcast %10 : vector<1x64xf32> to vector<64x64xf32>
    %12 = arith.addf %9, %11 : vector<64x64xf32>
    %cst_11 = arith.constant 0.000000e+00 : f32
    %13 = vector.broadcast %cst_11 : f32 to vector<64x64xf32>
    %14 = arith.maximumf %12, %13 : vector<64x64xf32>
    %c0_12 = arith.constant 0 : index
    %c0_13 = arith.constant 0 : index
    %15 = vector.load %arg9[%c0_12, %c0_13] : memref<64x64xf32, #tpu.memory_space<vmem>>, vector<64x64xf32>
    tpu.vector_store %arg9[%c0_12, %c0_13], %14 {strides = array<i32>} : memref<64x64xf32, #tpu.memory_space<vmem>>, vector<64x64xf32>,
    %c0_14 = arith.constant 0 : index
    %c0_15 = arith.constant 0 : index
    %16 = vector.load %arg6[%c0_14, %c0_15] : memref<64x128xf32, #tpu.memory_space<vmem>>, vector<64x128xf32>
    %cst_16 = arith.constant dense<0.000000e+00> : vector<64x128xf32>
    %17 = tpu.matmul %14, %16, %cst_16 {dimension_numbers = #tpu.dot_dimension_numbers<[1], [0], [0], [1], [0, 0, 1, 1], [], []>} : vector<64x64xf32>, vector<64x128xf32>, vector<64x128xf32> -> vector<64x128xf32>
    %c0_17 = arith.constant 0 : index
    %c0_18 = arith.constant 0 : index
    %18 = vector.load %arg10[%c0_17, %c0_18] : memref<64x128xf32, #tpu.memory_space<vmem>>, vector<64x128xf32>
    tpu.vector_store %arg10[%c0_17, %c0_18], %17 {strides = array<i32>} : memref<64x128xf32, #tpu.memory_space<vmem>>, vector<64x128xf32>,
    %c0_19 = arith.constant 0 : index
    %c0_20 = arith.constant 0 : index
    %19 = vector.load %arg7[%c0_19, %c0_20] : memref<64x128xf32, #tpu.memory_space<vmem>>, vector<64x128xf32>
    %cst_21 = arith.constant dense<0.000000e+00> : vector<64x128xf32>
    %20 = tpu.matmul %14, %19, %cst_21 {dimension_numbers = #tpu.dot_dimension_numbers<[1], [0], [0], [1], [0, 0, 1, 1], [], []>} : vector<64x64xf32>, vector<64x128xf32>, vector<64x128xf32> -> vector<64x128xf32>
    %c0_22 = arith.constant 0 : index
    %c0_23 = arith.constant 0 : index
    %21 = vector.load %arg8[%c0_22, %c0_23] : memref<1x128xf32, #tpu.memory_space<vmem>>, vector<1x128xf32>
    %22 = vector.broadcast %21 : vector<1x128xf32> to vector<64x128xf32>
    %23 = arith.addf %20, %22 : vector<64x128xf32>
    %c0_24 = arith.constant 0 : index
    %c0_25 = arith.constant 0 : index
    %24 = vector.load %arg11[%c0_24, %c0_25] : memref<64x128xf32, #tpu.memory_space<vmem>>, vector<64x128xf32>
    tpu.vector_store %arg11[%c0_24, %c0_25], %23 {strides = array<i32>} : memref<64x128xf32, #tpu.memory_space<vmem>>, vector<64x128xf32>,
    return
  }
  func.func @transform_0(%arg0: i32) -> (i32, i32) {
    %c0_i32 = arith.constant 0 : i32
    %c0_i32_0 = arith.constant 0 : i32
    return %arg0, %c0_i32 : i32, i32
  }
  func.func @transform_1(%arg0: i32) -> (i32, i32) {
    %c0_i32 = arith.constant 0 : i32
    %c0_i32_0 = arith.constant 0 : i32
    %c0_i32_1 = arith.constant 0 : i32
    return %c0_i32, %c0_i32_0 : i32, i32
  }
  func.func @transform_2(%arg0: i32) -> (i32, i32) {
    %c0_i32 = arith.constant 0 : i32
    %c0_i32_0 = arith.constant 0 : i32
    %c0_i32_1 = arith.constant 0 : i32
    return %c0_i32, %c0_i32_0 : i32, i32
  }
  func.func @transform_3(%arg0: i32) -> (i32, i32) {
    %c0_i32 = arith.constant 0 : i32
    %c0_i32_0 = arith.constant 0 : i32
    %c0_i32_1 = arith.constant 0 : i32
    return %c0_i32, %c0_i32_0 : i32, i32
  }
  func.func @transform_4(%arg0: i32) -> (i32, i32) {
    %c0_i32 = arith.constant 0 : i32
    %c0_i32_0 = arith.constant 0 : i32
    %c0_i32_1 = arith.constant 0 : i32
    return %c0_i32, %c0_i32_0 : i32, i32
  }
  func.func @transform_5(%arg0: i32) -> (i32, i32) {
    %c0_i32 = arith.constant 0 : i32
    %c0_i32_0 = arith.constant 0 : i32
    %c0_i32_1 = arith.constant 0 : i32
    return %c0_i32, %c0_i32_0 : i32, i32
  }
  func.func @transform_6(%arg0: i32) -> (i32, i32) {
    %c0_i32 = arith.constant 0 : i32
    %c0_i32_0 = arith.constant 0 : i32
    %c0_i32_1 = arith.constant 0 : i32
    return %c0_i32, %c0_i32_0 : i32, i32
  }
  func.func @transform_7(%arg0: i32) -> (i32, i32) {
    %c0_i32 = arith.constant 0 : i32
    %c0_i32_0 = arith.constant 0 : i32
    %c0_i32_1 = arith.constant 0 : i32
    return %c0_i32, %c0_i32_0 : i32, i32
  }
  func.func @transform_8(%arg0: i32) -> (i32, i32) {
    %c0_i32 = arith.constant 0 : i32
    %c0_i32_0 = arith.constant 0 : i32
    return %arg0, %c0_i32 : i32, i32
  }
  func.func @transform_9(%arg0: i32) -> (i32, i32) {
    %c0_i32 = arith.constant 0 : i32
    %c0_i32_0 = arith.constant 0 : i32
    return %arg0, %c0_i32 : i32, i32
  }
  func.func @transform_10(%arg0: i32) -> (i32, i32) {
    %c0_i32 = arith.constant 0 : i32
    %c0_i32_0 = arith.constant 0 : i32
    return %arg0, %c0_i32 : i32, i32
  }
}

module attributes {stable_mosaic.version = 11 : i64} {
  func.func @_knn_kernel(%arg0: i32, %arg1: i32, %arg2: memref<1x32x3xf32, #tpu.memory_space<vmem>>, %arg3: memref<1x32x3xf32, #tpu.memory_space<vmem>>, %arg4: memref<1x32x20xi32, #tpu.memory_space<vmem>>, %arg5: memref<1x32xf32, #tpu.memory_space<vmem>>) attributes {dimension_semantics = [#tpu.dimension_semantics<parallel>, #tpu.dimension_semantics<arbitrary>], iteration_bounds = array<i64: 2, 1>, scalar_prefetch = 0 : i64, scratch_operands = 1 : i64, tpu.core_type = #tpu.core_type<tc>, window_params = [{transform_indices = @transform_0, window_bounds = array<i64: 1, 32, 3>}, {transform_indices = @transform_1, window_bounds = array<i64: 1, 32, 3>}, {transform_indices = @transform_2, window_bounds = array<i64: 1, 32, 20>}]} {
    %c0_i32 = arith.constant 0 : i32
    %0 = arith.cmpi eq, %arg1, %c0_i32 : i32
    %1 = arith.extui %0 : i1 to i32
    %c0_i32_0 = arith.constant 0 : i32
    %2 = arith.cmpi ne, %1, %c0_i32_0 : i32
    scf.if %2 {
      %c0_15 = arith.constant 0 : index
      %c0_16 = arith.constant 0 : index
      %c0_17 = arith.constant 0 : index
      %24 = vector.load %arg3[%c0_15, %c0_16, %c0_17] : memref<1x32x3xf32, #tpu.memory_space<vmem>>, vector<1x32x3xf32>
      %25 = vector.shape_cast %24 : vector<1x32x3xf32> to vector<32x3xf32>
      %26 = arith.mulf %25, %25 : vector<32x3xf32>
      %cst_18 = arith.constant 1.000000e+00 : f32
      %27 = vector.broadcast %cst_18 : f32 to vector<1x3xf32>
      %cst_19 = arith.constant dense<0.000000e+00> : vector<1x32xf32>
      %28 = tpu.matmul %27, %26, %cst_19 {dimension_numbers = #tpu.dot_dimension_numbers<[1], [1], [0], [0], [0, 0, 1, 0], [], []>} : vector<1x3xf32>, vector<32x3xf32>, vector<1x32xf32> -> vector<1x32xf32>
      %c0_20 = arith.constant 0 : index
      %c0_21 = arith.constant 0 : index
      %29 = vector.load %arg5[%c0_20, %c0_21] : memref<1x32xf32, #tpu.memory_space<vmem>>, vector<1x32xf32>
      tpu.vector_store %arg5[%c0_20, %c0_21], %28 {strides = array<i32>} : memref<1x32xf32, #tpu.memory_space<vmem>>, vector<1x32xf32>,
    } else {
    }
    %c0 = arith.constant 0 : index
    %c0_1 = arith.constant 0 : index
    %c0_2 = arith.constant 0 : index
    %3 = vector.load %arg2[%c0, %c0_1, %c0_2] : memref<1x32x3xf32, #tpu.memory_space<vmem>>, vector<1x32x3xf32>
    %4 = vector.shape_cast %3 : vector<1x32x3xf32> to vector<32x3xf32>
    %c0_3 = arith.constant 0 : index
    %c0_4 = arith.constant 0 : index
    %c0_5 = arith.constant 0 : index
    %5 = vector.load %arg3[%c0_3, %c0_4, %c0_5] : memref<1x32x3xf32, #tpu.memory_space<vmem>>, vector<1x32x3xf32>
    %6 = vector.shape_cast %5 : vector<1x32x3xf32> to vector<32x3xf32>
    %cst = arith.constant dense<0.000000e+00> : vector<32x32xf32>
    %7 = tpu.matmul %4, %6, %cst {dimension_numbers = #tpu.dot_dimension_numbers<[1], [1], [0], [0], [0, 0, 1, 0], [], []>} : vector<32x3xf32>, vector<32x3xf32>, vector<32x32xf32> -> vector<32x32xf32>
    %cst_6 = arith.constant 2.000000e+00 : f32
    %8 = vector.broadcast %cst_6 : f32 to vector<32x32xf32>
    %9 = arith.mulf %8, %7 : vector<32x32xf32>
    %c0_7 = arith.constant 0 : index
    %c0_8 = arith.constant 0 : index
    %10 = vector.load %arg5[%c0_7, %c0_8] : memref<1x32xf32, #tpu.memory_space<vmem>>, vector<1x32xf32>
    %11 = vector.broadcast %10 : vector<1x32xf32> to vector<32x32xf32>
    %12 = arith.subf %9, %11 : vector<32x32xf32>
    %13 = tpu.iota {dimensions = array<i32: 1>} : vector<32x32xi32>
    %14 = arith.sitofp %13 : vector<32x32xi32> to vector<32x32xf32>
    %15 = tpu.iota {dimensions = array<i32: 1>} : vector<32x20xi32>
    %16 = arith.sitofp %15 : vector<32x20xi32> to vector<32x20xf32>
    %cst_9 = arith.constant 0.000000e+00 : f32
    %17 = vector.broadcast %cst_9 : f32 to vector<32x20xf32>
    %c0_i32_10 = arith.constant 0 : i32
    %c20_i32 = arith.constant 20 : i32
    %18 = arith.addi %c0_i32_10, %c20_i32 : i32
    %c1_i32 = arith.constant 1 : i32
    %19:2 = scf.for %arg6 = %c0_i32_10 to %18 step %c1_i32 iter_args(%arg7 = %12, %arg8 = %17) -> (vector<32x32xf32>, vector<32x20xf32>)  : i32 {
      %cst_15 = arith.constant dense<0xFF800000> : vector<32xf32>
      %24 = vector.multi_reduction <maximumf>, %arg7, %cst_15 [1] : vector<32x32xf32> to vector<32xf32>
      %25 = vector.shape_cast %24 : vector<32xf32> to vector<32x1xf32>
      %26 = vector.broadcast %25 : vector<32x1xf32> to vector<32x32xf32>
      %27 = arith.cmpf oeq, %arg7, %26 : vector<32x32xf32>
      %cst_16 = arith.constant 3.200000e+01 : f32
      %28 = vector.broadcast %cst_16 : f32 to vector<32x32xf32>
      %29 = arith.select %27, %14, %28 : vector<32x32xi1>, vector<32x32xf32>
      %cst_17 = arith.constant dense<0x7F800000> : vector<32xf32>
      %30 = vector.multi_reduction <minimumf>, %29, %cst_17 [1] : vector<32x32xf32> to vector<32xf32>
      %31 = vector.shape_cast %30 : vector<32xf32> to vector<32x1xf32>
      %32 = arith.sitofp %arg6 : i32 to f32
      %33 = vector.broadcast %32 : f32 to vector<32x20xf32>
      %34 = arith.cmpf oeq, %16, %33 : vector<32x20xf32>
      %35 = vector.shape_cast %31 : vector<32x1xf32> to vector<32x1xf32>
      %36 = vector.broadcast %35 : vector<32x1xf32> to vector<32x20xf32>
      %37 = arith.select %34, %36, %arg8 : vector<32x20xi1>, vector<32x20xf32>
      %38 = vector.broadcast %31 : vector<32x1xf32> to vector<32x32xf32>
      %39 = arith.cmpf oeq, %14, %38 : vector<32x32xf32>
      %cst_18 = arith.constant 0xFF800000 : f32
      %40 = vector.broadcast %cst_18 : f32 to vector<32x32xf32>
      %41 = arith.select %39, %40, %arg7 : vector<32x32xi1>, vector<32x32xf32>
      scf.yield %41, %37 : vector<32x32xf32>, vector<32x20xf32>
    }
    %c20_i32_11 = arith.constant 20 : i32
    %20 = arith.fptosi %19#1 : vector<32x20xf32> to vector<32x20xi32>
    %c0_12 = arith.constant 0 : index
    %c0_13 = arith.constant 0 : index
    %c0_14 = arith.constant 0 : index
    %21 = vector.load %arg4[%c0_12, %c0_13, %c0_14] : memref<1x32x20xi32, #tpu.memory_space<vmem>>, vector<1x32x20xi32>
    %22 = vector.shape_cast %21 : vector<1x32x20xi32> to vector<32x20xi32>
    %23 = vector.shape_cast %20 : vector<32x20xi32> to vector<1x32x20xi32>
    tpu.vector_store %arg4[%c0_12, %c0_13, %c0_14], %23 {strides = array<i32>} : memref<1x32x20xi32, #tpu.memory_space<vmem>>, vector<1x32x20xi32>,
    return
  }
  func.func @transform_0(%arg0: i32, %arg1: i32) -> (i32, i32, i32) {
    %c0_i32 = arith.constant 0 : i32
    %c0_i32_0 = arith.constant 0 : i32
    return %arg0, %arg1, %c0_i32 : i32, i32, i32
  }
  func.func @transform_1(%arg0: i32, %arg1: i32) -> (i32, i32, i32) {
    %c0_i32 = arith.constant 0 : i32
    %c0_i32_0 = arith.constant 0 : i32
    %c0_i32_1 = arith.constant 0 : i32
    return %arg0, %c0_i32, %c0_i32_0 : i32, i32, i32
  }
  func.func @transform_2(%arg0: i32, %arg1: i32) -> (i32, i32, i32) {
    %c0_i32 = arith.constant 0 : i32
    %c0_i32_0 = arith.constant 0 : i32
    return %arg0, %arg1, %c0_i32 : i32, i32, i32
  }
}

module attributes {stable_mosaic.version = 11 : i64} {
  func.func @_knn_kernel(%arg0: i32, %arg1: i32, %arg2: memref<1x32x64xf32, #tpu.memory_space<vmem>>, %arg3: memref<1x32x64xf32, #tpu.memory_space<vmem>>, %arg4: memref<1x32x20xi32, #tpu.memory_space<vmem>>, %arg5: memref<1x32xf32, #tpu.memory_space<vmem>>) attributes {dimension_semantics = [#tpu.dimension_semantics<parallel>, #tpu.dimension_semantics<arbitrary>], iteration_bounds = array<i64: 2, 1>, scalar_prefetch = 0 : i64, scratch_operands = 1 : i64, tpu.core_type = #tpu.core_type<tc>, window_params = [{transform_indices = @transform_0, window_bounds = array<i64: 1, 32, 64>}, {transform_indices = @transform_1, window_bounds = array<i64: 1, 32, 64>}, {transform_indices = @transform_2, window_bounds = array<i64: 1, 32, 20>}]} {
    %c0_i32 = arith.constant 0 : i32
    %0 = arith.cmpi eq, %arg1, %c0_i32 : i32
    %1 = arith.extui %0 : i1 to i32
    %c0_i32_0 = arith.constant 0 : i32
    %2 = arith.cmpi ne, %1, %c0_i32_0 : i32
    scf.if %2 {
      %c0_15 = arith.constant 0 : index
      %c0_16 = arith.constant 0 : index
      %c0_17 = arith.constant 0 : index
      %24 = vector.load %arg3[%c0_15, %c0_16, %c0_17] : memref<1x32x64xf32, #tpu.memory_space<vmem>>, vector<1x32x64xf32>
      %25 = vector.shape_cast %24 : vector<1x32x64xf32> to vector<32x64xf32>
      %26 = arith.mulf %25, %25 : vector<32x64xf32>
      %cst_18 = arith.constant 1.000000e+00 : f32
      %27 = vector.broadcast %cst_18 : f32 to vector<1x64xf32>
      %cst_19 = arith.constant dense<0.000000e+00> : vector<1x32xf32>
      %28 = tpu.matmul %27, %26, %cst_19 {dimension_numbers = #tpu.dot_dimension_numbers<[1], [1], [0], [0], [0, 0, 1, 0], [], []>} : vector<1x64xf32>, vector<32x64xf32>, vector<1x32xf32> -> vector<1x32xf32>
      %c0_20 = arith.constant 0 : index
      %c0_21 = arith.constant 0 : index
      %29 = vector.load %arg5[%c0_20, %c0_21] : memref<1x32xf32, #tpu.memory_space<vmem>>, vector<1x32xf32>
      tpu.vector_store %arg5[%c0_20, %c0_21], %28 {strides = array<i32>} : memref<1x32xf32, #tpu.memory_space<vmem>>, vector<1x32xf32>,
    } else {
    }
    %c0 = arith.constant 0 : index
    %c0_1 = arith.constant 0 : index
    %c0_2 = arith.constant 0 : index
    %3 = vector.load %arg2[%c0, %c0_1, %c0_2] : memref<1x32x64xf32, #tpu.memory_space<vmem>>, vector<1x32x64xf32>
    %4 = vector.shape_cast %3 : vector<1x32x64xf32> to vector<32x64xf32>
    %c0_3 = arith.constant 0 : index
    %c0_4 = arith.constant 0 : index
    %c0_5 = arith.constant 0 : index
    %5 = vector.load %arg3[%c0_3, %c0_4, %c0_5] : memref<1x32x64xf32, #tpu.memory_space<vmem>>, vector<1x32x64xf32>
    %6 = vector.shape_cast %5 : vector<1x32x64xf32> to vector<32x64xf32>
    %cst = arith.constant dense<0.000000e+00> : vector<32x32xf32>
    %7 = tpu.matmul %4, %6, %cst {dimension_numbers = #tpu.dot_dimension_numbers<[1], [1], [0], [0], [0, 0, 1, 0], [], []>} : vector<32x64xf32>, vector<32x64xf32>, vector<32x32xf32> -> vector<32x32xf32>
    %cst_6 = arith.constant 2.000000e+00 : f32
    %8 = vector.broadcast %cst_6 : f32 to vector<32x32xf32>
    %9 = arith.mulf %8, %7 : vector<32x32xf32>
    %c0_7 = arith.constant 0 : index
    %c0_8 = arith.constant 0 : index
    %10 = vector.load %arg5[%c0_7, %c0_8] : memref<1x32xf32, #tpu.memory_space<vmem>>, vector<1x32xf32>
    %11 = vector.broadcast %10 : vector<1x32xf32> to vector<32x32xf32>
    %12 = arith.subf %9, %11 : vector<32x32xf32>
    %13 = tpu.iota {dimensions = array<i32: 1>} : vector<32x32xi32>
    %14 = arith.sitofp %13 : vector<32x32xi32> to vector<32x32xf32>
    %15 = tpu.iota {dimensions = array<i32: 1>} : vector<32x20xi32>
    %16 = arith.sitofp %15 : vector<32x20xi32> to vector<32x20xf32>
    %cst_9 = arith.constant 0.000000e+00 : f32
    %17 = vector.broadcast %cst_9 : f32 to vector<32x20xf32>
    %c0_i32_10 = arith.constant 0 : i32
    %c20_i32 = arith.constant 20 : i32
    %18 = arith.addi %c0_i32_10, %c20_i32 : i32
    %c1_i32 = arith.constant 1 : i32
    %19:2 = scf.for %arg6 = %c0_i32_10 to %18 step %c1_i32 iter_args(%arg7 = %12, %arg8 = %17) -> (vector<32x32xf32>, vector<32x20xf32>)  : i32 {
      %cst_15 = arith.constant dense<0xFF800000> : vector<32xf32>
      %24 = vector.multi_reduction <maximumf>, %arg7, %cst_15 [1] : vector<32x32xf32> to vector<32xf32>
      %25 = vector.shape_cast %24 : vector<32xf32> to vector<32x1xf32>
      %26 = vector.broadcast %25 : vector<32x1xf32> to vector<32x32xf32>
      %27 = arith.cmpf oeq, %arg7, %26 : vector<32x32xf32>
      %cst_16 = arith.constant 3.200000e+01 : f32
      %28 = vector.broadcast %cst_16 : f32 to vector<32x32xf32>
      %29 = arith.select %27, %14, %28 : vector<32x32xi1>, vector<32x32xf32>
      %cst_17 = arith.constant dense<0x7F800000> : vector<32xf32>
      %30 = vector.multi_reduction <minimumf>, %29, %cst_17 [1] : vector<32x32xf32> to vector<32xf32>
      %31 = vector.shape_cast %30 : vector<32xf32> to vector<32x1xf32>
      %32 = arith.sitofp %arg6 : i32 to f32
      %33 = vector.broadcast %32 : f32 to vector<32x20xf32>
      %34 = arith.cmpf oeq, %16, %33 : vector<32x20xf32>
      %35 = vector.shape_cast %31 : vector<32x1xf32> to vector<32x1xf32>
      %36 = vector.broadcast %35 : vector<32x1xf32> to vector<32x20xf32>
      %37 = arith.select %34, %36, %arg8 : vector<32x20xi1>, vector<32x20xf32>
      %38 = vector.broadcast %31 : vector<32x1xf32> to vector<32x32xf32>
      %39 = arith.cmpf oeq, %14, %38 : vector<32x32xf32>
      %cst_18 = arith.constant 0xFF800000 : f32
      %40 = vector.broadcast %cst_18 : f32 to vector<32x32xf32>
      %41 = arith.select %39, %40, %arg7 : vector<32x32xi1>, vector<32x32xf32>
      scf.yield %41, %37 : vector<32x32xf32>, vector<32x20xf32>
    }
    %c20_i32_11 = arith.constant 20 : i32
    %20 = arith.fptosi %19#1 : vector<32x20xf32> to vector<32x20xi32>
    %c0_12 = arith.constant 0 : index
    %c0_13 = arith.constant 0 : index
    %c0_14 = arith.constant 0 : index
    %21 = vector.load %arg4[%c0_12, %c0_13, %c0_14] : memref<1x32x20xi32, #tpu.memory_space<vmem>>, vector<1x32x20xi32>
    %22 = vector.shape_cast %21 : vector<1x32x20xi32> to vector<32x20xi32>
    %23 = vector.shape_cast %20 : vector<32x20xi32> to vector<1x32x20xi32>
    tpu.vector_store %arg4[%c0_12, %c0_13, %c0_14], %23 {strides = array<i32>} : memref<1x32x20xi32, #tpu.memory_space<vmem>>, vector<1x32x20xi32>,
    return
  }
  func.func @transform_0(%arg0: i32, %arg1: i32) -> (i32, i32, i32) {
    %c0_i32 = arith.constant 0 : i32
    %c0_i32_0 = arith.constant 0 : i32
    return %arg0, %arg1, %c0_i32 : i32, i32, i32
  }
  func.func @transform_1(%arg0: i32, %arg1: i32) -> (i32, i32, i32) {
    %c0_i32 = arith.constant 0 : i32
    %c0_i32_0 = arith.constant 0 : i32
    %c0_i32_1 = arith.constant 0 : i32
    return %arg0, %c0_i32, %c0_i32_0 : i32, i32, i32
  }
  func.func @transform_2(%arg0: i32, %arg1: i32) -> (i32, i32, i32) {
    %c0_i32 = arith.constant 0 : i32
    %c0_i32_0 = arith.constant 0 : i32
    return %arg0, %arg1, %c0_i32 : i32, i32, i32
  }
}

module attributes {stable_mosaic.version = 11 : i64} {
  func.func @_edge_dg_kernel(%arg0: i32, %arg1: i32, %arg2: memref<64x20xi32, #tpu.memory_space<smem>>, %arg3: memref<1x32x128xf32, #tpu.memory_space<vmem>>, %arg4: memref<1x32x128xf32, #tpu.memory_space<vmem>>, %arg5: memref<128x128xf32, #tpu.memory_space<vmem>>, %arg6: memref<1x128xf32, #tpu.memory_space<vmem>>, %arg7: memref<128x256xf32, #tpu.memory_space<vmem>>, %arg8: memref<128x256xf32, #tpu.memory_space<vmem>>, %arg9: memref<1x256xf32, #tpu.memory_space<vmem>>, %arg10: memref<1x32x128xf32, #tpu.memory_space<vmem>>, %arg11: memref<1x32x128xf32, #tpu.memory_space<vmem>>, %arg12: memref<1x32x256xf32, #tpu.memory_space<vmem>>, %arg13: memref<1x32x256xf32, #tpu.memory_space<vmem>>, %arg14: memref<32x128xf32, #tpu.memory_space<vmem>>) attributes {dimension_semantics = [#tpu.dimension_semantics<parallel>, #tpu.dimension_semantics<parallel>], iteration_bounds = array<i64: 2, 1>, scalar_prefetch = 1 : i64, scratch_operands = 1 : i64, tpu.core_type = #tpu.core_type<tc>, window_params = [{transform_indices = @transform_0, window_bounds = array<i64: 1, 32, 128>}, {transform_indices = @transform_1, window_bounds = array<i64: 1, 32, 128>}, {pipeline_mode = #tpu.pipeline_mode<synchronous>, transform_indices = @transform_2, window_bounds = array<i64: 128, 128>}, {pipeline_mode = #tpu.pipeline_mode<synchronous>, transform_indices = @transform_3, window_bounds = array<i64: 1, 128>}, {pipeline_mode = #tpu.pipeline_mode<synchronous>, transform_indices = @transform_4, window_bounds = array<i64: 128, 256>}, {pipeline_mode = #tpu.pipeline_mode<synchronous>, transform_indices = @transform_5, window_bounds = array<i64: 128, 256>}, {pipeline_mode = #tpu.pipeline_mode<synchronous>, transform_indices = @transform_6, window_bounds = array<i64: 1, 256>}, {transform_indices = @transform_7, window_bounds = array<i64: 1, 32, 128>}, {transform_indices = @transform_8, window_bounds = array<i64: 1, 32, 128>}, {transform_indices = @transform_9, window_bounds = array<i64: 1, 32, 256>}, {transform_indices = @transform_10, window_bounds = array<i64: 1, 32, 256>}]} {
    %c32_i32 = arith.constant 32 : i32
    %0 = arith.muli %arg0, %c32_i32 : i32
    %c32_i32_0 = arith.constant 32 : i32
    %1 = arith.muli %arg1, %c32_i32_0 : i32
    %2 = arith.addi %0, %1 : i32
    %c0 = arith.constant 0 : index
    %c0_1 = arith.constant 0 : index
    %c0_2 = arith.constant 0 : index
    %3 = vector.load %arg4[%c0, %c0_1, %c0_2] : memref<1x32x128xf32, #tpu.memory_space<vmem>>, vector<1x32x128xf32>
    %4 = vector.shape_cast %3 : vector<1x32x128xf32> to vector<32x128xf32>
    %cst = arith.constant 0.000000e+00 : f32
    %5 = vector.broadcast %cst : f32 to vector<32x128xf32>
    %c0_i32 = arith.constant 0 : i32
    %c20_i32 = arith.constant 20 : i32
    %6 = arith.addi %c0_i32, %c20_i32 : i32
    %c1_i32 = arith.constant 1 : i32
    %7:2 = scf.for %arg15 = %c0_i32 to %6 step %c1_i32 iter_args(%arg16 = %5, %arg17 = %5) -> (vector<32x128xf32>, vector<32x128xf32>)  : i32 {
      %c0_i32_24 = arith.constant 0 : i32
      %c32_i32_25 = arith.constant 32 : i32
      %27 = arith.addi %c0_i32_24, %c32_i32_25 : i32
      %c1_i32_26 = arith.constant 1 : i32
      scf.for %arg18 = %c0_i32_24 to %27 step %c1_i32_26  : i32 {
        %41 = arith.addi %2, %arg18 : i32
        %42 = arith.index_cast %41 : i32 to index
        %43 = arith.index_cast %arg15 : i32 to index
        %44 = memref.load %arg2[%42, %43] : memref<64x20xi32, #tpu.memory_space<smem>>
        %c0_37 = arith.constant 0 : index
        %45 = arith.index_cast %44 : i32 to index
        %c0_38 = arith.constant 0 : index
        %46 = vector.load %arg3[%c0_37, %45, %c0_38] : memref<1x32x128xf32, #tpu.memory_space<vmem>>, vector<1x1x128xf32>
        %47 = vector.shape_cast %46 : vector<1x1x128xf32> to vector<1x128xf32>
        %48 = arith.index_cast %arg18 : i32 to index
        %c0_39 = arith.constant 0 : index
        %49 = vector.load %arg14[%48, %c0_39] : memref<32x128xf32, #tpu.memory_space<vmem>>, vector<1x128xf32>
        tpu.vector_store %arg14[%48, %c0_39], %47 {strides = array<i32>} : memref<32x128xf32, #tpu.memory_space<vmem>>, vector<1x128xf32>,
      }
      %c32_i32_27 = arith.constant 32 : i32
      %c0_28 = arith.constant 0 : index
      %c0_29 = arith.constant 0 : index
      %28 = vector.load %arg14[%c0_28, %c0_29] : memref<32x128xf32, #tpu.memory_space<vmem>>, vector<32x128xf32>
      %29 = arith.addf %28, %4 : vector<32x128xf32>
      %cst_30 = arith.constant 0.000000e+00 : f32
      %30 = vector.broadcast %cst_30 : f32 to vector<32x128xf32>
      %31 = arith.maximumf %29, %30 : vector<32x128xf32>
      %c0_31 = arith.constant 0 : index
      %c0_32 = arith.constant 0 : index
      %32 = vector.load %arg5[%c0_31, %c0_32] : memref<128x128xf32, #tpu.memory_space<vmem>>, vector<128x128xf32>
      %cst_33 = arith.constant dense<0.000000e+00> : vector<32x128xf32>
      %33 = tpu.matmul %31, %32, %cst_33 {dimension_numbers = #tpu.dot_dimension_numbers<[1], [0], [0], [1], [0, 0, 1, 1], [], []>} : vector<32x128xf32>, vector<128x128xf32>, vector<32x128xf32> -> vector<32x128xf32>
      %c0_34 = arith.constant 0 : index
      %c0_35 = arith.constant 0 : index
      %34 = vector.load %arg6[%c0_34, %c0_35] : memref<1x128xf32, #tpu.memory_space<vmem>>, vector<1x128xf32>
      %35 = vector.broadcast %34 : vector<1x128xf32> to vector<32x128xf32>
      %36 = arith.addf %33, %35 : vector<32x128xf32>
      %cst_36 = arith.constant 0.000000e+00 : f32
      %37 = vector.broadcast %cst_36 : f32 to vector<32x128xf32>
      %38 = arith.maximumf %36, %37 : vector<32x128xf32>
      %39 = arith.maximumf %arg16, %31 : vector<32x128xf32>
      %40 = arith.maximumf %arg17, %38 : vector<32x128xf32>
      scf.yield %39, %40 : vector<32x128xf32>, vector<32x128xf32>
    }
    %c20_i32_3 = arith.constant 20 : i32
    %c0_4 = arith.constant 0 : index
    %c0_5 = arith.constant 0 : index
    %c0_6 = arith.constant 0 : index
    %8 = vector.load %arg10[%c0_4, %c0_5, %c0_6] : memref<1x32x128xf32, #tpu.memory_space<vmem>>, vector<1x32x128xf32>
    %9 = vector.shape_cast %8 : vector<1x32x128xf32> to vector<32x128xf32>
    %10 = vector.shape_cast %7#0 : vector<32x128xf32> to vector<1x32x128xf32>
    tpu.vector_store %arg10[%c0_4, %c0_5, %c0_6], %10 {strides = array<i32>} : memref<1x32x128xf32, #tpu.memory_space<vmem>>, vector<1x32x128xf32>,
    %c0_7 = arith.constant 0 : index
    %c0_8 = arith.constant 0 : index
    %c0_9 = arith.constant 0 : index
    %11 = vector.load %arg11[%c0_7, %c0_8, %c0_9] : memref<1x32x128xf32, #tpu.memory_space<vmem>>, vector<1x32x128xf32>
    %12 = vector.shape_cast %11 : vector<1x32x128xf32> to vector<32x128xf32>
    %13 = vector.shape_cast %7#1 : vector<32x128xf32> to vector<1x32x128xf32>
    tpu.vector_store %arg11[%c0_7, %c0_8, %c0_9], %13 {strides = array<i32>} : memref<1x32x128xf32, #tpu.memory_space<vmem>>, vector<1x32x128xf32>,
    %c0_10 = arith.constant 0 : index
    %c0_11 = arith.constant 0 : index
    %14 = vector.load %arg7[%c0_10, %c0_11] : memref<128x256xf32, #tpu.memory_space<vmem>>, vector<128x256xf32>
    %cst_12 = arith.constant dense<0.000000e+00> : vector<32x256xf32>
    %15 = tpu.matmul %7#1, %14, %cst_12 {dimension_numbers = #tpu.dot_dimension_numbers<[1], [0], [0], [1], [0, 0, 1, 1], [], []>} : vector<32x128xf32>, vector<128x256xf32>, vector<32x256xf32> -> vector<32x256xf32>
    %c0_13 = arith.constant 0 : index
    %c0_14 = arith.constant 0 : index
    %c0_15 = arith.constant 0 : index
    %16 = vector.load %arg12[%c0_13, %c0_14, %c0_15] : memref<1x32x256xf32, #tpu.memory_space<vmem>>, vector<1x32x256xf32>
    %17 = vector.shape_cast %16 : vector<1x32x256xf32> to vector<32x256xf32>
    %18 = vector.shape_cast %15 : vector<32x256xf32> to vector<1x32x256xf32>
    tpu.vector_store %arg12[%c0_13, %c0_14, %c0_15], %18 {strides = array<i32>} : memref<1x32x256xf32, #tpu.memory_space<vmem>>, vector<1x32x256xf32>,
    %c0_16 = arith.constant 0 : index
    %c0_17 = arith.constant 0 : index
    %19 = vector.load %arg8[%c0_16, %c0_17] : memref<128x256xf32, #tpu.memory_space<vmem>>, vector<128x256xf32>
    %cst_18 = arith.constant dense<0.000000e+00> : vector<32x256xf32>
    %20 = tpu.matmul %7#1, %19, %cst_18 {dimension_numbers = #tpu.dot_dimension_numbers<[1], [0], [0], [1], [0, 0, 1, 1], [], []>} : vector<32x128xf32>, vector<128x256xf32>, vector<32x256xf32> -> vector<32x256xf32>
    %c0_19 = arith.constant 0 : index
    %c0_20 = arith.constant 0 : index
    %21 = vector.load %arg9[%c0_19, %c0_20] : memref<1x256xf32, #tpu.memory_space<vmem>>, vector<1x256xf32>
    %22 = vector.broadcast %21 : vector<1x256xf32> to vector<32x256xf32>
    %23 = arith.addf %20, %22 : vector<32x256xf32>
    %c0_21 = arith.constant 0 : index
    %c0_22 = arith.constant 0 : index
    %c0_23 = arith.constant 0 : index
    %24 = vector.load %arg13[%c0_21, %c0_22, %c0_23] : memref<1x32x256xf32, #tpu.memory_space<vmem>>, vector<1x32x256xf32>
    %25 = vector.shape_cast %24 : vector<1x32x256xf32> to vector<32x256xf32>
    %26 = vector.shape_cast %23 : vector<32x256xf32> to vector<1x32x256xf32>
    tpu.vector_store %arg13[%c0_21, %c0_22, %c0_23], %26 {strides = array<i32>} : memref<1x32x256xf32, #tpu.memory_space<vmem>>, vector<1x32x256xf32>,
    return
  }
  func.func @transform_0(%arg0: i32, %arg1: i32, %arg2: memref<64x20xi32, #tpu.memory_space<smem>>) -> (i32, i32, i32) {
    %c0_i32 = arith.constant 0 : i32
    %c0_i32_0 = arith.constant 0 : i32
    %c0_i32_1 = arith.constant 0 : i32
    return %arg0, %c0_i32, %c0_i32_0 : i32, i32, i32
  }
  func.func @transform_1(%arg0: i32, %arg1: i32, %arg2: memref<64x20xi32, #tpu.memory_space<smem>>) -> (i32, i32, i32) {
    %c0_i32 = arith.constant 0 : i32
    %c0_i32_0 = arith.constant 0 : i32
    return %arg0, %arg1, %c0_i32 : i32, i32, i32
  }
  func.func @transform_2(%arg0: i32, %arg1: i32, %arg2: memref<64x20xi32, #tpu.memory_space<smem>>) -> (i32, i32) {
    %c0_i32 = arith.constant 0 : i32
    %c0_i32_0 = arith.constant 0 : i32
    %c0_i32_1 = arith.constant 0 : i32
    return %c0_i32, %c0_i32_0 : i32, i32
  }
  func.func @transform_3(%arg0: i32, %arg1: i32, %arg2: memref<64x20xi32, #tpu.memory_space<smem>>) -> (i32, i32) {
    %c0_i32 = arith.constant 0 : i32
    %c0_i32_0 = arith.constant 0 : i32
    %c0_i32_1 = arith.constant 0 : i32
    return %c0_i32, %c0_i32_0 : i32, i32
  }
  func.func @transform_4(%arg0: i32, %arg1: i32, %arg2: memref<64x20xi32, #tpu.memory_space<smem>>) -> (i32, i32) {
    %c0_i32 = arith.constant 0 : i32
    %c0_i32_0 = arith.constant 0 : i32
    %c0_i32_1 = arith.constant 0 : i32
    return %c0_i32, %c0_i32_0 : i32, i32
  }
  func.func @transform_5(%arg0: i32, %arg1: i32, %arg2: memref<64x20xi32, #tpu.memory_space<smem>>) -> (i32, i32) {
    %c0_i32 = arith.constant 0 : i32
    %c0_i32_0 = arith.constant 0 : i32
    %c0_i32_1 = arith.constant 0 : i32
    return %c0_i32, %c0_i32_0 : i32, i32
  }
  func.func @transform_6(%arg0: i32, %arg1: i32, %arg2: memref<64x20xi32, #tpu.memory_space<smem>>) -> (i32, i32) {
    %c0_i32 = arith.constant 0 : i32
    %c0_i32_0 = arith.constant 0 : i32
    %c0_i32_1 = arith.constant 0 : i32
    return %c0_i32, %c0_i32_0 : i32, i32
  }
  func.func @transform_7(%arg0: i32, %arg1: i32, %arg2: memref<64x20xi32, #tpu.memory_space<smem>>) -> (i32, i32, i32) {
    %c0_i32 = arith.constant 0 : i32
    %c0_i32_0 = arith.constant 0 : i32
    return %arg0, %arg1, %c0_i32 : i32, i32, i32
  }
  func.func @transform_8(%arg0: i32, %arg1: i32, %arg2: memref<64x20xi32, #tpu.memory_space<smem>>) -> (i32, i32, i32) {
    %c0_i32 = arith.constant 0 : i32
    %c0_i32_0 = arith.constant 0 : i32
    return %arg0, %arg1, %c0_i32 : i32, i32, i32
  }
  func.func @transform_9(%arg0: i32, %arg1: i32, %arg2: memref<64x20xi32, #tpu.memory_space<smem>>) -> (i32, i32, i32) {
    %c0_i32 = arith.constant 0 : i32
    %c0_i32_0 = arith.constant 0 : i32
    return %arg0, %arg1, %c0_i32 : i32, i32, i32
  }
  func.func @transform_10(%arg0: i32, %arg1: i32, %arg2: memref<64x20xi32, #tpu.memory_space<smem>>) -> (i32, i32, i32) {
    %c0_i32 = arith.constant 0 : i32
    %c0_i32_0 = arith.constant 0 : i32
    return %arg0, %arg1, %c0_i32 : i32, i32, i32
  }
}

module attributes {stable_mosaic.version = 11 : i64} {
  func.func @_edge_sn_out_kernel(%arg0: i32, %arg1: i32, %arg2: memref<64x20xi32, #tpu.memory_space<smem>>, %arg3: memref<1x32x256xf32, #tpu.memory_space<vmem>>, %arg4: memref<1x32x256xf32, #tpu.memory_space<vmem>>, %arg5: memref<1x32x128xf32, #tpu.memory_space<vmem>>, %arg6: memref<1x32x128xf32, #tpu.memory_space<vmem>>, %arg7: memref<128x1024xf32, #tpu.memory_space<vmem>>, %arg8: memref<128x1024xf32, #tpu.memory_space<vmem>>, %arg9: memref<256x1024xf32, #tpu.memory_space<vmem>>, %arg10: memref<1x1024xf32, #tpu.memory_space<vmem>>, %arg11: memref<1x1024x32xf32, #tpu.memory_space<vmem>>, %arg12: memref<32x256xf32, #tpu.memory_space<vmem>>) attributes {dimension_semantics = [#tpu.dimension_semantics<parallel>, #tpu.dimension_semantics<parallel>], iteration_bounds = array<i64: 2, 1>, scalar_prefetch = 1 : i64, scratch_operands = 1 : i64, tpu.core_type = #tpu.core_type<tc>, window_params = [{transform_indices = @transform_0, window_bounds = array<i64: 1, 32, 256>}, {transform_indices = @transform_1, window_bounds = array<i64: 1, 32, 256>}, {transform_indices = @transform_2, window_bounds = array<i64: 1, 32, 128>}, {transform_indices = @transform_3, window_bounds = array<i64: 1, 32, 128>}, {pipeline_mode = #tpu.pipeline_mode<synchronous>, transform_indices = @transform_4, window_bounds = array<i64: 128, 1024>}, {pipeline_mode = #tpu.pipeline_mode<synchronous>, transform_indices = @transform_5, window_bounds = array<i64: 128, 1024>}, {pipeline_mode = #tpu.pipeline_mode<synchronous>, transform_indices = @transform_6, window_bounds = array<i64: 256, 1024>}, {pipeline_mode = #tpu.pipeline_mode<synchronous>, transform_indices = @transform_7, window_bounds = array<i64: 1, 1024>}, {transform_indices = @transform_8, window_bounds = array<i64: 1, 1024, 32>}]} {
    %c32_i32 = arith.constant 32 : i32
    %0 = arith.muli %arg0, %c32_i32 : i32
    %c32_i32_0 = arith.constant 32 : i32
    %1 = arith.muli %arg1, %c32_i32_0 : i32
    %2 = arith.addi %0, %1 : i32
    %cst = arith.constant 0xFF800000 : f32
    %3 = vector.broadcast %cst : f32 to vector<32x256xf32>
    %c0_i32 = arith.constant 0 : i32
    %c20_i32 = arith.constant 20 : i32
    %4 = arith.addi %c0_i32, %c20_i32 : i32
    %c1_i32 = arith.constant 1 : i32
    %5 = scf.for %arg13 = %c0_i32 to %4 step %c1_i32 iter_args(%arg14 = %3) -> (vector<32x256xf32>)  : i32 {
      %c0_i32_26 = arith.constant 0 : i32
      %c32_i32_27 = arith.constant 32 : i32
      %32 = arith.addi %c0_i32_26, %c32_i32_27 : i32
      %c1_i32_28 = arith.constant 1 : i32
      scf.for %arg15 = %c0_i32_26 to %32 step %c1_i32_28  : i32 {
        %35 = arith.addi %2, %arg15 : i32
        %36 = arith.index_cast %35 : i32 to index
        %37 = arith.index_cast %arg13 : i32 to index
        %38 = memref.load %arg2[%36, %37] : memref<64x20xi32, #tpu.memory_space<smem>>
        %c0_32 = arith.constant 0 : index
        %39 = arith.index_cast %38 : i32 to index
        %c0_33 = arith.constant 0 : index
        %40 = vector.load %arg3[%c0_32, %39, %c0_33] : memref<1x32x256xf32, #tpu.memory_space<vmem>>, vector<1x1x256xf32>
        %41 = vector.shape_cast %40 : vector<1x1x256xf32> to vector<1x256xf32>
        %42 = arith.index_cast %arg15 : i32 to index
        %c0_34 = arith.constant 0 : index
        %43 = vector.load %arg12[%42, %c0_34] : memref<32x256xf32, #tpu.memory_space<vmem>>, vector<1x256xf32>
        tpu.vector_store %arg12[%42, %c0_34], %41 {strides = array<i32>} : memref<32x256xf32, #tpu.memory_space<vmem>>, vector<1x256xf32>,
      }
      %c32_i32_29 = arith.constant 32 : i32
      %c0_30 = arith.constant 0 : index
      %c0_31 = arith.constant 0 : index
      %33 = vector.load %arg12[%c0_30, %c0_31] : memref<32x256xf32, #tpu.memory_space<vmem>>, vector<32x256xf32>
      %34 = arith.maximumf %arg14, %33 : vector<32x256xf32>
      scf.yield %34 : vector<32x256xf32>
    }
    %c20_i32_1 = arith.constant 20 : i32
    %c0 = arith.constant 0 : index
    %c0_2 = arith.constant 0 : index
    %c0_3 = arith.constant 0 : index
    %6 = vector.load %arg4[%c0, %c0_2, %c0_3] : memref<1x32x256xf32, #tpu.memory_space<vmem>>, vector<1x32x256xf32>
    %7 = vector.shape_cast %6 : vector<1x32x256xf32> to vector<32x256xf32>
    %8 = arith.addf %5, %7 : vector<32x256xf32>
    %cst_4 = arith.constant 0.000000e+00 : f32
    %9 = vector.broadcast %cst_4 : f32 to vector<32x256xf32>
    %10 = arith.maximumf %8, %9 : vector<32x256xf32>
    %c0_5 = arith.constant 0 : index
    %c0_6 = arith.constant 0 : index
    %c0_7 = arith.constant 0 : index
    %11 = vector.load %arg5[%c0_5, %c0_6, %c0_7] : memref<1x32x128xf32, #tpu.memory_space<vmem>>, vector<1x32x128xf32>
    %12 = vector.shape_cast %11 : vector<1x32x128xf32> to vector<32x128xf32>
    %c0_8 = arith.constant 0 : index
    %c0_9 = arith.constant 0 : index
    %13 = vector.load %arg7[%c0_8, %c0_9] : memref<128x1024xf32, #tpu.memory_space<vmem>>, vector<128x1024xf32>
    %cst_10 = arith.constant dense<0.000000e+00> : vector<32x1024xf32>
    %14 = tpu.matmul %12, %13, %cst_10 {dimension_numbers = #tpu.dot_dimension_numbers<[1], [0], [0], [1], [0, 0, 1, 1], [], []>} : vector<32x128xf32>, vector<128x1024xf32>, vector<32x1024xf32> -> vector<32x1024xf32>
    %c0_11 = arith.constant 0 : index
    %c0_12 = arith.constant 0 : index
    %c0_13 = arith.constant 0 : index
    %15 = vector.load %arg6[%c0_11, %c0_12, %c0_13] : memref<1x32x128xf32, #tpu.memory_space<vmem>>, vector<1x32x128xf32>
    %16 = vector.shape_cast %15 : vector<1x32x128xf32> to vector<32x128xf32>
    %c0_14 = arith.constant 0 : index
    %c0_15 = arith.constant 0 : index
    %17 = vector.load %arg8[%c0_14, %c0_15] : memref<128x1024xf32, #tpu.memory_space<vmem>>, vector<128x1024xf32>
    %cst_16 = arith.constant dense<0.000000e+00> : vector<32x1024xf32>
    %18 = tpu.matmul %16, %17, %cst_16 {dimension_numbers = #tpu.dot_dimension_numbers<[1], [0], [0], [1], [0, 0, 1, 1], [], []>} : vector<32x128xf32>, vector<128x1024xf32>, vector<32x1024xf32> -> vector<32x1024xf32>
    %19 = arith.addf %14, %18 : vector<32x1024xf32>
    %c0_17 = arith.constant 0 : index
    %c0_18 = arith.constant 0 : index
    %20 = vector.load %arg9[%c0_17, %c0_18] : memref<256x1024xf32, #tpu.memory_space<vmem>>, vector<256x1024xf32>
    %cst_19 = arith.constant dense<0.000000e+00> : vector<32x1024xf32>
    %21 = tpu.matmul %10, %20, %cst_19 {dimension_numbers = #tpu.dot_dimension_numbers<[1], [0], [0], [1], [0, 0, 1, 1], [], []>} : vector<32x256xf32>, vector<256x1024xf32>, vector<32x1024xf32> -> vector<32x1024xf32>
    %22 = arith.addf %19, %21 : vector<32x1024xf32>
    %c0_20 = arith.constant 0 : index
    %c0_21 = arith.constant 0 : index
    %23 = vector.load %arg10[%c0_20, %c0_21] : memref<1x1024xf32, #tpu.memory_space<vmem>>, vector<1x1024xf32>
    %24 = vector.broadcast %23 : vector<1x1024xf32> to vector<32x1024xf32>
    %25 = arith.addf %22, %24 : vector<32x1024xf32>
    %cst_22 = arith.constant 0.000000e+00 : f32
    %26 = vector.broadcast %cst_22 : f32 to vector<32x1024xf32>
    %27 = arith.maximumf %25, %26 : vector<32x1024xf32>
    %28 = tpu.transpose %27, [1, 0] : vector<32x1024xf32> -> vector<1024x32xf32>
    %c0_23 = arith.constant 0 : index
    %c0_24 = arith.constant 0 : index
    %c0_25 = arith.constant 0 : index
    %29 = vector.load %arg11[%c0_23, %c0_24, %c0_25] : memref<1x1024x32xf32, #tpu.memory_space<vmem>>, vector<1x1024x32xf32>
    %30 = vector.shape_cast %29 : vector<1x1024x32xf32> to vector<1024x32xf32>
    %31 = vector.shape_cast %28 : vector<1024x32xf32> to vector<1x1024x32xf32>
    tpu.vector_store %arg11[%c0_23, %c0_24, %c0_25], %31 {strides = array<i32>} : memref<1x1024x32xf32, #tpu.memory_space<vmem>>, vector<1x1024x32xf32>,
    return
  }
  func.func @transform_0(%arg0: i32, %arg1: i32, %arg2: memref<64x20xi32, #tpu.memory_space<smem>>) -> (i32, i32, i32) {
    %c0_i32 = arith.constant 0 : i32
    %c0_i32_0 = arith.constant 0 : i32
    %c0_i32_1 = arith.constant 0 : i32
    return %arg0, %c0_i32, %c0_i32_0 : i32, i32, i32
  }
  func.func @transform_1(%arg0: i32, %arg1: i32, %arg2: memref<64x20xi32, #tpu.memory_space<smem>>) -> (i32, i32, i32) {
    %c0_i32 = arith.constant 0 : i32
    %c0_i32_0 = arith.constant 0 : i32
    return %arg0, %arg1, %c0_i32 : i32, i32, i32
  }
  func.func @transform_2(%arg0: i32, %arg1: i32, %arg2: memref<64x20xi32, #tpu.memory_space<smem>>) -> (i32, i32, i32) {
    %c0_i32 = arith.constant 0 : i32
    %c0_i32_0 = arith.constant 0 : i32
    return %arg0, %arg1, %c0_i32 : i32, i32, i32
  }
  func.func @transform_3(%arg0: i32, %arg1: i32, %arg2: memref<64x20xi32, #tpu.memory_space<smem>>) -> (i32, i32, i32) {
    %c0_i32 = arith.constant 0 : i32
    %c0_i32_0 = arith.constant 0 : i32
    return %arg0, %arg1, %c0_i32 : i32, i32, i32
  }
  func.func @transform_4(%arg0: i32, %arg1: i32, %arg2: memref<64x20xi32, #tpu.memory_space<smem>>) -> (i32, i32) {
    %c0_i32 = arith.constant 0 : i32
    %c0_i32_0 = arith.constant 0 : i32
    %c0_i32_1 = arith.constant 0 : i32
    return %c0_i32, %c0_i32_0 : i32, i32
  }
  func.func @transform_5(%arg0: i32, %arg1: i32, %arg2: memref<64x20xi32, #tpu.memory_space<smem>>) -> (i32, i32) {
    %c0_i32 = arith.constant 0 : i32
    %c0_i32_0 = arith.constant 0 : i32
    %c0_i32_1 = arith.constant 0 : i32
    return %c0_i32, %c0_i32_0 : i32, i32
  }
  func.func @transform_6(%arg0: i32, %arg1: i32, %arg2: memref<64x20xi32, #tpu.memory_space<smem>>) -> (i32, i32) {
    %c0_i32 = arith.constant 0 : i32
    %c0_i32_0 = arith.constant 0 : i32
    %c0_i32_1 = arith.constant 0 : i32
    return %c0_i32, %c0_i32_0 : i32, i32
  }
  func.func @transform_7(%arg0: i32, %arg1: i32, %arg2: memref<64x20xi32, #tpu.memory_space<smem>>) -> (i32, i32) {
    %c0_i32 = arith.constant 0 : i32
    %c0_i32_0 = arith.constant 0 : i32
    %c0_i32_1 = arith.constant 0 : i32
    return %c0_i32, %c0_i32_0 : i32, i32
  }
  func.func @transform_8(%arg0: i32, %arg1: i32, %arg2: memref<64x20xi32, #tpu.memory_space<smem>>) -> (i32, i32, i32) {
    %c0_i32 = arith.constant 0 : i32
    %c0_i32_0 = arith.constant 0 : i32
    return %arg0, %c0_i32, %arg1 : i32, i32, i32
  }
}

</mosaic_0001>

<llo_original>
// kernel: lpdnet_forward.8
$region0: #{lpdnet_forward.8}
  #allocation0 [shape = 'u32[]', space=smem, size = 0x4, offset = 0x4, fixed_abs, tag = 'smem constant byte address 0x4 - core index']
  #allocation1 [shape = 'u32[144,128]{1,0:T(1,128)}', space=vmem, size = 0x12000, scoped, tag = 'internal scratch']
  #allocation2 [shape = 'f32[1,32]{1,0:T(1,128)}', space=vmem, size = 0x200, scoped, tag = 'scratch operand']
  %s0 = inlined_call_operand.vmem [shape: f32[2,32,3], index: 0, kind: input, shape index: {}, may-alias: {0,1}]
  %s1 = inlined_call_operand.vmem [shape: f32[2,32,3], index: 1, kind: input, shape index: {}, may-alias: {0,1}]
  %s2 = inlined_call_operand.vmem [shape: s32[2,32,20], index: 2, kind: output, shape index: {}]
  %s3 = sld [smem:[#allocation0]]
  $region52: #{lpdnet_forward.8} parent=0
    _
  %s5 = ssub.s32 1, %s3
  %s6 = scalar_select 0, %s5, %s3
  loop: start=0, step=1, limit=4
  $region2: #{lpdnet_forward.8} parent=0 // loop_pre_header
    _
  $region3: #{lpdnet_forward.8} parent=0 // loop_header
    %s8 = sphi 0, %s12
    %p9 = scmp.ge.s32.totalorder %s8, 4
    %s15 = sphi 0, %s27
    %s16 = sphi 0, %s23
    %s17 = sphi 0, %s15
    %s18 = sphi 0, %s16
    %s19 = sphi 0, %s17
    %s20 = sphi 0, %s18
    %s32 = sphi 0, %s34
    %s35 = sphi 0, %s32
    %s36 = sphi 0, %s35
    %s52 = sphi 0, %s36
    %s58 = sphi 0, %s60
    %s61 = sphi 0, %s58
    %s62 = sphi 0, %s61
    %s78 = sphi 0, %s62
    %s86 = sphi 0, %s88
    %s89 = sphi 0, %s86
    %s90 = sphi 0, %s89
    %s106 = sphi 0, %s90
  $region4: #{lpdnet_forward.8} parent=0 // loop_header_branch
    %11 = sbr.rel (%p9) target = $region8
  $region5: #{lpdnet_forward.8} parent=0 // loop_body
    %s13 = ssub.s32 %s8, 1
    %s14 = ssub.s32 %s8, 2
    %s21 = sadd.s32 1, %s16
    %p22 = scmp.ge.s32.totalorder %s21, 1
    %s23 = scalar_select %p22, 0, %s21
    %s24 = sadd.s32 1, %s15
    %s25 = scalar_select %p22, %s24, %s15
    %p26 = scmp.ge.s32.totalorder %s25, 2
    %s27 = scalar_select %p26, 0, %s25
    %s28 = ssub.s32 %s15, %s27
    %s29 = ssub.s32 %s16, %s23
    %s30 = sor.u32 %s28, %s29
    %p31 = scmp.eq.s32.totalorder %s30, 0
    %s33 = sadd.s32 %s32, 1
    %s34 = scalar_select %p31, %s32, %s33
    %p37 = pneg %p31
    %p38 = scmp.eq.s32.totalorder %s8, 1
    %p39 = por %p37, %p38
    %p40 = scmp.ne.s32.totalorder %s32, %s35
    %p41 = scmp.eq.s32.totalorder %s8, 0
    %p42 = por %p40, %p41
    %p43 = scmp.ne.s32.totalorder %s32, %s35
    %p44 = scmp.eq.s32.totalorder %s13, 1
    %p45 = por %p43, %p44
    %p46 = scmp.ne.s32.totalorder %s35, %s36
    %p47 = scmp.eq.s32.totalorder %s13, 0
    %p48 = por %p46, %p47
    %p49 = scmp.ne.s32.totalorder %s35, %s36
    %p50 = scmp.eq.s32.totalorder %s14, 1
    %p51 = por %p49, %p50
    %p53 = scmp.ne.s32.totalorder %s36, %s52
    %p54 = scmp.eq.s32.totalorder %s14, 0
    %p55 = por %p53, %p54
    %s56 = ssub.s32 %s15, %s27
    %p57 = scmp.eq.s32.totalorder %s56, 0
    %s59 = sadd.s32 %s58, 1
    %s60 = scalar_select %p57, %s58, %s59
    %p63 = pneg %p57
    %p64 = scmp.eq.s32.totalorder %s8, 1
    %p65 = por %p63, %p64
    %p66 = scmp.ne.s32.totalorder %s58, %s61
    %p67 = scmp.eq.s32.totalorder %s8, 0
    %p68 = por %p66, %p67
    %p69 = scmp.ne.s32.totalorder %s58, %s61
    %p70 = scmp.eq.s32.totalorder %s13, 1
    %p71 = por %p69, %p70
    %p72 = scmp.ne.s32.totalorder %s61, %s62
    %p73 = scmp.eq.s32.totalorder %s13, 0
    %p74 = por %p72, %p73
    %p75 = scmp.ne.s32.totalorder %s61, %s62
    %p76 = scmp.eq.s32.totalorder %s14, 1
    %p77 = por %p75, %p76
    %p79 = scmp.ne.s32.totalorder %s62, %s78
    %p80 = scmp.eq.s32.totalorder %s14, 0
    %p81 = por %p79, %p80
    %s82 = ssub.s32 %s15, %s27
    %s83 = ssub.s32 %s16, %s23
    %s84 = sor.u32 %s82, %s83
    %p85 = scmp.eq.s32.totalorder %s84, 0
    %s87 = sadd.s32 %s86, 1
    %s88 = scalar_select %p85, %s86, %s87
    %p91 = pneg %p85
    %p92 = scmp.eq.s32.totalorder %s8, 1
    %p93 = por %p91, %p92
    %p94 = scmp.ne.s32.totalorder %s86, %s89
    %p95 = scmp.eq.s32.totalorder %s8, 0
    %p96 = por %p94, %p95
    %p97 = scmp.ne.s32.totalorder %s86, %s89
    %p98 = scmp.eq.s32.totalorder %s13, 1
    %p99 = por %p97, %p98
    %p100 = scmp.ne.s32.totalorder %s89, %s90
    %p101 = scmp.eq.s32.totalorder %s13, 0
    %p102 = por %p100, %p101
    %p103 = scmp.ne.s32.totalorder %s89, %s90
    %p104 = scmp.eq.s32.totalorder %s14, 1
    %p105 = por %p103, %p104
    %p107 = scmp.ne.s32.totalorder %s90, %s106
    %p108 = scmp.eq.s32.totalorder %s14, 0
    %p109 = por %p107, %p108
    %p110 = scmp.le.s32.totalorder 1, %s8
    %p111 = scmp.lt.s32.totalorder %s8, 3
    %p112 = pnand %p110, %p111
    %p113 = pneg %p112
    // Predicated region
    $region9: #{lpdnet_forward.8} parent=5 // pred_check
      _
    $region10: #{lpdnet_forward.8} parent=5 // pred_check_branch
      %115 = sbr.rel (%p112) target = $region12
    $region11: #{lpdnet_forward.8} parent=5 // pred_region
      %s116 = ssub.s32 %s8, 1
    $region12: #{lpdnet_forward.8} parent=5 // pred_fallthru
      _
    %p117 = scmp.lt.s32.totalorder %s8, 2
    // Predicated region
    $region13: #{lpdnet_forward.8} parent=5 // pred_check
      %p118 = pneg %p117
    $region14: #{lpdnet_forward.8} parent=5 // pred_check_branch
      %120 = sbr.rel (%p118) target = $region16
    $region15: #{lpdnet_forward.8} parent=5 // pred_region
      // Predicated region
      $region17: #{lpdnet_forward.8} parent=15 // pred_check
        %p121 = pneg %p42
      $region18: #{lpdnet_forward.8} parent=15 // pred_check_branch
        %123 = sbr.rel (%p121) target = $region20
      $region19: #{lpdnet_forward.8} parent=15 // pred_region
        %s124 = smul.u32 4, %s16
        %p125 = scmp.lt.s32.totalorder %s15, 1
        %s126 = scalar_select %p125, %s15, 1
        %p127 = scmp.lt.s32.totalorder %s124, 3
        %s128 = scalar_select %p127, %s124, 3
        %s129 = smul.addr %s126, 4
        %s130 = sadd.s32 %s128, %s129
        %s131 = smul.addr %s130, 8
        %s132 = scalar_lea.vmem %s0, %s131
        %s133 = smul.u32 4, %s16
      $region20: #{lpdnet_forward.8} parent=15 // pred_fallthru
        _
      // Predicated region
      $region21: #{lpdnet_forward.8} parent=15 // pred_check
        %p134 = pneg %p68
      $region22: #{lpdnet_forward.8} parent=15 // pred_check_branch
        %136 = sbr.rel (%p134) target = $region24
      $region23: #{lpdnet_forward.8} parent=15 // pred_region
        %p137 = scmp.lt.s32.totalorder %s15, 1
        %s138 = scalar_select %p137, %s15, 1
        %s139 = smul.addr %s138, 4
        %s140 = smul.addr %s139, 8
        %s141 = scalar_lea.vmem %s1, %s140
      $region24: #{lpdnet_forward.8} parent=15 // pred_fallthru
        _
    $region16: #{lpdnet_forward.8} parent=5 // pred_fallthru
      _
    %p142 = scmp.le.s32.totalorder 1, %s8
    %p143 = scmp.lt.s32.totalorder %s8, 3
    %p144 = pnand %p142, %p143
    %p145 = pneg %p144
    // Predicated region
    $region25: #{lpdnet_forward.8} parent=5 // pred_check
      _
    $region26: #{lpdnet_forward.8} parent=5 // pred_check_branch
      %147 = sbr.rel (%p144) target = $region28
    $region27: #{lpdnet_forward.8} parent=5 // pred_region
      %s148 = ssub.s32 %s8, 1
      %s149 = smul.u32 4, %s18
      %p150 = scmp.lt.s32.totalorder %s17, 1
      %s151 = scalar_select %p150, %s17, 1
      %p152 = scmp.lt.s32.totalorder %s149, 3
      %s153 = scalar_select %p152, %s149, 3
      %s154 = smul.addr %s151, 4
      %s155 = sadd.s32 %s153, %s154
      %s156 = smul.addr %s155, 8
      %s157 = scalar_lea.vmem %s0, %s156
      %p158 = pneg %p48
      %p159 = pneg %p45
      %p160 = scmp.lt.s32.totalorder %s17, 1
      %s161 = scalar_select %p160, %s17, 1
      %s162 = smul.addr %s161, 4
      %s163 = smul.addr %s162, 8
      %s164 = scalar_lea.vmem %s1, %s163
      %p165 = pneg %p74
      %p166 = pneg %p71
      %p167 = pneg %p102
      %p168 = pneg %p99
      %s169 = smul.u32 4, %s18
      %p170 = scmp.lt.s32.totalorder %s17, 1
      %s171 = scalar_select %p170, %s17, 1
      %p172 = scmp.lt.s32.totalorder %s169, 3
      %s173 = scalar_select %p172, %s169, 3
      %s174 = smul.addr %s171, 4
      %s175 = sadd.s32 %s173, %s174
      %s176 = smul.addr %s175, 8
      %s177 = scalar_lea.vmem %s2, %s176
      %s178 = smul.u32 4, %s18
      %p179 = scmp.lt.s32.totalorder %s17, 1
      %s180 = scalar_select %p179, %s17, 1
      %p181 = scmp.lt.s32.totalorder %s178, 3
      %s182 = scalar_select %p181, %s178, 3
      %s183 = smul.addr %s180, 4
      %s184 = sadd.s32 %s182, %s183
      %s185 = smul.addr %s184, 8
      %s186 = scalar_lea.vmem %s0, %s185
      %s187 = smul.u32 4, %s18
      %p188 = scmp.lt.s32.totalorder %s17, 1
      %s189 = scalar_select %p188, %s17, 1
      %s190 = smul.addr %s189, 4
      %s191 = smul.addr %s190, 8
      %s192 = scalar_lea.vmem %s1, %s191
      %s193 = smul.u32 4, %s18
      %p194 = scmp.lt.s32.totalorder %s17, 1
      %s195 = scalar_select %p194, %s17, 1
      %p196 = scmp.lt.s32.totalorder %s193, 3
      %s197 = scalar_select %p196, %s193, 3
      %s198 = smul.addr %s195, 4
      %s199 = sadd.s32 %s197, %s198
      %s200 = smul.addr %s199, 8
      %s201 = scalar_lea.vmem %s2, %s200
      %s202 = smul.u32 4, %s18
      %p203 = scmp.eq.s32.totalorder %s18, 0
      // Predicated region
      $region29: #{lpdnet_forward.8} parent=27 // pred_check
        %p204 = pneg %p203
      $region30: #{lpdnet_forward.8} parent=27 // pred_check_branch
        %206 = sbr.rel (%p204) target = $region32
      $region31: #{lpdnet_forward.8} parent=27 // pred_region
        %v207 = vld [vmem:[%s192] sm:$0xff]
        %v208 = vld [vmem:[%s192 + $0x8] sm:$0xff]
        %v209 = vld [vmem:[%s192 + $0x10] sm:$0xff]
        %v210 = vld [vmem:[%s192 + $0x18] sm:$0xff]
        %v211 = vmul.f32 %v207, %v207
        %v212 = vmul.f32 %v208, %v208
        %v213 = vmul.f32 %v209, %v209
        %v214 = vmul.f32 %v210, %v210
        %vm215 = vcmask 23552
        %v217 = vsel %vm215, 1.0, 0
        %v220 = vsel %vm215, %v211, 0
        %v223 = vsel %vm215, %v212, 0
        %v226 = vsel %vm215, %v213, 0
        %v229 = vsel %vm215, %v214, 0
        %231 = vmatprep.subr.mxu0 0.0
        %232 = vmatpush1.xpose.msra.mxu0 %v220
        %233 = vmatprep.subr.mxu0 0.0
        %234 = vmatpush1.xpose.msra.mxu0 %v223
        %235 = vmatprep.subr.mxu0 0.0
        %236 = vmatpush1.xpose.msra.mxu0 %v226
        %237 = vmatprep.subr.mxu0 0.0
        %238 = vmatpush1.xpose.msra.mxu0 %v229
        %239 = vmatprep.subr.mxu0 0.0
        %240 = vmatpush1.xpose.msra.mxu0 0.0
        %241 = vmatprep.subr.mxu0 0.0
        %242 = vmatpush1.xpose.msra.mxu0 0.0
        %243 = vmatprep.subr.mxu0 0.0
        %244 = vmatpush1.xpose.msra.mxu0 0.0
        %245 = vmatprep.subr.mxu0 0.0
        %246 = vmatpush1.xpose.msra.mxu0 0.0
        %247 = vmatprep.subr.mxu0 0.0
        %248 = vmatpush1.xpose.msra.mxu0 0.0
        %249 = vmatprep.subr.mxu0 0.0
        %250 = vmatpush1.xpose.msra.mxu0 0.0
        %251 = vmatprep.subr.mxu0 0.0
        %252 = vmatpush1.xpose.msra.mxu0 0.0
        %253 = vmatprep.subr.mxu0 0.0
        %254 = vmatpush1.xpose.msra.mxu0 0.0
        %255 = vmatprep.subr.mxu0 0.0
        %256 = vmatpush1.xpose.msra.mxu0 0.0
        %257 = vmatprep.subr.mxu0 0.0
        %258 = vmatpush1.xpose.msra.mxu0 0.0
        %259 = vmatprep.subr.mxu0 0.0
        %260 = vmatpush1.xpose.msra.mxu0 0.0
        %261 = vmatprep.subr.mxu0 0.0
        %262 = vmatpush1.xpose.msra.mxu0 0.0
        %263 = vmatprep.subr.mxu0 0.0
        %264 = vmatpush1.xpose.msra.mxu0 0.0
        %265 = vmatprep.subr.mxu0 0.0
        %266 = vmatpush1.xpose.msra.mxu0 0.0
        %267 = vmatprep.subr.mxu0 0.0
        %268 = vmatpush1.xpose.msra.mxu0 0.0
        %269 = vmatprep.subr.mxu0 0.0
        %270 = vmatpush1.xpose.msra.mxu0 0.0
        %271 = vmatprep.subr.mxu0 0.0
        %272 = vmatpush1.xpose.msra.mxu0 0.0
        %273 = vmatprep.subr.mxu0 0.0
        %274 = vmatpush1.xpose.msra.mxu0 0.0
        %275 = vmatprep.subr.mxu0 0.0
        %276 = vmatpush1.xpose.msra.mxu0 0.0
        %277 = vmatprep.subr.mxu0 0.0
        %278 = vmatpush1.xpose.msra.mxu0 0.0
        %279 = vmatprep.subr.mxu0 0.0
        %280 = vmatpush1.xpose.msra.mxu0 0.0
        %281 = vmatprep.subr.mxu0 0.0
        %282 = vmatpush1.xpose.msra.mxu0 0.0
        %283 = vmatprep.subr.mxu0 0.0
        %284 = vmatpush1.xpose.msra.mxu0 0.0
        %285 = vmatprep.subr.mxu0 0.0
        %286 = vmatpush1.xpose.msra.mxu0 0.0
        %287 = vmatprep.subr.mxu0 0.0
        %288 = vmatpush1.xpose.msra.mxu0 0.0
        %289 = vmatprep.subr.mxu0 0.0
        %290 = vmatpush1.xpose.msra.mxu0 0.0
        %291 = vmatprep.subr.mxu0 0.0
        %292 = vmatpush1.xpose.msra.mxu0 0.0
        %293 = vmatprep.subr.mxu0 0.0
        %294 = vmatpush1.xpose.msra.mxu0 0.0
        %295 = vmatprep.mubr.f32.mxu0 0.0
        %296 = vmatmul.mubr.f32.gmra.mrb[0].mxu0 %v217
        %v297 = vpop.f32.mrb[0].mxu0
        %v298 = vadd.f32 0.0, %v297
        %v299 = vpop.f32.mrb[0].mxu0
        %300 = vdwg.mxu0
        %vm301 = vcmask 253952
        %302 = vst.msk [vmem:[#allocation2] sm:$0x1] %vm301, %v298
      $region32: #{lpdnet_forward.8} parent=27 // pred_fallthru
        _
      %v303 = vld [vmem:[%s186] sm:$0xff]
      %v304 = vld [vmem:[%s186 + $0x8] sm:$0xff]
      %v305 = vld [vmem:[%s186 + $0x10] sm:$0xff]
      %v306 = vld [vmem:[%s186 + $0x18] sm:$0xff]
      %v307 = vld [vmem:[%s192] sm:$0xff]
      %v308 = vld [vmem:[%s192 + $0x8] sm:$0xff]
      %v309 = vld [vmem:[%s192 + $0x10] sm:$0xff]
      %v310 = vld [vmem:[%s192 + $0x18] sm:$0xff]
      %vm311 = vcmask 23552
      %v313 = vsel %vm311, %v303, 0
      %v316 = vsel %vm311, %v304, 0
      %v319 = vsel %vm311, %v305, 0
      %v322 = vsel %vm311, %v306, 0
      %v325 = vsel %vm311, %v307, 0
      %v328 = vsel %vm311, %v308, 0
      %v331 = vsel %vm311, %v309, 0
      %v334 = vsel %vm311, %v310, 0
      %336 = vmatprep.subr.mxu0 0.0
      %337 = vmatpush1.xpose.msra.mxu0 %v325
      %338 = vmatprep.subr.mxu0 0.0
      %339 = vmatpush1.xpose.msra.mxu0 %v328
      %340 = vmatprep.subr.mxu0 0.0
      %341 = vmatpush1.xpose.msra.mxu0 %v331
      %342 = vmatprep.subr.mxu0 0.0
      %343 = vmatpush1.xpose.msra.mxu0 %v334
      %344 = vmatprep.subr.mxu0 0.0
      %345 = vmatpush1.xpose.msra.mxu0 0.0
      %346 = vmatprep.subr.mxu0 0.0
      %347 = vmatpush1.xpose.msra.mxu0 0.0
      %348 = vmatprep.subr.mxu0 0.0
      %349 = vmatpush1.xpose.msra.mxu0 0.0
      %350 = vmatprep.subr.mxu0 0.0
      %351 = vmatpush1.xpose.msra.mxu0 0.0
      %352 = vmatprep.subr.mxu0 0.0
      %353 = vmatpush1.xpose.msra.mxu0 0.0
      %354 = vmatprep.subr.mxu0 0.0
      %355 = vmatpush1.xpose.msra.mxu0 0.0
      %356 = vmatprep.subr.mxu0 0.0
      %357 = vmatpush1.xpose.msra.mxu0 0.0
      %358 = vmatprep.subr.mxu0 0.0
      %359 = vmatpush1.xpose.msra.mxu0 0.0
      %360 = vmatprep.subr.mxu0 0.0
      %361 = vmatpush1.xpose.msra.mxu0 0.0
      %362 = vmatprep.subr.mxu0 0.0
      %363 = vmatpush1.xpose.msra.mxu0 0.0
      %364 = vmatprep.subr.mxu0 0.0
      %365 = vmatpush1.xpose.msra.mxu0 0.0
      %366 = vmatprep.subr.mxu0 0.0
      %367 = vmatpush1.xpose.msra.mxu0 0.0
      %368 = vmatprep.subr.mxu0 0.0
      %369 = vmatpush1.xpose.msra.mxu0 0.0
      %370 = vmatprep.subr.mxu0 0.0
      %371 = vmatpush1.xpose.msra.mxu0 0.0
      %372 = vmatprep.subr.mxu0 0.0
      %373 = vmatpush1.xpose.msra.mxu0 0.0
      %374 = vmatprep.subr.mxu0 0.0
      %375 = vmatpush1.xpose.msra.mxu0 0.0
      %376 = vmatprep.subr.mxu0 0.0
      %377 = vmatpush1.xpose.msra.mxu0 0.0
      %378 = vmatprep.subr.mxu0 0.0
      %379 = vmatpush1.xpose.msra.mxu0 0.0
      %380 = vmatprep.subr.mxu0 0.0
      %381 = vmatpush1.xpose.msra.mxu0 0.0
      %382 = vmatprep.subr.mxu0 0.0
      %383 = vmatpush1.xpose.msra.mxu0 0.0
      %384 = vmatprep.subr.mxu0 0.0
      %385 = vmatpush1.xpose.msra.mxu0 0.0
      %386 = vmatprep.subr.mxu0 0.0
      %387 = vmatpush1.xpose.msra.mxu0 0.0
      %388 = vmatprep.subr.mxu0 0.0
      %389 = vmatpush1.xpose.msra.mxu0 0.0
      %390 = vmatprep.subr.mxu0 0.0
      %391 = vmatpush1.xpose.msra.mxu0 0.0
      %392 = vmatprep.subr.mxu0 0.0
      %393 = vmatpush1.xpose.msra.mxu0 0.0
      %394 = vmatprep.subr.mxu0 0.0
      %395 = vmatpush1.xpose.msra.mxu0 0.0
      %396 = vmatprep.subr.mxu0 0.0
      %397 = vmatpush1.xpose.msra.mxu0 0.0
      %398 = vmatprep.subr.mxu0 0.0
      %399 = vmatpush1.xpose.msra.mxu0 0.0
      %400 = vmatprep.mubr.f32.mxu0 0.0
      %401 = vmatmul.mubr.f32.gmra.mrb[0].mxu0 %v313
      %v402 = vpop.f32.mrb[0].mxu0
      %v403 = vadd.f32 0.0, %v402
      %v404 = vpop.f32.mrb[0].mxu0
      %405 = vmatprep.mubr.f32.mxu0 0.0
      %406 = vmatmul.mubr.f32.gmra.mrb[0].mxu0 %v316
      %v407 = vpop.f32.mrb[0].mxu0
      %v408 = vadd.f32 0.0, %v407
      %v409 = vpop.f32.mrb[0].mxu0
      %410 = vmatprep.mubr.f32.mxu0 0.0
      %411 = vmatmul.mubr.f32.gmra.mrb[0].mxu0 %v319
      %v412 = vpop.f32.mrb[0].mxu0
      %v413 = vadd.f32 0.0, %v412
      %v414 = vpop.f32.mrb[0].mxu0
      %415 = vmatprep.mubr.f32.mxu0 0.0
      %416 = vmatmul.mubr.f32.gmra.mrb[0].mxu0 %v322
      %v417 = vpop.f32.mrb[0].mxu0
      %v418 = vadd.f32 0.0, %v417
      %v419 = vpop.f32.mrb[0].mxu0
      %420 = vdwg.mxu0
      %v421 = vmul.f32 %v403, 2.0
      %v422 = vmul.f32 %v408, 2.0
      %v423 = vmul.f32 %v413, 2.0
      %v424 = vmul.f32 %v418, 2.0
      %v425 = vld [vmem:[#allocation2] sm:$0x1]
      %v427 = vlaneseq
      %v428 = vshrl.u32 %v427, 7
      %v429 = vsub.s32 0, %v428
      %v430 = vrot.slane %v425, %v429
      %v432 = vsub.f32 %v421, %v430
      %v433 = vsub.f32 %v422, %v430
      %v434 = vsub.f32 %v423, %v430
      %v435 = vsub.f32 %v424, %v430
      %v436 = vlaneseq
      %v437 = vand.u32 %v436, 127
      %v438 = vcvt.s32.f32 %v437
      loop: start=0, step=1, limit=20
      $region33: #{lpdnet_forward.8} parent=27 // loop_pre_header
        _
      $region34: #{lpdnet_forward.8} parent=27 // loop_header
        %s440 = sphi 0, %s444
        %p441 = scmp.ge.s32.totalorder %s440, 20
        %v445 = vphi %v432, %v497
        %v446 = vphi %v433, %v498
        %v447 = vphi %v434, %v499
        %v448 = vphi %v435, %v500
        %v449 = vphi 0.0, %v489
        %v450 = vphi 0.0, %v490
        %v451 = vphi 0.0, %v491
        %v452 = vphi 0.0, %v492
      $region35: #{lpdnet_forward.8} parent=27 // loop_header_branch
        %443 = sbr.rel (%p441) target = $region39
      $region36: #{lpdnet_forward.8} parent=27 // loop_body
        %vm453 = vcmask 261120
        %v454 = vsel %vm453, %v445, -inf
        %455 = vmax.xlane.f32.xlu0 %v454
        %v456 = vpop.xlane.xlu0 %455
        %v457 = vsel %vm453, %v446, -inf
        %458 = vmax.xlane.f32.xlu0 %v457
        %v459 = vpop.xlane.xlu0 %458
        %v460 = vsel %vm453, %v447, -inf
        %461 = vmax.xlane.f32.xlu0 %v460
        %v462 = vpop.xlane.xlu0 %461
        %v463 = vsel %vm453, %v448, -inf
        %464 = vmax.xlane.f32.xlu0 %v463
        %v465 = vpop.xlane.xlu0 %464
        %vm466 = vcmp.eq.f32.partialorder %v445, %v456
        %vm467 = vcmp.eq.f32.partialorder %v446, %v459
        %vm468 = vcmp.eq.f32.partialorder %v447, %v462
        %vm469 = vcmp.eq.f32.partialorder %v448, %v465
        %v470 = vsel %vm466, %v438, 32.0
        %v471 = vsel %vm467, %v438, 32.0
        %v472 = vsel %vm468, %v438, 32.0
        %v473 = vsel %vm469, %v438, 32.0
        %v474 = vsel %vm453, %v470, inf
        %475 = vmin.xlane.f32.xlu0 %v474
        %v476 = vpop.xlane.xlu0 %475
        %v477 = vsel %vm453, %v471, inf
        %478 = vmin.xlane.f32.xlu0 %v477
        %v479 = vpop.xlane.xlu0 %478
        %v480 = vsel %vm453, %v472, inf
        %481 = vmin.xlane.f32.xlu0 %v480
        %v482 = vpop.xlane.xlu0 %481
        %v483 = vsel %vm453, %v473, inf
        %484 = vmin.xlane.f32.xlu0 %v483
        %v485 = vpop.xlane.xlu0 %484
        %s486 = scvt.s32.f32 %s440
        %v487 = vstv %s486
        %vm488 = vcmp.eq.f32.partialorder %v438, %v487
        %v489 = vsel %vm488, %v476, %v449
        %v490 = vsel %vm488, %v479, %v450
        %v491 = vsel %vm488, %v482, %v451
        %v492 = vsel %vm488, %v485, %v452
        %vm493 = vcmp.eq.f32.partialorder %v438, %v476
        %vm494 = vcmp.eq.f32.partialorder %v438, %v479
        %vm495 = vcmp.eq.f32.partialorder %v438, %v482
        %vm496 = vcmp.eq.f32.partialorder %v438, %v485
        %v497 = vsel %vm493, -inf, %v445
        %v498 = vsel %vm494, -inf, %v446
        %v499 = vsel %vm495, -inf, %v447
        %v500 = vsel %vm496, -inf, %v448
      $region37: #{lpdnet_forward.8} parent=27 // loop_footer
        %s444 = sadd.s32 1, %s440
      $region38: #{lpdnet_forward.8} parent=27 // loop_footer_branch
        %439 = sbr.rel target = $region34
      $region39: #{lpdnet_forward.8} parent=27 // loop_exit
        _
      %v501 = vcvt.f32.s32.to.zero.pseudo %v449
      %v502 = vcvt.f32.s32.to.zero.pseudo %v450
      %v503 = vcvt.f32.s32.to.zero.pseudo %v451
      %v504 = vcvt.f32.s32.to.zero.pseudo %v452
      %vm505 = vcmask 162816
      %506 = vst.msk [vmem:[%s201] sm:$0xff] %vm505, %v501
      %507 = vst.msk [vmem:[%s201 + $0x8] sm:$0xff] %vm505, %v502
      %508 = vst.msk [vmem:[%s201 + $0x10] sm:$0xff] %vm505, %v503
      %509 = vst.msk [vmem:[%s201 + $0x18] sm:$0xff] %vm505, %v504
      %s510 = smul.u32 4, %s18
      %p511 = scmp.lt.s32.totalorder %s17, 1
      %s512 = scalar_select %p511, %s17, 1
      %p513 = scmp.lt.s32.totalorder %s510, 3
      %s514 = scalar_select %p513, %s510, 3
      %s515 = smul.addr %s512, 4
      %s516 = sadd.s32 %s514, %s515
      %s517 = smul.addr %s516, 8
      %s518 = scalar_lea.vmem %s2, %s517
      // Predicated region
      $region40: #{lpdnet_forward.8} parent=27 // pred_check
        %p519 = pneg %p99
      $region41: #{lpdnet_forward.8} parent=27 // pred_check_branch
        %521 = sbr.rel (%p519) target = $region43
      $region42: #{lpdnet_forward.8} parent=27 // pred_region
        %s522 = smul.u32 4, %s18
      $region43: #{lpdnet_forward.8} parent=27 // pred_fallthru
        _
    $region28: #{lpdnet_forward.8} parent=5 // pred_fallthru
      _
    %p523 = scmp.le.s32.totalorder 2, %s8
    // Predicated region
    $region44: #{lpdnet_forward.8} parent=5 // pred_check
      %p524 = pneg %p523
    $region45: #{lpdnet_forward.8} parent=5 // pred_check_branch
      %526 = sbr.rel (%p524) target = $region47
    $region46: #{lpdnet_forward.8} parent=5 // pred_region
      %s527 = ssub.s32 %s8, 2
      // Predicated region
      $region48: #{lpdnet_forward.8} parent=46 // pred_check
        %p528 = pneg %p105
      $region49: #{lpdnet_forward.8} parent=46 // pred_check_branch
        %530 = sbr.rel (%p528) target = $region51
      $region50: #{lpdnet_forward.8} parent=46 // pred_region
        %s531 = smul.u32 4, %s20
        %p532 = scmp.lt.s32.totalorder %s19, 1
        %s533 = scalar_select %p532, %s19, 1
        %p534 = scmp.lt.s32.totalorder %s531, 3
        %s535 = scalar_select %p534, %s531, 3
        %s536 = smul.addr %s533, 4
        %s537 = sadd.s32 %s535, %s536
        %s538 = smul.addr %s537, 8
        %s539 = scalar_lea.vmem %s2, %s538
      $region51: #{lpdnet_forward.8} parent=46 // pred_fallthru
        _
    $region47: #{lpdnet_forward.8} parent=5 // pred_fallthru
      _
  $region6: #{lpdnet_forward.8} parent=0 // loop_footer
    %s12 = sadd.s32 1, %s8
  $region7: #{lpdnet_forward.8} parent=0 // loop_footer_branch
    %7 = sbr.rel target = $region3
  $region8: #{lpdnet_forward.8} parent=0 // loop_exit
    _

// kernel: lpdnet_forward.5
$region0: #{lpdnet_forward.5}
  #allocation0 [shape = 'u32[]', space=smem, size = 0x4, offset = 0x4, fixed_abs, tag = 'smem constant byte address 0x4 - core index']
  #allocation1 [shape = 'u32[144,128]{1,0:T(1,128)}', space=vmem, size = 0x12000, scoped, tag = 'internal scratch']
  %s0 = inlined_call_operand.vmem [shape: f32[64,3], index: 0, kind: input, shape index: {}]
  %s1 = inlined_call_operand.hbm [shape: f32[3,64], index: 1, kind: input, shape index: {}]
  %s2 = inlined_call_operand.hbm [shape: f32[1,64], index: 2, kind: input, shape index: {}]
  %s3 = inlined_call_operand.hbm [shape: f32[64,64], index: 3, kind: input, shape index: {}]
  %s4 = inlined_call_operand.hbm [shape: f32[1,64], index: 4, kind: input, shape index: {}]
  %s5 = inlined_call_operand.vmem [shape: f32[64,128], index: 5, kind: input, shape index: {}]
  %s6 = inlined_call_operand.vmem [shape: f32[64,128], index: 6, kind: input, shape index: {}]
  %s7 = inlined_call_operand.hbm [shape: f32[1,128], index: 7, kind: input, shape index: {}]
  %s8 = inlined_call_operand.vmem [shape: f32[64,64], index: 8, kind: output, shape index: {0}]
  %s9 = inlined_call_operand.vmem [shape: f32[64,128], index: 9, kind: output, shape index: {1}]
  %s10 = inlined_call_operand.vmem [shape: f32[64,128], index: 10, kind: output, shape index: {2}]
  %11 = xla_tuple %s8, %s9, %s10
  %s12 = sld [smem:[#allocation0]]
  $region78: #{lpdnet_forward.5} parent=0
    _
  %s14 = ssub.s32 1, %s12
  %s15 = scalar_select 0, %s14, %s12
  $region1: #{lpdnet_forward.5} parent=0
    #allocation2 [shape = 'u8[2048]{0}', space=vmem, size = 0x800, scoped, tag = 'input window, operand 1, single buffered']
    #allocation3 [shape = 's32[1]{0}', space=sflag, size = 0x4, scoped, tag = 'scoped memory for lpdnet_forward.5']
    #allocation4 [shape = 'u8[512]{0}', space=vmem, size = 0x400, scoped, tag = 'input window, operand 2, single buffered']
    #allocation5 [shape = 's32[1]{0}', space=sflag, size = 0x4, scoped, tag = 'scoped memory for lpdnet_forward.5']
    #allocation6 [shape = 'u8[32768]{0}', space=vmem, size = 0x8000, scoped, tag = 'input window, operand 3, single buffered']
    #allocation7 [shape = 'u8[512]{0}', space=vmem, size = 0x400, scoped, tag = 'input window, operand 4, single buffered']
    #allocation8 [shape = 's32[1]{0}', space=sflag, size = 0x4, scoped, tag = 'scoped memory for lpdnet_forward.5']
    #allocation9 [shape = 'u8[512]{0}', space=vmem, size = 0x400, scoped, tag = 'input window, operand 7, single buffered']
    %16 = vsyncpa [#allocation3], 0
    %17 = vsyncpa [#allocation5], 0
    %18 = vsyncpa [#allocation8], 0
    // Predicated region
    $region2: #{lpdnet_forward.5} parent=1 // pred_check
      _
    $region3: #{lpdnet_forward.5} parent=1 // pred_check_branch
      %20 = sbr.rel (0) target = $region5
    $region4: #{lpdnet_forward.5} parent=1 // pred_region
      _
    $region5: #{lpdnet_forward.5} parent=1 // pred_fallthru
      _
    // Predicated region
    $region6: #{lpdnet_forward.5} parent=1 // pred_check
      _
    $region7: #{lpdnet_forward.5} parent=1 // pred_check_branch
      %22 = sbr.rel (0) target = $region9
    $region8: #{lpdnet_forward.5} parent=1 // pred_region
      %s24 = ssub.s32 64, 64
      %25 = vsyncadd [#allocation3], %s24
      %s27 = sshll.u32 [#allocation2], 4
      %s28 = int_to_ptr.vmem [resolvable:$true] %s27
      %30 = dma.hbm_to_vmem [thread:$0]  %s1, 64, %s28, [#allocation3]
    $region9: #{lpdnet_forward.5} parent=1 // pred_fallthru
      _
    // Predicated region
    $region10: #{lpdnet_forward.5} parent=1 // pred_check
      _
    $region11: #{lpdnet_forward.5} parent=1 // pred_check_branch
      %32 = sbr.rel (0) target = $region13
    $region12: #{lpdnet_forward.5} parent=1 // pred_region
      %s34 = ssub.s32 16, 16
      %35 = vsyncadd [#allocation5], %s34
      %s37 = sshll.u32 [#allocation4], 4
      %s38 = int_to_ptr.vmem [resolvable:$true] %s37
      %40 = dma.hbm_to_vmem [thread:$0]  %s2, 16, %s38, [#allocation5]
    $region13: #{lpdnet_forward.5} parent=1 // pred_fallthru
      _
    // Predicated region
    $region14: #{lpdnet_forward.5} parent=1 // pred_check
      _
    $region15: #{lpdnet_forward.5} parent=1 // pred_check_branch
      %42 = sbr.rel (0) target = $region17
    $region16: #{lpdnet_forward.5} parent=1 // pred_region
      %s44 = ssub.s32 1024, 1024
      %45 = vsyncadd [#allocation5], %s44
      %s46 = sshll.u32 [#allocation6], 4
      %s47 = int_to_ptr.vmem [resolvable:$true] %s46
      %52 = dma.hbm_to_vmem [thread:$0]  %s3, 1024, %s47, [#allocation5], 128, 128, 8
    $region17: #{lpdnet_forward.5} parent=1 // pred_fallthru
      _
    // Predicated region
    $region18: #{lpdnet_forward.5} parent=1 // pred_check
      _
    $region19: #{lpdnet_forward.5} parent=1 // pred_check_branch
      %54 = sbr.rel (0) target = $region21
    $region20: #{lpdnet_forward.5} parent=1 // pred_region
      %s56 = ssub.s32 16, 16
      %57 = vsyncadd [#allocation8], %s56
      %s59 = sshll.u32 [#allocation7], 4
      %s60 = int_to_ptr.vmem [resolvable:$true] %s59
      %62 = dma.hbm_to_vmem [thread:$0]  %s4, 16, %s60, [#allocation8]
    $region21: #{lpdnet_forward.5} parent=1 // pred_fallthru
      _
    // Predicated region
    $region22: #{lpdnet_forward.5} parent=1 // pred_check
      _
    $region23: #{lpdnet_forward.5} parent=1 // pred_check_branch
      %64 = sbr.rel (0) target = $region25
    $region24: #{lpdnet_forward.5} parent=1 // pred_region
      _
    $region25: #{lpdnet_forward.5} parent=1 // pred_fallthru
      _
    // Predicated region
    $region26: #{lpdnet_forward.5} parent=1 // pred_check
      _
    $region27: #{lpdnet_forward.5} parent=1 // pred_check_branch
      %66 = sbr.rel (0) target = $region29
    $region28: #{lpdnet_forward.5} parent=1 // pred_region
      _
    $region29: #{lpdnet_forward.5} parent=1 // pred_fallthru
      _
    // Predicated region
    $region30: #{lpdnet_forward.5} parent=1 // pred_check
      _
    $region31: #{lpdnet_forward.5} parent=1 // pred_check_branch
      %68 = sbr.rel (0) target = $region33
    $region32: #{lpdnet_forward.5} parent=1 // pred_region
      %s70 = ssub.s32 16, 16
      %71 = vsyncadd [#allocation8], %s70
      %s73 = sshll.u32 [#allocation9], 4
      %s74 = int_to_ptr.vmem [resolvable:$true] %s73
      %76 = dma.hbm_to_vmem [thread:$0]  %s7, 16, %s74, [#allocation8]
    $region33: #{lpdnet_forward.5} parent=1 // pred_fallthru
      _
    // Predicated region
    $region34: #{lpdnet_forward.5} parent=1 // pred_check
      _
    $region35: #{lpdnet_forward.5} parent=1 // pred_check_branch
      %78 = sbr.rel (0) target = $region37
    $region36: #{lpdnet_forward.5} parent=1 // pred_region
      %79 = dma.done [#allocation3], 64
    $region37: #{lpdnet_forward.5} parent=1 // pred_fallthru
      _
    // Predicated region
    $region38: #{lpdnet_forward.5} parent=1 // pred_check
      _
    $region39: #{lpdnet_forward.5} parent=1 // pred_check_branch
      %81 = sbr.rel (0) target = $region41
    $region40: #{lpdnet_forward.5} parent=1 // pred_region
      %82 = dma.done [#allocation5], 16
    $region41: #{lpdnet_forward.5} parent=1 // pred_fallthru
      _
    // Predicated region
    $region42: #{lpdnet_forward.5} parent=1 // pred_check
      _
    $region43: #{lpdnet_forward.5} parent=1 // pred_check_branch
      %84 = sbr.rel (0) target = $region45
    $region44: #{lpdnet_forward.5} parent=1 // pred_region
      %85 = dma.done [#allocation5], 1024
    $region45: #{lpdnet_forward.5} parent=1 // pred_fallthru
      _
    // Predicated region
    $region46: #{lpdnet_forward.5} parent=1 // pred_check
      _
    $region47: #{lpdnet_forward.5} parent=1 // pred_check_branch
      %87 = sbr.rel (0) target = $region49
    $region48: #{lpdnet_forward.5} parent=1 // pred_region
      %88 = dma.done [#allocation8], 16
    $region49: #{lpdnet_forward.5} parent=1 // pred_fallthru
      _
    // Predicated region
    $region50: #{lpdnet_forward.5} parent=1 // pred_check
      _
    $region51: #{lpdnet_forward.5} parent=1 // pred_check_branch
      %90 = sbr.rel (0) target = $region53
    $region52: #{lpdnet_forward.5} parent=1 // pred_region
      %91 = dma.done [#allocation8], 16
    $region53: #{lpdnet_forward.5} parent=1 // pred_fallthru
      _
    %v92 = vld [vmem:[%s0] sm:$0xff]
    %v93 = vld [vmem:[%s0 + $0x8] sm:$0xff]
    %v94 = vld [vmem:[%s0 + $0x10] sm:$0xff]
    %v95 = vld [vmem:[%s0 + $0x18] sm:$0xff]
    %v96 = vld [vmem:[%s0 + $0x20] sm:$0xff]
    %v97 = vld [vmem:[%s0 + $0x28] sm:$0xff]
    %v98 = vld [vmem:[%s0 + $0x30] sm:$0xff]
    %v99 = vld [vmem:[%s0 + $0x38] sm:$0xff]
    %v100 = vld [vmem:[#allocation2] sm:$0x7]
    %v101 = vld [vmem:[#allocation4] sm:$0x1]
    %v103 = vlaneseq
    %v104 = vshrl.u32 %v103, 7
    %v105 = vsub.s32 0, %v104
    %v106 = vrot.slane %v101, %v105
    %vm108 = vcmask 23552
    %v110 = vsel %vm108, %v92, 0
    %v113 = vsel %vm108, %v93, 0
    %v116 = vsel %vm108, %v94, 0
    %v119 = vsel %vm108, %v95, 0
    %v122 = vsel %vm108, %v96, 0
    %v125 = vsel %vm108, %v97, 0
    %v128 = vsel %vm108, %v98, 0
    %v131 = vsel %vm108, %v99, 0
    %vm133 = vcmask 1042432
    %v135 = vsel %vm133, %v100, 0
    %137 = vmatprep.subr.mxu0 0.0
    %138 = vmatpush1.msra.mxu0 %v135
    %139 = vmatprep.subr.mxu0 0.0
    %140 = vmatpush1.msra.mxu0 0.0
    %141 = vmatprep.subr.mxu0 0.0
    %142 = vmatpush1.msra.mxu0 0.0
    %143 = vmatprep.subr.mxu0 0.0
    %144 = vmatpush1.msra.mxu0 0.0
    %145 = vmatprep.subr.mxu0 0.0
    %146 = vmatpush1.msra.mxu0 0.0
    %147 = vmatprep.subr.mxu0 0.0
    %148 = vmatpush1.msra.mxu0 0.0
    %149 = vmatprep.subr.mxu0 0.0
    %150 = vmatpush1.msra.mxu0 0.0
    %151 = vmatprep.subr.mxu0 0.0
    %152 = vmatpush1.msra.mxu0 0.0
    %153 = vmatprep.subr.mxu0 0.0
    %154 = vmatpush1.msra.mxu0 0.0
    %155 = vmatprep.subr.mxu0 0.0
    %156 = vmatpush1.msra.mxu0 0.0
    %157 = vmatprep.subr.mxu0 0.0
    %158 = vmatpush1.msra.mxu0 0.0
    %159 = vmatprep.subr.mxu0 0.0
    %160 = vmatpush1.msra.mxu0 0.0
    %161 = vmatprep.subr.mxu0 0.0
    %162 = vmatpush1.msra.mxu0 0.0
    %163 = vmatprep.subr.mxu0 0.0
    %164 = vmatpush1.msra.mxu0 0.0
    %165 = vmatprep.subr.mxu0 0.0
    %166 = vmatpush1.msra.mxu0 0.0
    %167 = vmatprep.subr.mxu0 0.0
    %168 = vmatpush1.msra.mxu0 0.0
    %169 = vmatprep.subr.mxu0 0.0
    %170 = vmatpush1.msra.mxu0 0.0
    %171 = vmatprep.subr.mxu0 0.0
    %172 = vmatpush1.msra.mxu0 0.0
    %173 = vmatprep.subr.mxu0 0.0
    %174 = vmatpush1.msra.mxu0 0.0
    %175 = vmatprep.subr.mxu0 0.0
    %176 = vmatpush1.msra.mxu0 0.0
    %177 = vmatprep.subr.mxu0 0.0
    %178 = vmatpush1.msra.mxu0 0.0
    %179 = vmatprep.subr.mxu0 0.0
    %180 = vmatpush1.msra.mxu0 0.0
    %181 = vmatprep.subr.mxu0 0.0
    %182 = vmatpush1.msra.mxu0 0.0
    %183 = vmatprep.subr.mxu0 0.0
    %184 = vmatpush1.msra.mxu0 0.0
    %185 = vmatprep.subr.mxu0 0.0
    %186 = vmatpush1.msra.mxu0 0.0
    %187 = vmatprep.subr.mxu0 0.0
    %188 = vmatpush1.msra.mxu0 0.0
    %189 = vmatprep.subr.mxu0 0.0
    %190 = vmatpush1.msra.mxu0 0.0
    %191 = vmatprep.subr.mxu0 0.0
    %192 = vmatpush1.msra.mxu0 0.0
    %193 = vmatprep.subr.mxu0 0.0
    %194 = vmatpush1.msra.mxu0 0.0
    %195 = vmatprep.subr.mxu0 0.0
    %196 = vmatpush1.msra.mxu0 0.0
    %197 = vmatprep.subr.mxu0 0.0
    %198 = vmatpush1.msra.mxu0 0.0
    %199 = vmatprep.subr.mxu0 0.0
    %200 = vmatpush1.msra.mxu0 0.0
    %201 = vmatprep.mubr.f32.mxu0 0.0
    %202 = vmatmul.mubr.f32.gmra.mrb[0].mxu0 %v110
    %v203 = vpop.f32.mrb[0].mxu0
    %v204 = vadd.f32 %v106, %v203
    %v205 = vpop.f32.mrb[0].mxu0
    %206 = vmatprep.mubr.f32.mxu0 0.0
    %207 = vmatmul.mubr.f32.gmra.mrb[0].mxu0 %v113
    %v208 = vpop.f32.mrb[0].mxu0
    %v209 = vadd.f32 %v106, %v208
    %v210 = vpop.f32.mrb[0].mxu0
    %211 = vmatprep.mubr.f32.mxu0 0.0
    %212 = vmatmul.mubr.f32.gmra.mrb[0].mxu0 %v116
    %v213 = vpop.f32.mrb[0].mxu0
    %v214 = vadd.f32 %v106, %v213
    %v215 = vpop.f32.mrb[0].mxu0
    %216 = vmatprep.mubr.f32.mxu0 0.0
    %217 = vmatmul.mubr.f32.gmra.mrb[0].mxu0 %v119
    %v218 = vpop.f32.mrb[0].mxu0
    %v219 = vadd.f32 %v106, %v218
    %v220 = vpop.f32.mrb[0].mxu0
    %221 = vmatprep.mubr.f32.mxu0 0.0
    %222 = vmatmul.mubr.f32.gmra.mrb[0].mxu0 %v122
    %v223 = vpop.f32.mrb[0].mxu0
    %v224 = vadd.f32 %v106, %v223
    %v225 = vpop.f32.mrb[0].mxu0
    %226 = vmatprep.mubr.f32.mxu0 0.0
    %227 = vmatmul.mubr.f32.gmra.mrb[0].mxu0 %v125
    %v228 = vpop.f32.mrb[0].mxu0
    %v229 = vadd.f32 %v106, %v228
    %v230 = vpop.f32.mrb[0].mxu0
    %231 = vmatprep.mubr.f32.mxu0 0.0
    %232 = vmatmul.mubr.f32.gmra.mrb[0].mxu0 %v128
    %v233 = vpop.f32.mrb[0].mxu0
    %v234 = vadd.f32 %v106, %v233
    %v235 = vpop.f32.mrb[0].mxu0
    %236 = vmatprep.mubr.f32.mxu0 0.0
    %237 = vmatmul.mubr.f32.gmra.mrb[0].mxu0 %v131
    %v238 = vpop.f32.mrb[0].mxu0
    %v239 = vadd.f32 %v106, %v238
    %v240 = vpop.f32.mrb[0].mxu0
    %241 = vdwg.mxu0
    %v242 = vmax.f32 %v204, 0.0
    %v243 = vmax.f32 %v209, 0.0
    %v244 = vmax.f32 %v214, 0.0
    %v245 = vmax.f32 %v219, 0.0
    %v246 = vmax.f32 %v224, 0.0
    %v247 = vmax.f32 %v229, 0.0
    %v248 = vmax.f32 %v234, 0.0
    %v249 = vmax.f32 %v239, 0.0
    %v250 = vld [vmem:[#allocation6] sm:$0xff]
    %v251 = vld [vmem:[#allocation6 + $0x8] sm:$0xff]
    %v252 = vld [vmem:[#allocation6 + $0x10] sm:$0xff]
    %v253 = vld [vmem:[#allocation6 + $0x18] sm:$0xff]
    %v254 = vld [vmem:[#allocation6 + $0x20] sm:$0xff]
    %v255 = vld [vmem:[#allocation6 + $0x28] sm:$0xff]
    %v256 = vld [vmem:[#allocation6 + $0x30] sm:$0xff]
    %v257 = vld [vmem:[#allocation6 + $0x38] sm:$0xff]
    %v258 = vld [vmem:[#allocation7] sm:$0x1]
    %v260 = vlaneseq
    %v261 = vshrl.u32 %v260, 7
    %v262 = vsub.s32 0, %v261
    %v263 = vrot.slane %v258, %v262
    %vm265 = vcmask 523264
    %v267 = vsel %vm265, %v242, 0
    %v270 = vsel %vm265, %v243, 0
    %v273 = vsel %vm265, %v244, 0
    %v276 = vsel %vm265, %v245, 0
    %v279 = vsel %vm265, %v246, 0
    %v282 = vsel %vm265, %v247, 0
    %v285 = vsel %vm265, %v248, 0
    %v288 = vsel %vm265, %v249, 0
    %290 = vmatprep.subr.mxu0 0.0
    %291 = vmatpush1.msra.mxu0 %v250
    %292 = vmatprep.subr.mxu0 0.0
    %293 = vmatpush1.msra.mxu0 %v251
    %294 = vmatprep.subr.mxu0 0.0
    %295 = vmatpush1.msra.mxu0 %v252
    %296 = vmatprep.subr.mxu0 0.0
    %297 = vmatpush1.msra.mxu0 %v253
    %298 = vmatprep.subr.mxu0 0.0
    %299 = vmatpush1.msra.mxu0 %v254
    %300 = vmatprep.subr.mxu0 0.0
    %301 = vmatpush1.msra.mxu0 %v255
    %302 = vmatprep.subr.mxu0 0.0
    %303 = vmatpush1.msra.mxu0 %v256
    %304 = vmatprep.subr.mxu0 0.0
    %305 = vmatpush1.msra.mxu0 %v257
    %306 = vmatprep.subr.mxu0 0.0
    %307 = vmatpush1.msra.mxu0 0.0
    %308 = vmatprep.subr.mxu0 0.0
    %309 = vmatpush1.msra.mxu0 0.0
    %310 = vmatprep.subr.mxu0 0.0
    %311 = vmatpush1.msra.mxu0 0.0
    %312 = vmatprep.subr.mxu0 0.0
    %313 = vmatpush1.msra.mxu0 0.0
    %314 = vmatprep.subr.mxu0 0.0
    %315 = vmatpush1.msra.mxu0 0.0
    %316 = vmatprep.subr.mxu0 0.0
    %317 = vmatpush1.msra.mxu0 0.0
    %318 = vmatprep.subr.mxu0 0.0
    %319 = vmatpush1.msra.mxu0 0.0
    %320 = vmatprep.subr.mxu0 0.0
    %321 = vmatpush1.msra.mxu0 0.0
    %322 = vmatprep.subr.mxu0 0.0
    %323 = vmatpush1.msra.mxu0 0.0
    %324 = vmatprep.subr.mxu0 0.0
    %325 = vmatpush1.msra.mxu0 0.0
    %326 = vmatprep.subr.mxu0 0.0
    %327 = vmatpush1.msra.mxu0 0.0
    %328 = vmatprep.subr.mxu0 0.0
    %329 = vmatpush1.msra.mxu0 0.0
    %330 = vmatprep.subr.mxu0 0.0
    %331 = vmatpush1.msra.mxu0 0.0
    %332 = vmatprep.subr.mxu0 0.0
    %333 = vmatpush1.msra.mxu0 0.0
    %334 = vmatprep.subr.mxu0 0.0
    %335 = vmatpush1.msra.mxu0 0.0
    %336 = vmatprep.subr.mxu0 0.0
    %337 = vmatpush1.msra.mxu0 0.0
    %338 = vmatprep.subr.mxu0 0.0
    %339 = vmatpush1.msra.mxu0 0.0
    %340 = vmatprep.subr.mxu0 0.0
    %341 = vmatpush1.msra.mxu0 0.0
    %342 = vmatprep.subr.mxu0 0.0
    %343 = vmatpush1.msra.mxu0 0.0
    %344 = vmatprep.subr.mxu0 0.0
    %345 = vmatpush1.msra.mxu0 0.0
    %346 = vmatprep.subr.mxu0 0.0
    %347 = vmatpush1.msra.mxu0 0.0
    %348 = vmatprep.subr.mxu0 0.0
    %349 = vmatpush1.msra.mxu0 0.0
    %350 = vmatprep.subr.mxu0 0.0
    %351 = vmatpush1.msra.mxu0 0.0
    %352 = vmatprep.subr.mxu0 0.0
    %353 = vmatpush1.msra.mxu0 0.0
    %354 = vmatprep.mubr.f32.mxu0 0.0
    %355 = vmatmul.mubr.f32.gmra.mrb[0].mxu0 %v267
    %v356 = vpop.f32.mrb[0].mxu0
    %v357 = vadd.f32 %v263, %v356
    %v358 = vpop.f32.mrb[0].mxu0
    %359 = vmatprep.mubr.f32.mxu0 0.0
    %360 = vmatmul.mubr.f32.gmra.mrb[0].mxu0 %v270
    %v361 = vpop.f32.mrb[0].mxu0
    %v362 = vadd.f32 %v263, %v361
    %v363 = vpop.f32.mrb[0].mxu0
    %364 = vmatprep.mubr.f32.mxu0 0.0
    %365 = vmatmul.mubr.f32.gmra.mrb[0].mxu0 %v273
    %v366 = vpop.f32.mrb[0].mxu0
    %v367 = vadd.f32 %v263, %v366
    %v368 = vpop.f32.mrb[0].mxu0
    %369 = vmatprep.mubr.f32.mxu0 0.0
    %370 = vmatmul.mubr.f32.gmra.mrb[0].mxu0 %v276
    %v371 = vpop.f32.mrb[0].mxu0
    %v372 = vadd.f32 %v263, %v371
    %v373 = vpop.f32.mrb[0].mxu0
    %374 = vmatprep.mubr.f32.mxu0 0.0
    %375 = vmatmul.mubr.f32.gmra.mrb[0].mxu0 %v279
    %v376 = vpop.f32.mrb[0].mxu0
    %v377 = vadd.f32 %v263, %v376
    %v378 = vpop.f32.mrb[0].mxu0
    %379 = vmatprep.mubr.f32.mxu0 0.0
    %380 = vmatmul.mubr.f32.gmra.mrb[0].mxu0 %v282
    %v381 = vpop.f32.mrb[0].mxu0
    %v382 = vadd.f32 %v263, %v381
    %v383 = vpop.f32.mrb[0].mxu0
    %384 = vmatprep.mubr.f32.mxu0 0.0
    %385 = vmatmul.mubr.f32.gmra.mrb[0].mxu0 %v285
    %v386 = vpop.f32.mrb[0].mxu0
    %v387 = vadd.f32 %v263, %v386
    %v388 = vpop.f32.mrb[0].mxu0
    %389 = vmatprep.mubr.f32.mxu0 0.0
    %390 = vmatmul.mubr.f32.gmra.mrb[0].mxu0 %v288
    %v391 = vpop.f32.mrb[0].mxu0
    %v392 = vadd.f32 %v263, %v391
    %v393 = vpop.f32.mrb[0].mxu0
    %394 = vdwg.mxu0
    %v395 = vmax.f32 %v357, 0.0
    %v396 = vmax.f32 %v362, 0.0
    %v397 = vmax.f32 %v367, 0.0
    %v398 = vmax.f32 %v372, 0.0
    %v399 = vmax.f32 %v377, 0.0
    %v400 = vmax.f32 %v382, 0.0
    %v401 = vmax.f32 %v387, 0.0
    %v402 = vmax.f32 %v392, 0.0
    %403 = vst.msk [vmem:[%s8] sm:$0xff] %vm265, %v395
    %404 = vst.msk [vmem:[%s8 + $0x8] sm:$0xff] %vm265, %v396
    %405 = vst.msk [vmem:[%s8 + $0x10] sm:$0xff] %vm265, %v397
    %406 = vst.msk [vmem:[%s8 + $0x18] sm:$0xff] %vm265, %v398
    %407 = vst.msk [vmem:[%s8 + $0x20] sm:$0xff] %vm265, %v399
    %408 = vst.msk [vmem:[%s8 + $0x28] sm:$0xff] %vm265, %v400
    %409 = vst.msk [vmem:[%s8 + $0x30] sm:$0xff] %vm265, %v401
    %410 = vst.msk [vmem:[%s8 + $0x38] sm:$0xff] %vm265, %v402
    %v411 = vld [vmem:[%s5] sm:$0xff]
    %v412 = vld [vmem:[%s5 + $0x8] sm:$0xff]
    %v413 = vld [vmem:[%s5 + $0x10] sm:$0xff]
    %v414 = vld [vmem:[%s5 + $0x18] sm:$0xff]
    %v415 = vld [vmem:[%s5 + $0x20] sm:$0xff]
    %v416 = vld [vmem:[%s5 + $0x28] sm:$0xff]
    %v417 = vld [vmem:[%s5 + $0x30] sm:$0xff]
    %v418 = vld [vmem:[%s5 + $0x38] sm:$0xff]
    %v420 = vsel %vm265, %v395, 0
    %v423 = vsel %vm265, %v396, 0
    %v426 = vsel %vm265, %v397, 0
    %v429 = vsel %vm265, %v398, 0
    %v432 = vsel %vm265, %v399, 0
    %v435 = vsel %vm265, %v400, 0
    %v438 = vsel %vm265, %v401, 0
    %v441 = vsel %vm265, %v402, 0
    %443 = vmatprep.subr.mxu0 0.0
    %444 = vmatpush1.msra.mxu0 %v411
    %445 = vmatprep.subr.mxu0 0.0
    %446 = vmatpush1.msra.mxu0 %v412
    %447 = vmatprep.subr.mxu0 0.0
    %448 = vmatpush1.msra.mxu0 %v413
    %449 = vmatprep.subr.mxu0 0.0
    %450 = vmatpush1.msra.mxu0 %v414
    %451 = vmatprep.subr.mxu0 0.0
    %452 = vmatpush1.msra.mxu0 %v415
    %453 = vmatprep.subr.mxu0 0.0
    %454 = vmatpush1.msra.mxu0 %v416
    %455 = vmatprep.subr.mxu0 0.0
    %456 = vmatpush1.msra.mxu0 %v417
    %457 = vmatprep.subr.mxu0 0.0
    %458 = vmatpush1.msra.mxu0 %v418
    %459 = vmatprep.subr.mxu0 0.0
    %460 = vmatpush1.msra.mxu0 0.0
    %461 = vmatprep.subr.mxu0 0.0
    %462 = vmatpush1.msra.mxu0 0.0
    %463 = vmatprep.subr.mxu0 0.0
    %464 = vmatpush1.msra.mxu0 0.0
    %465 = vmatprep.subr.mxu0 0.0
    %466 = vmatpush1.msra.mxu0 0.0
    %467 = vmatprep.subr.mxu0 0.0
    %468 = vmatpush1.msra.mxu0 0.0
    %469 = vmatprep.subr.mxu0 0.0
    %470 = vmatpush1.msra.mxu0 0.0
    %471 = vmatprep.subr.mxu0 0.0
    %472 = vmatpush1.msra.mxu0 0.0
    %473 = vmatprep.subr.mxu0 0.0
    %474 = vmatpush1.msra.mxu0 0.0
    %475 = vmatprep.subr.mxu0 0.0
    %476 = vmatpush1.msra.mxu0 0.0
    %477 = vmatprep.subr.mxu0 0.0
    %478 = vmatpush1.msra.mxu0 0.0
    %479 = vmatprep.subr.mxu0 0.0
    %480 = vmatpush1.msra.mxu0 0.0
    %481 = vmatprep.subr.mxu0 0.0
    %482 = vmatpush1.msra.mxu0 0.0
    %483 = vmatprep.subr.mxu0 0.0
    %484 = vmatpush1.msra.mxu0 0.0
    %485 = vmatprep.subr.mxu0 0.0
    %486 = vmatpush1.msra.mxu0 0.0
    %487 = vmatprep.subr.mxu0 0.0
    %488 = vmatpush1.msra.mxu0 0.0
    %489 = vmatprep.subr.mxu0 0.0
    %490 = vmatpush1.msra.mxu0 0.0
    %491 = vmatprep.subr.mxu0 0.0
    %492 = vmatpush1.msra.mxu0 0.0
    %493 = vmatprep.subr.mxu0 0.0
    %494 = vmatpush1.msra.mxu0 0.0
    %495 = vmatprep.subr.mxu0 0.0
    %496 = vmatpush1.msra.mxu0 0.0
    %497 = vmatprep.subr.mxu0 0.0
    %498 = vmatpush1.msra.mxu0 0.0
    %499 = vmatprep.subr.mxu0 0.0
    %500 = vmatpush1.msra.mxu0 0.0
    %501 = vmatprep.subr.mxu0 0.0
    %502 = vmatpush1.msra.mxu0 0.0
    %503 = vmatprep.subr.mxu0 0.0
    %504 = vmatpush1.msra.mxu0 0.0
    %505 = vmatprep.subr.mxu0 0.0
    %506 = vmatpush1.msra.mxu0 0.0
    %507 = vmatprep.mubr.f32.mxu0 0.0
    %508 = vmatmul.mubr.f32.gmra.mrb[0].mxu0 %v420
    %v509 = vpop.f32.mrb[0].mxu0
    %v510 = vadd.f32 0.0, %v509
    %v511 = vpop.f32.mrb[0].mxu0
    %512 = vmatprep.mubr.f32.mxu0 0.0
    %513 = vmatmul.mubr.f32.gmra.mrb[0].mxu0 %v423
    %v514 = vpop.f32.mrb[0].mxu0
    %v515 = vadd.f32 0.0, %v514
    %v516 = vpop.f32.mrb[0].mxu0
    %517 = vmatprep.mubr.f32.mxu0 0.0
    %518 = vmatmul.mubr.f32.gmra.mrb[0].mxu0 %v426
    %v519 = vpop.f32.mrb[0].mxu0
    %v520 = vadd.f32 0.0, %v519
    %v521 = vpop.f32.mrb[0].mxu0
    %522 = vmatprep.mubr.f32.mxu0 0.0
    %523 = vmatmul.mubr.f32.gmra.mrb[0].mxu0 %v429
    %v524 = vpop.f32.mrb[0].mxu0
    %v525 = vadd.f32 0.0, %v524
    %v526 = vpop.f32.mrb[0].mxu0
    %527 = vmatprep.mubr.f32.mxu0 0.0
    %528 = vmatmul.mubr.f32.gmra.mrb[0].mxu0 %v432
    %v529 = vpop.f32.mrb[0].mxu0
    %v530 = vadd.f32 0.0, %v529
    %v531 = vpop.f32.mrb[0].mxu0
    %532 = vmatprep.mubr.f32.mxu0 0.0
    %533 = vmatmul.mubr.f32.gmra.mrb[0].mxu0 %v435
    %v534 = vpop.f32.mrb[0].mxu0
    %v535 = vadd.f32 0.0, %v534
    %v536 = vpop.f32.mrb[0].mxu0
    %537 = vmatprep.mubr.f32.mxu0 0.0
    %538 = vmatmul.mubr.f32.gmra.mrb[0].mxu0 %v438
    %v539 = vpop.f32.mrb[0].mxu0
    %v540 = vadd.f32 0.0, %v539
    %v541 = vpop.f32.mrb[0].mxu0
    %542 = vmatprep.mubr.f32.mxu0 0.0
    %543 = vmatmul.mubr.f32.gmra.mrb[0].mxu0 %v441
    %v544 = vpop.f32.mrb[0].mxu0
    %v545 = vadd.f32 0.0, %v544
    %v546 = vpop.f32.mrb[0].mxu0
    %547 = vdwg.mxu0
    %548 = vst [vmem:[%s9] sm:$0xff] %v510
    %549 = vst [vmem:[%s9 + $0x8] sm:$0xff] %v515
    %550 = vst [vmem:[%s9 + $0x10] sm:$0xff] %v520
    %551 = vst [vmem:[%s9 + $0x18] sm:$0xff] %v525
    %552 = vst [vmem:[%s9 + $0x20] sm:$0xff] %v530
    %553 = vst [vmem:[%s9 + $0x28] sm:$0xff] %v535
    %554 = vst [vmem:[%s9 + $0x30] sm:$0xff] %v540
    %555 = vst [vmem:[%s9 + $0x38] sm:$0xff] %v545
    %v556 = vld [vmem:[%s6] sm:$0xff]
    %v557 = vld [vmem:[%s6 + $0x8] sm:$0xff]
    %v558 = vld [vmem:[%s6 + $0x10] sm:$0xff]
    %v559 = vld [vmem:[%s6 + $0x18] sm:$0xff]
    %v560 = vld [vmem:[%s6 + $0x20] sm:$0xff]
    %v561 = vld [vmem:[%s6 + $0x28] sm:$0xff]
    %v562 = vld [vmem:[%s6 + $0x30] sm:$0xff]
    %v563 = vld [vmem:[%s6 + $0x38] sm:$0xff]
    %v564 = vld [vmem:[#allocation9] sm:$0x1]
    %v566 = vlaneseq
    %v567 = vshrl.u32 %v566, 7
    %v568 = vsub.s32 0, %v567
    %v569 = vrot.slane %v564, %v568
    %571 = vmatprep.subr.mxu0 0.0
    %572 = vmatpush1.msra.mxu0 %v556
    %573 = vmatprep.subr.mxu0 0.0
    %574 = vmatpush1.msra.mxu0 %v557
    %575 = vmatprep.subr.mxu0 0.0
    %576 = vmatpush1.msra.mxu0 %v558
    %577 = vmatprep.subr.mxu0 0.0
    %578 = vmatpush1.msra.mxu0 %v559
    %579 = vmatprep.subr.mxu0 0.0
    %580 = vmatpush1.msra.mxu0 %v560
    %581 = vmatprep.subr.mxu0 0.0
    %582 = vmatpush1.msra.mxu0 %v561
    %583 = vmatprep.subr.mxu0 0.0
    %584 = vmatpush1.msra.mxu0 %v562
    %585 = vmatprep.subr.mxu0 0.0
    %586 = vmatpush1.msra.mxu0 %v563
    %587 = vmatprep.subr.mxu0 0.0
    %588 = vmatpush1.msra.mxu0 0.0
    %589 = vmatprep.subr.mxu0 0.0
    %590 = vmatpush1.msra.mxu0 0.0
    %591 = vmatprep.subr.mxu0 0.0
    %592 = vmatpush1.msra.mxu0 0.0
    %593 = vmatprep.subr.mxu0 0.0
    %594 = vmatpush1.msra.mxu0 0.0
    %595 = vmatprep.subr.mxu0 0.0
    %596 = vmatpush1.msra.mxu0 0.0
    %597 = vmatprep.subr.mxu0 0.0
    %598 = vmatpush1.msra.mxu0 0.0
    %599 = vmatprep.subr.mxu0 0.0
    %600 = vmatpush1.msra.mxu0 0.0
    %601 = vmatprep.subr.mxu0 0.0
    %602 = vmatpush1.msra.mxu0 0.0
    %603 = vmatprep.subr.mxu0 0.0
    %604 = vmatpush1.msra.mxu0 0.0
    %605 = vmatprep.subr.mxu0 0.0
    %606 = vmatpush1.msra.mxu0 0.0
    %607 = vmatprep.subr.mxu0 0.0
    %608 = vmatpush1.msra.mxu0 0.0
    %609 = vmatprep.subr.mxu0 0.0
    %610 = vmatpush1.msra.mxu0 0.0
    %611 = vmatprep.subr.mxu0 0.0
    %612 = vmatpush1.msra.mxu0 0.0
    %613 = vmatprep.subr.mxu0 0.0
    %614 = vmatpush1.msra.mxu0 0.0
    %615 = vmatprep.subr.mxu0 0.0
    %616 = vmatpush1.msra.mxu0 0.0
    %617 = vmatprep.subr.mxu0 0.0
    %618 = vmatpush1.msra.mxu0 0.0
    %619 = vmatprep.subr.mxu0 0.0
    %620 = vmatpush1.msra.mxu0 0.0
    %621 = vmatprep.subr.mxu0 0.0
    %622 = vmatpush1.msra.mxu0 0.0
    %623 = vmatprep.subr.mxu0 0.0
    %624 = vmatpush1.msra.mxu0 0.0
    %625 = vmatprep.subr.mxu0 0.0
    %626 = vmatpush1.msra.mxu0 0.0
    %627 = vmatprep.subr.mxu0 0.0
    %628 = vmatpush1.msra.mxu0 0.0
    %629 = vmatprep.subr.mxu0 0.0
    %630 = vmatpush1.msra.mxu0 0.0
    %631 = vmatprep.subr.mxu0 0.0
    %632 = vmatpush1.msra.mxu0 0.0
    %633 = vmatprep.subr.mxu0 0.0
    %634 = vmatpush1.msra.mxu0 0.0
    %635 = vmatprep.mubr.f32.mxu0 0.0
    %636 = vmatmul.mubr.f32.gmra.mrb[0].mxu0 %v420
    %v637 = vpop.f32.mrb[0].mxu0
    %v638 = vadd.f32 %v569, %v637
    %v639 = vpop.f32.mrb[0].mxu0
    %640 = vmatprep.mubr.f32.mxu0 0.0
    %641 = vmatmul.mubr.f32.gmra.mrb[0].mxu0 %v423
    %v642 = vpop.f32.mrb[0].mxu0
    %v643 = vadd.f32 %v569, %v642
    %v644 = vpop.f32.mrb[0].mxu0
    %645 = vmatprep.mubr.f32.mxu0 0.0
    %646 = vmatmul.mubr.f32.gmra.mrb[0].mxu0 %v426
    %v647 = vpop.f32.mrb[0].mxu0
    %v648 = vadd.f32 %v569, %v647
    %v649 = vpop.f32.mrb[0].mxu0
    %650 = vmatprep.mubr.f32.mxu0 0.0
    %651 = vmatmul.mubr.f32.gmra.mrb[0].mxu0 %v429
    %v652 = vpop.f32.mrb[0].mxu0
    %v653 = vadd.f32 %v569, %v652
    %v654 = vpop.f32.mrb[0].mxu0
    %655 = vmatprep.mubr.f32.mxu0 0.0
    %656 = vmatmul.mubr.f32.gmra.mrb[0].mxu0 %v432
    %v657 = vpop.f32.mrb[0].mxu0
    %v658 = vadd.f32 %v569, %v657
    %v659 = vpop.f32.mrb[0].mxu0
    %660 = vmatprep.mubr.f32.mxu0 0.0
    %661 = vmatmul.mubr.f32.gmra.mrb[0].mxu0 %v435
    %v662 = vpop.f32.mrb[0].mxu0
    %v663 = vadd.f32 %v569, %v662
    %v664 = vpop.f32.mrb[0].mxu0
    %665 = vmatprep.mubr.f32.mxu0 0.0
    %666 = vmatmul.mubr.f32.gmra.mrb[0].mxu0 %v438
    %v667 = vpop.f32.mrb[0].mxu0
    %v668 = vadd.f32 %v569, %v667
    %v669 = vpop.f32.mrb[0].mxu0
    %670 = vmatprep.mubr.f32.mxu0 0.0
    %671 = vmatmul.mubr.f32.gmra.mrb[0].mxu0 %v441
    %v672 = vpop.f32.mrb[0].mxu0
    %v673 = vadd.f32 %v569, %v672
    %v674 = vpop.f32.mrb[0].mxu0
    %675 = vdwg.mxu0
    %676 = vst [vmem:[%s10] sm:$0xff] %v638
    %677 = vst [vmem:[%s10 + $0x8] sm:$0xff] %v643
    %678 = vst [vmem:[%s10 + $0x10] sm:$0xff] %v648
    %679 = vst [vmem:[%s10 + $0x18] sm:$0xff] %v653
    %680 = vst [vmem:[%s10 + $0x20] sm:$0xff] %v658
    %681 = vst [vmem:[%s10 + $0x28] sm:$0xff] %v663
    %682 = vst [vmem:[%s10 + $0x30] sm:$0xff] %v668
    %683 = vst [vmem:[%s10 + $0x38] sm:$0xff] %v673
    // Predicated region
    $region54: #{lpdnet_forward.5} parent=1 // pred_check
      _
    $region55: #{lpdnet_forward.5} parent=1 // pred_check_branch
      %685 = sbr.rel (0) target = $region57
    $region56: #{lpdnet_forward.5} parent=1 // pred_region
      _
    $region57: #{lpdnet_forward.5} parent=1 // pred_fallthru
      _
    // Predicated region
    $region58: #{lpdnet_forward.5} parent=1 // pred_check
      _
    $region59: #{lpdnet_forward.5} parent=1 // pred_check_branch
      %687 = sbr.rel (0) target = $region61
    $region60: #{lpdnet_forward.5} parent=1 // pred_region
      _
    $region61: #{lpdnet_forward.5} parent=1 // pred_fallthru
      _
    // Predicated region
    $region62: #{lpdnet_forward.5} parent=1 // pred_check
      _
    $region63: #{lpdnet_forward.5} parent=1 // pred_check_branch
      %689 = sbr.rel (0) target = $region65
    $region64: #{lpdnet_forward.5} parent=1 // pred_region
      _
    $region65: #{lpdnet_forward.5} parent=1 // pred_fallthru
      _
    // Predicated region
    $region66: #{lpdnet_forward.5} parent=1 // pred_check
      _
    $region67: #{lpdnet_forward.5} parent=1 // pred_check_branch
      %691 = sbr.rel (0) target = $region69
    $region68: #{lpdnet_forward.5} parent=1 // pred_region
      _
    $region69: #{lpdnet_forward.5} parent=1 // pred_fallthru
      _
    // Predicated region
    $region70: #{lpdnet_forward.5} parent=1 // pred_check
      _
    $region71: #{lpdnet_forward.5} parent=1 // pred_check_branch
      %693 = sbr.rel (0) target = $region73
    $region72: #{lpdnet_forward.5} parent=1 // pred_region
      _
    $region73: #{lpdnet_forward.5} parent=1 // pred_fallthru
      _
    // Predicated region
    $region74: #{lpdnet_forward.5} parent=1 // pred_check
      _
    $region75: #{lpdnet_forward.5} parent=1 // pred_check_branch
      %695 = sbr.rel (0) target = $region77
    $region76: #{lpdnet_forward.5} parent=1 // pred_region
      _
    $region77: #{lpdnet_forward.5} parent=1 // pred_fallthru
      _
    %696 = vsyncpa [#allocation3], 1
    %697 = vsyncpa [#allocation5], 1
    %698 = vsyncpa [#allocation8], 1

// kernel: lpdnet_forward.6
$region0: #{lpdnet_forward.6}
  #allocation0 [shape = 'u32[]', space=smem, size = 0x4, offset = 0x4, fixed_abs, tag = 'smem constant byte address 0x4 - core index']
  #allocation1 [shape = 'u32[144,128]{1,0:T(1,128)}', space=vmem, size = 0x12000, scoped, tag = 'internal scratch']
  #allocation2 [shape = 'f32[1,32]{1,0:T(1,128)}', space=vmem, size = 0x200, scoped, tag = 'scratch operand']
  %s0 = inlined_call_operand.vmem [shape: f32[2,32,64], index: 0, kind: input, shape index: {}, may-alias: {0,1}]
  %s1 = inlined_call_operand.vmem [shape: f32[2,32,64], index: 1, kind: input, shape index: {}, may-alias: {0,1}]
  %s2 = inlined_call_operand.vmem [shape: s32[2,32,20], index: 2, kind: output, shape index: {}]
  %s3 = sld [smem:[#allocation0]]
  $region52: #{lpdnet_forward.6} parent=0
    _
  %s5 = ssub.s32 1, %s3
  %s6 = scalar_select 0, %s5, %s3
  loop: start=0, step=1, limit=4
  $region2: #{lpdnet_forward.6} parent=0 // loop_pre_header
    _
  $region3: #{lpdnet_forward.6} parent=0 // loop_header
    %s8 = sphi 0, %s12
    %p9 = scmp.ge.s32.totalorder %s8, 4
    %s15 = sphi 0, %s27
    %s16 = sphi 0, %s23
    %s17 = sphi 0, %s15
    %s18 = sphi 0, %s16
    %s19 = sphi 0, %s17
    %s20 = sphi 0, %s18
    %s32 = sphi 0, %s34
    %s35 = sphi 0, %s32
    %s36 = sphi 0, %s35
    %s52 = sphi 0, %s36
    %s58 = sphi 0, %s60
    %s61 = sphi 0, %s58
    %s62 = sphi 0, %s61
    %s78 = sphi 0, %s62
    %s86 = sphi 0, %s88
    %s89 = sphi 0, %s86
    %s90 = sphi 0, %s89
    %s106 = sphi 0, %s90
  $region4: #{lpdnet_forward.6} parent=0 // loop_header_branch
    %11 = sbr.rel (%p9) target = $region8
  $region5: #{lpdnet_forward.6} parent=0 // loop_body
    %s13 = ssub.s32 %s8, 1
    %s14 = ssub.s32 %s8, 2
    %s21 = sadd.s32 1, %s16
    %p22 = scmp.ge.s32.totalorder %s21, 1
    %s23 = scalar_select %p22, 0, %s21
    %s24 = sadd.s32 1, %s15
    %s25 = scalar_select %p22, %s24, %s15
    %p26 = scmp.ge.s32.totalorder %s25, 2
    %s27 = scalar_select %p26, 0, %s25
    %s28 = ssub.s32 %s15, %s27
    %s29 = ssub.s32 %s16, %s23
    %s30 = sor.u32 %s28, %s29
    %p31 = scmp.eq.s32.totalorder %s30, 0
    %s33 = sadd.s32 %s32, 1
    %s34 = scalar_select %p31, %s32, %s33
    %p37 = pneg %p31
    %p38 = scmp.eq.s32.totalorder %s8, 1
    %p39 = por %p37, %p38
    %p40 = scmp.ne.s32.totalorder %s32, %s35
    %p41 = scmp.eq.s32.totalorder %s8, 0
    %p42 = por %p40, %p41
    %p43 = scmp.ne.s32.totalorder %s32, %s35
    %p44 = scmp.eq.s32.totalorder %s13, 1
    %p45 = por %p43, %p44
    %p46 = scmp.ne.s32.totalorder %s35, %s36
    %p47 = scmp.eq.s32.totalorder %s13, 0
    %p48 = por %p46, %p47
    %p49 = scmp.ne.s32.totalorder %s35, %s36
    %p50 = scmp.eq.s32.totalorder %s14, 1
    %p51 = por %p49, %p50
    %p53 = scmp.ne.s32.totalorder %s36, %s52
    %p54 = scmp.eq.s32.totalorder %s14, 0
    %p55 = por %p53, %p54
    %s56 = ssub.s32 %s15, %s27
    %p57 = scmp.eq.s32.totalorder %s56, 0
    %s59 = sadd.s32 %s58, 1
    %s60 = scalar_select %p57, %s58, %s59
    %p63 = pneg %p57
    %p64 = scmp.eq.s32.totalorder %s8, 1
    %p65 = por %p63, %p64
    %p66 = scmp.ne.s32.totalorder %s58, %s61
    %p67 = scmp.eq.s32.totalorder %s8, 0
    %p68 = por %p66, %p67
    %p69 = scmp.ne.s32.totalorder %s58, %s61
    %p70 = scmp.eq.s32.totalorder %s13, 1
    %p71 = por %p69, %p70
    %p72 = scmp.ne.s32.totalorder %s61, %s62
    %p73 = scmp.eq.s32.totalorder %s13, 0
    %p74 = por %p72, %p73
    %p75 = scmp.ne.s32.totalorder %s61, %s62
    %p76 = scmp.eq.s32.totalorder %s14, 1
    %p77 = por %p75, %p76
    %p79 = scmp.ne.s32.totalorder %s62, %s78
    %p80 = scmp.eq.s32.totalorder %s14, 0
    %p81 = por %p79, %p80
    %s82 = ssub.s32 %s15, %s27
    %s83 = ssub.s32 %s16, %s23
    %s84 = sor.u32 %s82, %s83
    %p85 = scmp.eq.s32.totalorder %s84, 0
    %s87 = sadd.s32 %s86, 1
    %s88 = scalar_select %p85, %s86, %s87
    %p91 = pneg %p85
    %p92 = scmp.eq.s32.totalorder %s8, 1
    %p93 = por %p91, %p92
    %p94 = scmp.ne.s32.totalorder %s86, %s89
    %p95 = scmp.eq.s32.totalorder %s8, 0
    %p96 = por %p94, %p95
    %p97 = scmp.ne.s32.totalorder %s86, %s89
    %p98 = scmp.eq.s32.totalorder %s13, 1
    %p99 = por %p97, %p98
    %p100 = scmp.ne.s32.totalorder %s89, %s90
    %p101 = scmp.eq.s32.totalorder %s13, 0
    %p102 = por %p100, %p101
    %p103 = scmp.ne.s32.totalorder %s89, %s90
    %p104 = scmp.eq.s32.totalorder %s14, 1
    %p105 = por %p103, %p104
    %p107 = scmp.ne.s32.totalorder %s90, %s106
    %p108 = scmp.eq.s32.totalorder %s14, 0
    %p109 = por %p107, %p108
    %p110 = scmp.le.s32.totalorder 1, %s8
    %p111 = scmp.lt.s32.totalorder %s8, 3
    %p112 = pnand %p110, %p111
    %p113 = pneg %p112
    // Predicated region
    $region9: #{lpdnet_forward.6} parent=5 // pred_check
      _
    $region10: #{lpdnet_forward.6} parent=5 // pred_check_branch
      %115 = sbr.rel (%p112) target = $region12
    $region11: #{lpdnet_forward.6} parent=5 // pred_region
      %s116 = ssub.s32 %s8, 1
    $region12: #{lpdnet_forward.6} parent=5 // pred_fallthru
      _
    %p117 = scmp.lt.s32.totalorder %s8, 2
    // Predicated region
    $region13: #{lpdnet_forward.6} parent=5 // pred_check
      %p118 = pneg %p117
    $region14: #{lpdnet_forward.6} parent=5 // pred_check_branch
      %120 = sbr.rel (%p118) target = $region16
    $region15: #{lpdnet_forward.6} parent=5 // pred_region
      // Predicated region
      $region17: #{lpdnet_forward.6} parent=15 // pred_check
        %p121 = pneg %p42
      $region18: #{lpdnet_forward.6} parent=15 // pred_check_branch
        %123 = sbr.rel (%p121) target = $region20
      $region19: #{lpdnet_forward.6} parent=15 // pred_region
        %s124 = smul.u32 4, %s16
        %p125 = scmp.lt.s32.totalorder %s15, 1
        %s126 = scalar_select %p125, %s15, 1
        %p127 = scmp.lt.s32.totalorder %s124, 3
        %s128 = scalar_select %p127, %s124, 3
        %s129 = smul.addr %s126, 4
        %s130 = sadd.s32 %s128, %s129
        %s131 = smul.addr %s130, 8
        %s132 = scalar_lea.vmem %s0, %s131
        %s133 = smul.u32 4, %s16
      $region20: #{lpdnet_forward.6} parent=15 // pred_fallthru
        _
      // Predicated region
      $region21: #{lpdnet_forward.6} parent=15 // pred_check
        %p134 = pneg %p68
      $region22: #{lpdnet_forward.6} parent=15 // pred_check_branch
        %136 = sbr.rel (%p134) target = $region24
      $region23: #{lpdnet_forward.6} parent=15 // pred_region
        %p137 = scmp.lt.s32.totalorder %s15, 1
        %s138 = scalar_select %p137, %s15, 1
        %s139 = smul.addr %s138, 4
        %s140 = smul.addr %s139, 8
        %s141 = scalar_lea.vmem %s1, %s140
      $region24: #{lpdnet_forward.6} parent=15 // pred_fallthru
        _
    $region16: #{lpdnet_forward.6} parent=5 // pred_fallthru
      _
    %p142 = scmp.le.s32.totalorder 1, %s8
    %p143 = scmp.lt.s32.totalorder %s8, 3
    %p144 = pnand %p142, %p143
    %p145 = pneg %p144
    // Predicated region
    $region25: #{lpdnet_forward.6} parent=5 // pred_check
      _
    $region26: #{lpdnet_forward.6} parent=5 // pred_check_branch
      %147 = sbr.rel (%p144) target = $region28
    $region27: #{lpdnet_forward.6} parent=5 // pred_region
      %s148 = ssub.s32 %s8, 1
      %s149 = smul.u32 4, %s18
      %p150 = scmp.lt.s32.totalorder %s17, 1
      %s151 = scalar_select %p150, %s17, 1
      %p152 = scmp.lt.s32.totalorder %s149, 3
      %s153 = scalar_select %p152, %s149, 3
      %s154 = smul.addr %s151, 4
      %s155 = sadd.s32 %s153, %s154
      %s156 = smul.addr %s155, 8
      %s157 = scalar_lea.vmem %s0, %s156
      %p158 = pneg %p48
      %p159 = pneg %p45
      %p160 = scmp.lt.s32.totalorder %s17, 1
      %s161 = scalar_select %p160, %s17, 1
      %s162 = smul.addr %s161, 4
      %s163 = smul.addr %s162, 8
      %s164 = scalar_lea.vmem %s1, %s163
      %p165 = pneg %p74
      %p166 = pneg %p71
      %p167 = pneg %p102
      %p168 = pneg %p99
      %s169 = smul.u32 4, %s18
      %p170 = scmp.lt.s32.totalorder %s17, 1
      %s171 = scalar_select %p170, %s17, 1
      %p172 = scmp.lt.s32.totalorder %s169, 3
      %s173 = scalar_select %p172, %s169, 3
      %s174 = smul.addr %s171, 4
      %s175 = sadd.s32 %s173, %s174
      %s176 = smul.addr %s175, 8
      %s177 = scalar_lea.vmem %s2, %s176
      %s178 = smul.u32 4, %s18
      %p179 = scmp.lt.s32.totalorder %s17, 1
      %s180 = scalar_select %p179, %s17, 1
      %p181 = scmp.lt.s32.totalorder %s178, 3
      %s182 = scalar_select %p181, %s178, 3
      %s183 = smul.addr %s180, 4
      %s184 = sadd.s32 %s182, %s183
      %s185 = smul.addr %s184, 8
      %s186 = scalar_lea.vmem %s0, %s185
      %s187 = smul.u32 4, %s18
      %p188 = scmp.lt.s32.totalorder %s17, 1
      %s189 = scalar_select %p188, %s17, 1
      %s190 = smul.addr %s189, 4
      %s191 = smul.addr %s190, 8
      %s192 = scalar_lea.vmem %s1, %s191
      %s193 = smul.u32 4, %s18
      %p194 = scmp.lt.s32.totalorder %s17, 1
      %s195 = scalar_select %p194, %s17, 1
      %p196 = scmp.lt.s32.totalorder %s193, 3
      %s197 = scalar_select %p196, %s193, 3
      %s198 = smul.addr %s195, 4
      %s199 = sadd.s32 %s197, %s198
      %s200 = smul.addr %s199, 8
      %s201 = scalar_lea.vmem %s2, %s200
      %s202 = smul.u32 4, %s18
      %p203 = scmp.eq.s32.totalorder %s18, 0
      // Predicated region
      $region29: #{lpdnet_forward.6} parent=27 // pred_check
        %p204 = pneg %p203
      $region30: #{lpdnet_forward.6} parent=27 // pred_check_branch
        %206 = sbr.rel (%p204) target = $region32
      $region31: #{lpdnet_forward.6} parent=27 // pred_region
        %v207 = vld [vmem:[%s192] sm:$0xff]
        %v208 = vld [vmem:[%s192 + $0x8] sm:$0xff]
        %v209 = vld [vmem:[%s192 + $0x10] sm:$0xff]
        %v210 = vld [vmem:[%s192 + $0x18] sm:$0xff]
        %v211 = vmul.f32 %v207, %v207
        %v212 = vmul.f32 %v208, %v208
        %v213 = vmul.f32 %v209, %v209
        %v214 = vmul.f32 %v210, %v210
        %vm215 = vcmask 523264
        %v217 = vsel %vm215, 1.0, 0
        %v220 = vsel %vm215, %v211, 0
        %v223 = vsel %vm215, %v212, 0
        %v226 = vsel %vm215, %v213, 0
        %v229 = vsel %vm215, %v214, 0
        %231 = vmatprep.subr.mxu0 0.0
        %232 = vmatpush1.xpose.msra.mxu0 %v220
        %233 = vmatprep.subr.mxu0 0.0
        %234 = vmatpush1.xpose.msra.mxu0 %v223
        %235 = vmatprep.subr.mxu0 0.0
        %236 = vmatpush1.xpose.msra.mxu0 %v226
        %237 = vmatprep.subr.mxu0 0.0
        %238 = vmatpush1.xpose.msra.mxu0 %v229
        %239 = vmatprep.subr.mxu0 0.0
        %240 = vmatpush1.xpose.msra.mxu0 0.0
        %241 = vmatprep.subr.mxu0 0.0
        %242 = vmatpush1.xpose.msra.mxu0 0.0
        %243 = vmatprep.subr.mxu0 0.0
        %244 = vmatpush1.xpose.msra.mxu0 0.0
        %245 = vmatprep.subr.mxu0 0.0
        %246 = vmatpush1.xpose.msra.mxu0 0.0
        %247 = vmatprep.subr.mxu0 0.0
        %248 = vmatpush1.xpose.msra.mxu0 0.0
        %249 = vmatprep.subr.mxu0 0.0
        %250 = vmatpush1.xpose.msra.mxu0 0.0
        %251 = vmatprep.subr.mxu0 0.0
        %252 = vmatpush1.xpose.msra.mxu0 0.0
        %253 = vmatprep.subr.mxu0 0.0
        %254 = vmatpush1.xpose.msra.mxu0 0.0
        %255 = vmatprep.subr.mxu0 0.0
        %256 = vmatpush1.xpose.msra.mxu0 0.0
        %257 = vmatprep.subr.mxu0 0.0
        %258 = vmatpush1.xpose.msra.mxu0 0.0
        %259 = vmatprep.subr.mxu0 0.0
        %260 = vmatpush1.xpose.msra.mxu0 0.0
        %261 = vmatprep.subr.mxu0 0.0
        %262 = vmatpush1.xpose.msra.mxu0 0.0
        %263 = vmatprep.subr.mxu0 0.0
        %264 = vmatpush1.xpose.msra.mxu0 0.0
        %265 = vmatprep.subr.mxu0 0.0
        %266 = vmatpush1.xpose.msra.mxu0 0.0
        %267 = vmatprep.subr.mxu0 0.0
        %268 = vmatpush1.xpose.msra.mxu0 0.0
        %269 = vmatprep.subr.mxu0 0.0
        %270 = vmatpush1.xpose.msra.mxu0 0.0
        %271 = vmatprep.subr.mxu0 0.0
        %272 = vmatpush1.xpose.msra.mxu0 0.0
        %273 = vmatprep.subr.mxu0 0.0
        %274 = vmatpush1.xpose.msra.mxu0 0.0
        %275 = vmatprep.subr.mxu0 0.0
        %276 = vmatpush1.xpose.msra.mxu0 0.0
        %277 = vmatprep.subr.mxu0 0.0
        %278 = vmatpush1.xpose.msra.mxu0 0.0
        %279 = vmatprep.subr.mxu0 0.0
        %280 = vmatpush1.xpose.msra.mxu0 0.0
        %281 = vmatprep.subr.mxu0 0.0
        %282 = vmatpush1.xpose.msra.mxu0 0.0
        %283 = vmatprep.subr.mxu0 0.0
        %284 = vmatpush1.xpose.msra.mxu0 0.0
        %285 = vmatprep.subr.mxu0 0.0
        %286 = vmatpush1.xpose.msra.mxu0 0.0
        %287 = vmatprep.subr.mxu0 0.0
        %288 = vmatpush1.xpose.msra.mxu0 0.0
        %289 = vmatprep.subr.mxu0 0.0
        %290 = vmatpush1.xpose.msra.mxu0 0.0
        %291 = vmatprep.subr.mxu0 0.0
        %292 = vmatpush1.xpose.msra.mxu0 0.0
        %293 = vmatprep.subr.mxu0 0.0
        %294 = vmatpush1.xpose.msra.mxu0 0.0
        %295 = vmatprep.mubr.f32.mxu0 0.0
        %296 = vmatmul.mubr.f32.gmra.mrb[0].mxu0 %v217
        %v297 = vpop.f32.mrb[0].mxu0
        %v298 = vadd.f32 0.0, %v297
        %v299 = vpop.f32.mrb[0].mxu0
        %300 = vdwg.mxu0
        %vm301 = vcmask 253952
        %302 = vst.msk [vmem:[#allocation2] sm:$0x1] %vm301, %v298
      $region32: #{lpdnet_forward.6} parent=27 // pred_fallthru
        _
      %v303 = vld [vmem:[%s186] sm:$0xff]
      %v304 = vld [vmem:[%s186 + $0x8] sm:$0xff]
      %v305 = vld [vmem:[%s186 + $0x10] sm:$0xff]
      %v306 = vld [vmem:[%s186 + $0x18] sm:$0xff]
      %v307 = vld [vmem:[%s192] sm:$0xff]
      %v308 = vld [vmem:[%s192 + $0x8] sm:$0xff]
      %v309 = vld [vmem:[%s192 + $0x10] sm:$0xff]
      %v310 = vld [vmem:[%s192 + $0x18] sm:$0xff]
      %vm311 = vcmask 523264
      %v313 = vsel %vm311, %v303, 0
      %v316 = vsel %vm311, %v304, 0
      %v319 = vsel %vm311, %v305, 0
      %v322 = vsel %vm311, %v306, 0
      %v325 = vsel %vm311, %v307, 0
      %v328 = vsel %vm311, %v308, 0
      %v331 = vsel %vm311, %v309, 0
      %v334 = vsel %vm311, %v310, 0
      %336 = vmatprep.subr.mxu0 0.0
      %337 = vmatpush1.xpose.msra.mxu0 %v325
      %338 = vmatprep.subr.mxu0 0.0
      %339 = vmatpush1.xpose.msra.mxu0 %v328
      %340 = vmatprep.subr.mxu0 0.0
      %341 = vmatpush1.xpose.msra.mxu0 %v331
      %342 = vmatprep.subr.mxu0 0.0
      %343 = vmatpush1.xpose.msra.mxu0 %v334
      %344 = vmatprep.subr.mxu0 0.0
      %345 = vmatpush1.xpose.msra.mxu0 0.0
      %346 = vmatprep.subr.mxu0 0.0
      %347 = vmatpush1.xpose.msra.mxu0 0.0
      %348 = vmatprep.subr.mxu0 0.0
      %349 = vmatpush1.xpose.msra.mxu0 0.0
      %350 = vmatprep.subr.mxu0 0.0
      %351 = vmatpush1.xpose.msra.mxu0 0.0
      %352 = vmatprep.subr.mxu0 0.0
      %353 = vmatpush1.xpose.msra.mxu0 0.0
      %354 = vmatprep.subr.mxu0 0.0
      %355 = vmatpush1.xpose.msra.mxu0 0.0
      %356 = vmatprep.subr.mxu0 0.0
      %357 = vmatpush1.xpose.msra.mxu0 0.0
      %358 = vmatprep.subr.mxu0 0.0
      %359 = vmatpush1.xpose.msra.mxu0 0.0
      %360 = vmatprep.subr.mxu0 0.0
      %361 = vmatpush1.xpose.msra.mxu0 0.0
      %362 = vmatprep.subr.mxu0 0.0
      %363 = vmatpush1.xpose.msra.mxu0 0.0
      %364 = vmatprep.subr.mxu0 0.0
      %365 = vmatpush1.xpose.msra.mxu0 0.0
      %366 = vmatprep.subr.mxu0 0.0
      %367 = vmatpush1.xpose.msra.mxu0 0.0
      %368 = vmatprep.subr.mxu0 0.0
      %369 = vmatpush1.xpose.msra.mxu0 0.0
      %370 = vmatprep.subr.mxu0 0.0
      %371 = vmatpush1.xpose.msra.mxu0 0.0
      %372 = vmatprep.subr.mxu0 0.0
      %373 = vmatpush1.xpose.msra.mxu0 0.0
      %374 = vmatprep.subr.mxu0 0.0
      %375 = vmatpush1.xpose.msra.mxu0 0.0
      %376 = vmatprep.subr.mxu0 0.0
      %377 = vmatpush1.xpose.msra.mxu0 0.0
      %378 = vmatprep.subr.mxu0 0.0
      %379 = vmatpush1.xpose.msra.mxu0 0.0
      %380 = vmatprep.subr.mxu0 0.0
      %381 = vmatpush1.xpose.msra.mxu0 0.0
      %382 = vmatprep.subr.mxu0 0.0
      %383 = vmatpush1.xpose.msra.mxu0 0.0
      %384 = vmatprep.subr.mxu0 0.0
      %385 = vmatpush1.xpose.msra.mxu0 0.0
      %386 = vmatprep.subr.mxu0 0.0
      %387 = vmatpush1.xpose.msra.mxu0 0.0
      %388 = vmatprep.subr.mxu0 0.0
      %389 = vmatpush1.xpose.msra.mxu0 0.0
      %390 = vmatprep.subr.mxu0 0.0
      %391 = vmatpush1.xpose.msra.mxu0 0.0
      %392 = vmatprep.subr.mxu0 0.0
      %393 = vmatpush1.xpose.msra.mxu0 0.0
      %394 = vmatprep.subr.mxu0 0.0
      %395 = vmatpush1.xpose.msra.mxu0 0.0
      %396 = vmatprep.subr.mxu0 0.0
      %397 = vmatpush1.xpose.msra.mxu0 0.0
      %398 = vmatprep.subr.mxu0 0.0
      %399 = vmatpush1.xpose.msra.mxu0 0.0
      %400 = vmatprep.mubr.f32.mxu0 0.0
      %401 = vmatmul.mubr.f32.gmra.mrb[0].mxu0 %v313
      %v402 = vpop.f32.mrb[0].mxu0
      %v403 = vadd.f32 0.0, %v402
      %v404 = vpop.f32.mrb[0].mxu0
      %405 = vmatprep.mubr.f32.mxu0 0.0
      %406 = vmatmul.mubr.f32.gmra.mrb[0].mxu0 %v316
      %v407 = vpop.f32.mrb[0].mxu0
      %v408 = vadd.f32 0.0, %v407
      %v409 = vpop.f32.mrb[0].mxu0
      %410 = vmatprep.mubr.f32.mxu0 0.0
      %411 = vmatmul.mubr.f32.gmra.mrb[0].mxu0 %v319
      %v412 = vpop.f32.mrb[0].mxu0
      %v413 = vadd.f32 0.0, %v412
      %v414 = vpop.f32.mrb[0].mxu0
      %415 = vmatprep.mubr.f32.mxu0 0.0
      %416 = vmatmul.mubr.f32.gmra.mrb[0].mxu0 %v322
      %v417 = vpop.f32.mrb[0].mxu0
      %v418 = vadd.f32 0.0, %v417
      %v419 = vpop.f32.mrb[0].mxu0
      %420 = vdwg.mxu0
      %v421 = vmul.f32 %v403, 2.0
      %v422 = vmul.f32 %v408, 2.0
      %v423 = vmul.f32 %v413, 2.0
      %v424 = vmul.f32 %v418, 2.0
      %v425 = vld [vmem:[#allocation2] sm:$0x1]
      %v427 = vlaneseq
      %v428 = vshrl.u32 %v427, 7
      %v429 = vsub.s32 0, %v428
      %v430 = vrot.slane %v425, %v429
      %v432 = vsub.f32 %v421, %v430
      %v433 = vsub.f32 %v422, %v430
      %v434 = vsub.f32 %v423, %v430
      %v435 = vsub.f32 %v424, %v430
      %v436 = vlaneseq
      %v437 = vand.u32 %v436, 127
      %v438 = vcvt.s32.f32 %v437
      loop: start=0, step=1, limit=20
      $region33: #{lpdnet_forward.6} parent=27 // loop_pre_header
        _
      $region34: #{lpdnet_forward.6} parent=27 // loop_header
        %s440 = sphi 0, %s444
        %p441 = scmp.ge.s32.totalorder %s440, 20
        %v445 = vphi %v432, %v497
        %v446 = vphi %v433, %v498
        %v447 = vphi %v434, %v499
        %v448 = vphi %v435, %v500
        %v449 = vphi 0.0, %v489
        %v450 = vphi 0.0, %v490
        %v451 = vphi 0.0, %v491
        %v452 = vphi 0.0, %v492
      $region35: #{lpdnet_forward.6} parent=27 // loop_header_branch
        %443 = sbr.rel (%p441) target = $region39
      $region36: #{lpdnet_forward.6} parent=27 // loop_body
        %vm453 = vcmask 261120
        %v454 = vsel %vm453, %v445, -inf
        %455 = vmax.xlane.f32.xlu0 %v454
        %v456 = vpop.xlane.xlu0 %455
        %v457 = vsel %vm453, %v446, -inf
        %458 = vmax.xlane.f32.xlu0 %v457
        %v459 = vpop.xlane.xlu0 %458
        %v460 = vsel %vm453, %v447, -inf
        %461 = vmax.xlane.f32.xlu0 %v460
        %v462 = vpop.xlane.xlu0 %461
        %v463 = vsel %vm453, %v448, -inf
        %464 = vmax.xlane.f32.xlu0 %v463
        %v465 = vpop.xlane.xlu0 %464
        %vm466 = vcmp.eq.f32.partialorder %v445, %v456
        %vm467 = vcmp.eq.f32.partialorder %v446, %v459
        %vm468 = vcmp.eq.f32.partialorder %v447, %v462
        %vm469 = vcmp.eq.f32.partialorder %v448, %v465
        %v470 = vsel %vm466, %v438, 32.0
        %v471 = vsel %vm467, %v438, 32.0
        %v472 = vsel %vm468, %v438, 32.0
        %v473 = vsel %vm469, %v438, 32.0
        %v474 = vsel %vm453, %v470, inf
        %475 = vmin.xlane.f32.xlu0 %v474
        %v476 = vpop.xlane.xlu0 %475
        %v477 = vsel %vm453, %v471, inf
        %478 = vmin.xlane.f32.xlu0 %v477
        %v479 = vpop.xlane.xlu0 %478
        %v480 = vsel %vm453, %v472, inf
        %481 = vmin.xlane.f32.xlu0 %v480
        %v482 = vpop.xlane.xlu0 %481
        %v483 = vsel %vm453, %v473, inf
        %484 = vmin.xlane.f32.xlu0 %v483
        %v485 = vpop.xlane.xlu0 %484
        %s486 = scvt.s32.f32 %s440
        %v487 = vstv %s486
        %vm488 = vcmp.eq.f32.partialorder %v438, %v487
        %v489 = vsel %vm488, %v476, %v449
        %v490 = vsel %vm488, %v479, %v450
        %v491 = vsel %vm488, %v482, %v451
        %v492 = vsel %vm488, %v485, %v452
        %vm493 = vcmp.eq.f32.partialorder %v438, %v476
        %vm494 = vcmp.eq.f32.partialorder %v438, %v479
        %vm495 = vcmp.eq.f32.partialorder %v438, %v482
        %vm496 = vcmp.eq.f32.partialorder %v438, %v485
        %v497 = vsel %vm493, -inf, %v445
        %v498 = vsel %vm494, -inf, %v446
        %v499 = vsel %vm495, -inf, %v447
        %v500 = vsel %vm496, -inf, %v448
      $region37: #{lpdnet_forward.6} parent=27 // loop_footer
        %s444 = sadd.s32 1, %s440
      $region38: #{lpdnet_forward.6} parent=27 // loop_footer_branch
        %439 = sbr.rel target = $region34
      $region39: #{lpdnet_forward.6} parent=27 // loop_exit
        _
      %v501 = vcvt.f32.s32.to.zero.pseudo %v449
      %v502 = vcvt.f32.s32.to.zero.pseudo %v450
      %v503 = vcvt.f32.s32.to.zero.pseudo %v451
      %v504 = vcvt.f32.s32.to.zero.pseudo %v452
      %vm505 = vcmask 162816
      %506 = vst.msk [vmem:[%s201] sm:$0xff] %vm505, %v501
      %507 = vst.msk [vmem:[%s201 + $0x8] sm:$0xff] %vm505, %v502
      %508 = vst.msk [vmem:[%s201 + $0x10] sm:$0xff] %vm505, %v503
      %509 = vst.msk [vmem:[%s201 + $0x18] sm:$0xff] %vm505, %v504
      %s510 = smul.u32 4, %s18
      %p511 = scmp.lt.s32.totalorder %s17, 1
      %s512 = scalar_select %p511, %s17, 1
      %p513 = scmp.lt.s32.totalorder %s510, 3
      %s514 = scalar_select %p513, %s510, 3
      %s515 = smul.addr %s512, 4
      %s516 = sadd.s32 %s514, %s515
      %s517 = smul.addr %s516, 8
      %s518 = scalar_lea.vmem %s2, %s517
      // Predicated region
      $region40: #{lpdnet_forward.6} parent=27 // pred_check
        %p519 = pneg %p99
      $region41: #{lpdnet_forward.6} parent=27 // pred_check_branch
        %521 = sbr.rel (%p519) target = $region43
      $region42: #{lpdnet_forward.6} parent=27 // pred_region
        %s522 = smul.u32 4, %s18
      $region43: #{lpdnet_forward.6} parent=27 // pred_fallthru
        _
    $region28: #{lpdnet_forward.6} parent=5 // pred_fallthru
      _
    %p523 = scmp.le.s32.totalorder 2, %s8
    // Predicated region
    $region44: #{lpdnet_forward.6} parent=5 // pred_check
      %p524 = pneg %p523
    $region45: #{lpdnet_forward.6} parent=5 // pred_check_branch
      %526 = sbr.rel (%p524) target = $region47
    $region46: #{lpdnet_forward.6} parent=5 // pred_region
      %s527 = ssub.s32 %s8, 2
      // Predicated region
      $region48: #{lpdnet_forward.6} parent=46 // pred_check
        %p528 = pneg %p105
      $region49: #{lpdnet_forward.6} parent=46 // pred_check_branch
        %530 = sbr.rel (%p528) target = $region51
      $region50: #{lpdnet_forward.6} parent=46 // pred_region
        %s531 = smul.u32 4, %s20
        %p532 = scmp.lt.s32.totalorder %s19, 1
        %s533 = scalar_select %p532, %s19, 1
        %p534 = scmp.lt.s32.totalorder %s531, 3
        %s535 = scalar_select %p534, %s531, 3
        %s536 = smul.addr %s533, 4
        %s537 = sadd.s32 %s535, %s536
        %s538 = smul.addr %s537, 8
        %s539 = scalar_lea.vmem %s2, %s538
      $region51: #{lpdnet_forward.6} parent=46 // pred_fallthru
        _
    $region47: #{lpdnet_forward.6} parent=5 // pred_fallthru
      _
  $region6: #{lpdnet_forward.6} parent=0 // loop_footer
    %s12 = sadd.s32 1, %s8
  $region7: #{lpdnet_forward.6} parent=0 // loop_footer_branch
    %7 = sbr.rel target = $region3
  $region8: #{lpdnet_forward.6} parent=0 // loop_exit
    _

// kernel: lpdnet_forward.7
$region0: #{lpdnet_forward.7}
  #allocation0 [shape = 'u32[]', space=smem, size = 0x4, offset = 0x4, fixed_abs, tag = 'smem constant byte address 0x4 - core index']
  #allocation1 [shape = 'u32[144,128]{1,0:T(1,128)}', space=vmem, size = 0x12000, scoped, tag = 'internal scratch']
  #allocation2 [shape = 'f32[32,128]{1,0:T(8,128)}', space=vmem, size = 0x4000, scoped, tag = 'scratch operand']
  #allocation3 [shape = 's32[1]{0}', space=sflag, size = 0x4, scoped, tag = 'scoped memory for lpdnet_forward.7']
  #allocation4 [shape = 'u8[32768]{0}', space=smem, size = 0x8000, scoped, tag = 'prefetched SMEM operand 0']
  %s0 = inlined_call_operand.vmem [shape: s32[64,20], index: 0, kind: input, shape index: {}]
  %s1 = inlined_call_operand.vmem [shape: f32[2,32,128], index: 1, kind: input, shape index: {}]
  %s2 = inlined_call_operand.vmem [shape: f32[2,32,128], index: 2, kind: input, shape index: {}]
  %s3 = inlined_call_operand.hbm [shape: f32[128,128], index: 3, kind: input, shape index: {}]
  %s4 = inlined_call_operand.hbm [shape: f32[1,128], index: 4, kind: input, shape index: {}]
  %s5 = inlined_call_operand.vmem [shape: f32[128,256], index: 5, kind: input, shape index: {}]
  %s6 = inlined_call_operand.vmem [shape: f32[128,256], index: 6, kind: input, shape index: {}]
  %s7 = inlined_call_operand.hbm [shape: f32[1,256], index: 7, kind: input, shape index: {}]
  %s8 = inlined_call_operand.vmem [shape: f32[2,32,128], index: 8, kind: output, shape index: {0}]
  %s9 = inlined_call_operand.vmem [shape: f32[2,32,128], index: 9, kind: output, shape index: {1}]
  %s10 = inlined_call_operand.vmem [shape: f32[2,32,256], index: 10, kind: output, shape index: {2}]
  %s11 = inlined_call_operand.vmem [shape: f32[2,32,256], index: 11, kind: output, shape index: {3}]
  %12 = xla_tuple %s8, %s9, %s10, %s11
  %s13 = sld [smem:[#allocation0]]
  $region111: #{lpdnet_forward.7} parent=0
    _
  %s15 = ssub.s32 1, %s13
  %s16 = scalar_select 0, %s15, %s13
  %s17 = sshll.u32 %s0, 4
  %s18 = int_to_ptr.vmem [resolvable:$true] %s17
  %20 = dma.vmem_to_smem %s18, 1024, [#allocation4], [#allocation3]
  %21 = dma.done [#allocation3], 1024
  %22 = sfence
  $region1: #{lpdnet_forward.7} parent=0
    #allocation5 [shape = 'u8[65536]{0}', space=vmem, size = 0x10000, scoped, tag = 'input window, operand 3, single buffered']
    #allocation6 [shape = 's32[2]{0}', space=sflag, size = 0x8, scoped, tag = 'scoped memory for lpdnet_forward.7']
    #allocation7 [shape = 'u8[512]{0}', space=vmem, size = 0x400, scoped, tag = 'input window, operand 4, single buffered']
    #allocation8 [shape = 's32[1]{0}', space=sflag, size = 0x4, scoped, tag = 'scoped memory for lpdnet_forward.7']
    #allocation9 [shape = 'u8[1024]{0}', space=vmem, size = 0x400, scoped, tag = 'input window, operand 7, single buffered']
    %23 = vsyncpa [#allocation6], 0
    %24 = vsyncpa [#allocation8], 0
    loop: start=0, step=1, limit=4
    $region2: #{lpdnet_forward.7} parent=1 // loop_pre_header
      _
    $region3: #{lpdnet_forward.7} parent=1 // loop_header
      %s26 = sphi 0, %s30
      %p27 = scmp.ge.s32.totalorder %s26, 4
      %s33 = sphi 0, %s45
      %s34 = sphi 0, %s41
      %s35 = sphi 0, %s33
      %s36 = sphi 0, %s34
      %s37 = sphi 0, %s35
      %s38 = sphi 0, %s36
      %s48 = sphi 0, %s50
      %s51 = sphi 0, %s48
      %s52 = sphi 0, %s51
      %s68 = sphi 0, %s52
      %s76 = sphi 0, %s78
      %s79 = sphi 0, %s76
      %s80 = sphi 0, %s79
      %s96 = sphi 0, %s80
      %s100 = sphi 0, %s100
      %s102 = sphi 0, %s100
      %s103 = sphi 0, %s102
      %s117 = sphi 0, %s103
      %s121 = sphi 0, %s121
      %s123 = sphi 0, %s121
      %s124 = sphi 0, %s123
      %s138 = sphi 0, %s124
      %s142 = sphi 0, %s142
      %s144 = sphi 0, %s142
      %s145 = sphi 0, %s144
      %s159 = sphi 0, %s145
      %s163 = sphi 0, %s163
      %s165 = sphi 0, %s163
      %s166 = sphi 0, %s165
      %s180 = sphi 0, %s166
      %s184 = sphi 0, %s184
      %s186 = sphi 0, %s184
      %s187 = sphi 0, %s186
      %s201 = sphi 0, %s187
      %s209 = sphi 0, %s211
      %s212 = sphi 0, %s209
      %s213 = sphi 0, %s212
      %s229 = sphi 0, %s213
      %s237 = sphi 0, %s239
      %s240 = sphi 0, %s237
      %s241 = sphi 0, %s240
      %s257 = sphi 0, %s241
      %s265 = sphi 0, %s267
      %s268 = sphi 0, %s265
      %s269 = sphi 0, %s268
      %s285 = sphi 0, %s269
      %s293 = sphi 0, %s295
      %s296 = sphi 0, %s293
      %s297 = sphi 0, %s296
      %s313 = sphi 0, %s297
    $region4: #{lpdnet_forward.7} parent=1 // loop_header_branch
      %29 = sbr.rel (%p27) target = $region8
    $region5: #{lpdnet_forward.7} parent=1 // loop_body
      %s31 = ssub.s32 %s26, 1
      %s32 = ssub.s32 %s26, 2
      %s39 = sadd.s32 1, %s34
      %p40 = scmp.ge.s32.totalorder %s39, 1
      %s41 = scalar_select %p40, 0, %s39
      %s42 = sadd.s32 1, %s33
      %s43 = scalar_select %p40, %s42, %s33
      %p44 = scmp.ge.s32.totalorder %s43, 2
      %s45 = scalar_select %p44, 0, %s43
      %s46 = ssub.s32 %s33, %s45
      %p47 = scmp.eq.s32.totalorder %s46, 0
      %s49 = sadd.s32 %s48, 1
      %s50 = scalar_select %p47, %s48, %s49
      %p53 = pneg %p47
      %p54 = scmp.eq.s32.totalorder %s26, 1
      %p55 = por %p53, %p54
      %p56 = scmp.ne.s32.totalorder %s48, %s51
      %p57 = scmp.eq.s32.totalorder %s26, 0
      %p58 = por %p56, %p57
      %p59 = scmp.ne.s32.totalorder %s48, %s51
      %p60 = scmp.eq.s32.totalorder %s31, 1
      %p61 = por %p59, %p60
      %p62 = scmp.ne.s32.totalorder %s51, %s52
      %p63 = scmp.eq.s32.totalorder %s31, 0
      %p64 = por %p62, %p63
      %p65 = scmp.ne.s32.totalorder %s51, %s52
      %p66 = scmp.eq.s32.totalorder %s32, 1
      %p67 = por %p65, %p66
      %p69 = scmp.ne.s32.totalorder %s52, %s68
      %p70 = scmp.eq.s32.totalorder %s32, 0
      %p71 = por %p69, %p70
      %s72 = ssub.s32 %s33, %s45
      %s73 = ssub.s32 %s34, %s41
      %s74 = sor.u32 %s72, %s73
      %p75 = scmp.eq.s32.totalorder %s74, 0
      %s77 = sadd.s32 %s76, 1
      %s78 = scalar_select %p75, %s76, %s77
      %p81 = pneg %p75
      %p82 = scmp.eq.s32.totalorder %s26, 1
      %p83 = por %p81, %p82
      %p84 = scmp.ne.s32.totalorder %s76, %s79
      %p85 = scmp.eq.s32.totalorder %s26, 0
      %p86 = por %p84, %p85
      %p87 = scmp.ne.s32.totalorder %s76, %s79
      %p88 = scmp.eq.s32.totalorder %s31, 1
      %p89 = por %p87, %p88
      %p90 = scmp.ne.s32.totalorder %s79, %s80
      %p91 = scmp.eq.s32.totalorder %s31, 0
      %p92 = por %p90, %p91
      %p93 = scmp.ne.s32.totalorder %s79, %s80
      %p94 = scmp.eq.s32.totalorder %s32, 1
      %p95 = por %p93, %p94
      %p97 = scmp.ne.s32.totalorder %s80, %s96
      %p98 = scmp.eq.s32.totalorder %s32, 0
      %p99 = por %p97, %p98
      %s101 = sadd.s32 %s100, 1
      %p104 = scmp.eq.s32.totalorder %s26, 1
      %p105 = scmp.ne.s32.totalorder %s100, %s102
      %p106 = scmp.eq.s32.totalorder %s26, 0
      %p107 = por %p105, %p106
      %p108 = scmp.ne.s32.totalorder %s100, %s102
      %p109 = scmp.eq.s32.totalorder %s31, 1
      %p110 = por %p108, %p109
      %p111 = scmp.ne.s32.totalorder %s102, %s103
      %p112 = scmp.eq.s32.totalorder %s31, 0
      %p113 = por %p111, %p112
      %p114 = scmp.ne.s32.totalorder %s102, %s103
      %p115 = scmp.eq.s32.totalorder %s32, 1
      %p116 = por %p114, %p115
      %p118 = scmp.ne.s32.totalorder %s103, %s117
      %p119 = scmp.eq.s32.totalorder %s32, 0
      %p120 = por %p118, %p119
      %s122 = sadd.s32 %s121, 1
      %p125 = scmp.eq.s32.totalorder %s26, 1
      %p126 = scmp.ne.s32.totalorder %s121, %s123
      %p127 = scmp.eq.s32.totalorder %s26, 0
      %p128 = por %p126, %p127
      %p129 = scmp.ne.s32.totalorder %s121, %s123
      %p130 = scmp.eq.s32.totalorder %s31, 1
      %p131 = por %p129, %p130
      %p132 = scmp.ne.s32.totalorder %s123, %s124
      %p133 = scmp.eq.s32.totalorder %s31, 0
      %p134 = por %p132, %p133
      %p135 = scmp.ne.s32.totalorder %s123, %s124
      %p136 = scmp.eq.s32.totalorder %s32, 1
      %p137 = por %p135, %p136
      %p139 = scmp.ne.s32.totalorder %s124, %s138
      %p140 = scmp.eq.s32.totalorder %s32, 0
      %p141 = por %p139, %p140
      %s143 = sadd.s32 %s142, 1
      %p146 = scmp.eq.s32.totalorder %s26, 1
      %p147 = scmp.ne.s32.totalorder %s142, %s144
      %p148 = scmp.eq.s32.totalorder %s26, 0
      %p149 = por %p147, %p148
      %p150 = scmp.ne.s32.totalorder %s142, %s144
      %p151 = scmp.eq.s32.totalorder %s31, 1
      %p152 = por %p150, %p151
      %p153 = scmp.ne.s32.totalorder %s144, %s145
      %p154 = scmp.eq.s32.totalorder %s31, 0
      %p155 = por %p153, %p154
      %p156 = scmp.ne.s32.totalorder %s144, %s145
      %p157 = scmp.eq.s32.totalorder %s32, 1
      %p158 = por %p156, %p157
      %p160 = scmp.ne.s32.totalorder %s145, %s159
      %p161 = scmp.eq.s32.totalorder %s32, 0
      %p162 = por %p160, %p161
      %s164 = sadd.s32 %s163, 1
      %p167 = scmp.eq.s32.totalorder %s26, 1
      %p168 = scmp.ne.s32.totalorder %s163, %s165
      %p169 = scmp.eq.s32.totalorder %s26, 0
      %p170 = por %p168, %p169
      %p171 = scmp.ne.s32.totalorder %s163, %s165
      %p172 = scmp.eq.s32.totalorder %s31, 1
      %p173 = por %p171, %p172
      %p174 = scmp.ne.s32.totalorder %s165, %s166
      %p175 = scmp.eq.s32.totalorder %s31, 0
      %p176 = por %p174, %p175
      %p177 = scmp.ne.s32.totalorder %s165, %s166
      %p178 = scmp.eq.s32.totalorder %s32, 1
      %p179 = por %p177, %p178
      %p181 = scmp.ne.s32.totalorder %s166, %s180
      %p182 = scmp.eq.s32.totalorder %s32, 0
      %p183 = por %p181, %p182
      %s185 = sadd.s32 %s184, 1
      %p188 = scmp.eq.s32.totalorder %s26, 1
      %p189 = scmp.ne.s32.totalorder %s184, %s186
      %p190 = scmp.eq.s32.totalorder %s26, 0
      %p191 = por %p189, %p190
      %p192 = scmp.ne.s32.totalorder %s184, %s186
      %p193 = scmp.eq.s32.totalorder %s31, 1
      %p194 = por %p192, %p193
      %p195 = scmp.ne.s32.totalorder %s186, %s187
      %p196 = scmp.eq.s32.totalorder %s31, 0
      %p197 = por %p195, %p196
      %p198 = scmp.ne.s32.totalorder %s186, %s187
      %p199 = scmp.eq.s32.totalorder %s32, 1
      %p200 = por %p198, %p199
      %p202 = scmp.ne.s32.totalorder %s187, %s201
      %p203 = scmp.eq.s32.totalorder %s32, 0
      %p204 = por %p202, %p203
      %s205 = ssub.s32 %s33, %s45
      %s206 = ssub.s32 %s34, %s41
      %s207 = sor.u32 %s205, %s206
      %p208 = scmp.eq.s32.totalorder %s207, 0
      %s210 = sadd.s32 %s209, 1
      %s211 = scalar_select %p208, %s209, %s210
      %p214 = pneg %p208
      %p215 = scmp.eq.s32.totalorder %s26, 1
      %p216 = por %p214, %p215
      %p217 = scmp.ne.s32.totalorder %s209, %s212
      %p218 = scmp.eq.s32.totalorder %s26, 0
      %p219 = por %p217, %p218
      %p220 = scmp.ne.s32.totalorder %s209, %s212
      %p221 = scmp.eq.s32.totalorder %s31, 1
      %p222 = por %p220, %p221
      %p223 = scmp.ne.s32.totalorder %s212, %s213
      %p224 = scmp.eq.s32.totalorder %s31, 0
      %p225 = por %p223, %p224
      %p226 = scmp.ne.s32.totalorder %s212, %s213
      %p227 = scmp.eq.s32.totalorder %s32, 1
      %p228 = por %p226, %p227
      %p230 = scmp.ne.s32.totalorder %s213, %s229
      %p231 = scmp.eq.s32.totalorder %s32, 0
      %p232 = por %p230, %p231
      %s233 = ssub.s32 %s33, %s45
      %s234 = ssub.s32 %s34, %s41
      %s235 = sor.u32 %s233, %s234
      %p236 = scmp.eq.s32.totalorder %s235, 0
      %s238 = sadd.s32 %s237, 1
      %s239 = scalar_select %p236, %s237, %s238
      %p242 = pneg %p236
      %p243 = scmp.eq.s32.totalorder %s26, 1
      %p244 = por %p242, %p243
      %p245 = scmp.ne.s32.totalorder %s237, %s240
      %p246 = scmp.eq.s32.totalorder %s26, 0
      %p247 = por %p245, %p246
      %p248 = scmp.ne.s32.totalorder %s237, %s240
      %p249 = scmp.eq.s32.totalorder %s31, 1
      %p250 = por %p248, %p249
      %p251 = scmp.ne.s32.totalorder %s240, %s241
      %p252 = scmp.eq.s32.totalorder %s31, 0
      %p253 = por %p251, %p252
      %p254 = scmp.ne.s32.totalorder %s240, %s241
      %p255 = scmp.eq.s32.totalorder %s32, 1
      %p256 = por %p254, %p255
      %p258 = scmp.ne.s32.totalorder %s241, %s257
      %p259 = scmp.eq.s32.totalorder %s32, 0
      %p260 = por %p258, %p259
      %s261 = ssub.s32 %s33, %s45
      %s262 = ssub.s32 %s34, %s41
      %s263 = sor.u32 %s261, %s262
      %p264 = scmp.eq.s32.totalorder %s263, 0
      %s266 = sadd.s32 %s265, 1
      %s267 = scalar_select %p264, %s265, %s266
      %p270 = pneg %p264
      %p271 = scmp.eq.s32.totalorder %s26, 1
      %p272 = por %p270, %p271
      %p273 = scmp.ne.s32.totalorder %s265, %s268
      %p274 = scmp.eq.s32.totalorder %s26, 0
      %p275 = por %p273, %p274
      %p276 = scmp.ne.s32.totalorder %s265, %s268
      %p277 = scmp.eq.s32.totalorder %s31, 1
      %p278 = por %p276, %p277
      %p279 = scmp.ne.s32.totalorder %s268, %s269
      %p280 = scmp.eq.s32.totalorder %s31, 0
      %p281 = por %p279, %p280
      %p282 = scmp.ne.s32.totalorder %s268, %s269
      %p283 = scmp.eq.s32.totalorder %s32, 1
      %p284 = por %p282, %p283
      %p286 = scmp.ne.s32.totalorder %s269, %s285
      %p287 = scmp.eq.s32.totalorder %s32, 0
      %p288 = por %p286, %p287
      %s289 = ssub.s32 %s33, %s45
      %s290 = ssub.s32 %s34, %s41
      %s291 = sor.u32 %s289, %s290
      %p292 = scmp.eq.s32.totalorder %s291, 0
      %s294 = sadd.s32 %s293, 1
      %s295 = scalar_select %p292, %s293, %s294
      %p298 = pneg %p292
      %p299 = scmp.eq.s32.totalorder %s26, 1
      %p300 = por %p298, %p299
      %p301 = scmp.ne.s32.totalorder %s293, %s296
      %p302 = scmp.eq.s32.totalorder %s26, 0
      %p303 = por %p301, %p302
      %p304 = scmp.ne.s32.totalorder %s293, %s296
      %p305 = scmp.eq.s32.totalorder %s31, 1
      %p306 = por %p304, %p305
      %p307 = scmp.ne.s32.totalorder %s296, %s297
      %p308 = scmp.eq.s32.totalorder %s31, 0
      %p309 = por %p307, %p308
      %p310 = scmp.ne.s32.totalorder %s296, %s297
      %p311 = scmp.eq.s32.totalorder %s32, 1
      %p312 = por %p310, %p311
      %p314 = scmp.ne.s32.totalorder %s297, %s313
      %p315 = scmp.eq.s32.totalorder %s32, 0
      %p316 = por %p314, %p315
      %p317 = scmp.le.s32.totalorder 1, %s26
      %p318 = scmp.lt.s32.totalorder %s26, 3
      %p319 = pnand %p317, %p318
      %p320 = pneg %p319
      // Predicated region
      $region9: #{lpdnet_forward.7} parent=5 // pred_check
        _
      $region10: #{lpdnet_forward.7} parent=5 // pred_check_branch
        %322 = sbr.rel (%p319) target = $region12
      $region11: #{lpdnet_forward.7} parent=5 // pred_region
        %s323 = ssub.s32 %s26, 1
        // Predicated region
        $region13: #{lpdnet_forward.7} parent=11 // pred_check
          %p324 = pneg %p113
        $region14: #{lpdnet_forward.7} parent=11 // pred_check_branch
          %326 = sbr.rel (%p324) target = $region16
        $region15: #{lpdnet_forward.7} parent=11 // pred_region
          %s328 = ssub.s32 2048, 2048
          %329 = vsyncadd [#allocation6], %s328
          %s330 = sshll.u32 [#allocation5], 4
          %s331 = int_to_ptr.vmem [resolvable:$true] %s330
          %336 = dma.hbm_to_vmem [thread:$0]  %s3, 2048, %s331, [#allocation6], 128, 128, 8
        $region16: #{lpdnet_forward.7} parent=11 // pred_fallthru
          _
        // Predicated region
        $region17: #{lpdnet_forward.7} parent=11 // pred_check
          %p337 = pneg %p134
        $region18: #{lpdnet_forward.7} parent=11 // pred_check_branch
          %339 = sbr.rel (%p337) target = $region20
        $region19: #{lpdnet_forward.7} parent=11 // pred_region
          %s341 = ssub.s32 16, 16
          %342 = vsyncadd [#allocation8], %s341
          %s344 = sshll.u32 [#allocation7], 4
          %s345 = int_to_ptr.vmem [resolvable:$true] %s344
          %347 = dma.hbm_to_vmem [thread:$0]  %s4, 16, %s345, [#allocation8]
        $region20: #{lpdnet_forward.7} parent=11 // pred_fallthru
          _
        // Predicated region
        $region21: #{lpdnet_forward.7} parent=11 // pred_check
          %p348 = pneg %p155
        $region22: #{lpdnet_forward.7} parent=11 // pred_check_branch
          %350 = sbr.rel (%p348) target = $region24
        $region23: #{lpdnet_forward.7} parent=11 // pred_region
          _
        $region24: #{lpdnet_forward.7} parent=11 // pred_fallthru
          _
        // Predicated region
        $region25: #{lpdnet_forward.7} parent=11 // pred_check
          %p351 = pneg %p176
        $region26: #{lpdnet_forward.7} parent=11 // pred_check_branch
          %353 = sbr.rel (%p351) target = $region28
        $region27: #{lpdnet_forward.7} parent=11 // pred_region
          _
        $region28: #{lpdnet_forward.7} parent=11 // pred_fallthru
          _
        // Predicated region
        $region29: #{lpdnet_forward.7} parent=11 // pred_check
          %p354 = pneg %p197
        $region30: #{lpdnet_forward.7} parent=11 // pred_check_branch
          %356 = sbr.rel (%p354) target = $region32
        $region31: #{lpdnet_forward.7} parent=11 // pred_region
          %s358 = ssub.s32 32, 32
          %359 = vsyncadd [#allocation8], %s358
          %s361 = sshll.u32 [#allocation9], 4
          %s362 = int_to_ptr.vmem [resolvable:$true] %s361
          %364 = dma.hbm_to_vmem [thread:$0]  %s7, 32, %s362, [#allocation8]
        $region32: #{lpdnet_forward.7} parent=11 // pred_fallthru
          _
      $region12: #{lpdnet_forward.7} parent=5 // pred_fallthru
        _
      %p365 = scmp.lt.s32.totalorder %s26, 2
      // Predicated region
      $region33: #{lpdnet_forward.7} parent=5 // pred_check
        %p366 = pneg %p365
      $region34: #{lpdnet_forward.7} parent=5 // pred_check_branch
        %368 = sbr.rel (%p366) target = $region36
      $region35: #{lpdnet_forward.7} parent=5 // pred_region
        // Predicated region
        $region37: #{lpdnet_forward.7} parent=35 // pred_check
          %p369 = pneg %p58
        $region38: #{lpdnet_forward.7} parent=35 // pred_check_branch
          %371 = sbr.rel (%p369) target = $region40
        $region39: #{lpdnet_forward.7} parent=35 // pred_region
          %p372 = scmp.lt.s32.totalorder %s33, 1
          %s373 = scalar_select %p372, %s33, 1
          %s374 = smul.addr %s373, 4
          %s375 = smul.addr %s374, 8
          %s376 = scalar_lea.vmem %s1, %s375
        $region40: #{lpdnet_forward.7} parent=35 // pred_fallthru
          _
        // Predicated region
        $region41: #{lpdnet_forward.7} parent=35 // pred_check
          %p377 = pneg %p86
        $region42: #{lpdnet_forward.7} parent=35 // pred_check_branch
          %379 = sbr.rel (%p377) target = $region44
        $region43: #{lpdnet_forward.7} parent=35 // pred_region
          %s380 = smul.u32 4, %s34
          %p381 = scmp.lt.s32.totalorder %s33, 1
          %s382 = scalar_select %p381, %s33, 1
          %p383 = scmp.lt.s32.totalorder %s380, 3
          %s384 = scalar_select %p383, %s380, 3
          %s385 = smul.addr %s382, 4
          %s386 = sadd.s32 %s384, %s385
          %s387 = smul.addr %s386, 8
          %s388 = scalar_lea.vmem %s2, %s387
          %s389 = smul.u32 4, %s34
        $region44: #{lpdnet_forward.7} parent=35 // pred_fallthru
          _
      $region36: #{lpdnet_forward.7} parent=5 // pred_fallthru
        _
      %p390 = scmp.le.s32.totalorder 1, %s26
      %p391 = scmp.lt.s32.totalorder %s26, 3
      %p392 = pnand %p390, %p391
      %p393 = pneg %p392
      // Predicated region
      $region45: #{lpdnet_forward.7} parent=5 // pred_check
        _
      $region46: #{lpdnet_forward.7} parent=5 // pred_check_branch
        %395 = sbr.rel (%p392) target = $region48
      $region47: #{lpdnet_forward.7} parent=5 // pred_region
        %s396 = ssub.s32 %s26, 1
        // Predicated region
        $region49: #{lpdnet_forward.7} parent=47 // pred_check
          %p397 = pneg %p113
        $region50: #{lpdnet_forward.7} parent=47 // pred_check_branch
          %399 = sbr.rel (%p397) target = $region52
        $region51: #{lpdnet_forward.7} parent=47 // pred_region
          %400 = dma.done [#allocation6], 2048
        $region52: #{lpdnet_forward.7} parent=47 // pred_fallthru
          _
        // Predicated region
        $region53: #{lpdnet_forward.7} parent=47 // pred_check
          %p401 = pneg %p134
        $region54: #{lpdnet_forward.7} parent=47 // pred_check_branch
          %403 = sbr.rel (%p401) target = $region56
        $region55: #{lpdnet_forward.7} parent=47 // pred_region
          %404 = dma.done [#allocation8], 16
        $region56: #{lpdnet_forward.7} parent=47 // pred_fallthru
          _
        // Predicated region
        $region57: #{lpdnet_forward.7} parent=47 // pred_check
          %p405 = pneg %p197
        $region58: #{lpdnet_forward.7} parent=47 // pred_check_branch
          %407 = sbr.rel (%p405) target = $region60
        $region59: #{lpdnet_forward.7} parent=47 // pred_region
          %408 = dma.done [#allocation8], 32
        $region60: #{lpdnet_forward.7} parent=47 // pred_fallthru
          _
        %p409 = scmp.lt.s32.totalorder %s35, 1
        %s410 = scalar_select %p409, %s35, 1
        %s411 = smul.addr %s410, 4
        %s412 = smul.addr %s411, 8
        %s413 = scalar_lea.vmem %s1, %s412
        %p414 = pneg %p64
        %p415 = pneg %p61
        %s416 = smul.u32 4, %s36
        %p417 = scmp.lt.s32.totalorder %s35, 1
        %s418 = scalar_select %p417, %s35, 1
        %p419 = scmp.lt.s32.totalorder %s416, 3
        %s420 = scalar_select %p419, %s416, 3
        %s421 = smul.addr %s418, 4
        %s422 = sadd.s32 %s420, %s421
        %s423 = smul.addr %s422, 8
        %s424 = scalar_lea.vmem %s2, %s423
        %p425 = pneg %p92
        %p426 = pneg %p89
        %p427 = pneg %p113
        %p428 = pneg %p110
        %p429 = pneg %p134
        %p430 = pneg %p131
        %p431 = pneg %p155
        %p432 = pneg %p152
        %p433 = pneg %p176
        %p434 = pneg %p173
        %p435 = pneg %p197
        %p436 = pneg %p194
        %p437 = pneg %p225
        %p438 = pneg %p222
        %s439 = smul.u32 4, %s36
        %p440 = scmp.lt.s32.totalorder %s35, 1
        %s441 = scalar_select %p440, %s35, 1
        %p442 = scmp.lt.s32.totalorder %s439, 3
        %s443 = scalar_select %p442, %s439, 3
        %s444 = smul.addr %s441, 4
        %s445 = sadd.s32 %s443, %s444
        %s446 = smul.addr %s445, 8
        %s447 = scalar_lea.vmem %s8, %s446
        %p448 = pneg %p253
        %p449 = pneg %p250
        %s450 = smul.u32 4, %s36
        %p451 = scmp.lt.s32.totalorder %s35, 1
        %s452 = scalar_select %p451, %s35, 1
        %p453 = scmp.lt.s32.totalorder %s450, 3
        %s454 = scalar_select %p453, %s450, 3
        %s455 = smul.addr %s452, 4
        %s456 = sadd.s32 %s454, %s455
        %s457 = smul.addr %s456, 8
        %s458 = scalar_lea.vmem %s9, %s457
        %p459 = pneg %p281
        %p460 = pneg %p278
        %s461 = smul.u32 4, %s36
        %p462 = scmp.lt.s32.totalorder %s35, 1
        %s463 = scalar_select %p462, %s35, 1
        %p464 = scmp.lt.s32.totalorder %s461, 3
        %s465 = scalar_select %p464, %s461, 3
        %s466 = smul.addr %s465, 2
        %s467 = smul.addr %s463, 8
        %s468 = sadd.s32 %s466, %s467
        %s469 = smul.addr %s468, 8
        %s470 = scalar_lea.vmem %s10, %s469
        %p471 = pneg %p309
        %p472 = pneg %p306
        %s473 = smul.u32 4, %s36
        %p474 = scmp.lt.s32.totalorder %s35, 1
        %s475 = scalar_select %p474, %s35, 1
        %p476 = scmp.lt.s32.totalorder %s473, 3
        %s477 = scalar_select %p476, %s473, 3
        %s478 = smul.addr %s477, 2
        %s479 = smul.addr %s475, 8
        %s480 = sadd.s32 %s478, %s479
        %s481 = smul.addr %s480, 8
        %s482 = scalar_lea.vmem %s11, %s481
        %p483 = scmp.lt.s32.totalorder %s35, 1
        %s484 = scalar_select %p483, %s35, 1
        %s485 = smul.addr %s484, 4
        %s486 = smul.addr %s485, 8
        %s487 = scalar_lea.vmem %s1, %s486
        %s488 = smul.u32 4, %s36
        %p489 = scmp.lt.s32.totalorder %s35, 1
        %s490 = scalar_select %p489, %s35, 1
        %p491 = scmp.lt.s32.totalorder %s488, 3
        %s492 = scalar_select %p491, %s488, 3
        %s493 = smul.addr %s490, 4
        %s494 = sadd.s32 %s492, %s493
        %s495 = smul.addr %s494, 8
        %s496 = scalar_lea.vmem %s2, %s495
        %s497 = smul.u32 4, %s36
        %s498 = smul.u32 4, %s36
        %p499 = scmp.lt.s32.totalorder %s35, 1
        %s500 = scalar_select %p499, %s35, 1
        %p501 = scmp.lt.s32.totalorder %s498, 3
        %s502 = scalar_select %p501, %s498, 3
        %s503 = smul.addr %s500, 4
        %s504 = sadd.s32 %s502, %s503
        %s505 = smul.addr %s504, 8
        %s506 = scalar_lea.vmem %s8, %s505
        %s507 = smul.u32 4, %s36
        %s508 = smul.u32 4, %s36
        %p509 = scmp.lt.s32.totalorder %s35, 1
        %s510 = scalar_select %p509, %s35, 1
        %p511 = scmp.lt.s32.totalorder %s508, 3
        %s512 = scalar_select %p511, %s508, 3
        %s513 = smul.addr %s510, 4
        %s514 = sadd.s32 %s512, %s513
        %s515 = smul.addr %s514, 8
        %s516 = scalar_lea.vmem %s9, %s515
        %s517 = smul.u32 4, %s36
        %s518 = smul.u32 4, %s36
        %p519 = scmp.lt.s32.totalorder %s35, 1
        %s520 = scalar_select %p519, %s35, 1
        %p521 = scmp.lt.s32.totalorder %s518, 3
        %s522 = scalar_select %p521, %s518, 3
        %s523 = smul.addr %s522, 2
        %s524 = smul.addr %s520, 8
        %s525 = sadd.s32 %s523, %s524
        %s526 = smul.addr %s525, 8
        %s527 = scalar_lea.vmem %s10, %s526
        %s528 = smul.u32 4, %s36
        %s529 = smul.u32 4, %s36
        %p530 = scmp.lt.s32.totalorder %s35, 1
        %s531 = scalar_select %p530, %s35, 1
        %p532 = scmp.lt.s32.totalorder %s529, 3
        %s533 = scalar_select %p532, %s529, 3
        %s534 = smul.addr %s533, 2
        %s535 = smul.addr %s531, 8
        %s536 = sadd.s32 %s534, %s535
        %s537 = smul.addr %s536, 8
        %s538 = scalar_lea.vmem %s11, %s537
        %s539 = smul.u32 4, %s36
        %s540 = smul.u32 %s35, 32
        %s541 = smul.u32 %s36, 32
        %s542 = sadd.s32 %s540, %s541
        %v543 = vld [vmem:[%s496] sm:$0xff]
        %v544 = vld [vmem:[%s496 + $0x8] sm:$0xff]
        %v545 = vld [vmem:[%s496 + $0x10] sm:$0xff]
        %v546 = vld [vmem:[%s496 + $0x18] sm:$0xff]
        loop: start=0, step=1, limit=20
        $region61: #{lpdnet_forward.7} parent=47 // loop_pre_header
          _
        $region62: #{lpdnet_forward.7} parent=47 // loop_header
          %s548 = sphi 0, %s552
          %p549 = scmp.ge.s32.totalorder %s548, 20
          %v553 = vphi 0.0, %v704
          %v554 = vphi 0.0, %v705
          %v555 = vphi 0.0, %v706
          %v556 = vphi 0.0, %v707
          %v557 = vphi 0.0, %v708
          %v558 = vphi 0.0, %v709
          %v559 = vphi 0.0, %v710
          %v560 = vphi 0.0, %v711
        $region63: #{lpdnet_forward.7} parent=47 // loop_header_branch
          %551 = sbr.rel (%p549) target = $region67
        $region64: #{lpdnet_forward.7} parent=47 // loop_body
          loop: start=0, step=1, limit=32
          $region68: #{lpdnet_forward.7} parent=64 // loop_pre_header
            _
          $region69: #{lpdnet_forward.7} parent=64 // loop_header
            %s562 = sphi 0, %s566
            %p563 = scmp.ge.s32.totalorder %s562, 32
          $region70: #{lpdnet_forward.7} parent=64 // loop_header_branch
            %565 = sbr.rel (%p563) target = $region74
          $region71: #{lpdnet_forward.7} parent=64 // loop_body
            %s567 = sadd.s32 %s542, %s562
            %s568 = sshra.s32 %s548, 7
            %s569 = sand.u32 %s548, 127
            %s570 = sadd.s32 %s568, %s567
            %s571 = smul.u32 %s570, 128
            %s572 = sshra.s32 %s548, 7
            %s573 = sand.u32 %s548, 127
            %s574 = sadd.s32 %s571, %s573
            %s575 = sld [smem:[#allocation4 + %s574]]
            %s576 = scalar_lea.vmem %s487, %s575
            %v577 = vld [vmem:[%s576] sm:$0x1]
            %s578 = scalar_lea.vmem [#allocation2], %s562
            %579 = vst [vmem:[%s578] sm:$0x1] %v577
          $region72: #{lpdnet_forward.7} parent=64 // loop_footer
            %s566 = sadd.s32 1, %s562
          $region73: #{lpdnet_forward.7} parent=64 // loop_footer_branch
            %561 = sbr.rel target = $region69
          $region74: #{lpdnet_forward.7} parent=64 // loop_exit
            _
          %v580 = vld [vmem:[#allocation2] sm:$0xff]
          %v581 = vld [vmem:[#allocation2 + $0x8] sm:$0xff]
          %v582 = vld [vmem:[#allocation2 + $0x10] sm:$0xff]
          %v583 = vld [vmem:[#allocation2 + $0x18] sm:$0xff]
          %v584 = vadd.f32 %v580, %v543
          %v585 = vadd.f32 %v581, %v544
          %v586 = vadd.f32 %v582, %v545
          %v587 = vadd.f32 %v583, %v546
          %v588 = vmax.f32 %v584, 0.0
          %v589 = vmax.f32 %v585, 0.0
          %v590 = vmax.f32 %v586, 0.0
          %v591 = vmax.f32 %v587, 0.0
          %v592 = vld [vmem:[#allocation5] sm:$0xff]
          %v593 = vld [vmem:[#allocation5 + $0x8] sm:$0xff]
          %v594 = vld [vmem:[#allocation5 + $0x10] sm:$0xff]
          %v595 = vld [vmem:[#allocation5 + $0x18] sm:$0xff]
          %v596 = vld [vmem:[#allocation5 + $0x20] sm:$0xff]
          %v597 = vld [vmem:[#allocation5 + $0x28] sm:$0xff]
          %v598 = vld [vmem:[#allocation5 + $0x30] sm:$0xff]
          %v599 = vld [vmem:[#allocation5 + $0x38] sm:$0xff]
          %v600 = vld [vmem:[#allocation5 + $0x40] sm:$0xff]
          %v601 = vld [vmem:[#allocation5 + $0x48] sm:$0xff]
          %v602 = vld [vmem:[#allocation5 + $0x50] sm:$0xff]
          %v603 = vld [vmem:[#allocation5 + $0x58] sm:$0xff]
          %v604 = vld [vmem:[#allocation5 + $0x60] sm:$0xff]
          %v605 = vld [vmem:[#allocation5 + $0x68] sm:$0xff]
          %v606 = vld [vmem:[#allocation5 + $0x70] sm:$0xff]
          %v607 = vld [vmem:[#allocation5 + $0x78] sm:$0xff]
          %v608 = vld [vmem:[#allocation7] sm:$0x1]
          %v610 = vlaneseq
          %v611 = vshrl.u32 %v610, 7
          %v612 = vsub.s32 0, %v611
          %v613 = vrot.slane %v608, %v612
          %615 = vmatprep.subr.mxu0 0.0
          %616 = vmatpush1.msra.mxu0 %v592
          %617 = vmatprep.subr.mxu0 0.0
          %618 = vmatpush1.msra.mxu0 %v593
          %619 = vmatprep.subr.mxu0 0.0
          %620 = vmatpush1.msra.mxu0 %v594
          %621 = vmatprep.subr.mxu0 0.0
          %622 = vmatpush1.msra.mxu0 %v595
          %623 = vmatprep.subr.mxu0 0.0
          %624 = vmatpush1.msra.mxu0 %v596
          %625 = vmatprep.subr.mxu0 0.0
          %626 = vmatpush1.msra.mxu0 %v597
          %627 = vmatprep.subr.mxu0 0.0
          %628 = vmatpush1.msra.mxu0 %v598
          %629 = vmatprep.subr.mxu0 0.0
          %630 = vmatpush1.msra.mxu0 %v599
          %631 = vmatprep.subr.mxu0 0.0
          %632 = vmatpush1.msra.mxu0 %v600
          %633 = vmatprep.subr.mxu0 0.0
          %634 = vmatpush1.msra.mxu0 %v601
          %635 = vmatprep.subr.mxu0 0.0
          %636 = vmatpush1.msra.mxu0 %v602
          %637 = vmatprep.subr.mxu0 0.0
          %638 = vmatpush1.msra.mxu0 %v603
          %639 = vmatprep.subr.mxu0 0.0
          %640 = vmatpush1.msra.mxu0 %v604
          %641 = vmatprep.subr.mxu0 0.0
          %642 = vmatpush1.msra.mxu0 %v605
          %643 = vmatprep.subr.mxu0 0.0
          %644 = vmatpush1.msra.mxu0 %v606
          %645 = vmatprep.subr.mxu0 0.0
          %646 = vmatpush1.msra.mxu0 %v607
          %647 = vmatprep.subr.mxu0 0.0
          %648 = vmatpush1.msra.mxu0 0.0
          %649 = vmatprep.subr.mxu0 0.0
          %650 = vmatpush1.msra.mxu0 0.0
          %651 = vmatprep.subr.mxu0 0.0
          %652 = vmatpush1.msra.mxu0 0.0
          %653 = vmatprep.subr.mxu0 0.0
          %654 = vmatpush1.msra.mxu0 0.0
          %655 = vmatprep.subr.mxu0 0.0
          %656 = vmatpush1.msra.mxu0 0.0
          %657 = vmatprep.subr.mxu0 0.0
          %658 = vmatpush1.msra.mxu0 0.0
          %659 = vmatprep.subr.mxu0 0.0
          %660 = vmatpush1.msra.mxu0 0.0
          %661 = vmatprep.subr.mxu0 0.0
          %662 = vmatpush1.msra.mxu0 0.0
          %663 = vmatprep.subr.mxu0 0.0
          %664 = vmatpush1.msra.mxu0 0.0
          %665 = vmatprep.subr.mxu0 0.0
          %666 = vmatpush1.msra.mxu0 0.0
          %667 = vmatprep.subr.mxu0 0.0
          %668 = vmatpush1.msra.mxu0 0.0
          %669 = vmatprep.subr.mxu0 0.0
          %670 = vmatpush1.msra.mxu0 0.0
          %671 = vmatprep.subr.mxu0 0.0
          %672 = vmatpush1.msra.mxu0 0.0
          %673 = vmatprep.subr.mxu0 0.0
          %674 = vmatpush1.msra.mxu0 0.0
          %675 = vmatprep.subr.mxu0 0.0
          %676 = vmatpush1.msra.mxu0 0.0
          %677 = vmatprep.subr.mxu0 0.0
          %678 = vmatpush1.msra.mxu0 0.0
          %679 = vmatprep.mubr.f32.mxu0 0.0
          %680 = vmatmul.mubr.f32.gmra.mrb[0].mxu0 %v588
          %v681 = vpop.f32.mrb[0].mxu0
          %v682 = vadd.f32 %v613, %v681
          %v683 = vpop.f32.mrb[0].mxu0
          %684 = vmatprep.mubr.f32.mxu0 0.0
          %685 = vmatmul.mubr.f32.gmra.mrb[0].mxu0 %v589
          %v686 = vpop.f32.mrb[0].mxu0
          %v687 = vadd.f32 %v613, %v686
          %v688 = vpop.f32.mrb[0].mxu0
          %689 = vmatprep.mubr.f32.mxu0 0.0
          %690 = vmatmul.mubr.f32.gmra.mrb[0].mxu0 %v590
          %v691 = vpop.f32.mrb[0].mxu0
          %v692 = vadd.f32 %v613, %v691
          %v693 = vpop.f32.mrb[0].mxu0
          %694 = vmatprep.mubr.f32.mxu0 0.0
          %695 = vmatmul.mubr.f32.gmra.mrb[0].mxu0 %v591
          %v696 = vpop.f32.mrb[0].mxu0
          %v697 = vadd.f32 %v613, %v696
          %v698 = vpop.f32.mrb[0].mxu0
          %699 = vdwg.mxu0
          %v700 = vmax.f32 %v682, 0.0
          %v701 = vmax.f32 %v687, 0.0
          %v702 = vmax.f32 %v692, 0.0
          %v703 = vmax.f32 %v697, 0.0
          %v704 = vmax.f32 %v553, %v588
          %v705 = vmax.f32 %v554, %v589
          %v706 = vmax.f32 %v555, %v590
          %v707 = vmax.f32 %v556, %v591
          %v708 = vmax.f32 %v557, %v700
          %v709 = vmax.f32 %v558, %v701
          %v710 = vmax.f32 %v559, %v702
          %v711 = vmax.f32 %v560, %v703
        $region65: #{lpdnet_forward.7} parent=47 // loop_footer
          %s552 = sadd.s32 1, %s548
        $region66: #{lpdnet_forward.7} parent=47 // loop_footer_branch
          %547 = sbr.rel target = $region62
        $region67: #{lpdnet_forward.7} parent=47 // loop_exit
          _
        %712 = vst [vmem:[%s506] sm:$0xff] %v553
        %713 = vst [vmem:[%s506 + $0x8] sm:$0xff] %v554
        %714 = vst [vmem:[%s506 + $0x10] sm:$0xff] %v555
        %715 = vst [vmem:[%s506 + $0x18] sm:$0xff] %v556
        %716 = vst [vmem:[%s516] sm:$0xff] %v557
        %717 = vst [vmem:[%s516 + $0x8] sm:$0xff] %v558
        %718 = vst [vmem:[%s516 + $0x10] sm:$0xff] %v559
        %719 = vst [vmem:[%s516 + $0x18] sm:$0xff] %v560
        %v720 = vld [vmem:[%s5] sm:$0xff]
        %v721 = vld [vmem:[%s5 + $0x8] sm:$0xff]
        %v722 = vld [vmem:[%s5 + $0x10] sm:$0xff]
        %v723 = vld [vmem:[%s5 + $0x18] sm:$0xff]
        %v724 = vld [vmem:[%s5 + $0x20] sm:$0xff]
        %v725 = vld [vmem:[%s5 + $0x28] sm:$0xff]
        %v726 = vld [vmem:[%s5 + $0x30] sm:$0xff]
        %v727 = vld [vmem:[%s5 + $0x38] sm:$0xff]
        %v728 = vld [vmem:[%s5 + $0x40] sm:$0xff]
        %v729 = vld [vmem:[%s5 + $0x48] sm:$0xff]
        %v730 = vld [vmem:[%s5 + $0x50] sm:$0xff]
        %v731 = vld [vmem:[%s5 + $0x58] sm:$0xff]
        %v732 = vld [vmem:[%s5 + $0x60] sm:$0xff]
        %v733 = vld [vmem:[%s5 + $0x68] sm:$0xff]
        %v734 = vld [vmem:[%s5 + $0x70] sm:$0xff]
        %v735 = vld [vmem:[%s5 + $0x78] sm:$0xff]
        %v736 = vld [vmem:[%s5 + $0x80] sm:$0xff]
        %v737 = vld [vmem:[%s5 + $0x88] sm:$0xff]
        %v738 = vld [vmem:[%s5 + $0x90] sm:$0xff]
        %v739 = vld [vmem:[%s5 + $0x98] sm:$0xff]
        %v740 = vld [vmem:[%s5 + $0xa0] sm:$0xff]
        %v741 = vld [vmem:[%s5 + $0xa8] sm:$0xff]
        %v742 = vld [vmem:[%s5 + $0xb0] sm:$0xff]
        %v743 = vld [vmem:[%s5 + $0xb8] sm:$0xff]
        %v744 = vld [vmem:[%s5 + $0xc0] sm:$0xff]
        %v745 = vld [vmem:[%s5 + $0xc8] sm:$0xff]
        %v746 = vld [vmem:[%s5 + $0xd0] sm:$0xff]
        %v747 = vld [vmem:[%s5 + $0xd8] sm:$0xff]
        %v748 = vld [vmem:[%s5 + $0xe0] sm:$0xff]
        %v749 = vld [vmem:[%s5 + $0xe8] sm:$0xff]
        %v750 = vld [vmem:[%s5 + $0xf0] sm:$0xff]
        %v751 = vld [vmem:[%s5 + $0xf8] sm:$0xff]
        %752 = vmatprep.subr.mxu0 %v721
        %753 = vmatpush1.msra.mxu0 %v720
        %754 = vmatprep.subr.mxu0 %v723
        %755 = vmatpush1.msra.mxu0 %v722
        %756 = vmatprep.subr.mxu0 %v725
        %757 = vmatpush1.msra.mxu0 %v724
        %758 = vmatprep.subr.mxu0 %v727
        %759 = vmatpush1.msra.mxu0 %v726
        %760 = vmatprep.subr.mxu0 %v729
        %761 = vmatpush1.msra.mxu0 %v728
        %762 = vmatprep.subr.mxu0 %v731
        %763 = vmatpush1.msra.mxu0 %v730
        %764 = vmatprep.subr.mxu0 %v733
        %765 = vmatpush1.msra.mxu0 %v732
        %766 = vmatprep.subr.mxu0 %v735
        %767 = vmatpush1.msra.mxu0 %v734
        %768 = vmatprep.subr.mxu0 %v737
        %769 = vmatpush1.msra.mxu0 %v736
        %770 = vmatprep.subr.mxu0 %v739
        %771 = vmatpush1.msra.mxu0 %v738
        %772 = vmatprep.subr.mxu0 %v741
        %773 = vmatpush1.msra.mxu0 %v740
        %774 = vmatprep.subr.mxu0 %v743
        %775 = vmatpush1.msra.mxu0 %v742
        %776 = vmatprep.subr.mxu0 %v745
        %777 = vmatpush1.msra.mxu0 %v744
        %778 = vmatprep.subr.mxu0 %v747
        %779 = vmatpush1.msra.mxu0 %v746
        %780 = vmatprep.subr.mxu0 %v749
        %781 = vmatpush1.msra.mxu0 %v748
        %782 = vmatprep.subr.mxu0 %v751
        %783 = vmatpush1.msra.mxu0 %v750
        %784 = vmatprep.subr.mxu0 0.0
        %785 = vmatpush1.msra.mxu0 0.0
        %786 = vmatprep.subr.mxu0 0.0
        %787 = vmatpush1.msra.mxu0 0.0
        %788 = vmatprep.subr.mxu0 0.0
        %789 = vmatpush1.msra.mxu0 0.0
        %790 = vmatprep.subr.mxu0 0.0
        %791 = vmatpush1.msra.mxu0 0.0
        %792 = vmatprep.subr.mxu0 0.0
        %793 = vmatpush1.msra.mxu0 0.0
        %794 = vmatprep.subr.mxu0 0.0
        %795 = vmatpush1.msra.mxu0 0.0
        %796 = vmatprep.subr.mxu0 0.0
        %797 = vmatpush1.msra.mxu0 0.0
        %798 = vmatprep.subr.mxu0 0.0
        %799 = vmatpush1.msra.mxu0 0.0
        %800 = vmatprep.subr.mxu0 0.0
        %801 = vmatpush1.msra.mxu0 0.0
        %802 = vmatprep.subr.mxu0 0.0
        %803 = vmatpush1.msra.mxu0 0.0
        %804 = vmatprep.subr.mxu0 0.0
        %805 = vmatpush1.msra.mxu0 0.0
        %806 = vmatprep.subr.mxu0 0.0
        %807 = vmatpush1.msra.mxu0 0.0
        %808 = vmatprep.subr.mxu0 0.0
        %809 = vmatpush1.msra.mxu0 0.0
        %810 = vmatprep.subr.mxu0 0.0
        %811 = vmatpush1.msra.mxu0 0.0
        %812 = vmatprep.subr.mxu0 0.0
        %813 = vmatpush1.msra.mxu0 0.0
        %814 = vmatprep.subr.mxu0 0.0
        %815 = vmatpush1.msra.mxu0 0.0
        %816 = vmatprep.mubr.f32.mxu0 0.0
        %817 = vmatmul.mubr.f32.gmra.mrb[0].mxu0 %v557
        %v818 = vpop.f32.mrb[0].mxu0
        %v819 = vadd.f32 0.0, %v818
        %v820 = vpop.f32.mrb[0].mxu0
        %v821 = vadd.f32 0.0, %v820
        %822 = vmatprep.mubr.f32.mxu0 0.0
        %823 = vmatmul.mubr.f32.gmra.mrb[0].mxu0 %v558
        %v824 = vpop.f32.mrb[0].mxu0
        %v825 = vadd.f32 0.0, %v824
        %v826 = vpop.f32.mrb[0].mxu0
        %v827 = vadd.f32 0.0, %v826
        %828 = vmatprep.mubr.f32.mxu0 0.0
        %829 = vmatmul.mubr.f32.gmra.mrb[0].mxu0 %v559
        %v830 = vpop.f32.mrb[0].mxu0
        %v831 = vadd.f32 0.0, %v830
        %v832 = vpop.f32.mrb[0].mxu0
        %v833 = vadd.f32 0.0, %v832
        %834 = vmatprep.mubr.f32.mxu0 0.0
        %835 = vmatmul.mubr.f32.gmra.mrb[0].mxu0 %v560
        %v836 = vpop.f32.mrb[0].mxu0
        %v837 = vadd.f32 0.0, %v836
        %v838 = vpop.f32.mrb[0].mxu0
        %v839 = vadd.f32 0.0, %v838
        %840 = vdwg.mxu0
        %841 = vst [vmem:[%s527] sm:$0xff] %v819
        %842 = vst [vmem:[%s527 + $0x8] sm:$0xff] %v821
        %843 = vst [vmem:[%s527 + $0x10] sm:$0xff] %v825
        %844 = vst [vmem:[%s527 + $0x18] sm:$0xff] %v827
        %845 = vst [vmem:[%s527 + $0x20] sm:$0xff] %v831
        %846 = vst [vmem:[%s527 + $0x28] sm:$0xff] %v833
        %847 = vst [vmem:[%s527 + $0x30] sm:$0xff] %v837
        %848 = vst [vmem:[%s527 + $0x38] sm:$0xff] %v839
        %v849 = vld [vmem:[%s6] sm:$0xff]
        %v850 = vld [vmem:[%s6 + $0x8] sm:$0xff]
        %v851 = vld [vmem:[%s6 + $0x10] sm:$0xff]
        %v852 = vld [vmem:[%s6 + $0x18] sm:$0xff]
        %v853 = vld [vmem:[%s6 + $0x20] sm:$0xff]
        %v854 = vld [vmem:[%s6 + $0x28] sm:$0xff]
        %v855 = vld [vmem:[%s6 + $0x30] sm:$0xff]
        %v856 = vld [vmem:[%s6 + $0x38] sm:$0xff]
        %v857 = vld [vmem:[%s6 + $0x40] sm:$0xff]
        %v858 = vld [vmem:[%s6 + $0x48] sm:$0xff]
        %v859 = vld [vmem:[%s6 + $0x50] sm:$0xff]
        %v860 = vld [vmem:[%s6 + $0x58] sm:$0xff]
        %v861 = vld [vmem:[%s6 + $0x60] sm:$0xff]
        %v862 = vld [vmem:[%s6 + $0x68] sm:$0xff]
        %v863 = vld [vmem:[%s6 + $0x70] sm:$0xff]
        %v864 = vld [vmem:[%s6 + $0x78] sm:$0xff]
        %v865 = vld [vmem:[%s6 + $0x80] sm:$0xff]
        %v866 = vld [vmem:[%s6 + $0x88] sm:$0xff]
        %v867 = vld [vmem:[%s6 + $0x90] sm:$0xff]
        %v868 = vld [vmem:[%s6 + $0x98] sm:$0xff]
        %v869 = vld [vmem:[%s6 + $0xa0] sm:$0xff]
        %v870 = vld [vmem:[%s6 + $0xa8] sm:$0xff]
        %v871 = vld [vmem:[%s6 + $0xb0] sm:$0xff]
        %v872 = vld [vmem:[%s6 + $0xb8] sm:$0xff]
        %v873 = vld [vmem:[%s6 + $0xc0] sm:$0xff]
        %v874 = vld [vmem:[%s6 + $0xc8] sm:$0xff]
        %v875 = vld [vmem:[%s6 + $0xd0] sm:$0xff]
        %v876 = vld [vmem:[%s6 + $0xd8] sm:$0xff]
        %v877 = vld [vmem:[%s6 + $0xe0] sm:$0xff]
        %v878 = vld [vmem:[%s6 + $0xe8] sm:$0xff]
        %v879 = vld [vmem:[%s6 + $0xf0] sm:$0xff]
        %v880 = vld [vmem:[%s6 + $0xf8] sm:$0xff]
        %v881 = vld [vmem:[#allocation9] sm:$0x3]
        %v883 = vlaneseq
        %v884 = vshrl.u32 %v883, 7
        %v885 = vsub.s32 0, %v884
        %v886 = vrot.slane %v881, %v885
        %v887 = vlaneseq
        %v888 = vshrl.u32 %v887, 7
        %v889 = vsub.s32 1, %v888
        %v890 = vrot.slane %v881, %v889
        %893 = vmatprep.subr.mxu0 %v850
        %894 = vmatpush1.msra.mxu0 %v849
        %895 = vmatprep.subr.mxu0 %v852
        %896 = vmatpush1.msra.mxu0 %v851
        %897 = vmatprep.subr.mxu0 %v854
        %898 = vmatpush1.msra.mxu0 %v853
        %899 = vmatprep.subr.mxu0 %v856
        %900 = vmatpush1.msra.mxu0 %v855
        %901 = vmatprep.subr.mxu0 %v858
        %902 = vmatpush1.msra.mxu0 %v857
        %903 = vmatprep.subr.mxu0 %v860
        %904 = vmatpush1.msra.mxu0 %v859
        %905 = vmatprep.subr.mxu0 %v862
        %906 = vmatpush1.msra.mxu0 %v861
        %907 = vmatprep.subr.mxu0 %v864
        %908 = vmatpush1.msra.mxu0 %v863
        %909 = vmatprep.subr.mxu0 %v866
        %910 = vmatpush1.msra.mxu0 %v865
        %911 = vmatprep.subr.mxu0 %v868
        %912 = vmatpush1.msra.mxu0 %v867
        %913 = vmatprep.subr.mxu0 %v870
        %914 = vmatpush1.msra.mxu0 %v869
        %915 = vmatprep.subr.mxu0 %v872
        %916 = vmatpush1.msra.mxu0 %v871
        %917 = vmatprep.subr.mxu0 %v874
        %918 = vmatpush1.msra.mxu0 %v873
        %919 = vmatprep.subr.mxu0 %v876
        %920 = vmatpush1.msra.mxu0 %v875
        %921 = vmatprep.subr.mxu0 %v878
        %922 = vmatpush1.msra.mxu0 %v877
        %923 = vmatprep.subr.mxu0 %v880
        %924 = vmatpush1.msra.mxu0 %v879
        %925 = vmatprep.subr.mxu0 0.0
        %926 = vmatpush1.msra.mxu0 0.0
        %927 = vmatprep.subr.mxu0 0.0
        %928 = vmatpush1.msra.mxu0 0.0
        %929 = vmatprep.subr.mxu0 0.0
        %930 = vmatpush1.msra.mxu0 0.0
        %931 = vmatprep.subr.mxu0 0.0
        %932 = vmatpush1.msra.mxu0 0.0
        %933 = vmatprep.subr.mxu0 0.0
        %934 = vmatpush1.msra.mxu0 0.0
        %935 = vmatprep.subr.mxu0 0.0
        %936 = vmatpush1.msra.mxu0 0.0
        %937 = vmatprep.subr.mxu0 0.0
        %938 = vmatpush1.msra.mxu0 0.0
        %939 = vmatprep.subr.mxu0 0.0
        %940 = vmatpush1.msra.mxu0 0.0
        %941 = vmatprep.subr.mxu0 0.0
        %942 = vmatpush1.msra.mxu0 0.0
        %943 = vmatprep.subr.mxu0 0.0
        %944 = vmatpush1.msra.mxu0 0.0
        %945 = vmatprep.subr.mxu0 0.0
        %946 = vmatpush1.msra.mxu0 0.0
        %947 = vmatprep.subr.mxu0 0.0
        %948 = vmatpush1.msra.mxu0 0.0
        %949 = vmatprep.subr.mxu0 0.0
        %950 = vmatpush1.msra.mxu0 0.0
        %951 = vmatprep.subr.mxu0 0.0
        %952 = vmatpush1.msra.mxu0 0.0
        %953 = vmatprep.subr.mxu0 0.0
        %954 = vmatpush1.msra.mxu0 0.0
        %955 = vmatprep.subr.mxu0 0.0
        %956 = vmatpush1.msra.mxu0 0.0
        %957 = vmatprep.mubr.f32.mxu0 0.0
        %958 = vmatmul.mubr.f32.gmra.mrb[0].mxu0 %v557
        %v959 = vpop.f32.mrb[0].mxu0
        %v960 = vadd.f32 %v886, %v959
        %v961 = vpop.f32.mrb[0].mxu0
        %v962 = vadd.f32 %v890, %v961
        %963 = vmatprep.mubr.f32.mxu0 0.0
        %964 = vmatmul.mubr.f32.gmra.mrb[0].mxu0 %v558
        %v965 = vpop.f32.mrb[0].mxu0
        %v966 = vadd.f32 %v886, %v965
        %v967 = vpop.f32.mrb[0].mxu0
        %v968 = vadd.f32 %v890, %v967
        %969 = vmatprep.mubr.f32.mxu0 0.0
        %970 = vmatmul.mubr.f32.gmra.mrb[0].mxu0 %v559
        %v971 = vpop.f32.mrb[0].mxu0
        %v972 = vadd.f32 %v886, %v971
        %v973 = vpop.f32.mrb[0].mxu0
        %v974 = vadd.f32 %v890, %v973
        %975 = vmatprep.mubr.f32.mxu0 0.0
        %976 = vmatmul.mubr.f32.gmra.mrb[0].mxu0 %v560
        %v977 = vpop.f32.mrb[0].mxu0
        %v978 = vadd.f32 %v886, %v977
        %v979 = vpop.f32.mrb[0].mxu0
        %v980 = vadd.f32 %v890, %v979
        %981 = vdwg.mxu0
        %982 = vst [vmem:[%s538] sm:$0xff] %v960
        %983 = vst [vmem:[%s538 + $0x8] sm:$0xff] %v962
        %984 = vst [vmem:[%s538 + $0x10] sm:$0xff] %v966
        %985 = vst [vmem:[%s538 + $0x18] sm:$0xff] %v968
        %986 = vst [vmem:[%s538 + $0x20] sm:$0xff] %v972
        %987 = vst [vmem:[%s538 + $0x28] sm:$0xff] %v974
        %988 = vst [vmem:[%s538 + $0x30] sm:$0xff] %v978
        %989 = vst [vmem:[%s538 + $0x38] sm:$0xff] %v980
        %s990 = smul.u32 4, %s36
        %p991 = scmp.lt.s32.totalorder %s35, 1
        %s992 = scalar_select %p991, %s35, 1
        %p993 = scmp.lt.s32.totalorder %s990, 3
        %s994 = scalar_select %p993, %s990, 3
        %s995 = smul.addr %s992, 4
        %s996 = sadd.s32 %s994, %s995
        %s997 = smul.addr %s996, 8
        %s998 = scalar_lea.vmem %s8, %s997
        %s999 = smul.u32 4, %s36
        %p1000 = scmp.lt.s32.totalorder %s35, 1
        %s1001 = scalar_select %p1000, %s35, 1
        %p1002 = scmp.lt.s32.totalorder %s999, 3
        %s1003 = scalar_select %p1002, %s999, 3
        %s1004 = smul.addr %s1001, 4
        %s1005 = sadd.s32 %s1003, %s1004
        %s1006 = smul.addr %s1005, 8
        %s1007 = scalar_lea.vmem %s9, %s1006
        %s1008 = smul.u32 4, %s36
        %p1009 = scmp.lt.s32.totalorder %s35, 1
        %s1010 = scalar_select %p1009, %s35, 1
        %p1011 = scmp.lt.s32.totalorder %s1008, 3
        %s1012 = scalar_select %p1011, %s1008, 3
        %s1013 = smul.addr %s1012, 2
        %s1014 = smul.addr %s1010, 8
        %s1015 = sadd.s32 %s1013, %s1014
        %s1016 = smul.addr %s1015, 8
        %s1017 = scalar_lea.vmem %s10, %s1016
        %s1018 = smul.u32 4, %s36
        %p1019 = scmp.lt.s32.totalorder %s35, 1
        %s1020 = scalar_select %p1019, %s35, 1
        %p1021 = scmp.lt.s32.totalorder %s1018, 3
        %s1022 = scalar_select %p1021, %s1018, 3
        %s1023 = smul.addr %s1022, 2
        %s1024 = smul.addr %s1020, 8
        %s1025 = sadd.s32 %s1023, %s1024
        %s1026 = smul.addr %s1025, 8
        %s1027 = scalar_lea.vmem %s11, %s1026
        // Predicated region
        $region75: #{lpdnet_forward.7} parent=47 // pred_check
          %p1028 = pneg %p222
        $region76: #{lpdnet_forward.7} parent=47 // pred_check_branch
          %1030 = sbr.rel (%p1028) target = $region78
        $region77: #{lpdnet_forward.7} parent=47 // pred_region
          %s1031 = smul.u32 4, %s36
        $region78: #{lpdnet_forward.7} parent=47 // pred_fallthru
          _
        // Predicated region
        $region79: #{lpdnet_forward.7} parent=47 // pred_check
          %p1032 = pneg %p250
        $region80: #{lpdnet_forward.7} parent=47 // pred_check_branch
          %1034 = sbr.rel (%p1032) target = $region82
        $region81: #{lpdnet_forward.7} parent=47 // pred_region
          %s1035 = smul.u32 4, %s36
        $region82: #{lpdnet_forward.7} parent=47 // pred_fallthru
          _
        // Predicated region
        $region83: #{lpdnet_forward.7} parent=47 // pred_check
          %p1036 = pneg %p278
        $region84: #{lpdnet_forward.7} parent=47 // pred_check_branch
          %1038 = sbr.rel (%p1036) target = $region86
        $region85: #{lpdnet_forward.7} parent=47 // pred_region
          %s1039 = smul.u32 4, %s36
        $region86: #{lpdnet_forward.7} parent=47 // pred_fallthru
          _
        // Predicated region
        $region87: #{lpdnet_forward.7} parent=47 // pred_check
          %p1040 = pneg %p306
        $region88: #{lpdnet_forward.7} parent=47 // pred_check_branch
          %1042 = sbr.rel (%p1040) target = $region90
        $region89: #{lpdnet_forward.7} parent=47 // pred_region
          %s1043 = smul.u32 4, %s36
        $region90: #{lpdnet_forward.7} parent=47 // pred_fallthru
          _
      $region48: #{lpdnet_forward.7} parent=5 // pred_fallthru
        _
      %p1044 = scmp.le.s32.totalorder 2, %s26
      // Predicated region
      $region91: #{lpdnet_forward.7} parent=5 // pred_check
        %p1045 = pneg %p1044
      $region92: #{lpdnet_forward.7} parent=5 // pred_check_branch
        %1047 = sbr.rel (%p1045) target = $region94
      $region93: #{lpdnet_forward.7} parent=5 // pred_region
        %s1048 = ssub.s32 %s26, 2
        // Predicated region
        $region95: #{lpdnet_forward.7} parent=93 // pred_check
          %p1049 = pneg %p228
        $region96: #{lpdnet_forward.7} parent=93 // pred_check_branch
          %1051 = sbr.rel (%p1049) target = $region98
        $region97: #{lpdnet_forward.7} parent=93 // pred_region
          %s1052 = smul.u32 4, %s38
          %p1053 = scmp.lt.s32.totalorder %s37, 1
          %s1054 = scalar_select %p1053, %s37, 1
          %p1055 = scmp.lt.s32.totalorder %s1052, 3
          %s1056 = scalar_select %p1055, %s1052, 3
          %s1057 = smul.addr %s1054, 4
          %s1058 = sadd.s32 %s1056, %s1057
          %s1059 = smul.addr %s1058, 8
          %s1060 = scalar_lea.vmem %s8, %s1059
        $region98: #{lpdnet_forward.7} parent=93 // pred_fallthru
          _
        // Predicated region
        $region99: #{lpdnet_forward.7} parent=93 // pred_check
          %p1061 = pneg %p256
        $region100: #{lpdnet_forward.7} parent=93 // pred_check_branch
          %1063 = sbr.rel (%p1061) target = $region102
        $region101: #{lpdnet_forward.7} parent=93 // pred_region
          %s1064 = smul.u32 4, %s38
          %p1065 = scmp.lt.s32.totalorder %s37, 1
          %s1066 = scalar_select %p1065, %s37, 1
          %p1067 = scmp.lt.s32.totalorder %s1064, 3
          %s1068 = scalar_select %p1067, %s1064, 3
          %s1069 = smul.addr %s1066, 4
          %s1070 = sadd.s32 %s1068, %s1069
          %s1071 = smul.addr %s1070, 8
          %s1072 = scalar_lea.vmem %s9, %s1071
        $region102: #{lpdnet_forward.7} parent=93 // pred_fallthru
          _
        // Predicated region
        $region103: #{lpdnet_forward.7} parent=93 // pred_check
          %p1073 = pneg %p284
        $region104: #{lpdnet_forward.7} parent=93 // pred_check_branch
          %1075 = sbr.rel (%p1073) target = $region106
        $region105: #{lpdnet_forward.7} parent=93 // pred_region
          %s1076 = smul.u32 4, %s38
          %p1077 = scmp.lt.s32.totalorder %s37, 1
          %s1078 = scalar_select %p1077, %s37, 1
          %p1079 = scmp.lt.s32.totalorder %s1076, 3
          %s1080 = scalar_select %p1079, %s1076, 3
          %s1081 = smul.addr %s1080, 2
          %s1082 = smul.addr %s1078, 8
          %s1083 = sadd.s32 %s1081, %s1082
          %s1084 = smul.addr %s1083, 8
          %s1085 = scalar_lea.vmem %s10, %s1084
        $region106: #{lpdnet_forward.7} parent=93 // pred_fallthru
          _
        // Predicated region
        $region107: #{lpdnet_forward.7} parent=93 // pred_check
          %p1086 = pneg %p312
        $region108: #{lpdnet_forward.7} parent=93 // pred_check_branch
          %1088 = sbr.rel (%p1086) target = $region110
        $region109: #{lpdnet_forward.7} parent=93 // pred_region
          %s1089 = smul.u32 4, %s38
          %p1090 = scmp.lt.s32.totalorder %s37, 1
          %s1091 = scalar_select %p1090, %s37, 1
          %p1092 = scmp.lt.s32.totalorder %s1089, 3
          %s1093 = scalar_select %p1092, %s1089, 3
          %s1094 = smul.addr %s1093, 2
          %s1095 = smul.addr %s1091, 8
          %s1096 = sadd.s32 %s1094, %s1095
          %s1097 = smul.addr %s1096, 8
          %s1098 = scalar_lea.vmem %s11, %s1097
        $region110: #{lpdnet_forward.7} parent=93 // pred_fallthru
          _
      $region94: #{lpdnet_forward.7} parent=5 // pred_fallthru
        _
    $region6: #{lpdnet_forward.7} parent=1 // loop_footer
      %s30 = sadd.s32 1, %s26
    $region7: #{lpdnet_forward.7} parent=1 // loop_footer_branch
      %25 = sbr.rel target = $region3
    $region8: #{lpdnet_forward.7} parent=1 // loop_exit
      _
    %1099 = vsyncpa [#allocation6], 1
    %s1100 = scalar_lea.sflag [#allocation6], 1
    %1101 = vsyncpa %s1100, 1
    %1102 = vsyncpa [#allocation8], 1

// kernel: lpdnet_forward.9
$region0: #{lpdnet_forward.9}
  #allocation0 [shape = 'u32[]', space=smem, size = 0x4, offset = 0x4, fixed_abs, tag = 'smem constant byte address 0x4 - core index']
  #allocation1 [shape = 'u32[144,128]{1,0:T(1,128)}', space=vmem, size = 0x12000, scoped, tag = 'internal scratch']
  #allocation2 [shape = 'f32[32,256]{1,0:T(8,128)}', space=vmem, size = 0x8000, scoped, tag = 'scratch operand']
  #allocation3 [shape = 's32[1]{0}', space=sflag, size = 0x4, scoped, tag = 'scoped memory for lpdnet_forward.9']
  #allocation4 [shape = 'u8[32768]{0}', space=smem, size = 0x8000, scoped, tag = 'prefetched SMEM operand 0']
  %s0 = inlined_call_operand.vmem [shape: s32[64,20], index: 0, kind: input, shape index: {}]
  %s1 = inlined_call_operand.vmem [shape: f32[2,32,256], index: 1, kind: input, shape index: {}]
  %s2 = inlined_call_operand.vmem [shape: f32[2,32,256], index: 2, kind: input, shape index: {}]
  %s3 = inlined_call_operand.vmem [shape: f32[2,32,128], index: 3, kind: input, shape index: {}]
  %s4 = inlined_call_operand.vmem [shape: f32[2,32,128], index: 4, kind: input, shape index: {}]
  %s5 = inlined_call_operand.vmem [shape: f32[128,1024], index: 5, kind: input, shape index: {}]
  %s6 = inlined_call_operand.vmem [shape: f32[128,1024], index: 6, kind: input, shape index: {}]
  %s7 = inlined_call_operand.vmem [shape: f32[256,1024], index: 7, kind: input, shape index: {}]
  %s8 = inlined_call_operand.vmem [shape: f32[1,1024], index: 8, kind: input, shape index: {}]
  %s9 = inlined_call_operand.vmem [shape: f32[2,1024,32], index: 9, kind: output, shape index: {}]
  %s10 = sld [smem:[#allocation0]]
  $region79: #{lpdnet_forward.9} parent=0
    _
  %s12 = ssub.s32 1, %s10
  %s13 = scalar_select 0, %s12, %s10
  %s14 = sshll.u32 %s0, 4
  %s15 = int_to_ptr.vmem [resolvable:$true] %s14
  %17 = dma.vmem_to_smem %s15, 1024, [#allocation4], [#allocation3]
  %18 = dma.done [#allocation3], 1024
  %19 = sfence
  loop: start=0, step=1, limit=4
  $region2: #{lpdnet_forward.9} parent=0 // loop_pre_header
    _
  $region3: #{lpdnet_forward.9} parent=0 // loop_header
    %s21 = sphi 0, %s25
    %p22 = scmp.ge.s32.totalorder %s21, 4
    %s28 = sphi 0, %s40
    %s29 = sphi 0, %s36
    %s30 = sphi 0, %s28
    %s31 = sphi 0, %s29
    %s32 = sphi 0, %s30
    %s33 = sphi 0, %s31
    %s43 = sphi 0, %s45
    %s46 = sphi 0, %s43
    %s47 = sphi 0, %s46
    %s63 = sphi 0, %s47
    %s71 = sphi 0, %s73
    %s74 = sphi 0, %s71
    %s75 = sphi 0, %s74
    %s91 = sphi 0, %s75
    %s99 = sphi 0, %s101
    %s102 = sphi 0, %s99
    %s103 = sphi 0, %s102
    %s119 = sphi 0, %s103
    %s127 = sphi 0, %s129
    %s130 = sphi 0, %s127
    %s131 = sphi 0, %s130
    %s147 = sphi 0, %s131
    %s151 = sphi 0, %s151
    %s153 = sphi 0, %s151
    %s154 = sphi 0, %s153
    %s168 = sphi 0, %s154
    %s172 = sphi 0, %s172
    %s174 = sphi 0, %s172
    %s175 = sphi 0, %s174
    %s189 = sphi 0, %s175
    %s193 = sphi 0, %s193
    %s195 = sphi 0, %s193
    %s196 = sphi 0, %s195
    %s210 = sphi 0, %s196
    %s214 = sphi 0, %s214
    %s216 = sphi 0, %s214
    %s217 = sphi 0, %s216
    %s231 = sphi 0, %s217
    %s239 = sphi 0, %s241
    %s242 = sphi 0, %s239
    %s243 = sphi 0, %s242
    %s259 = sphi 0, %s243
  $region4: #{lpdnet_forward.9} parent=0 // loop_header_branch
    %24 = sbr.rel (%p22) target = $region8
  $region5: #{lpdnet_forward.9} parent=0 // loop_body
    %s26 = ssub.s32 %s21, 1
    %s27 = ssub.s32 %s21, 2
    %s34 = sadd.s32 1, %s29
    %p35 = scmp.ge.s32.totalorder %s34, 1
    %s36 = scalar_select %p35, 0, %s34
    %s37 = sadd.s32 1, %s28
    %s38 = scalar_select %p35, %s37, %s28
    %p39 = scmp.ge.s32.totalorder %s38, 2
    %s40 = scalar_select %p39, 0, %s38
    %s41 = ssub.s32 %s28, %s40
    %p42 = scmp.eq.s32.totalorder %s41, 0
    %s44 = sadd.s32 %s43, 1
    %s45 = scalar_select %p42, %s43, %s44
    %p48 = pneg %p42
    %p49 = scmp.eq.s32.totalorder %s21, 1
    %p50 = por %p48, %p49
    %p51 = scmp.ne.s32.totalorder %s43, %s46
    %p52 = scmp.eq.s32.totalorder %s21, 0
    %p53 = por %p51, %p52
    %p54 = scmp.ne.s32.totalorder %s43, %s46
    %p55 = scmp.eq.s32.totalorder %s26, 1
    %p56 = por %p54, %p55
    %p57 = scmp.ne.s32.totalorder %s46, %s47
    %p58 = scmp.eq.s32.totalorder %s26, 0
    %p59 = por %p57, %p58
    %p60 = scmp.ne.s32.totalorder %s46, %s47
    %p61 = scmp.eq.s32.totalorder %s27, 1
    %p62 = por %p60, %p61
    %p64 = scmp.ne.s32.totalorder %s47, %s63
    %p65 = scmp.eq.s32.totalorder %s27, 0
    %p66 = por %p64, %p65
    %s67 = ssub.s32 %s28, %s40
    %s68 = ssub.s32 %s29, %s36
    %s69 = sor.u32 %s67, %s68
    %p70 = scmp.eq.s32.totalorder %s69, 0
    %s72 = sadd.s32 %s71, 1
    %s73 = scalar_select %p70, %s71, %s72
    %p76 = pneg %p70
    %p77 = scmp.eq.s32.totalorder %s21, 1
    %p78 = por %p76, %p77
    %p79 = scmp.ne.s32.totalorder %s71, %s74
    %p80 = scmp.eq.s32.totalorder %s21, 0
    %p81 = por %p79, %p80
    %p82 = scmp.ne.s32.totalorder %s71, %s74
    %p83 = scmp.eq.s32.totalorder %s26, 1
    %p84 = por %p82, %p83
    %p85 = scmp.ne.s32.totalorder %s74, %s75
    %p86 = scmp.eq.s32.totalorder %s26, 0
    %p87 = por %p85, %p86
    %p88 = scmp.ne.s32.totalorder %s74, %s75
    %p89 = scmp.eq.s32.totalorder %s27, 1
    %p90 = por %p88, %p89
    %p92 = scmp.ne.s32.totalorder %s75, %s91
    %p93 = scmp.eq.s32.totalorder %s27, 0
    %p94 = por %p92, %p93
    %s95 = ssub.s32 %s28, %s40
    %s96 = ssub.s32 %s29, %s36
    %s97 = sor.u32 %s95, %s96
    %p98 = scmp.eq.s32.totalorder %s97, 0
    %s100 = sadd.s32 %s99, 1
    %s101 = scalar_select %p98, %s99, %s100
    %p104 = pneg %p98
    %p105 = scmp.eq.s32.totalorder %s21, 1
    %p106 = por %p104, %p105
    %p107 = scmp.ne.s32.totalorder %s99, %s102
    %p108 = scmp.eq.s32.totalorder %s21, 0
    %p109 = por %p107, %p108
    %p110 = scmp.ne.s32.totalorder %s99, %s102
    %p111 = scmp.eq.s32.totalorder %s26, 1
    %p112 = por %p110, %p111
    %p113 = scmp.ne.s32.totalorder %s102, %s103
    %p114 = scmp.eq.s32.totalorder %s26, 0
    %p115 = por %p113, %p114
    %p116 = scmp.ne.s32.totalorder %s102, %s103
    %p117 = scmp.eq.s32.totalorder %s27, 1
    %p118 = por %p116, %p117
    %p120 = scmp.ne.s32.totalorder %s103, %s119
    %p121 = scmp.eq.s32.totalorder %s27, 0
    %p122 = por %p120, %p121
    %s123 = ssub.s32 %s28, %s40
    %s124 = ssub.s32 %s29, %s36
    %s125 = sor.u32 %s123, %s124
    %p126 = scmp.eq.s32.totalorder %s125, 0
    %s128 = sadd.s32 %s127, 1
    %s129 = scalar_select %p126, %s127, %s128
    %p132 = pneg %p126
    %p133 = scmp.eq.s32.totalorder %s21, 1
    %p134 = por %p132, %p133
    %p135 = scmp.ne.s32.totalorder %s127, %s130
    %p136 = scmp.eq.s32.totalorder %s21, 0
    %p137 = por %p135, %p136
    %p138 = scmp.ne.s32.totalorder %s127, %s130
    %p139 = scmp.eq.s32.totalorder %s26, 1
    %p140 = por %p138, %p139
    %p141 = scmp.ne.s32.totalorder %s130, %s131
    %p142 = scmp.eq.s32.totalorder %s26, 0
    %p143 = por %p141, %p142
    %p144 = scmp.ne.s32.totalorder %s130, %s131
    %p145 = scmp.eq.s32.totalorder %s27, 1
    %p146 = por %p144, %p145
    %p148 = scmp.ne.s32.totalorder %s131, %s147
    %p149 = scmp.eq.s32.totalorder %s27, 0
    %p150 = por %p148, %p149
    %s152 = sadd.s32 %s151, 1
    %p155 = scmp.eq.s32.totalorder %s21, 1
    %p156 = scmp.ne.s32.totalorder %s151, %s153
    %p157 = scmp.eq.s32.totalorder %s21, 0
    %p158 = por %p156, %p157
    %p159 = scmp.ne.s32.totalorder %s151, %s153
    %p160 = scmp.eq.s32.totalorder %s26, 1
    %p161 = por %p159, %p160
    %p162 = scmp.ne.s32.totalorder %s153, %s154
    %p163 = scmp.eq.s32.totalorder %s26, 0
    %p164 = por %p162, %p163
    %p165 = scmp.ne.s32.totalorder %s153, %s154
    %p166 = scmp.eq.s32.totalorder %s27, 1
    %p167 = por %p165, %p166
    %p169 = scmp.ne.s32.totalorder %s154, %s168
    %p170 = scmp.eq.s32.totalorder %s27, 0
    %p171 = por %p169, %p170
    %s173 = sadd.s32 %s172, 1
    %p176 = scmp.eq.s32.totalorder %s21, 1
    %p177 = scmp.ne.s32.totalorder %s172, %s174
    %p178 = scmp.eq.s32.totalorder %s21, 0
    %p179 = por %p177, %p178
    %p180 = scmp.ne.s32.totalorder %s172, %s174
    %p181 = scmp.eq.s32.totalorder %s26, 1
    %p182 = por %p180, %p181
    %p183 = scmp.ne.s32.totalorder %s174, %s175
    %p184 = scmp.eq.s32.totalorder %s26, 0
    %p185 = por %p183, %p184
    %p186 = scmp.ne.s32.totalorder %s174, %s175
    %p187 = scmp.eq.s32.totalorder %s27, 1
    %p188 = por %p186, %p187
    %p190 = scmp.ne.s32.totalorder %s175, %s189
    %p191 = scmp.eq.s32.totalorder %s27, 0
    %p192 = por %p190, %p191
    %s194 = sadd.s32 %s193, 1
    %p197 = scmp.eq.s32.totalorder %s21, 1
    %p198 = scmp.ne.s32.totalorder %s193, %s195
    %p199 = scmp.eq.s32.totalorder %s21, 0
    %p200 = por %p198, %p199
    %p201 = scmp.ne.s32.totalorder %s193, %s195
    %p202 = scmp.eq.s32.totalorder %s26, 1
    %p203 = por %p201, %p202
    %p204 = scmp.ne.s32.totalorder %s195, %s196
    %p205 = scmp.eq.s32.totalorder %s26, 0
    %p206 = por %p204, %p205
    %p207 = scmp.ne.s32.totalorder %s195, %s196
    %p208 = scmp.eq.s32.totalorder %s27, 1
    %p209 = por %p207, %p208
    %p211 = scmp.ne.s32.totalorder %s196, %s210
    %p212 = scmp.eq.s32.totalorder %s27, 0
    %p213 = por %p211, %p212
    %s215 = sadd.s32 %s214, 1
    %p218 = scmp.eq.s32.totalorder %s21, 1
    %p219 = scmp.ne.s32.totalorder %s214, %s216
    %p220 = scmp.eq.s32.totalorder %s21, 0
    %p221 = por %p219, %p220
    %p222 = scmp.ne.s32.totalorder %s214, %s216
    %p223 = scmp.eq.s32.totalorder %s26, 1
    %p224 = por %p222, %p223
    %p225 = scmp.ne.s32.totalorder %s216, %s217
    %p226 = scmp.eq.s32.totalorder %s26, 0
    %p227 = por %p225, %p226
    %p228 = scmp.ne.s32.totalorder %s216, %s217
    %p229 = scmp.eq.s32.totalorder %s27, 1
    %p230 = por %p228, %p229
    %p232 = scmp.ne.s32.totalorder %s217, %s231
    %p233 = scmp.eq.s32.totalorder %s27, 0
    %p234 = por %p232, %p233
    %s235 = ssub.s32 %s28, %s40
    %s236 = ssub.s32 %s29, %s36
    %s237 = sor.u32 %s235, %s236
    %p238 = scmp.eq.s32.totalorder %s237, 0
    %s240 = sadd.s32 %s239, 1
    %s241 = scalar_select %p238, %s239, %s240
    %p244 = pneg %p238
    %p245 = scmp.eq.s32.totalorder %s21, 1
    %p246 = por %p244, %p245
    %p247 = scmp.ne.s32.totalorder %s239, %s242
    %p248 = scmp.eq.s32.totalorder %s21, 0
    %p249 = por %p247, %p248
    %p250 = scmp.ne.s32.totalorder %s239, %s242
    %p251 = scmp.eq.s32.totalorder %s26, 1
    %p252 = por %p250, %p251
    %p253 = scmp.ne.s32.totalorder %s242, %s243
    %p254 = scmp.eq.s32.totalorder %s26, 0
    %p255 = por %p253, %p254
    %p256 = scmp.ne.s32.totalorder %s242, %s243
    %p257 = scmp.eq.s32.totalorder %s27, 1
    %p258 = por %p256, %p257
    %p260 = scmp.ne.s32.totalorder %s243, %s259
    %p261 = scmp.eq.s32.totalorder %s27, 0
    %p262 = por %p260, %p261
    %p263 = scmp.le.s32.totalorder 1, %s21
    %p264 = scmp.lt.s32.totalorder %s21, 3
    %p265 = pnand %p263, %p264
    %p266 = pneg %p265
    // Predicated region
    $region9: #{lpdnet_forward.9} parent=5 // pred_check
      _
    $region10: #{lpdnet_forward.9} parent=5 // pred_check_branch
      %268 = sbr.rel (%p265) target = $region12
    $region11: #{lpdnet_forward.9} parent=5 // pred_region
      %s269 = ssub.s32 %s21, 1
      // Predicated region
      $region13: #{lpdnet_forward.9} parent=11 // pred_check
        %p270 = pneg %p164
      $region14: #{lpdnet_forward.9} parent=11 // pred_check_branch
        %272 = sbr.rel (%p270) target = $region16
      $region15: #{lpdnet_forward.9} parent=11 // pred_region
        _
      $region16: #{lpdnet_forward.9} parent=11 // pred_fallthru
        _
      // Predicated region
      $region17: #{lpdnet_forward.9} parent=11 // pred_check
        %p273 = pneg %p185
      $region18: #{lpdnet_forward.9} parent=11 // pred_check_branch
        %275 = sbr.rel (%p273) target = $region20
      $region19: #{lpdnet_forward.9} parent=11 // pred_region
        _
      $region20: #{lpdnet_forward.9} parent=11 // pred_fallthru
        _
      // Predicated region
      $region21: #{lpdnet_forward.9} parent=11 // pred_check
        %p276 = pneg %p206
      $region22: #{lpdnet_forward.9} parent=11 // pred_check_branch
        %278 = sbr.rel (%p276) target = $region24
      $region23: #{lpdnet_forward.9} parent=11 // pred_region
        _
      $region24: #{lpdnet_forward.9} parent=11 // pred_fallthru
        _
      // Predicated region
      $region25: #{lpdnet_forward.9} parent=11 // pred_check
        %p279 = pneg %p227
      $region26: #{lpdnet_forward.9} parent=11 // pred_check_branch
        %281 = sbr.rel (%p279) target = $region28
      $region27: #{lpdnet_forward.9} parent=11 // pred_region
        _
      $region28: #{lpdnet_forward.9} parent=11 // pred_fallthru
        _
    $region12: #{lpdnet_forward.9} parent=5 // pred_fallthru
      _
    %p282 = scmp.lt.s32.totalorder %s21, 2
    // Predicated region
    $region29: #{lpdnet_forward.9} parent=5 // pred_check
      %p283 = pneg %p282
    $region30: #{lpdnet_forward.9} parent=5 // pred_check_branch
      %285 = sbr.rel (%p283) target = $region32
    $region31: #{lpdnet_forward.9} parent=5 // pred_region
      // Predicated region
      $region33: #{lpdnet_forward.9} parent=31 // pred_check
        %p286 = pneg %p53
      $region34: #{lpdnet_forward.9} parent=31 // pred_check_branch
        %288 = sbr.rel (%p286) target = $region36
      $region35: #{lpdnet_forward.9} parent=31 // pred_region
        %p289 = scmp.lt.s32.totalorder %s28, 1
        %s290 = scalar_select %p289, %s28, 1
        %s291 = smul.addr %s290, 8
        %s292 = smul.addr %s291, 8
        %s293 = scalar_lea.vmem %s1, %s292
      $region36: #{lpdnet_forward.9} parent=31 // pred_fallthru
        _
      // Predicated region
      $region37: #{lpdnet_forward.9} parent=31 // pred_check
        %p294 = pneg %p81
      $region38: #{lpdnet_forward.9} parent=31 // pred_check_branch
        %296 = sbr.rel (%p294) target = $region40
      $region39: #{lpdnet_forward.9} parent=31 // pred_region
        %s297 = smul.u32 4, %s29
        %p298 = scmp.lt.s32.totalorder %s28, 1
        %s299 = scalar_select %p298, %s28, 1
        %p300 = scmp.lt.s32.totalorder %s297, 3
        %s301 = scalar_select %p300, %s297, 3
        %s302 = smul.addr %s301, 2
        %s303 = smul.addr %s299, 8
        %s304 = sadd.s32 %s302, %s303
        %s305 = smul.addr %s304, 8
        %s306 = scalar_lea.vmem %s2, %s305
        %s307 = smul.u32 4, %s29
      $region40: #{lpdnet_forward.9} parent=31 // pred_fallthru
        _
      // Predicated region
      $region41: #{lpdnet_forward.9} parent=31 // pred_check
        %p308 = pneg %p109
      $region42: #{lpdnet_forward.9} parent=31 // pred_check_branch
        %310 = sbr.rel (%p308) target = $region44
      $region43: #{lpdnet_forward.9} parent=31 // pred_region
        %s311 = smul.u32 4, %s29
        %p312 = scmp.lt.s32.totalorder %s28, 1
        %s313 = scalar_select %p312, %s28, 1
        %p314 = scmp.lt.s32.totalorder %s311, 3
        %s315 = scalar_select %p314, %s311, 3
        %s316 = smul.addr %s313, 4
        %s317 = sadd.s32 %s315, %s316
        %s318 = smul.addr %s317, 8
        %s319 = scalar_lea.vmem %s3, %s318
        %s320 = smul.u32 4, %s29
      $region44: #{lpdnet_forward.9} parent=31 // pred_fallthru
        _
      // Predicated region
      $region45: #{lpdnet_forward.9} parent=31 // pred_check
        %p321 = pneg %p137
      $region46: #{lpdnet_forward.9} parent=31 // pred_check_branch
        %323 = sbr.rel (%p321) target = $region48
      $region47: #{lpdnet_forward.9} parent=31 // pred_region
        %s324 = smul.u32 4, %s29
        %p325 = scmp.lt.s32.totalorder %s28, 1
        %s326 = scalar_select %p325, %s28, 1
        %p327 = scmp.lt.s32.totalorder %s324, 3
        %s328 = scalar_select %p327, %s324, 3
        %s329 = smul.addr %s326, 4
        %s330 = sadd.s32 %s328, %s329
        %s331 = smul.addr %s330, 8
        %s332 = scalar_lea.vmem %s4, %s331
        %s333 = smul.u32 4, %s29
      $region48: #{lpdnet_forward.9} parent=31 // pred_fallthru
        _
    $region32: #{lpdnet_forward.9} parent=5 // pred_fallthru
      _
    %p334 = scmp.le.s32.totalorder 1, %s21
    %p335 = scmp.lt.s32.totalorder %s21, 3
    %p336 = pnand %p334, %p335
    %p337 = pneg %p336
    // Predicated region
    $region49: #{lpdnet_forward.9} parent=5 // pred_check
      _
    $region50: #{lpdnet_forward.9} parent=5 // pred_check_branch
      %339 = sbr.rel (%p336) target = $region52
    $region51: #{lpdnet_forward.9} parent=5 // pred_region
      %s340 = ssub.s32 %s21, 1
      %p341 = scmp.lt.s32.totalorder %s30, 1
      %s342 = scalar_select %p341, %s30, 1
      %s343 = smul.addr %s342, 8
      %s344 = smul.addr %s343, 8
      %s345 = scalar_lea.vmem %s1, %s344
      %p346 = pneg %p59
      %p347 = pneg %p56
      %s348 = smul.u32 4, %s31
      %p349 = scmp.lt.s32.totalorder %s30, 1
      %s350 = scalar_select %p349, %s30, 1
      %p351 = scmp.lt.s32.totalorder %s348, 3
      %s352 = scalar_select %p351, %s348, 3
      %s353 = smul.addr %s352, 2
      %s354 = smul.addr %s350, 8
      %s355 = sadd.s32 %s353, %s354
      %s356 = smul.addr %s355, 8
      %s357 = scalar_lea.vmem %s2, %s356
      %p358 = pneg %p87
      %p359 = pneg %p84
      %s360 = smul.u32 4, %s31
      %p361 = scmp.lt.s32.totalorder %s30, 1
      %s362 = scalar_select %p361, %s30, 1
      %p363 = scmp.lt.s32.totalorder %s360, 3
      %s364 = scalar_select %p363, %s360, 3
      %s365 = smul.addr %s362, 4
      %s366 = sadd.s32 %s364, %s365
      %s367 = smul.addr %s366, 8
      %s368 = scalar_lea.vmem %s3, %s367
      %p369 = pneg %p115
      %p370 = pneg %p112
      %s371 = smul.u32 4, %s31
      %p372 = scmp.lt.s32.totalorder %s30, 1
      %s373 = scalar_select %p372, %s30, 1
      %p374 = scmp.lt.s32.totalorder %s371, 3
      %s375 = scalar_select %p374, %s371, 3
      %s376 = smul.addr %s373, 4
      %s377 = sadd.s32 %s375, %s376
      %s378 = smul.addr %s377, 8
      %s379 = scalar_lea.vmem %s4, %s378
      %p380 = pneg %p143
      %p381 = pneg %p140
      %p382 = pneg %p164
      %p383 = pneg %p161
      %p384 = pneg %p185
      %p385 = pneg %p182
      %p386 = pneg %p206
      %p387 = pneg %p203
      %p388 = pneg %p227
      %p389 = pneg %p224
      %p390 = pneg %p255
      %p391 = pneg %p252
      %p392 = scmp.lt.s32.totalorder %s30, 1
      %s393 = scalar_select %p392, %s30, 1
      %p394 = scmp.lt.s32.totalorder %s31, 0
      %s395 = scalar_select %p394, %s31, 0
      %s396 = smul.addr %s393, 128
      %s397 = sadd.s32 %s395, %s396
      %s398 = smul.addr %s397, 8
      %s399 = scalar_lea.vmem %s9, %s398
      %p400 = scmp.lt.s32.totalorder %s30, 1
      %s401 = scalar_select %p400, %s30, 1
      %s402 = smul.addr %s401, 8
      %s403 = smul.addr %s402, 8
      %s404 = scalar_lea.vmem %s1, %s403
      %s405 = smul.u32 4, %s31
      %p406 = scmp.lt.s32.totalorder %s30, 1
      %s407 = scalar_select %p406, %s30, 1
      %p408 = scmp.lt.s32.totalorder %s405, 3
      %s409 = scalar_select %p408, %s405, 3
      %s410 = smul.addr %s409, 2
      %s411 = smul.addr %s407, 8
      %s412 = sadd.s32 %s410, %s411
      %s413 = smul.addr %s412, 8
      %s414 = scalar_lea.vmem %s2, %s413
      %s415 = smul.u32 4, %s31
      %s416 = smul.u32 4, %s31
      %p417 = scmp.lt.s32.totalorder %s30, 1
      %s418 = scalar_select %p417, %s30, 1
      %p419 = scmp.lt.s32.totalorder %s416, 3
      %s420 = scalar_select %p419, %s416, 3
      %s421 = smul.addr %s418, 4
      %s422 = sadd.s32 %s420, %s421
      %s423 = smul.addr %s422, 8
      %s424 = scalar_lea.vmem %s3, %s423
      %s425 = smul.u32 4, %s31
      %s426 = smul.u32 4, %s31
      %p427 = scmp.lt.s32.totalorder %s30, 1
      %s428 = scalar_select %p427, %s30, 1
      %p429 = scmp.lt.s32.totalorder %s426, 3
      %s430 = scalar_select %p429, %s426, 3
      %s431 = smul.addr %s428, 4
      %s432 = sadd.s32 %s430, %s431
      %s433 = smul.addr %s432, 8
      %s434 = scalar_lea.vmem %s4, %s433
      %s435 = smul.u32 4, %s31
      %p436 = scmp.lt.s32.totalorder %s30, 1
      %s437 = scalar_select %p436, %s30, 1
      %p438 = scmp.lt.s32.totalorder %s31, 0
      %s439 = scalar_select %p438, %s31, 0
      %s440 = smul.addr %s437, 128
      %s441 = sadd.s32 %s439, %s440
      %s442 = smul.addr %s441, 8
      %s443 = scalar_lea.vmem %s9, %s442
      %s444 = smul.u32 %s30, 32
      %s445 = smul.u32 %s31, 32
      %s446 = sadd.s32 %s444, %s445
      loop: start=0, step=1, limit=20
      $region53: #{lpdnet_forward.9} parent=51 // loop_pre_header
        _
      $region54: #{lpdnet_forward.9} parent=51 // loop_header
        %s448 = sphi 0, %s452
        %p449 = scmp.ge.s32.totalorder %s448, 20
        %v453 = vphi -inf, %v507
        %v454 = vphi -inf, %v508
        %v455 = vphi -inf, %v509
        %v456 = vphi -inf, %v510
        %v457 = vphi -inf, %v511
        %v458 = vphi -inf, %v512
        %v459 = vphi -inf, %v513
        %v460 = vphi -inf, %v514
      $region55: #{lpdnet_forward.9} parent=51 // loop_header_branch
        %451 = sbr.rel (%p449) target = $region59
      $region56: #{lpdnet_forward.9} parent=51 // loop_body
        loop: start=0, step=1, limit=32
        $region60: #{lpdnet_forward.9} parent=56 // loop_pre_header
          _
        $region61: #{lpdnet_forward.9} parent=56 // loop_header
          %s462 = sphi 0, %s466
          %p463 = scmp.ge.s32.totalorder %s462, 32
        $region62: #{lpdnet_forward.9} parent=56 // loop_header_branch
          %465 = sbr.rel (%p463) target = $region66
        $region63: #{lpdnet_forward.9} parent=56 // loop_body
          %s467 = sadd.s32 %s446, %s462
          %s468 = sshra.s32 %s448, 7
          %s469 = sand.u32 %s448, 127
          %s470 = sadd.s32 %s468, %s467
          %s471 = smul.u32 %s470, 128
          %s472 = sshra.s32 %s448, 7
          %s473 = sand.u32 %s448, 127
          %s474 = sadd.s32 %s471, %s473
          %s475 = sld [smem:[#allocation4 + %s474]]
          %s476 = sshra.s32 %s475, 3
          %s477 = sand.u32 %s475, 7
          %s478 = sshra.s32 %s475, 3
          %s479 = sand.u32 %s475, 7
          %s480 = smul.u32 %s476, 2
          %s481 = smul.u32 %s480, 8
          %s482 = sadd.s32 %s481, %s479
          %s483 = scalar_lea.vmem %s404, %s482
          %v484 = vld [vmem:[%s483] ss:$8 sm:$0x3]
          %v485 = vlaneseq
          %vm486 = vcmp.ge.s32.totalorder %v485, 0
          %vm487 = vcmp.lt.s32.totalorder %v485, 256
          %vm488 = vmand %vm486, %vm487
          %s489 = sshra.s32 %s462, 3
          %s490 = sand.u32 %s462, 7
          %s491 = sshra.s32 %s462, 3
          %s492 = sand.u32 %s462, 7
          %s493 = smul.u32 %s489, 2
          %s494 = smul.u32 %s493, 8
          %s495 = sadd.s32 %s494, %s492
          %s496 = scalar_lea.vmem [#allocation2], %s495
          %497 = vst.msk [vmem:[%s496] ss:$8 sm:$0x3] %vm488, %v484
          %498 = vst.msk [vmem:[%s496] ss:$8 sm:$0x0] %vm488, %v484
        $region64: #{lpdnet_forward.9} parent=56 // loop_footer
          %s466 = sadd.s32 1, %s462
        $region65: #{lpdnet_forward.9} parent=56 // loop_footer_branch
          %461 = sbr.rel target = $region61
        $region66: #{lpdnet_forward.9} parent=56 // loop_exit
          _
        %v499 = vld [vmem:[#allocation2] sm:$0xff]
        %v500 = vld [vmem:[#allocation2 + $0x8] sm:$0xff]
        %v501 = vld [vmem:[#allocation2 + $0x10] sm:$0xff]
        %v502 = vld [vmem:[#allocation2 + $0x18] sm:$0xff]
        %v503 = vld [vmem:[#allocation2 + $0x20] sm:$0xff]
        %v504 = vld [vmem:[#allocation2 + $0x28] sm:$0xff]
        %v505 = vld [vmem:[#allocation2 + $0x30] sm:$0xff]
        %v506 = vld [vmem:[#allocation2 + $0x38] sm:$0xff]
        %v507 = vmax.f32 %v453, %v499
        %v508 = vmax.f32 %v454, %v500
        %v509 = vmax.f32 %v455, %v501
        %v510 = vmax.f32 %v456, %v502
        %v511 = vmax.f32 %v457, %v503
        %v512 = vmax.f32 %v458, %v504
        %v513 = vmax.f32 %v459, %v505
        %v514 = vmax.f32 %v460, %v506
      $region57: #{lpdnet_forward.9} parent=51 // loop_footer
        %s452 = sadd.s32 1, %s448
      $region58: #{lpdnet_forward.9} parent=51 // loop_footer_branch
        %447 = sbr.rel target = $region54
      $region59: #{lpdnet_forward.9} parent=51 // loop_exit
        _
      %v515 = vld [vmem:[%s414] sm:$0xff]
      %v516 = vld [vmem:[%s414 + $0x8] sm:$0xff]
      %v517 = vld [vmem:[%s414 + $0x10] sm:$0xff]
      %v518 = vld [vmem:[%s414 + $0x18] sm:$0xff]
      %v519 = vld [vmem:[%s414 + $0x20] sm:$0xff]
      %v520 = vld [vmem:[%s414 + $0x28] sm:$0xff]
      %v521 = vld [vmem:[%s414 + $0x30] sm:$0xff]
      %v522 = vld [vmem:[%s414 + $0x38] sm:$0xff]
      %v523 = vadd.f32 %v453, %v515
      %v524 = vadd.f32 %v454, %v516
      %v525 = vadd.f32 %v455, %v517
      %v526 = vadd.f32 %v456, %v518
      %v527 = vadd.f32 %v457, %v519
      %v528 = vadd.f32 %v458, %v520
      %v529 = vadd.f32 %v459, %v521
      %v530 = vadd.f32 %v460, %v522
      %v531 = vmax.f32 %v523, 0.0
      %v532 = vmax.f32 %v524, 0.0
      %v533 = vmax.f32 %v525, 0.0
      %v534 = vmax.f32 %v526, 0.0
      %v535 = vmax.f32 %v527, 0.0
      %v536 = vmax.f32 %v528, 0.0
      %v537 = vmax.f32 %v529, 0.0
      %v538 = vmax.f32 %v530, 0.0
      %v539 = vld [vmem:[%s424] sm:$0xff]
      %v540 = vld [vmem:[%s424 + $0x8] sm:$0xff]
      %v541 = vld [vmem:[%s424 + $0x10] sm:$0xff]
      %v542 = vld [vmem:[%s424 + $0x18] sm:$0xff]
      %v543 = vld [vmem:[%s5] sm:$0xff]
      %v544 = vld [vmem:[%s5 + $0x8] sm:$0xff]
      %v545 = vld [vmem:[%s5 + $0x10] sm:$0xff]
      %v546 = vld [vmem:[%s5 + $0x18] sm:$0xff]
      %v547 = vld [vmem:[%s5 + $0x20] sm:$0xff]
      %v548 = vld [vmem:[%s5 + $0x28] sm:$0xff]
      %v549 = vld [vmem:[%s5 + $0x30] sm:$0xff]
      %v550 = vld [vmem:[%s5 + $0x38] sm:$0xff]
      %v551 = vld [vmem:[%s5 + $0x40] sm:$0xff]
      %v552 = vld [vmem:[%s5 + $0x48] sm:$0xff]
      %v553 = vld [vmem:[%s5 + $0x50] sm:$0xff]
      %v554 = vld [vmem:[%s5 + $0x58] sm:$0xff]
      %v555 = vld [vmem:[%s5 + $0x60] sm:$0xff]
      %v556 = vld [vmem:[%s5 + $0x68] sm:$0xff]
      %v557 = vld [vmem:[%s5 + $0x70] sm:$0xff]
      %v558 = vld [vmem:[%s5 + $0x78] sm:$0xff]
      %v559 = vld [vmem:[%s5 + $0x80] sm:$0xff]
      %v560 = vld [vmem:[%s5 + $0x88] sm:$0xff]
      %v561 = vld [vmem:[%s5 + $0x90] sm:$0xff]
      %v562 = vld [vmem:[%s5 + $0x98] sm:$0xff]
      %v563 = vld [vmem:[%s5 + $0xa0] sm:$0xff]
      %v564 = vld [vmem:[%s5 + $0xa8] sm:$0xff]
      %v565 = vld [vmem:[%s5 + $0xb0] sm:$0xff]
      %v566 = vld [vmem:[%s5 + $0xb8] sm:$0xff]
      %v567 = vld [vmem:[%s5 + $0xc0] sm:$0xff]
      %v568 = vld [vmem:[%s5 + $0xc8] sm:$0xff]
      %v569 = vld [vmem:[%s5 + $0xd0] sm:$0xff]
      %v570 = vld [vmem:[%s5 + $0xd8] sm:$0xff]
      %v571 = vld [vmem:[%s5 + $0xe0] sm:$0xff]
      %v572 = vld [vmem:[%s5 + $0xe8] sm:$0xff]
      %v573 = vld [vmem:[%s5 + $0xf0] sm:$0xff]
      %v574 = vld [vmem:[%s5 + $0xf8] sm:$0xff]
      %v575 = vld [vmem:[%s5 + $0x100] sm:$0xff]
      %v576 = vld [vmem:[%s5 + $0x108] sm:$0xff]
      %v577 = vld [vmem:[%s5 + $0x110] sm:$0xff]
      %v578 = vld [vmem:[%s5 + $0x118] sm:$0xff]
      %v579 = vld [vmem:[%s5 + $0x120] sm:$0xff]
      %v580 = vld [vmem:[%s5 + $0x128] sm:$0xff]
      %v581 = vld [vmem:[%s5 + $0x130] sm:$0xff]
      %v582 = vld [vmem:[%s5 + $0x138] sm:$0xff]
      %v583 = vld [vmem:[%s5 + $0x140] sm:$0xff]
      %v584 = vld [vmem:[%s5 + $0x148] sm:$0xff]
      %v585 = vld [vmem:[%s5 + $0x150] sm:$0xff]
      %v586 = vld [vmem:[%s5 + $0x158] sm:$0xff]
      %v587 = vld [vmem:[%s5 + $0x160] sm:$0xff]
      %v588 = vld [vmem:[%s5 + $0x168] sm:$0xff]
      %v589 = vld [vmem:[%s5 + $0x170] sm:$0xff]
      %v590 = vld [vmem:[%s5 + $0x178] sm:$0xff]
      %v591 = vld [vmem:[%s5 + $0x180] sm:$0xff]
      %v592 = vld [vmem:[%s5 + $0x188] sm:$0xff]
      %v593 = vld [vmem:[%s5 + $0x190] sm:$0xff]
      %v594 = vld [vmem:[%s5 + $0x198] sm:$0xff]
      %v595 = vld [vmem:[%s5 + $0x1a0] sm:$0xff]
      %v596 = vld [vmem:[%s5 + $0x1a8] sm:$0xff]
      %v597 = vld [vmem:[%s5 + $0x1b0] sm:$0xff]
      %v598 = vld [vmem:[%s5 + $0x1b8] sm:$0xff]
      %v599 = vld [vmem:[%s5 + $0x1c0] sm:$0xff]
      %v600 = vld [vmem:[%s5 + $0x1c8] sm:$0xff]
      %v601 = vld [vmem:[%s5 + $0x1d0] sm:$0xff]
      %v602 = vld [vmem:[%s5 + $0x1d8] sm:$0xff]
      %v603 = vld [vmem:[%s5 + $0x1e0] sm:$0xff]
      %v604 = vld [vmem:[%s5 + $0x1e8] sm:$0xff]
      %v605 = vld [vmem:[%s5 + $0x1f0] sm:$0xff]
      %v606 = vld [vmem:[%s5 + $0x1f8] sm:$0xff]
      %v607 = vld [vmem:[%s5 + $0x200] sm:$0xff]
      %v608 = vld [vmem:[%s5 + $0x208] sm:$0xff]
      %v609 = vld [vmem:[%s5 + $0x210] sm:$0xff]
      %v610 = vld [vmem:[%s5 + $0x218] sm:$0xff]
      %v611 = vld [vmem:[%s5 + $0x220] sm:$0xff]
      %v612 = vld [vmem:[%s5 + $0x228] sm:$0xff]
      %v613 = vld [vmem:[%s5 + $0x230] sm:$0xff]
      %v614 = vld [vmem:[%s5 + $0x238] sm:$0xff]
      %v615 = vld [vmem:[%s5 + $0x240] sm:$0xff]
      %v616 = vld [vmem:[%s5 + $0x248] sm:$0xff]
      %v617 = vld [vmem:[%s5 + $0x250] sm:$0xff]
      %v618 = vld [vmem:[%s5 + $0x258] sm:$0xff]
      %v619 = vld [vmem:[%s5 + $0x260] sm:$0xff]
      %v620 = vld [vmem:[%s5 + $0x268] sm:$0xff]
      %v621 = vld [vmem:[%s5 + $0x270] sm:$0xff]
      %v622 = vld [vmem:[%s5 + $0x278] sm:$0xff]
      %v623 = vld [vmem:[%s5 + $0x280] sm:$0xff]
      %v624 = vld [vmem:[%s5 + $0x288] sm:$0xff]
      %v625 = vld [vmem:[%s5 + $0x290] sm:$0xff]
      %v626 = vld [vmem:[%s5 + $0x298] sm:$0xff]
      %v627 = vld [vmem:[%s5 + $0x2a0] sm:$0xff]
      %v628 = vld [vmem:[%s5 + $0x2a8] sm:$0xff]
      %v629 = vld [vmem:[%s5 + $0x2b0] sm:$0xff]
      %v630 = vld [vmem:[%s5 + $0x2b8] sm:$0xff]
      %v631 = vld [vmem:[%s5 + $0x2c0] sm:$0xff]
      %v632 = vld [vmem:[%s5 + $0x2c8] sm:$0xff]
      %v633 = vld [vmem:[%s5 + $0x2d0] sm:$0xff]
      %v634 = vld [vmem:[%s5 + $0x2d8] sm:$0xff]
      %v635 = vld [vmem:[%s5 + $0x2e0] sm:$0xff]
      %v636 = vld [vmem:[%s5 + $0x2e8] sm:$0xff]
      %v637 = vld [vmem:[%s5 + $0x2f0] sm:$0xff]
      %v638 = vld [vmem:[%s5 + $0x2f8] sm:$0xff]
      %v639 = vld [vmem:[%s5 + $0x300] sm:$0xff]
      %v640 = vld [vmem:[%s5 + $0x308] sm:$0xff]
      %v641 = vld [vmem:[%s5 + $0x310] sm:$0xff]
      %v642 = vld [vmem:[%s5 + $0x318] sm:$0xff]
      %v643 = vld [vmem:[%s5 + $0x320] sm:$0xff]
      %v644 = vld [vmem:[%s5 + $0x328] sm:$0xff]
      %v645 = vld [vmem:[%s5 + $0x330] sm:$0xff]
      %v646 = vld [vmem:[%s5 + $0x338] sm:$0xff]
      %v647 = vld [vmem:[%s5 + $0x340] sm:$0xff]
      %v648 = vld [vmem:[%s5 + $0x348] sm:$0xff]
      %v649 = vld [vmem:[%s5 + $0x350] sm:$0xff]
      %v650 = vld [vmem:[%s5 + $0x358] sm:$0xff]
      %v651 = vld [vmem:[%s5 + $0x360] sm:$0xff]
      %v652 = vld [vmem:[%s5 + $0x368] sm:$0xff]
      %v653 = vld [vmem:[%s5 + $0x370] sm:$0xff]
      %v654 = vld [vmem:[%s5 + $0x378] sm:$0xff]
      %v655 = vld [vmem:[%s5 + $0x380] sm:$0xff]
      %v656 = vld [vmem:[%s5 + $0x388] sm:$0xff]
      %v657 = vld [vmem:[%s5 + $0x390] sm:$0xff]
      %v658 = vld [vmem:[%s5 + $0x398] sm:$0xff]
      %v659 = vld [vmem:[%s5 + $0x3a0] sm:$0xff]
      %v660 = vld [vmem:[%s5 + $0x3a8] sm:$0xff]
      %v661 = vld [vmem:[%s5 + $0x3b0] sm:$0xff]
      %v662 = vld [vmem:[%s5 + $0x3b8] sm:$0xff]
      %v663 = vld [vmem:[%s5 + $0x3c0] sm:$0xff]
      %v664 = vld [vmem:[%s5 + $0x3c8] sm:$0xff]
      %v665 = vld [vmem:[%s5 + $0x3d0] sm:$0xff]
      %v666 = vld [vmem:[%s5 + $0x3d8] sm:$0xff]
      %v667 = vld [vmem:[%s5 + $0x3e0] sm:$0xff]
      %v668 = vld [vmem:[%s5 + $0x3e8] sm:$0xff]
      %v669 = vld [vmem:[%s5 + $0x3f0] sm:$0xff]
      %v670 = vld [vmem:[%s5 + $0x3f8] sm:$0xff]
      %v671 = vld [vmem:[%s434] sm:$0xff]
      %v672 = vld [vmem:[%s434 + $0x8] sm:$0xff]
      %v673 = vld [vmem:[%s434 + $0x10] sm:$0xff]
      %v674 = vld [vmem:[%s434 + $0x18] sm:$0xff]
      %v675 = vld [vmem:[%s6] sm:$0xff]
      %v676 = vld [vmem:[%s6 + $0x8] sm:$0xff]
      %v677 = vld [vmem:[%s6 + $0x10] sm:$0xff]
      %v678 = vld [vmem:[%s6 + $0x18] sm:$0xff]
      %v679 = vld [vmem:[%s6 + $0x20] sm:$0xff]
      %v680 = vld [vmem:[%s6 + $0x28] sm:$0xff]
      %v681 = vld [vmem:[%s6 + $0x30] sm:$0xff]
      %v682 = vld [vmem:[%s6 + $0x38] sm:$0xff]
      %v683 = vld [vmem:[%s6 + $0x40] sm:$0xff]
      %v684 = vld [vmem:[%s6 + $0x48] sm:$0xff]
      %v685 = vld [vmem:[%s6 + $0x50] sm:$0xff]
      %v686 = vld [vmem:[%s6 + $0x58] sm:$0xff]
      %v687 = vld [vmem:[%s6 + $0x60] sm:$0xff]
      %v688 = vld [vmem:[%s6 + $0x68] sm:$0xff]
      %v689 = vld [vmem:[%s6 + $0x70] sm:$0xff]
      %v690 = vld [vmem:[%s6 + $0x78] sm:$0xff]
      %v691 = vld [vmem:[%s6 + $0x80] sm:$0xff]
      %v692 = vld [vmem:[%s6 + $0x88] sm:$0xff]
      %v693 = vld [vmem:[%s6 + $0x90] sm:$0xff]
      %v694 = vld [vmem:[%s6 + $0x98] sm:$0xff]
      %v695 = vld [vmem:[%s6 + $0xa0] sm:$0xff]
      %v696 = vld [vmem:[%s6 + $0xa8] sm:$0xff]
      %v697 = vld [vmem:[%s6 + $0xb0] sm:$0xff]
      %v698 = vld [vmem:[%s6 + $0xb8] sm:$0xff]
      %v699 = vld [vmem:[%s6 + $0xc0] sm:$0xff]
      %v700 = vld [vmem:[%s6 + $0xc8] sm:$0xff]
      %v701 = vld [vmem:[%s6 + $0xd0] sm:$0xff]
      %v702 = vld [vmem:[%s6 + $0xd8] sm:$0xff]
      %v703 = vld [vmem:[%s6 + $0xe0] sm:$0xff]
      %v704 = vld [vmem:[%s6 + $0xe8] sm:$0xff]
      %v705 = vld [vmem:[%s6 + $0xf0] sm:$0xff]
      %v706 = vld [vmem:[%s6 + $0xf8] sm:$0xff]
      %v707 = vld [vmem:[%s6 + $0x100] sm:$0xff]
      %v708 = vld [vmem:[%s6 + $0x108] sm:$0xff]
      %v709 = vld [vmem:[%s6 + $0x110] sm:$0xff]
      %v710 = vld [vmem:[%s6 + $0x118] sm:$0xff]
      %v711 = vld [vmem:[%s6 + $0x120] sm:$0xff]
      %v712 = vld [vmem:[%s6 + $0x128] sm:$0xff]
      %v713 = vld [vmem:[%s6 + $0x130] sm:$0xff]
      %v714 = vld [vmem:[%s6 + $0x138] sm:$0xff]
      %v715 = vld [vmem:[%s6 + $0x140] sm:$0xff]
      %v716 = vld [vmem:[%s6 + $0x148] sm:$0xff]
      %v717 = vld [vmem:[%s6 + $0x150] sm:$0xff]
      %v718 = vld [vmem:[%s6 + $0x158] sm:$0xff]
      %v719 = vld [vmem:[%s6 + $0x160] sm:$0xff]
      %v720 = vld [vmem:[%s6 + $0x168] sm:$0xff]
      %v721 = vld [vmem:[%s6 + $0x170] sm:$0xff]
      %v722 = vld [vmem:[%s6 + $0x178] sm:$0xff]
      %v723 = vld [vmem:[%s6 + $0x180] sm:$0xff]
      %v724 = vld [vmem:[%s6 + $0x188] sm:$0xff]
      %v725 = vld [vmem:[%s6 + $0x190] sm:$0xff]
      %v726 = vld [vmem:[%s6 + $0x198] sm:$0xff]
      %v727 = vld [vmem:[%s6 + $0x1a0] sm:$0xff]
      %v728 = vld [vmem:[%s6 + $0x1a8] sm:$0xff]
      %v729 = vld [vmem:[%s6 + $0x1b0] sm:$0xff]
      %v730 = vld [vmem:[%s6 + $0x1b8] sm:$0xff]
      %v731 = vld [vmem:[%s6 + $0x1c0] sm:$0xff]
      %v732 = vld [vmem:[%s6 + $0x1c8] sm:$0xff]
      %v733 = vld [vmem:[%s6 + $0x1d0] sm:$0xff]
      %v734 = vld [vmem:[%s6 + $0x1d8] sm:$0xff]
      %v735 = vld [vmem:[%s6 + $0x1e0] sm:$0xff]
      %v736 = vld [vmem:[%s6 + $0x1e8] sm:$0xff]
      %v737 = vld [vmem:[%s6 + $0x1f0] sm:$0xff]
      %v738 = vld [vmem:[%s6 + $0x1f8] sm:$0xff]
      %v739 = vld [vmem:[%s6 + $0x200] sm:$0xff]
      %v740 = vld [vmem:[%s6 + $0x208] sm:$0xff]
      %v741 = vld [vmem:[%s6 + $0x210] sm:$0xff]
      %v742 = vld [vmem:[%s6 + $0x218] sm:$0xff]
      %v743 = vld [vmem:[%s6 + $0x220] sm:$0xff]
      %v744 = vld [vmem:[%s6 + $0x228] sm:$0xff]
      %v745 = vld [vmem:[%s6 + $0x230] sm:$0xff]
      %v746 = vld [vmem:[%s6 + $0x238] sm:$0xff]
      %v747 = vld [vmem:[%s6 + $0x240] sm:$0xff]
      %v748 = vld [vmem:[%s6 + $0x248] sm:$0xff]
      %v749 = vld [vmem:[%s6 + $0x250] sm:$0xff]
      %v750 = vld [vmem:[%s6 + $0x258] sm:$0xff]
      %v751 = vld [vmem:[%s6 + $0x260] sm:$0xff]
      %v752 = vld [vmem:[%s6 + $0x268] sm:$0xff]
      %v753 = vld [vmem:[%s6 + $0x270] sm:$0xff]
      %v754 = vld [vmem:[%s6 + $0x278] sm:$0xff]
      %v755 = vld [vmem:[%s6 + $0x280] sm:$0xff]
      %v756 = vld [vmem:[%s6 + $0x288] sm:$0xff]
      %v757 = vld [vmem:[%s6 + $0x290] sm:$0xff]
      %v758 = vld [vmem:[%s6 + $0x298] sm:$0xff]
      %v759 = vld [vmem:[%s6 + $0x2a0] sm:$0xff]
      %v760 = vld [vmem:[%s6 + $0x2a8] sm:$0xff]
      %v761 = vld [vmem:[%s6 + $0x2b0] sm:$0xff]
      %v762 = vld [vmem:[%s6 + $0x2b8] sm:$0xff]
      %v763 = vld [vmem:[%s6 + $0x2c0] sm:$0xff]
      %v764 = vld [vmem:[%s6 + $0x2c8] sm:$0xff]
      %v765 = vld [vmem:[%s6 + $0x2d0] sm:$0xff]
      %v766 = vld [vmem:[%s6 + $0x2d8] sm:$0xff]
      %v767 = vld [vmem:[%s6 + $0x2e0] sm:$0xff]
      %v768 = vld [vmem:[%s6 + $0x2e8] sm:$0xff]
      %v769 = vld [vmem:[%s6 + $0x2f0] sm:$0xff]
      %v770 = vld [vmem:[%s6 + $0x2f8] sm:$0xff]
      %v771 = vld [vmem:[%s6 + $0x300] sm:$0xff]
      %v772 = vld [vmem:[%s6 + $0x308] sm:$0xff]
      %v773 = vld [vmem:[%s6 + $0x310] sm:$0xff]
      %v774 = vld [vmem:[%s6 + $0x318] sm:$0xff]
      %v775 = vld [vmem:[%s6 + $0x320] sm:$0xff]
      %v776 = vld [vmem:[%s6 + $0x328] sm:$0xff]
      %v777 = vld [vmem:[%s6 + $0x330] sm:$0xff]
      %v778 = vld [vmem:[%s6 + $0x338] sm:$0xff]
      %v779 = vld [vmem:[%s6 + $0x340] sm:$0xff]
      %v780 = vld [vmem:[%s6 + $0x348] sm:$0xff]
      %v781 = vld [vmem:[%s6 + $0x350] sm:$0xff]
      %v782 = vld [vmem:[%s6 + $0x358] sm:$0xff]
      %v783 = vld [vmem:[%s6 + $0x360] sm:$0xff]
      %v784 = vld [vmem:[%s6 + $0x368] sm:$0xff]
      %v785 = vld [vmem:[%s6 + $0x370] sm:$0xff]
      %v786 = vld [vmem:[%s6 + $0x378] sm:$0xff]
      %v787 = vld [vmem:[%s6 + $0x380] sm:$0xff]
      %v788 = vld [vmem:[%s6 + $0x388] sm:$0xff]
      %v789 = vld [vmem:[%s6 + $0x390] sm:$0xff]
      %v790 = vld [vmem:[%s6 + $0x398] sm:$0xff]
      %v791 = vld [vmem:[%s6 + $0x3a0] sm:$0xff]
      %v792 = vld [vmem:[%s6 + $0x3a8] sm:$0xff]
      %v793 = vld [vmem:[%s6 + $0x3b0] sm:$0xff]
      %v794 = vld [vmem:[%s6 + $0x3b8] sm:$0xff]
      %v795 = vld [vmem:[%s6 + $0x3c0] sm:$0xff]
      %v796 = vld [vmem:[%s6 + $0x3c8] sm:$0xff]
      %v797 = vld [vmem:[%s6 + $0x3d0] sm:$0xff]
      %v798 = vld [vmem:[%s6 + $0x3d8] sm:$0xff]
      %v799 = vld [vmem:[%s6 + $0x3e0] sm:$0xff]
      %v800 = vld [vmem:[%s6 + $0x3e8] sm:$0xff]
      %v801 = vld [vmem:[%s6 + $0x3f0] sm:$0xff]
      %v802 = vld [vmem:[%s6 + $0x3f8] sm:$0xff]
      %803 = vmatprep.subr.mxu0 %v676
      %804 = vmatpush1.msra.mxu0 %v675
      %805 = vmatprep.subr.mxu0 %v684
      %806 = vmatpush1.msra.mxu0 %v683
      %807 = vmatprep.subr.mxu0 %v692
      %808 = vmatpush1.msra.mxu0 %v691
      %809 = vmatprep.subr.mxu0 %v700
      %810 = vmatpush1.msra.mxu0 %v699
      %811 = vmatprep.subr.mxu0 %v708
      %812 = vmatpush1.msra.mxu0 %v707
      %813 = vmatprep.subr.mxu0 %v716
      %814 = vmatpush1.msra.mxu0 %v715
      %815 = vmatprep.subr.mxu0 %v724
      %816 = vmatpush1.msra.mxu0 %v723
      %817 = vmatprep.subr.mxu0 %v732
      %818 = vmatpush1.msra.mxu0 %v731
      %819 = vmatprep.subr.mxu0 %v740
      %820 = vmatpush1.msra.mxu0 %v739
      %821 = vmatprep.subr.mxu0 %v748
      %822 = vmatpush1.msra.mxu0 %v747
      %823 = vmatprep.subr.mxu0 %v756
      %824 = vmatpush1.msra.mxu0 %v755
      %825 = vmatprep.subr.mxu0 %v764
      %826 = vmatpush1.msra.mxu0 %v763
      %827 = vmatprep.subr.mxu0 %v772
      %828 = vmatpush1.msra.mxu0 %v771
      %829 = vmatprep.subr.mxu0 %v780
      %830 = vmatpush1.msra.mxu0 %v779
      %831 = vmatprep.subr.mxu0 %v788
      %832 = vmatpush1.msra.mxu0 %v787
      %833 = vmatprep.subr.mxu0 %v796
      %834 = vmatpush1.msra.mxu0 %v795
      %835 = vmatprep.subr.mxu0 0.0
      %836 = vmatpush1.msra.mxu0 0.0
      %837 = vmatprep.subr.mxu0 0.0
      %838 = vmatpush1.msra.mxu0 0.0
      %839 = vmatprep.subr.mxu0 0.0
      %840 = vmatpush1.msra.mxu0 0.0
      %841 = vmatprep.subr.mxu0 0.0
      %842 = vmatpush1.msra.mxu0 0.0
      %843 = vmatprep.subr.mxu0 0.0
      %844 = vmatpush1.msra.mxu0 0.0
      %845 = vmatprep.subr.mxu0 0.0
      %846 = vmatpush1.msra.mxu0 0.0
      %847 = vmatprep.subr.mxu0 0.0
      %848 = vmatpush1.msra.mxu0 0.0
      %849 = vmatprep.subr.mxu0 0.0
      %850 = vmatpush1.msra.mxu0 0.0
      %851 = vmatprep.subr.mxu0 0.0
      %852 = vmatpush1.msra.mxu0 0.0
      %853 = vmatprep.subr.mxu0 0.0
      %854 = vmatpush1.msra.mxu0 0.0
      %855 = vmatprep.subr.mxu0 0.0
      %856 = vmatpush1.msra.mxu0 0.0
      %857 = vmatprep.subr.mxu0 0.0
      %858 = vmatpush1.msra.mxu0 0.0
      %859 = vmatprep.subr.mxu0 0.0
      %860 = vmatpush1.msra.mxu0 0.0
      %861 = vmatprep.subr.mxu0 0.0
      %862 = vmatpush1.msra.mxu0 0.0
      %863 = vmatprep.subr.mxu0 0.0
      %864 = vmatpush1.msra.mxu0 0.0
      %865 = vmatprep.subr.mxu0 0.0
      %866 = vmatpush1.msra.mxu0 0.0
      %867 = vmatprep.mubr.f32.mxu0 0.0
      %868 = vmatmul.mubr.f32.gmra.mrb[0].mxu0 %v671
      %v869 = vpop.f32.mrb[0].mxu0
      %v870 = vadd.f32 0.0, %v869
      %v871 = vpop.f32.mrb[0].mxu0
      %v872 = vadd.f32 0.0, %v871
      %873 = vmatprep.mubr.f32.mxu0 0.0
      %874 = vmatmul.mubr.f32.gmra.mrb[0].mxu0 %v672
      %v875 = vpop.f32.mrb[0].mxu0
      %v876 = vadd.f32 0.0, %v875
      %v877 = vpop.f32.mrb[0].mxu0
      %v878 = vadd.f32 0.0, %v877
      %879 = vmatprep.mubr.f32.mxu0 0.0
      %880 = vmatmul.mubr.f32.gmra.mrb[0].mxu0 %v673
      %v881 = vpop.f32.mrb[0].mxu0
      %v882 = vadd.f32 0.0, %v881
      %v883 = vpop.f32.mrb[0].mxu0
      %v884 = vadd.f32 0.0, %v883
      %885 = vmatprep.mubr.f32.mxu0 0.0
      %886 = vmatmul.mubr.f32.gmra.mrb[0].mxu0 %v674
      %v887 = vpop.f32.mrb[0].mxu0
      %v888 = vadd.f32 0.0, %v887
      %v889 = vpop.f32.mrb[0].mxu0
      %v890 = vadd.f32 0.0, %v889
      %891 = vdwg.mxu0
      %892 = vmatprep.subr.mxu0 %v678
      %893 = vmatpush1.msra.mxu0 %v677
      %894 = vmatprep.subr.mxu0 %v686
      %895 = vmatpush1.msra.mxu0 %v685
      %896 = vmatprep.subr.mxu0 %v694
      %897 = vmatpush1.msra.mxu0 %v693
      %898 = vmatprep.subr.mxu0 %v702
      %899 = vmatpush1.msra.mxu0 %v701
      %900 = vmatprep.subr.mxu0 %v710
      %901 = vmatpush1.msra.mxu0 %v709
      %902 = vmatprep.subr.mxu0 %v718
      %903 = vmatpush1.msra.mxu0 %v717
      %904 = vmatprep.subr.mxu0 %v726
      %905 = vmatpush1.msra.mxu0 %v725
      %906 = vmatprep.subr.mxu0 %v734
      %907 = vmatpush1.msra.mxu0 %v733
      %908 = vmatprep.subr.mxu0 %v742
      %909 = vmatpush1.msra.mxu0 %v741
      %910 = vmatprep.subr.mxu0 %v750
      %911 = vmatpush1.msra.mxu0 %v749
      %912 = vmatprep.subr.mxu0 %v758
      %913 = vmatpush1.msra.mxu0 %v757
      %914 = vmatprep.subr.mxu0 %v766
      %915 = vmatpush1.msra.mxu0 %v765
      %916 = vmatprep.subr.mxu0 %v774
      %917 = vmatpush1.msra.mxu0 %v773
      %918 = vmatprep.subr.mxu0 %v782
      %919 = vmatpush1.msra.mxu0 %v781
      %920 = vmatprep.subr.mxu0 %v790
      %921 = vmatpush1.msra.mxu0 %v789
      %922 = vmatprep.subr.mxu0 %v798
      %923 = vmatpush1.msra.mxu0 %v797
      %924 = vmatprep.subr.mxu0 0.0
      %925 = vmatpush1.msra.mxu0 0.0
      %926 = vmatprep.subr.mxu0 0.0
      %927 = vmatpush1.msra.mxu0 0.0
      %928 = vmatprep.subr.mxu0 0.0
      %929 = vmatpush1.msra.mxu0 0.0
      %930 = vmatprep.subr.mxu0 0.0
      %931 = vmatpush1.msra.mxu0 0.0
      %932 = vmatprep.subr.mxu0 0.0
      %933 = vmatpush1.msra.mxu0 0.0
      %934 = vmatprep.subr.mxu0 0.0
      %935 = vmatpush1.msra.mxu0 0.0
      %936 = vmatprep.subr.mxu0 0.0
      %937 = vmatpush1.msra.mxu0 0.0
      %938 = vmatprep.subr.mxu0 0.0
      %939 = vmatpush1.msra.mxu0 0.0
      %940 = vmatprep.subr.mxu0 0.0
      %941 = vmatpush1.msra.mxu0 0.0
      %942 = vmatprep.subr.mxu0 0.0
      %943 = vmatpush1.msra.mxu0 0.0
      %944 = vmatprep.subr.mxu0 0.0
      %945 = vmatpush1.msra.mxu0 0.0
      %946 = vmatprep.subr.mxu0 0.0
      %947 = vmatpush1.msra.mxu0 0.0
      %948 = vmatprep.subr.mxu0 0.0
      %949 = vmatpush1.msra.mxu0 0.0
      %950 = vmatprep.subr.mxu0 0.0
      %951 = vmatpush1.msra.mxu0 0.0
      %952 = vmatprep.subr.mxu0 0.0
      %953 = vmatpush1.msra.mxu0 0.0
      %954 = vmatprep.subr.mxu0 0.0
      %955 = vmatpush1.msra.mxu0 0.0
      %956 = vmatprep.mubr.f32.mxu0 0.0
      %957 = vmatmul.mubr.f32.gmra.mrb[0].mxu0 %v671
      %v958 = vpop.f32.mrb[0].mxu0
      %v959 = vadd.f32 0.0, %v958
      %v960 = vpop.f32.mrb[0].mxu0
      %v961 = vadd.f32 0.0, %v960
      %962 = vmatprep.mubr.f32.mxu0 0.0
      %963 = vmatmul.mubr.f32.gmra.mrb[0].mxu0 %v672
      %v964 = vpop.f32.mrb[0].mxu0
      %v965 = vadd.f32 0.0, %v964
      %v966 = vpop.f32.mrb[0].mxu0
      %v967 = vadd.f32 0.0, %v966
      %968 = vmatprep.mubr.f32.mxu0 0.0
      %969 = vmatmul.mubr.f32.gmra.mrb[0].mxu0 %v673
      %v970 = vpop.f32.mrb[0].mxu0
      %v971 = vadd.f32 0.0, %v970
      %v972 = vpop.f32.mrb[0].mxu0
      %v973 = vadd.f32 0.0, %v972
      %974 = vmatprep.mubr.f32.mxu0 0.0
      %975 = vmatmul.mubr.f32.gmra.mrb[0].mxu0 %v674
      %v976 = vpop.f32.mrb[0].mxu0
      %v977 = vadd.f32 0.0, %v976
      %v978 = vpop.f32.mrb[0].mxu0
      %v979 = vadd.f32 0.0, %v978
      %980 = vdwg.mxu0
      %981 = vmatprep.subr.mxu0 %v680
      %982 = vmatpush1.msra.mxu0 %v679
      %983 = vmatprep.subr.mxu0 %v688
      %984 = vmatpush1.msra.mxu0 %v687
      %985 = vmatprep.subr.mxu0 %v696
      %986 = vmatpush1.msra.mxu0 %v695
      %987 = vmatprep.subr.mxu0 %v704
      %988 = vmatpush1.msra.mxu0 %v703
      %989 = vmatprep.subr.mxu0 %v712
      %990 = vmatpush1.msra.mxu0 %v711
      %991 = vmatprep.subr.mxu0 %v720
      %992 = vmatpush1.msra.mxu0 %v719
      %993 = vmatprep.subr.mxu0 %v728
      %994 = vmatpush1.msra.mxu0 %v727
      %995 = vmatprep.subr.mxu0 %v736
      %996 = vmatpush1.msra.mxu0 %v735
      %997 = vmatprep.subr.mxu0 %v744
      %998 = vmatpush1.msra.mxu0 %v743
      %999 = vmatprep.subr.mxu0 %v752
      %1000 = vmatpush1.msra.mxu0 %v751
      %1001 = vmatprep.subr.mxu0 %v760
      %1002 = vmatpush1.msra.mxu0 %v759
      %1003 = vmatprep.subr.mxu0 %v768
      %1004 = vmatpush1.msra.mxu0 %v767
      %1005 = vmatprep.subr.mxu0 %v776
      %1006 = vmatpush1.msra.mxu0 %v775
      %1007 = vmatprep.subr.mxu0 %v784
      %1008 = vmatpush1.msra.mxu0 %v783
      %1009 = vmatprep.subr.mxu0 %v792
      %1010 = vmatpush1.msra.mxu0 %v791
      %1011 = vmatprep.subr.mxu0 %v800
      %1012 = vmatpush1.msra.mxu0 %v799
      %1013 = vmatprep.subr.mxu0 0.0
      %1014 = vmatpush1.msra.mxu0 0.0
      %1015 = vmatprep.subr.mxu0 0.0
      %1016 = vmatpush1.msra.mxu0 0.0
      %1017 = vmatprep.subr.mxu0 0.0
      %1018 = vmatpush1.msra.mxu0 0.0
      %1019 = vmatprep.subr.mxu0 0.0
      %1020 = vmatpush1.msra.mxu0 0.0
      %1021 = vmatprep.subr.mxu0 0.0
      %1022 = vmatpush1.msra.mxu0 0.0
      %1023 = vmatprep.subr.mxu0 0.0
      %1024 = vmatpush1.msra.mxu0 0.0
      %1025 = vmatprep.subr.mxu0 0.0
      %1026 = vmatpush1.msra.mxu0 0.0
      %1027 = vmatprep.subr.mxu0 0.0
      %1028 = vmatpush1.msra.mxu0 0.0
      %1029 = vmatprep.subr.mxu0 0.0
      %1030 = vmatpush1.msra.mxu0 0.0
      %1031 = vmatprep.subr.mxu0 0.0
      %1032 = vmatpush1.msra.mxu0 0.0
      %1033 = vmatprep.subr.mxu0 0.0
      %1034 = vmatpush1.msra.mxu0 0.0
      %1035 = vmatprep.subr.mxu0 0.0
      %1036 = vmatpush1.msra.mxu0 0.0
      %1037 = vmatprep.subr.mxu0 0.0
      %1038 = vmatpush1.msra.mxu0 0.0
      %1039 = vmatprep.subr.mxu0 0.0
      %1040 = vmatpush1.msra.mxu0 0.0
      %1041 = vmatprep.subr.mxu0 0.0
      %1042 = vmatpush1.msra.mxu0 0.0
      %1043 = vmatprep.subr.mxu0 0.0
      %1044 = vmatpush1.msra.mxu0 0.0
      %1045 = vmatprep.mubr.f32.mxu0 0.0
      %1046 = vmatmul.mubr.f32.gmra.mrb[0].mxu0 %v671
      %v1047 = vpop.f32.mrb[0].mxu0
      %v1048 = vadd.f32 0.0, %v1047
      %v1049 = vpop.f32.mrb[0].mxu0
      %v1050 = vadd.f32 0.0, %v1049
      %1051 = vmatprep.mubr.f32.mxu0 0.0
      %1052 = vmatmul.mubr.f32.gmra.mrb[0].mxu0 %v672
      %v1053 = vpop.f32.mrb[0].mxu0
      %v1054 = vadd.f32 0.0, %v1053
      %v1055 = vpop.f32.mrb[0].mxu0
      %v1056 = vadd.f32 0.0, %v1055
      %1057 = vmatprep.mubr.f32.mxu0 0.0
      %1058 = vmatmul.mubr.f32.gmra.mrb[0].mxu0 %v673
      %v1059 = vpop.f32.mrb[0].mxu0
      %v1060 = vadd.f32 0.0, %v1059
      %v1061 = vpop.f32.mrb[0].mxu0
      %v1062 = vadd.f32 0.0, %v1061
      %1063 = vmatprep.mubr.f32.mxu0 0.0
      %1064 = vmatmul.mubr.f32.gmra.mrb[0].mxu0 %v674
      %v1065 = vpop.f32.mrb[0].mxu0
      %v1066 = vadd.f32 0.0, %v1065
      %v1067 = vpop.f32.mrb[0].mxu0
      %v1068 = vadd.f32 0.0, %v1067
      %1069 = vdwg.mxu0
      %1070 = vmatprep.subr.mxu0 %v682
      %1071 = vmatpush1.msra.mxu0 %v681
      %1072 = vmatprep.subr.mxu0 %v690
      %1073 = vmatpush1.msra.mxu0 %v689
      %1074 = vmatprep.subr.mxu0 %v698
      %1075 = vmatpush1.msra.mxu0 %v697
      %1076 = vmatprep.subr.mxu0 %v706
      %1077 = vmatpush1.msra.mxu0 %v705
      %1078 = vmatprep.subr.mxu0 %v714
      %1079 = vmatpush1.msra.mxu0 %v713
      %1080 = vmatprep.subr.mxu0 %v722
      %1081 = vmatpush1.msra.mxu0 %v721
      %1082 = vmatprep.subr.mxu0 %v730
      %1083 = vmatpush1.msra.mxu0 %v729
      %1084 = vmatprep.subr.mxu0 %v738
      %1085 = vmatpush1.msra.mxu0 %v737
      %1086 = vmatprep.subr.mxu0 %v746
      %1087 = vmatpush1.msra.mxu0 %v745
      %1088 = vmatprep.subr.mxu0 %v754
      %1089 = vmatpush1.msra.mxu0 %v753
      %1090 = vmatprep.subr.mxu0 %v762
      %1091 = vmatpush1.msra.mxu0 %v761
      %1092 = vmatprep.subr.mxu0 %v770
      %1093 = vmatpush1.msra.mxu0 %v769
      %1094 = vmatprep.subr.mxu0 %v778
      %1095 = vmatpush1.msra.mxu0 %v777
      %1096 = vmatprep.subr.mxu0 %v786
      %1097 = vmatpush1.msra.mxu0 %v785
      %1098 = vmatprep.subr.mxu0 %v794
      %1099 = vmatpush1.msra.mxu0 %v793
      %1100 = vmatprep.subr.mxu0 %v802
      %1101 = vmatpush1.msra.mxu0 %v801
      %1102 = vmatprep.subr.mxu0 0.0
      %1103 = vmatpush1.msra.mxu0 0.0
      %1104 = vmatprep.subr.mxu0 0.0
      %1105 = vmatpush1.msra.mxu0 0.0
      %1106 = vmatprep.subr.mxu0 0.0
      %1107 = vmatpush1.msra.mxu0 0.0
      %1108 = vmatprep.subr.mxu0 0.0
      %1109 = vmatpush1.msra.mxu0 0.0
      %1110 = vmatprep.subr.mxu0 0.0
      %1111 = vmatpush1.msra.mxu0 0.0
      %1112 = vmatprep.subr.mxu0 0.0
      %1113 = vmatpush1.msra.mxu0 0.0
      %1114 = vmatprep.subr.mxu0 0.0
      %1115 = vmatpush1.msra.mxu0 0.0
      %1116 = vmatprep.subr.mxu0 0.0
      %1117 = vmatpush1.msra.mxu0 0.0
      %1118 = vmatprep.subr.mxu0 0.0
      %1119 = vmatpush1.msra.mxu0 0.0
      %1120 = vmatprep.subr.mxu0 0.0
      %1121 = vmatpush1.msra.mxu0 0.0
      %1122 = vmatprep.subr.mxu0 0.0
      %1123 = vmatpush1.msra.mxu0 0.0
      %1124 = vmatprep.subr.mxu0 0.0
      %1125 = vmatpush1.msra.mxu0 0.0
      %1126 = vmatprep.subr.mxu0 0.0
      %1127 = vmatpush1.msra.mxu0 0.0
      %1128 = vmatprep.subr.mxu0 0.0
      %1129 = vmatpush1.msra.mxu0 0.0
      %1130 = vmatprep.subr.mxu0 0.0
      %1131 = vmatpush1.msra.mxu0 0.0
      %1132 = vmatprep.subr.mxu0 0.0
      %1133 = vmatpush1.msra.mxu0 0.0
      %1134 = vmatprep.mubr.f32.mxu0 0.0
      %1135 = vmatmul.mubr.f32.gmra.mrb[0].mxu0 %v671
      %v1136 = vpop.f32.mrb[0].mxu0
      %v1137 = vadd.f32 0.0, %v1136
      %v1138 = vpop.f32.mrb[0].mxu0
      %v1139 = vadd.f32 0.0, %v1138
      %1140 = vmatprep.mubr.f32.mxu0 0.0
      %1141 = vmatmul.mubr.f32.gmra.mrb[0].mxu0 %v672
      %v1142 = vpop.f32.mrb[0].mxu0
      %v1143 = vadd.f32 0.0, %v1142
      %v1144 = vpop.f32.mrb[0].mxu0
      %v1145 = vadd.f32 0.0, %v1144
      %1146 = vmatprep.mubr.f32.mxu0 0.0
      %1147 = vmatmul.mubr.f32.gmra.mrb[0].mxu0 %v673
      %v1148 = vpop.f32.mrb[0].mxu0
      %v1149 = vadd.f32 0.0, %v1148
      %v1150 = vpop.f32.mrb[0].mxu0
      %v1151 = vadd.f32 0.0, %v1150
      %1152 = vmatprep.mubr.f32.mxu0 0.0
      %1153 = vmatmul.mubr.f32.gmra.mrb[0].mxu0 %v674
      %v1154 = vpop.f32.mrb[0].mxu0
      %v1155 = vadd.f32 0.0, %v1154
      %v1156 = vpop.f32.mrb[0].mxu0
      %v1157 = vadd.f32 0.0, %v1156
      %1158 = vdwg.mxu0
      %1159 = vmatprep.subr.mxu0 %v544
      %1160 = vmatpush1.msra.mxu0 %v543
      %1161 = vmatprep.subr.mxu0 %v552
      %1162 = vmatpush1.msra.mxu0 %v551
      %1163 = vmatprep.subr.mxu0 %v560
      %1164 = vmatpush1.msra.mxu0 %v559
      %1165 = vmatprep.subr.mxu0 %v568
      %1166 = vmatpush1.msra.mxu0 %v567
      %1167 = vmatprep.subr.mxu0 %v576
      %1168 = vmatpush1.msra.mxu0 %v575
      %1169 = vmatprep.subr.mxu0 %v584
      %1170 = vmatpush1.msra.mxu0 %v583
      %1171 = vmatprep.subr.mxu0 %v592
      %1172 = vmatpush1.msra.mxu0 %v591
      %1173 = vmatprep.subr.mxu0 %v600
      %1174 = vmatpush1.msra.mxu0 %v599
      %1175 = vmatprep.subr.mxu0 %v608
      %1176 = vmatpush1.msra.mxu0 %v607
      %1177 = vmatprep.subr.mxu0 %v616
      %1178 = vmatpush1.msra.mxu0 %v615
      %1179 = vmatprep.subr.mxu0 %v624
      %1180 = vmatpush1.msra.mxu0 %v623
      %1181 = vmatprep.subr.mxu0 %v632
      %1182 = vmatpush1.msra.mxu0 %v631
      %1183 = vmatprep.subr.mxu0 %v640
      %1184 = vmatpush1.msra.mxu0 %v639
      %1185 = vmatprep.subr.mxu0 %v648
      %1186 = vmatpush1.msra.mxu0 %v647
      %1187 = vmatprep.subr.mxu0 %v656
      %1188 = vmatpush1.msra.mxu0 %v655
      %1189 = vmatprep.subr.mxu0 %v664
      %1190 = vmatpush1.msra.mxu0 %v663
      %1191 = vmatprep.subr.mxu0 0.0
      %1192 = vmatpush1.msra.mxu0 0.0
      %1193 = vmatprep.subr.mxu0 0.0
      %1194 = vmatpush1.msra.mxu0 0.0
      %1195 = vmatprep.subr.mxu0 0.0
      %1196 = vmatpush1.msra.mxu0 0.0
      %1197 = vmatprep.subr.mxu0 0.0
      %1198 = vmatpush1.msra.mxu0 0.0
      %1199 = vmatprep.subr.mxu0 0.0
      %1200 = vmatpush1.msra.mxu0 0.0
      %1201 = vmatprep.subr.mxu0 0.0
      %1202 = vmatpush1.msra.mxu0 0.0
      %1203 = vmatprep.subr.mxu0 0.0
      %1204 = vmatpush1.msra.mxu0 0.0
      %1205 = vmatprep.subr.mxu0 0.0
      %1206 = vmatpush1.msra.mxu0 0.0
      %1207 = vmatprep.subr.mxu0 0.0
      %1208 = vmatpush1.msra.mxu0 0.0
      %1209 = vmatprep.subr.mxu0 0.0
      %1210 = vmatpush1.msra.mxu0 0.0
      %1211 = vmatprep.subr.mxu0 0.0
      %1212 = vmatpush1.msra.mxu0 0.0
      %1213 = vmatprep.subr.mxu0 0.0
      %1214 = vmatpush1.msra.mxu0 0.0
      %1215 = vmatprep.subr.mxu0 0.0
      %1216 = vmatpush1.msra.mxu0 0.0
      %1217 = vmatprep.subr.mxu0 0.0
      %1218 = vmatpush1.msra.mxu0 0.0
      %1219 = vmatprep.subr.mxu0 0.0
      %1220 = vmatpush1.msra.mxu0 0.0
      %1221 = vmatprep.subr.mxu0 0.0
      %1222 = vmatpush1.msra.mxu0 0.0
      %1223 = vmatprep.mubr.f32.mxu0 0.0
      %1224 = vmatmul.mubr.f32.gmra.mrb[0].mxu0 %v539
      %v1225 = vpop.f32.mrb[0].mxu0
      %v1226 = vadd.f32 %v870, %v1225
      %v1227 = vpop.f32.mrb[0].mxu0
      %v1228 = vadd.f32 %v872, %v1227
      %1229 = vmatprep.mubr.f32.mxu0 0.0
      %1230 = vmatmul.mubr.f32.gmra.mrb[0].mxu0 %v540
      %v1231 = vpop.f32.mrb[0].mxu0
      %v1232 = vadd.f32 %v876, %v1231
      %v1233 = vpop.f32.mrb[0].mxu0
      %v1234 = vadd.f32 %v878, %v1233
      %1235 = vmatprep.mubr.f32.mxu0 0.0
      %1236 = vmatmul.mubr.f32.gmra.mrb[0].mxu0 %v541
      %v1237 = vpop.f32.mrb[0].mxu0
      %v1238 = vadd.f32 %v882, %v1237
      %v1239 = vpop.f32.mrb[0].mxu0
      %v1240 = vadd.f32 %v884, %v1239
      %1241 = vmatprep.mubr.f32.mxu0 0.0
      %1242 = vmatmul.mubr.f32.gmra.mrb[0].mxu0 %v542
      %v1243 = vpop.f32.mrb[0].mxu0
      %v1244 = vadd.f32 %v888, %v1243
      %v1245 = vpop.f32.mrb[0].mxu0
      %v1246 = vadd.f32 %v890, %v1245
      %1247 = vdwg.mxu0
      %1248 = vmatprep.subr.mxu0 %v546
      %1249 = vmatpush1.msra.mxu0 %v545
      %1250 = vmatprep.subr.mxu0 %v554
      %1251 = vmatpush1.msra.mxu0 %v553
      %1252 = vmatprep.subr.mxu0 %v562
      %1253 = vmatpush1.msra.mxu0 %v561
      %1254 = vmatprep.subr.mxu0 %v570
      %1255 = vmatpush1.msra.mxu0 %v569
      %1256 = vmatprep.subr.mxu0 %v578
      %1257 = vmatpush1.msra.mxu0 %v577
      %1258 = vmatprep.subr.mxu0 %v586
      %1259 = vmatpush1.msra.mxu0 %v585
      %1260 = vmatprep.subr.mxu0 %v594
      %1261 = vmatpush1.msra.mxu0 %v593
      %1262 = vmatprep.subr.mxu0 %v602
      %1263 = vmatpush1.msra.mxu0 %v601
      %1264 = vmatprep.subr.mxu0 %v610
      %1265 = vmatpush1.msra.mxu0 %v609
      %1266 = vmatprep.subr.mxu0 %v618
      %1267 = vmatpush1.msra.mxu0 %v617
      %1268 = vmatprep.subr.mxu0 %v626
      %1269 = vmatpush1.msra.mxu0 %v625
      %1270 = vmatprep.subr.mxu0 %v634
      %1271 = vmatpush1.msra.mxu0 %v633
      %1272 = vmatprep.subr.mxu0 %v642
      %1273 = vmatpush1.msra.mxu0 %v641
      %1274 = vmatprep.subr.mxu0 %v650
      %1275 = vmatpush1.msra.mxu0 %v649
      %1276 = vmatprep.subr.mxu0 %v658
      %1277 = vmatpush1.msra.mxu0 %v657
      %1278 = vmatprep.subr.mxu0 %v666
      %1279 = vmatpush1.msra.mxu0 %v665
      %1280 = vmatprep.subr.mxu0 0.0
      %1281 = vmatpush1.msra.mxu0 0.0
      %1282 = vmatprep.subr.mxu0 0.0
      %1283 = vmatpush1.msra.mxu0 0.0
      %1284 = vmatprep.subr.mxu0 0.0
      %1285 = vmatpush1.msra.mxu0 0.0
      %1286 = vmatprep.subr.mxu0 0.0
      %1287 = vmatpush1.msra.mxu0 0.0
      %1288 = vmatprep.subr.mxu0 0.0
      %1289 = vmatpush1.msra.mxu0 0.0
      %1290 = vmatprep.subr.mxu0 0.0
      %1291 = vmatpush1.msra.mxu0 0.0
      %1292 = vmatprep.subr.mxu0 0.0
      %1293 = vmatpush1.msra.mxu0 0.0
      %1294 = vmatprep.subr.mxu0 0.0
      %1295 = vmatpush1.msra.mxu0 0.0
      %1296 = vmatprep.subr.mxu0 0.0
      %1297 = vmatpush1.msra.mxu0 0.0
      %1298 = vmatprep.subr.mxu0 0.0
      %1299 = vmatpush1.msra.mxu0 0.0
      %1300 = vmatprep.subr.mxu0 0.0
      %1301 = vmatpush1.msra.mxu0 0.0
      %1302 = vmatprep.subr.mxu0 0.0
      %1303 = vmatpush1.msra.mxu0 0.0
      %1304 = vmatprep.subr.mxu0 0.0
      %1305 = vmatpush1.msra.mxu0 0.0
      %1306 = vmatprep.subr.mxu0 0.0
      %1307 = vmatpush1.msra.mxu0 0.0
      %1308 = vmatprep.subr.mxu0 0.0
      %1309 = vmatpush1.msra.mxu0 0.0
      %1310 = vmatprep.subr.mxu0 0.0
      %1311 = vmatpush1.msra.mxu0 0.0
      %1312 = vmatprep.mubr.f32.mxu0 0.0
      %1313 = vmatmul.mubr.f32.gmra.mrb[0].mxu0 %v539
      %v1314 = vpop.f32.mrb[0].mxu0
      %v1315 = vadd.f32 %v959, %v1314
      %v1316 = vpop.f32.mrb[0].mxu0
      %v1317 = vadd.f32 %v961, %v1316
      %1318 = vmatprep.mubr.f32.mxu0 0.0
      %1319 = vmatmul.mubr.f32.gmra.mrb[0].mxu0 %v540
      %v1320 = vpop.f32.mrb[0].mxu0
      %v1321 = vadd.f32 %v965, %v1320
      %v1322 = vpop.f32.mrb[0].mxu0
      %v1323 = vadd.f32 %v967, %v1322
      %1324 = vmatprep.mubr.f32.mxu0 0.0
      %1325 = vmatmul.mubr.f32.gmra.mrb[0].mxu0 %v541
      %v1326 = vpop.f32.mrb[0].mxu0
      %v1327 = vadd.f32 %v971, %v1326
      %v1328 = vpop.f32.mrb[0].mxu0
      %v1329 = vadd.f32 %v973, %v1328
      %1330 = vmatprep.mubr.f32.mxu0 0.0
      %1331 = vmatmul.mubr.f32.gmra.mrb[0].mxu0 %v542
      %v1332 = vpop.f32.mrb[0].mxu0
      %v1333 = vadd.f32 %v977, %v1332
      %v1334 = vpop.f32.mrb[0].mxu0
      %v1335 = vadd.f32 %v979, %v1334
      %1336 = vdwg.mxu0
      %1337 = vmatprep.subr.mxu0 %v548
      %1338 = vmatpush1.msra.mxu0 %v547
      %1339 = vmatprep.subr.mxu0 %v556
      %1340 = vmatpush1.msra.mxu0 %v555
      %1341 = vmatprep.subr.mxu0 %v564
      %1342 = vmatpush1.msra.mxu0 %v563
      %1343 = vmatprep.subr.mxu0 %v572
      %1344 = vmatpush1.msra.mxu0 %v571
      %1345 = vmatprep.subr.mxu0 %v580
      %1346 = vmatpush1.msra.mxu0 %v579
      %1347 = vmatprep.subr.mxu0 %v588
      %1348 = vmatpush1.msra.mxu0 %v587
      %1349 = vmatprep.subr.mxu0 %v596
      %1350 = vmatpush1.msra.mxu0 %v595
      %1351 = vmatprep.subr.mxu0 %v604
      %1352 = vmatpush1.msra.mxu0 %v603
      %1353 = vmatprep.subr.mxu0 %v612
      %1354 = vmatpush1.msra.mxu0 %v611
      %1355 = vmatprep.subr.mxu0 %v620
      %1356 = vmatpush1.msra.mxu0 %v619
      %1357 = vmatprep.subr.mxu0 %v628
      %1358 = vmatpush1.msra.mxu0 %v627
      %1359 = vmatprep.subr.mxu0 %v636
      %1360 = vmatpush1.msra.mxu0 %v635
      %1361 = vmatprep.subr.mxu0 %v644
      %1362 = vmatpush1.msra.mxu0 %v643
      %1363 = vmatprep.subr.mxu0 %v652
      %1364 = vmatpush1.msra.mxu0 %v651
      %1365 = vmatprep.subr.mxu0 %v660
      %1366 = vmatpush1.msra.mxu0 %v659
      %1367 = vmatprep.subr.mxu0 %v668
      %1368 = vmatpush1.msra.mxu0 %v667
      %1369 = vmatprep.subr.mxu0 0.0
      %1370 = vmatpush1.msra.mxu0 0.0
      %1371 = vmatprep.subr.mxu0 0.0
      %1372 = vmatpush1.msra.mxu0 0.0
      %1373 = vmatprep.subr.mxu0 0.0
      %1374 = vmatpush1.msra.mxu0 0.0
      %1375 = vmatprep.subr.mxu0 0.0
      %1376 = vmatpush1.msra.mxu0 0.0
      %1377 = vmatprep.subr.mxu0 0.0
      %1378 = vmatpush1.msra.mxu0 0.0
      %1379 = vmatprep.subr.mxu0 0.0
      %1380 = vmatpush1.msra.mxu0 0.0
      %1381 = vmatprep.subr.mxu0 0.0
      %1382 = vmatpush1.msra.mxu0 0.0
      %1383 = vmatprep.subr.mxu0 0.0
      %1384 = vmatpush1.msra.mxu0 0.0
      %1385 = vmatprep.subr.mxu0 0.0
      %1386 = vmatpush1.msra.mxu0 0.0
      %1387 = vmatprep.subr.mxu0 0.0
      %1388 = vmatpush1.msra.mxu0 0.0
      %1389 = vmatprep.subr.mxu0 0.0
      %1390 = vmatpush1.msra.mxu0 0.0
      %1391 = vmatprep.subr.mxu0 0.0
      %1392 = vmatpush1.msra.mxu0 0.0
      %1393 = vmatprep.subr.mxu0 0.0
      %1394 = vmatpush1.msra.mxu0 0.0
      %1395 = vmatprep.subr.mxu0 0.0
      %1396 = vmatpush1.msra.mxu0 0.0
      %1397 = vmatprep.subr.mxu0 0.0
      %1398 = vmatpush1.msra.mxu0 0.0
      %1399 = vmatprep.subr.mxu0 0.0
      %1400 = vmatpush1.msra.mxu0 0.0
      %1401 = vmatprep.mubr.f32.mxu0 0.0
      %1402 = vmatmul.mubr.f32.gmra.mrb[0].mxu0 %v539
      %v1403 = vpop.f32.mrb[0].mxu0
      %v1404 = vadd.f32 %v1048, %v1403
      %v1405 = vpop.f32.mrb[0].mxu0
      %v1406 = vadd.f32 %v1050, %v1405
      %1407 = vmatprep.mubr.f32.mxu0 0.0
      %1408 = vmatmul.mubr.f32.gmra.mrb[0].mxu0 %v540
      %v1409 = vpop.f32.mrb[0].mxu0
      %v1410 = vadd.f32 %v1054, %v1409
      %v1411 = vpop.f32.mrb[0].mxu0
      %v1412 = vadd.f32 %v1056, %v1411
      %1413 = vmatprep.mubr.f32.mxu0 0.0
      %1414 = vmatmul.mubr.f32.gmra.mrb[0].mxu0 %v541
      %v1415 = vpop.f32.mrb[0].mxu0
      %v1416 = vadd.f32 %v1060, %v1415
      %v1417 = vpop.f32.mrb[0].mxu0
      %v1418 = vadd.f32 %v1062, %v1417
      %1419 = vmatprep.mubr.f32.mxu0 0.0
      %1420 = vmatmul.mubr.f32.gmra.mrb[0].mxu0 %v542
      %v1421 = vpop.f32.mrb[0].mxu0
      %v1422 = vadd.f32 %v1066, %v1421
      %v1423 = vpop.f32.mrb[0].mxu0
      %v1424 = vadd.f32 %v1068, %v1423
      %1425 = vdwg.mxu0
      %1426 = vmatprep.subr.mxu0 %v550
      %1427 = vmatpush1.msra.mxu0 %v549
      %1428 = vmatprep.subr.mxu0 %v558
      %1429 = vmatpush1.msra.mxu0 %v557
      %1430 = vmatprep.subr.mxu0 %v566
      %1431 = vmatpush1.msra.mxu0 %v565
      %1432 = vmatprep.subr.mxu0 %v574
      %1433 = vmatpush1.msra.mxu0 %v573
      %1434 = vmatprep.subr.mxu0 %v582
      %1435 = vmatpush1.msra.mxu0 %v581
      %1436 = vmatprep.subr.mxu0 %v590
      %1437 = vmatpush1.msra.mxu0 %v589
      %1438 = vmatprep.subr.mxu0 %v598
      %1439 = vmatpush1.msra.mxu0 %v597
      %1440 = vmatprep.subr.mxu0 %v606
      %1441 = vmatpush1.msra.mxu0 %v605
      %1442 = vmatprep.subr.mxu0 %v614
      %1443 = vmatpush1.msra.mxu0 %v613
      %1444 = vmatprep.subr.mxu0 %v622
      %1445 = vmatpush1.msra.mxu0 %v621
      %1446 = vmatprep.subr.mxu0 %v630
      %1447 = vmatpush1.msra.mxu0 %v629
      %1448 = vmatprep.subr.mxu0 %v638
      %1449 = vmatpush1.msra.mxu0 %v637
      %1450 = vmatprep.subr.mxu0 %v646
      %1451 = vmatpush1.msra.mxu0 %v645
      %1452 = vmatprep.subr.mxu0 %v654
      %1453 = vmatpush1.msra.mxu0 %v653
      %1454 = vmatprep.subr.mxu0 %v662
      %1455 = vmatpush1.msra.mxu0 %v661
      %1456 = vmatprep.subr.mxu0 %v670
      %1457 = vmatpush1.msra.mxu0 %v669
      %1458 = vmatprep.subr.mxu0 0.0
      %1459 = vmatpush1.msra.mxu0 0.0
      %1460 = vmatprep.subr.mxu0 0.0
      %1461 = vmatpush1.msra.mxu0 0.0
      %1462 = vmatprep.subr.mxu0 0.0
      %1463 = vmatpush1.msra.mxu0 0.0
      %1464 = vmatprep.subr.mxu0 0.0
      %1465 = vmatpush1.msra.mxu0 0.0
      %1466 = vmatprep.subr.mxu0 0.0
      %1467 = vmatpush1.msra.mxu0 0.0
      %1468 = vmatprep.subr.mxu0 0.0
      %1469 = vmatpush1.msra.mxu0 0.0
      %1470 = vmatprep.subr.mxu0 0.0
      %1471 = vmatpush1.msra.mxu0 0.0
      %1472 = vmatprep.subr.mxu0 0.0
      %1473 = vmatpush1.msra.mxu0 0.0
      %1474 = vmatprep.subr.mxu0 0.0
      %1475 = vmatpush1.msra.mxu0 0.0
      %1476 = vmatprep.subr.mxu0 0.0
      %1477 = vmatpush1.msra.mxu0 0.0
      %1478 = vmatprep.subr.mxu0 0.0
      %1479 = vmatpush1.msra.mxu0 0.0
      %1480 = vmatprep.subr.mxu0 0.0
      %1481 = vmatpush1.msra.mxu0 0.0
      %1482 = vmatprep.subr.mxu0 0.0
      %1483 = vmatpush1.msra.mxu0 0.0
      %1484 = vmatprep.subr.mxu0 0.0
      %1485 = vmatpush1.msra.mxu0 0.0
      %1486 = vmatprep.subr.mxu0 0.0
      %1487 = vmatpush1.msra.mxu0 0.0
      %1488 = vmatprep.subr.mxu0 0.0
      %1489 = vmatpush1.msra.mxu0 0.0
      %1490 = vmatprep.mubr.f32.mxu0 0.0
      %1491 = vmatmul.mubr.f32.gmra.mrb[0].mxu0 %v539
      %v1492 = vpop.f32.mrb[0].mxu0
      %v1493 = vadd.f32 %v1137, %v1492
      %v1494 = vpop.f32.mrb[0].mxu0
      %v1495 = vadd.f32 %v1139, %v1494
      %1496 = vmatprep.mubr.f32.mxu0 0.0
      %1497 = vmatmul.mubr.f32.gmra.mrb[0].mxu0 %v540
      %v1498 = vpop.f32.mrb[0].mxu0
      %v1499 = vadd.f32 %v1143, %v1498
      %v1500 = vpop.f32.mrb[0].mxu0
      %v1501 = vadd.f32 %v1145, %v1500
      %1502 = vmatprep.mubr.f32.mxu0 0.0
      %1503 = vmatmul.mubr.f32.gmra.mrb[0].mxu0 %v541
      %v1504 = vpop.f32.mrb[0].mxu0
      %v1505 = vadd.f32 %v1149, %v1504
      %v1506 = vpop.f32.mrb[0].mxu0
      %v1507 = vadd.f32 %v1151, %v1506
      %1508 = vmatprep.mubr.f32.mxu0 0.0
      %1509 = vmatmul.mubr.f32.gmra.mrb[0].mxu0 %v542
      %v1510 = vpop.f32.mrb[0].mxu0
      %v1511 = vadd.f32 %v1155, %v1510
      %v1512 = vpop.f32.mrb[0].mxu0
      %v1513 = vadd.f32 %v1157, %v1512
      %1514 = vdwg.mxu0
      %v1515 = vld [vmem:[%s7] sm:$0xff]
      %v1516 = vld [vmem:[%s7 + $0x8] sm:$0xff]
      %v1517 = vld [vmem:[%s7 + $0x10] sm:$0xff]
      %v1518 = vld [vmem:[%s7 + $0x18] sm:$0xff]
      %v1519 = vld [vmem:[%s7 + $0x20] sm:$0xff]
      %v1520 = vld [vmem:[%s7 + $0x28] sm:$0xff]
      %v1521 = vld [vmem:[%s7 + $0x30] sm:$0xff]
      %v1522 = vld [vmem:[%s7 + $0x38] sm:$0xff]
      %v1523 = vld [vmem:[%s7 + $0x40] sm:$0xff]
      %v1524 = vld [vmem:[%s7 + $0x48] sm:$0xff]
      %v1525 = vld [vmem:[%s7 + $0x50] sm:$0xff]
      %v1526 = vld [vmem:[%s7 + $0x58] sm:$0xff]
      %v1527 = vld [vmem:[%s7 + $0x60] sm:$0xff]
      %v1528 = vld [vmem:[%s7 + $0x68] sm:$0xff]
      %v1529 = vld [vmem:[%s7 + $0x70] sm:$0xff]
      %v1530 = vld [vmem:[%s7 + $0x78] sm:$0xff]
      %v1531 = vld [vmem:[%s7 + $0x80] sm:$0xff]
      %v1532 = vld [vmem:[%s7 + $0x88] sm:$0xff]
      %v1533 = vld [vmem:[%s7 + $0x90] sm:$0xff]
      %v1534 = vld [vmem:[%s7 + $0x98] sm:$0xff]
      %v1535 = vld [vmem:[%s7 + $0xa0] sm:$0xff]
      %v1536 = vld [vmem:[%s7 + $0xa8] sm:$0xff]
      %v1537 = vld [vmem:[%s7 + $0xb0] sm:$0xff]
      %v1538 = vld [vmem:[%s7 + $0xb8] sm:$0xff]
      %v1539 = vld [vmem:[%s7 + $0xc0] sm:$0xff]
      %v1540 = vld [vmem:[%s7 + $0xc8] sm:$0xff]
      %v1541 = vld [vmem:[%s7 + $0xd0] sm:$0xff]
      %v1542 = vld [vmem:[%s7 + $0xd8] sm:$0xff]
      %v1543 = vld [vmem:[%s7 + $0xe0] sm:$0xff]
      %v1544 = vld [vmem:[%s7 + $0xe8] sm:$0xff]
      %v1545 = vld [vmem:[%s7 + $0xf0] sm:$0xff]
      %v1546 = vld [vmem:[%s7 + $0xf8] sm:$0xff]
      %v1547 = vld [vmem:[%s7 + $0x100] sm:$0xff]
      %v1548 = vld [vmem:[%s7 + $0x108] sm:$0xff]
      %v1549 = vld [vmem:[%s7 + $0x110] sm:$0xff]
      %v1550 = vld [vmem:[%s7 + $0x118] sm:$0xff]
      %v1551 = vld [vmem:[%s7 + $0x120] sm:$0xff]
      %v1552 = vld [vmem:[%s7 + $0x128] sm:$0xff]
      %v1553 = vld [vmem:[%s7 + $0x130] sm:$0xff]
      %v1554 = vld [vmem:[%s7 + $0x138] sm:$0xff]
      %v1555 = vld [vmem:[%s7 + $0x140] sm:$0xff]
      %v1556 = vld [vmem:[%s7 + $0x148] sm:$0xff]
      %v1557 = vld [vmem:[%s7 + $0x150] sm:$0xff]
      %v1558 = vld [vmem:[%s7 + $0x158] sm:$0xff]
      %v1559 = vld [vmem:[%s7 + $0x160] sm:$0xff]
      %v1560 = vld [vmem:[%s7 + $0x168] sm:$0xff]
      %v1561 = vld [vmem:[%s7 + $0x170] sm:$0xff]
      %v1562 = vld [vmem:[%s7 + $0x178] sm:$0xff]
      %v1563 = vld [vmem:[%s7 + $0x180] sm:$0xff]
      %v1564 = vld [vmem:[%s7 + $0x188] sm:$0xff]
      %v1565 = vld [vmem:[%s7 + $0x190] sm:$0xff]
      %v1566 = vld [vmem:[%s7 + $0x198] sm:$0xff]
      %v1567 = vld [vmem:[%s7 + $0x1a0] sm:$0xff]
      %v1568 = vld [vmem:[%s7 + $0x1a8] sm:$0xff]
      %v1569 = vld [vmem:[%s7 + $0x1b0] sm:$0xff]
      %v1570 = vld [vmem:[%s7 + $0x1b8] sm:$0xff]
      %v1571 = vld [vmem:[%s7 + $0x1c0] sm:$0xff]
      %v1572 = vld [vmem:[%s7 + $0x1c8] sm:$0xff]
      %v1573 = vld [vmem:[%s7 + $0x1d0] sm:$0xff]
      %v1574 = vld [vmem:[%s7 + $0x1d8] sm:$0xff]
      %v1575 = vld [vmem:[%s7 + $0x1e0] sm:$0xff]
      %v1576 = vld [vmem:[%s7 + $0x1e8] sm:$0xff]
      %v1577 = vld [vmem:[%s7 + $0x1f0] sm:$0xff]
      %v1578 = vld [vmem:[%s7 + $0x1f8] sm:$0xff]
      %v1579 = vld [vmem:[%s7 + $0x200] sm:$0xff]
      %v1580 = vld [vmem:[%s7 + $0x208] sm:$0xff]
      %v1581 = vld [vmem:[%s7 + $0x210] sm:$0xff]
      %v1582 = vld [vmem:[%s7 + $0x218] sm:$0xff]
      %v1583 = vld [vmem:[%s7 + $0x220] sm:$0xff]
      %v1584 = vld [vmem:[%s7 + $0x228] sm:$0xff]
      %v1585 = vld [vmem:[%s7 + $0x230] sm:$0xff]
      %v1586 = vld [vmem:[%s7 + $0x238] sm:$0xff]
      %v1587 = vld [vmem:[%s7 + $0x240] sm:$0xff]
      %v1588 = vld [vmem:[%s7 + $0x248] sm:$0xff]
      %v1589 = vld [vmem:[%s7 + $0x250] sm:$0xff]
      %v1590 = vld [vmem:[%s7 + $0x258] sm:$0xff]
      %v1591 = vld [vmem:[%s7 + $0x260] sm:$0xff]
      %v1592 = vld [vmem:[%s7 + $0x268] sm:$0xff]
      %v1593 = vld [vmem:[%s7 + $0x270] sm:$0xff]
      %v1594 = vld [vmem:[%s7 + $0x278] sm:$0xff]
      %v1595 = vld [vmem:[%s7 + $0x280] sm:$0xff]
      %v1596 = vld [vmem:[%s7 + $0x288] sm:$0xff]
      %v1597 = vld [vmem:[%s7 + $0x290] sm:$0xff]
      %v1598 = vld [vmem:[%s7 + $0x298] sm:$0xff]
      %v1599 = vld [vmem:[%s7 + $0x2a0] sm:$0xff]
      %v1600 = vld [vmem:[%s7 + $0x2a8] sm:$0xff]
      %v1601 = vld [vmem:[%s7 + $0x2b0] sm:$0xff]
      %v1602 = vld [vmem:[%s7 + $0x2b8] sm:$0xff]
      %v1603 = vld [vmem:[%s7 + $0x2c0] sm:$0xff]
      %v1604 = vld [vmem:[%s7 + $0x2c8] sm:$0xff]
      %v1605 = vld [vmem:[%s7 + $0x2d0] sm:$0xff]
      %v1606 = vld [vmem:[%s7 + $0x2d8] sm:$0xff]
      %v1607 = vld [vmem:[%s7 + $0x2e0] sm:$0xff]
      %v1608 = vld [vmem:[%s7 + $0x2e8] sm:$0xff]
      %v1609 = vld [vmem:[%s7 + $0x2f0] sm:$0xff]
      %v1610 = vld [vmem:[%s7 + $0x2f8] sm:$0xff]
      %v1611 = vld [vmem:[%s7 + $0x300] sm:$0xff]
      %v1612 = vld [vmem:[%s7 + $0x308] sm:$0xff]
      %v1613 = vld [vmem:[%s7 + $0x310] sm:$0xff]
      %v1614 = vld [vmem:[%s7 + $0x318] sm:$0xff]
      %v1615 = vld [vmem:[%s7 + $0x320] sm:$0xff]
      %v1616 = vld [vmem:[%s7 + $0x328] sm:$0xff]
      %v1617 = vld [vmem:[%s7 + $0x330] sm:$0xff]
      %v1618 = vld [vmem:[%s7 + $0x338] sm:$0xff]
      %v1619 = vld [vmem:[%s7 + $0x340] sm:$0xff]
      %v1620 = vld [vmem:[%s7 + $0x348] sm:$0xff]
      %v1621 = vld [vmem:[%s7 + $0x350] sm:$0xff]
      %v1622 = vld [vmem:[%s7 + $0x358] sm:$0xff]
      %v1623 = vld [vmem:[%s7 + $0x360] sm:$0xff]
      %v1624 = vld [vmem:[%s7 + $0x368] sm:$0xff]
      %v1625 = vld [vmem:[%s7 + $0x370] sm:$0xff]
      %v1626 = vld [vmem:[%s7 + $0x378] sm:$0xff]
      %v1627 = vld [vmem:[%s7 + $0x380] sm:$0xff]
      %v1628 = vld [vmem:[%s7 + $0x388] sm:$0xff]
      %v1629 = vld [vmem:[%s7 + $0x390] sm:$0xff]
      %v1630 = vld [vmem:[%s7 + $0x398] sm:$0xff]
      %v1631 = vld [vmem:[%s7 + $0x3a0] sm:$0xff]
      %v1632 = vld [vmem:[%s7 + $0x3a8] sm:$0xff]
      %v1633 = vld [vmem:[%s7 + $0x3b0] sm:$0xff]
      %v1634 = vld [vmem:[%s7 + $0x3b8] sm:$0xff]
      %v1635 = vld [vmem:[%s7 + $0x3c0] sm:$0xff]
      %v1636 = vld [vmem:[%s7 + $0x3c8] sm:$0xff]
      %v1637 = vld [vmem:[%s7 + $0x3d0] sm:$0xff]
      %v1638 = vld [vmem:[%s7 + $0x3d8] sm:$0xff]
      %v1639 = vld [vmem:[%s7 + $0x3e0] sm:$0xff]
      %v1640 = vld [vmem:[%s7 + $0x3e8] sm:$0xff]
      %v1641 = vld [vmem:[%s7 + $0x3f0] sm:$0xff]
      %v1642 = vld [vmem:[%s7 + $0x3f8] sm:$0xff]
      %v1643 = vld [vmem:[%s7 + $0x400] sm:$0xff]
      %v1644 = vld [vmem:[%s7 + $0x408] sm:$0xff]
      %v1645 = vld [vmem:[%s7 + $0x410] sm:$0xff]
      %v1646 = vld [vmem:[%s7 + $0x418] sm:$0xff]
      %v1647 = vld [vmem:[%s7 + $0x420] sm:$0xff]
      %v1648 = vld [vmem:[%s7 + $0x428] sm:$0xff]
      %v1649 = vld [vmem:[%s7 + $0x430] sm:$0xff]
      %v1650 = vld [vmem:[%s7 + $0x438] sm:$0xff]
      %v1651 = vld [vmem:[%s7 + $0x440] sm:$0xff]
      %v1652 = vld [vmem:[%s7 + $0x448] sm:$0xff]
      %v1653 = vld [vmem:[%s7 + $0x450] sm:$0xff]
      %v1654 = vld [vmem:[%s7 + $0x458] sm:$0xff]
      %v1655 = vld [vmem:[%s7 + $0x460] sm:$0xff]
      %v1656 = vld [vmem:[%s7 + $0x468] sm:$0xff]
      %v1657 = vld [vmem:[%s7 + $0x470] sm:$0xff]
      %v1658 = vld [vmem:[%s7 + $0x478] sm:$0xff]
      %v1659 = vld [vmem:[%s7 + $0x480] sm:$0xff]
      %v1660 = vld [vmem:[%s7 + $0x488] sm:$0xff]
      %v1661 = vld [vmem:[%s7 + $0x490] sm:$0xff]
      %v1662 = vld [vmem:[%s7 + $0x498] sm:$0xff]
      %v1663 = vld [vmem:[%s7 + $0x4a0] sm:$0xff]
      %v1664 = vld [vmem:[%s7 + $0x4a8] sm:$0xff]
      %v1665 = vld [vmem:[%s7 + $0x4b0] sm:$0xff]
      %v1666 = vld [vmem:[%s7 + $0x4b8] sm:$0xff]
      %v1667 = vld [vmem:[%s7 + $0x4c0] sm:$0xff]
      %v1668 = vld [vmem:[%s7 + $0x4c8] sm:$0xff]
      %v1669 = vld [vmem:[%s7 + $0x4d0] sm:$0xff]
      %v1670 = vld [vmem:[%s7 + $0x4d8] sm:$0xff]
      %v1671 = vld [vmem:[%s7 + $0x4e0] sm:$0xff]
      %v1672 = vld [vmem:[%s7 + $0x4e8] sm:$0xff]
      %v1673 = vld [vmem:[%s7 + $0x4f0] sm:$0xff]
      %v1674 = vld [vmem:[%s7 + $0x4f8] sm:$0xff]
      %v1675 = vld [vmem:[%s7 + $0x500] sm:$0xff]
      %v1676 = vld [vmem:[%s7 + $0x508] sm:$0xff]
      %v1677 = vld [vmem:[%s7 + $0x510] sm:$0xff]
      %v1678 = vld [vmem:[%s7 + $0x518] sm:$0xff]
      %v1679 = vld [vmem:[%s7 + $0x520] sm:$0xff]
      %v1680 = vld [vmem:[%s7 + $0x528] sm:$0xff]
      %v1681 = vld [vmem:[%s7 + $0x530] sm:$0xff]
      %v1682 = vld [vmem:[%s7 + $0x538] sm:$0xff]
      %v1683 = vld [vmem:[%s7 + $0x540] sm:$0xff]
      %v1684 = vld [vmem:[%s7 + $0x548] sm:$0xff]
      %v1685 = vld [vmem:[%s7 + $0x550] sm:$0xff]
      %v1686 = vld [vmem:[%s7 + $0x558] sm:$0xff]
      %v1687 = vld [vmem:[%s7 + $0x560] sm:$0xff]
      %v1688 = vld [vmem:[%s7 + $0x568] sm:$0xff]
      %v1689 = vld [vmem:[%s7 + $0x570] sm:$0xff]
      %v1690 = vld [vmem:[%s7 + $0x578] sm:$0xff]
      %v1691 = vld [vmem:[%s7 + $0x580] sm:$0xff]
      %v1692 = vld [vmem:[%s7 + $0x588] sm:$0xff]
      %v1693 = vld [vmem:[%s7 + $0x590] sm:$0xff]
      %v1694 = vld [vmem:[%s7 + $0x598] sm:$0xff]
      %v1695 = vld [vmem:[%s7 + $0x5a0] sm:$0xff]
      %v1696 = vld [vmem:[%s7 + $0x5a8] sm:$0xff]
      %v1697 = vld [vmem:[%s7 + $0x5b0] sm:$0xff]
      %v1698 = vld [vmem:[%s7 + $0x5b8] sm:$0xff]
      %v1699 = vld [vmem:[%s7 + $0x5c0] sm:$0xff]
      %v1700 = vld [vmem:[%s7 + $0x5c8] sm:$0xff]
      %v1701 = vld [vmem:[%s7 + $0x5d0] sm:$0xff]
      %v1702 = vld [vmem:[%s7 + $0x5d8] sm:$0xff]
      %v1703 = vld [vmem:[%s7 + $0x5e0] sm:$0xff]
      %v1704 = vld [vmem:[%s7 + $0x5e8] sm:$0xff]
      %v1705 = vld [vmem:[%s7 + $0x5f0] sm:$0xff]
      %v1706 = vld [vmem:[%s7 + $0x5f8] sm:$0xff]
      %v1707 = vld [vmem:[%s7 + $0x600] sm:$0xff]
      %v1708 = vld [vmem:[%s7 + $0x608] sm:$0xff]
      %v1709 = vld [vmem:[%s7 + $0x610] sm:$0xff]
      %v1710 = vld [vmem:[%s7 + $0x618] sm:$0xff]
      %v1711 = vld [vmem:[%s7 + $0x620] sm:$0xff]
      %v1712 = vld [vmem:[%s7 + $0x628] sm:$0xff]
      %v1713 = vld [vmem:[%s7 + $0x630] sm:$0xff]
      %v1714 = vld [vmem:[%s7 + $0x638] sm:$0xff]
      %v1715 = vld [vmem:[%s7 + $0x640] sm:$0xff]
      %v1716 = vld [vmem:[%s7 + $0x648] sm:$0xff]
      %v1717 = vld [vmem:[%s7 + $0x650] sm:$0xff]
      %v1718 = vld [vmem:[%s7 + $0x658] sm:$0xff]
      %v1719 = vld [vmem:[%s7 + $0x660] sm:$0xff]
      %v1720 = vld [vmem:[%s7 + $0x668] sm:$0xff]
      %v1721 = vld [vmem:[%s7 + $0x670] sm:$0xff]
      %v1722 = vld [vmem:[%s7 + $0x678] sm:$0xff]
      %v1723 = vld [vmem:[%s7 + $0x680] sm:$0xff]
      %v1724 = vld [vmem:[%s7 + $0x688] sm:$0xff]
      %v1725 = vld [vmem:[%s7 + $0x690] sm:$0xff]
      %v1726 = vld [vmem:[%s7 + $0x698] sm:$0xff]
      %v1727 = vld [vmem:[%s7 + $0x6a0] sm:$0xff]
      %v1728 = vld [vmem:[%s7 + $0x6a8] sm:$0xff]
      %v1729 = vld [vmem:[%s7 + $0x6b0] sm:$0xff]
      %v1730 = vld [vmem:[%s7 + $0x6b8] sm:$0xff]
      %v1731 = vld [vmem:[%s7 + $0x6c0] sm:$0xff]
      %v1732 = vld [vmem:[%s7 + $0x6c8] sm:$0xff]
      %v1733 = vld [vmem:[%s7 + $0x6d0] sm:$0xff]
      %v1734 = vld [vmem:[%s7 + $0x6d8] sm:$0xff]
      %v1735 = vld [vmem:[%s7 + $0x6e0] sm:$0xff]
      %v1736 = vld [vmem:[%s7 + $0x6e8] sm:$0xff]
      %v1737 = vld [vmem:[%s7 + $0x6f0] sm:$0xff]
      %v1738 = vld [vmem:[%s7 + $0x6f8] sm:$0xff]
      %v1739 = vld [vmem:[%s7 + $0x700] sm:$0xff]
      %v1740 = vld [vmem:[%s7 + $0x708] sm:$0xff]
      %v1741 = vld [vmem:[%s7 + $0x710] sm:$0xff]
      %v1742 = vld [vmem:[%s7 + $0x718] sm:$0xff]
      %v1743 = vld [vmem:[%s7 + $0x720] sm:$0xff]
      %v1744 = vld [vmem:[%s7 + $0x728] sm:$0xff]
      %v1745 = vld [vmem:[%s7 + $0x730] sm:$0xff]
      %v1746 = vld [vmem:[%s7 + $0x738] sm:$0xff]
      %v1747 = vld [vmem:[%s7 + $0x740] sm:$0xff]
      %v1748 = vld [vmem:[%s7 + $0x748] sm:$0xff]
      %v1749 = vld [vmem:[%s7 + $0x750] sm:$0xff]
      %v1750 = vld [vmem:[%s7 + $0x758] sm:$0xff]
      %v1751 = vld [vmem:[%s7 + $0x760] sm:$0xff]
      %v1752 = vld [vmem:[%s7 + $0x768] sm:$0xff]
      %v1753 = vld [vmem:[%s7 + $0x770] sm:$0xff]
      %v1754 = vld [vmem:[%s7 + $0x778] sm:$0xff]
      %v1755 = vld [vmem:[%s7 + $0x780] sm:$0xff]
      %v1756 = vld [vmem:[%s7 + $0x788] sm:$0xff]
      %v1757 = vld [vmem:[%s7 + $0x790] sm:$0xff]
      %v1758 = vld [vmem:[%s7 + $0x798] sm:$0xff]
      %v1759 = vld [vmem:[%s7 + $0x7a0] sm:$0xff]
      %v1760 = vld [vmem:[%s7 + $0x7a8] sm:$0xff]
      %v1761 = vld [vmem:[%s7 + $0x7b0] sm:$0xff]
      %v1762 = vld [vmem:[%s7 + $0x7b8] sm:$0xff]
      %v1763 = vld [vmem:[%s7 + $0x7c0] sm:$0xff]
      %v1764 = vld [vmem:[%s7 + $0x7c8] sm:$0xff]
      %v1765 = vld [vmem:[%s7 + $0x7d0] sm:$0xff]
      %v1766 = vld [vmem:[%s7 + $0x7d8] sm:$0xff]
      %v1767 = vld [vmem:[%s7 + $0x7e0] sm:$0xff]
      %v1768 = vld [vmem:[%s7 + $0x7e8] sm:$0xff]
      %v1769 = vld [vmem:[%s7 + $0x7f0] sm:$0xff]
      %v1770 = vld [vmem:[%s7 + $0x7f8] sm:$0xff]
      %1771 = vmatprep.subr.mxu0 %v1516
      %1772 = vmatpush1.msra.mxu0 %v1515
      %1773 = vmatprep.subr.mxu0 %v1524
      %1774 = vmatpush1.msra.mxu0 %v1523
      %1775 = vmatprep.subr.mxu0 %v1532
      %1776 = vmatpush1.msra.mxu0 %v1531
      %1777 = vmatprep.subr.mxu0 %v1540
      %1778 = vmatpush1.msra.mxu0 %v1539
      %1779 = vmatprep.subr.mxu0 %v1548
      %1780 = vmatpush1.msra.mxu0 %v1547
      %1781 = vmatprep.subr.mxu0 %v1556
      %1782 = vmatpush1.msra.mxu0 %v1555
      %1783 = vmatprep.subr.mxu0 %v1564
      %1784 = vmatpush1.msra.mxu0 %v1563
      %1785 = vmatprep.subr.mxu0 %v1572
      %1786 = vmatpush1.msra.mxu0 %v1571
      %1787 = vmatprep.subr.mxu0 %v1580
      %1788 = vmatpush1.msra.mxu0 %v1579
      %1789 = vmatprep.subr.mxu0 %v1588
      %1790 = vmatpush1.msra.mxu0 %v1587
      %1791 = vmatprep.subr.mxu0 %v1596
      %1792 = vmatpush1.msra.mxu0 %v1595
      %1793 = vmatprep.subr.mxu0 %v1604
      %1794 = vmatpush1.msra.mxu0 %v1603
      %1795 = vmatprep.subr.mxu0 %v1612
      %1796 = vmatpush1.msra.mxu0 %v1611
      %1797 = vmatprep.subr.mxu0 %v1620
      %1798 = vmatpush1.msra.mxu0 %v1619
      %1799 = vmatprep.subr.mxu0 %v1628
      %1800 = vmatpush1.msra.mxu0 %v1627
      %1801 = vmatprep.subr.mxu0 %v1636
      %1802 = vmatpush1.msra.mxu0 %v1635
      %1803 = vmatprep.subr.mxu0 %v1644
      %1804 = vmatpush1.msra.mxu0 %v1643
      %1805 = vmatprep.subr.mxu0 %v1652
      %1806 = vmatpush1.msra.mxu0 %v1651
      %1807 = vmatprep.subr.mxu0 %v1660
      %1808 = vmatpush1.msra.mxu0 %v1659
      %1809 = vmatprep.subr.mxu0 %v1668
      %1810 = vmatpush1.msra.mxu0 %v1667
      %1811 = vmatprep.subr.mxu0 %v1676
      %1812 = vmatpush1.msra.mxu0 %v1675
      %1813 = vmatprep.subr.mxu0 %v1684
      %1814 = vmatpush1.msra.mxu0 %v1683
      %1815 = vmatprep.subr.mxu0 %v1692
      %1816 = vmatpush1.msra.mxu0 %v1691
      %1817 = vmatprep.subr.mxu0 %v1700
      %1818 = vmatpush1.msra.mxu0 %v1699
      %1819 = vmatprep.subr.mxu0 %v1708
      %1820 = vmatpush1.msra.mxu0 %v1707
      %1821 = vmatprep.subr.mxu0 %v1716
      %1822 = vmatpush1.msra.mxu0 %v1715
      %1823 = vmatprep.subr.mxu0 %v1724
      %1824 = vmatpush1.msra.mxu0 %v1723
      %1825 = vmatprep.subr.mxu0 %v1732
      %1826 = vmatpush1.msra.mxu0 %v1731
      %1827 = vmatprep.subr.mxu0 %v1740
      %1828 = vmatpush1.msra.mxu0 %v1739
      %1829 = vmatprep.subr.mxu0 %v1748
      %1830 = vmatpush1.msra.mxu0 %v1747
      %1831 = vmatprep.subr.mxu0 %v1756
      %1832 = vmatpush1.msra.mxu0 %v1755
      %1833 = vmatprep.subr.mxu0 %v1764
      %1834 = vmatpush1.msra.mxu0 %v1763
      %1835 = vmatprep.mubr.f32.mxu0 %v532
      %1836 = vmatmul.mubr.f32.gmra.mrb[0].mxu0 %v531
      %v1837 = vpop.f32.mrb[0].mxu0
      %v1838 = vadd.f32 0.0, %v1837
      %v1839 = vpop.f32.mrb[0].mxu0
      %v1840 = vadd.f32 0.0, %v1839
      %1841 = vmatprep.mubr.f32.mxu0 %v534
      %1842 = vmatmul.mubr.f32.gmra.mrb[0].mxu0 %v533
      %v1843 = vpop.f32.mrb[0].mxu0
      %v1844 = vadd.f32 0.0, %v1843
      %v1845 = vpop.f32.mrb[0].mxu0
      %v1846 = vadd.f32 0.0, %v1845
      %1847 = vmatprep.mubr.f32.mxu0 %v536
      %1848 = vmatmul.mubr.f32.gmra.mrb[0].mxu0 %v535
      %v1849 = vpop.f32.mrb[0].mxu0
      %v1850 = vadd.f32 0.0, %v1849
      %v1851 = vpop.f32.mrb[0].mxu0
      %v1852 = vadd.f32 0.0, %v1851
      %1853 = vmatprep.mubr.f32.mxu0 %v538
      %1854 = vmatmul.mubr.f32.gmra.mrb[0].mxu0 %v537
      %v1855 = vpop.f32.mrb[0].mxu0
      %v1856 = vadd.f32 0.0, %v1855
      %v1857 = vpop.f32.mrb[0].mxu0
      %v1858 = vadd.f32 0.0, %v1857
      %1859 = vdwg.mxu0
      %1860 = vmatprep.subr.mxu0 %v1518
      %1861 = vmatpush1.msra.mxu0 %v1517
      %1862 = vmatprep.subr.mxu0 %v1526
      %1863 = vmatpush1.msra.mxu0 %v1525
      %1864 = vmatprep.subr.mxu0 %v1534
      %1865 = vmatpush1.msra.mxu0 %v1533
      %1866 = vmatprep.subr.mxu0 %v1542
      %1867 = vmatpush1.msra.mxu0 %v1541
      %1868 = vmatprep.subr.mxu0 %v1550
      %1869 = vmatpush1.msra.mxu0 %v1549
      %1870 = vmatprep.subr.mxu0 %v1558
      %1871 = vmatpush1.msra.mxu0 %v1557
      %1872 = vmatprep.subr.mxu0 %v1566
      %1873 = vmatpush1.msra.mxu0 %v1565
      %1874 = vmatprep.subr.mxu0 %v1574
      %1875 = vmatpush1.msra.mxu0 %v1573
      %1876 = vmatprep.subr.mxu0 %v1582
      %1877 = vmatpush1.msra.mxu0 %v1581
      %1878 = vmatprep.subr.mxu0 %v1590
      %1879 = vmatpush1.msra.mxu0 %v1589
      %1880 = vmatprep.subr.mxu0 %v1598
      %1881 = vmatpush1.msra.mxu0 %v1597
      %1882 = vmatprep.subr.mxu0 %v1606
      %1883 = vmatpush1.msra.mxu0 %v1605
      %1884 = vmatprep.subr.mxu0 %v1614
      %1885 = vmatpush1.msra.mxu0 %v1613
      %1886 = vmatprep.subr.mxu0 %v1622
      %1887 = vmatpush1.msra.mxu0 %v1621
      %1888 = vmatprep.subr.mxu0 %v1630
      %1889 = vmatpush1.msra.mxu0 %v1629
      %1890 = vmatprep.subr.mxu0 %v1638
      %1891 = vmatpush1.msra.mxu0 %v1637
      %1892 = vmatprep.subr.mxu0 %v1646
      %1893 = vmatpush1.msra.mxu0 %v1645
      %1894 = vmatprep.subr.mxu0 %v1654
      %1895 = vmatpush1.msra.mxu0 %v1653
      %1896 = vmatprep.subr.mxu0 %v1662
      %1897 = vmatpush1.msra.mxu0 %v1661
      %1898 = vmatprep.subr.mxu0 %v1670
      %1899 = vmatpush1.msra.mxu0 %v1669
      %1900 = vmatprep.subr.mxu0 %v1678
      %1901 = vmatpush1.msra.mxu0 %v1677
      %1902 = vmatprep.subr.mxu0 %v1686
      %1903 = vmatpush1.msra.mxu0 %v1685
      %1904 = vmatprep.subr.mxu0 %v1694
      %1905 = vmatpush1.msra.mxu0 %v1693
      %1906 = vmatprep.subr.mxu0 %v1702
      %1907 = vmatpush1.msra.mxu0 %v1701
      %1908 = vmatprep.subr.mxu0 %v1710
      %1909 = vmatpush1.msra.mxu0 %v1709
      %1910 = vmatprep.subr.mxu0 %v1718
      %1911 = vmatpush1.msra.mxu0 %v1717
      %1912 = vmatprep.subr.mxu0 %v1726
      %1913 = vmatpush1.msra.mxu0 %v1725
      %1914 = vmatprep.subr.mxu0 %v1734
      %1915 = vmatpush1.msra.mxu0 %v1733
      %1916 = vmatprep.subr.mxu0 %v1742
      %1917 = vmatpush1.msra.mxu0 %v1741
      %1918 = vmatprep.subr.mxu0 %v1750
      %1919 = vmatpush1.msra.mxu0 %v1749
      %1920 = vmatprep.subr.mxu0 %v1758
      %1921 = vmatpush1.msra.mxu0 %v1757
      %1922 = vmatprep.subr.mxu0 %v1766
      %1923 = vmatpush1.msra.mxu0 %v1765
      %1924 = vmatprep.mubr.f32.mxu0 %v532
      %1925 = vmatmul.mubr.f32.gmra.mrb[0].mxu0 %v531
      %v1926 = vpop.f32.mrb[0].mxu0
      %v1927 = vadd.f32 0.0, %v1926
      %v1928 = vpop.f32.mrb[0].mxu0
      %v1929 = vadd.f32 0.0, %v1928
      %1930 = vmatprep.mubr.f32.mxu0 %v534
      %1931 = vmatmul.mubr.f32.gmra.mrb[0].mxu0 %v533
      %v1932 = vpop.f32.mrb[0].mxu0
      %v1933 = vadd.f32 0.0, %v1932
      %v1934 = vpop.f32.mrb[0].mxu0
      %v1935 = vadd.f32 0.0, %v1934
      %1936 = vmatprep.mubr.f32.mxu0 %v536
      %1937 = vmatmul.mubr.f32.gmra.mrb[0].mxu0 %v535
      %v1938 = vpop.f32.mrb[0].mxu0
      %v1939 = vadd.f32 0.0, %v1938
      %v1940 = vpop.f32.mrb[0].mxu0
      %v1941 = vadd.f32 0.0, %v1940
      %1942 = vmatprep.mubr.f32.mxu0 %v538
      %1943 = vmatmul.mubr.f32.gmra.mrb[0].mxu0 %v537
      %v1944 = vpop.f32.mrb[0].mxu0
      %v1945 = vadd.f32 0.0, %v1944
      %v1946 = vpop.f32.mrb[0].mxu0
      %v1947 = vadd.f32 0.0, %v1946
      %1948 = vdwg.mxu0
      %1949 = vmatprep.subr.mxu0 %v1520
      %1950 = vmatpush1.msra.mxu0 %v1519
      %1951 = vmatprep.subr.mxu0 %v1528
      %1952 = vmatpush1.msra.mxu0 %v1527
      %1953 = vmatprep.subr.mxu0 %v1536
      %1954 = vmatpush1.msra.mxu0 %v1535
      %1955 = vmatprep.subr.mxu0 %v1544
      %1956 = vmatpush1.msra.mxu0 %v1543
      %1957 = vmatprep.subr.mxu0 %v1552
      %1958 = vmatpush1.msra.mxu0 %v1551
      %1959 = vmatprep.subr.mxu0 %v1560
      %1960 = vmatpush1.msra.mxu0 %v1559
      %1961 = vmatprep.subr.mxu0 %v1568
      %1962 = vmatpush1.msra.mxu0 %v1567
      %1963 = vmatprep.subr.mxu0 %v1576
      %1964 = vmatpush1.msra.mxu0 %v1575
      %1965 = vmatprep.subr.mxu0 %v1584
      %1966 = vmatpush1.msra.mxu0 %v1583
      %1967 = vmatprep.subr.mxu0 %v1592
      %1968 = vmatpush1.msra.mxu0 %v1591
      %1969 = vmatprep.subr.mxu0 %v1600
      %1970 = vmatpush1.msra.mxu0 %v1599
      %1971 = vmatprep.subr.mxu0 %v1608
      %1972 = vmatpush1.msra.mxu0 %v1607
      %1973 = vmatprep.subr.mxu0 %v1616
      %1974 = vmatpush1.msra.mxu0 %v1615
      %1975 = vmatprep.subr.mxu0 %v1624
      %1976 = vmatpush1.msra.mxu0 %v1623
      %1977 = vmatprep.subr.mxu0 %v1632
      %1978 = vmatpush1.msra.mxu0 %v1631
      %1979 = vmatprep.subr.mxu0 %v1640
      %1980 = vmatpush1.msra.mxu0 %v1639
      %1981 = vmatprep.subr.mxu0 %v1648
      %1982 = vmatpush1.msra.mxu0 %v1647
      %1983 = vmatprep.subr.mxu0 %v1656
      %1984 = vmatpush1.msra.mxu0 %v1655
      %1985 = vmatprep.subr.mxu0 %v1664
      %1986 = vmatpush1.msra.mxu0 %v1663
      %1987 = vmatprep.subr.mxu0 %v1672
      %1988 = vmatpush1.msra.mxu0 %v1671
      %1989 = vmatprep.subr.mxu0 %v1680
      %1990 = vmatpush1.msra.mxu0 %v1679
      %1991 = vmatprep.subr.mxu0 %v1688
      %1992 = vmatpush1.msra.mxu0 %v1687
      %1993 = vmatprep.subr.mxu0 %v1696
      %1994 = vmatpush1.msra.mxu0 %v1695
      %1995 = vmatprep.subr.mxu0 %v1704
      %1996 = vmatpush1.msra.mxu0 %v1703
      %1997 = vmatprep.subr.mxu0 %v1712
      %1998 = vmatpush1.msra.mxu0 %v1711
      %1999 = vmatprep.subr.mxu0 %v1720
      %2000 = vmatpush1.msra.mxu0 %v1719
      %2001 = vmatprep.subr.mxu0 %v1728
      %2002 = vmatpush1.msra.mxu0 %v1727
      %2003 = vmatprep.subr.mxu0 %v1736
      %2004 = vmatpush1.msra.mxu0 %v1735
      %2005 = vmatprep.subr.mxu0 %v1744
      %2006 = vmatpush1.msra.mxu0 %v1743
      %2007 = vmatprep.subr.mxu0 %v1752
      %2008 = vmatpush1.msra.mxu0 %v1751
      %2009 = vmatprep.subr.mxu0 %v1760
      %2010 = vmatpush1.msra.mxu0 %v1759
      %2011 = vmatprep.subr.mxu0 %v1768
      %2012 = vmatpush1.msra.mxu0 %v1767
      %2013 = vmatprep.mubr.f32.mxu0 %v532
      %2014 = vmatmul.mubr.f32.gmra.mrb[0].mxu0 %v531
      %v2015 = vpop.f32.mrb[0].mxu0
      %v2016 = vadd.f32 0.0, %v2015
      %v2017 = vpop.f32.mrb[0].mxu0
      %v2018 = vadd.f32 0.0, %v2017
      %2019 = vmatprep.mubr.f32.mxu0 %v534
      %2020 = vmatmul.mubr.f32.gmra.mrb[0].mxu0 %v533
      %v2021 = vpop.f32.mrb[0].mxu0
      %v2022 = vadd.f32 0.0, %v2021
      %v2023 = vpop.f32.mrb[0].mxu0
      %v2024 = vadd.f32 0.0, %v2023
      %2025 = vmatprep.mubr.f32.mxu0 %v536
      %2026 = vmatmul.mubr.f32.gmra.mrb[0].mxu0 %v535
      %v2027 = vpop.f32.mrb[0].mxu0
      %v2028 = vadd.f32 0.0, %v2027
      %v2029 = vpop.f32.mrb[0].mxu0
      %v2030 = vadd.f32 0.0, %v2029
      %2031 = vmatprep.mubr.f32.mxu0 %v538
      %2032 = vmatmul.mubr.f32.gmra.mrb[0].mxu0 %v537
      %v2033 = vpop.f32.mrb[0].mxu0
      %v2034 = vadd.f32 0.0, %v2033
      %v2035 = vpop.f32.mrb[0].mxu0
      %v2036 = vadd.f32 0.0, %v2035
      %2037 = vdwg.mxu0
      %2038 = vmatprep.subr.mxu0 %v1522
      %2039 = vmatpush1.msra.mxu0 %v1521
      %2040 = vmatprep.subr.mxu0 %v1530
      %2041 = vmatpush1.msra.mxu0 %v1529
      %2042 = vmatprep.subr.mxu0 %v1538
      %2043 = vmatpush1.msra.mxu0 %v1537
      %2044 = vmatprep.subr.mxu0 %v1546
      %2045 = vmatpush1.msra.mxu0 %v1545
      %2046 = vmatprep.subr.mxu0 %v1554
      %2047 = vmatpush1.msra.mxu0 %v1553
      %2048 = vmatprep.subr.mxu0 %v1562
      %2049 = vmatpush1.msra.mxu0 %v1561
      %2050 = vmatprep.subr.mxu0 %v1570
      %2051 = vmatpush1.msra.mxu0 %v1569
      %2052 = vmatprep.subr.mxu0 %v1578
      %2053 = vmatpush1.msra.mxu0 %v1577
      %2054 = vmatprep.subr.mxu0 %v1586
      %2055 = vmatpush1.msra.mxu0 %v1585
      %2056 = vmatprep.subr.mxu0 %v1594
      %2057 = vmatpush1.msra.mxu0 %v1593
      %2058 = vmatprep.subr.mxu0 %v1602
      %2059 = vmatpush1.msra.mxu0 %v1601
      %2060 = vmatprep.subr.mxu0 %v1610
      %2061 = vmatpush1.msra.mxu0 %v1609
      %2062 = vmatprep.subr.mxu0 %v1618
      %2063 = vmatpush1.msra.mxu0 %v1617
      %2064 = vmatprep.subr.mxu0 %v1626
      %2065 = vmatpush1.msra.mxu0 %v1625
      %2066 = vmatprep.subr.mxu0 %v1634
      %2067 = vmatpush1.msra.mxu0 %v1633
      %2068 = vmatprep.subr.mxu0 %v1642
      %2069 = vmatpush1.msra.mxu0 %v1641
      %2070 = vmatprep.subr.mxu0 %v1650
      %2071 = vmatpush1.msra.mxu0 %v1649
      %2072 = vmatprep.subr.mxu0 %v1658
      %2073 = vmatpush1.msra.mxu0 %v1657
      %2074 = vmatprep.subr.mxu0 %v1666
      %2075 = vmatpush1.msra.mxu0 %v1665
      %2076 = vmatprep.subr.mxu0 %v1674
      %2077 = vmatpush1.msra.mxu0 %v1673
      %2078 = vmatprep.subr.mxu0 %v1682
      %2079 = vmatpush1.msra.mxu0 %v1681
      %2080 = vmatprep.subr.mxu0 %v1690
      %2081 = vmatpush1.msra.mxu0 %v1689
      %2082 = vmatprep.subr.mxu0 %v1698
      %2083 = vmatpush1.msra.mxu0 %v1697
      %2084 = vmatprep.subr.mxu0 %v1706
      %2085 = vmatpush1.msra.mxu0 %v1705
      %2086 = vmatprep.subr.mxu0 %v1714
      %2087 = vmatpush1.msra.mxu0 %v1713
      %2088 = vmatprep.subr.mxu0 %v1722
      %2089 = vmatpush1.msra.mxu0 %v1721
      %2090 = vmatprep.subr.mxu0 %v1730
      %2091 = vmatpush1.msra.mxu0 %v1729
      %2092 = vmatprep.subr.mxu0 %v1738
      %2093 = vmatpush1.msra.mxu0 %v1737
      %2094 = vmatprep.subr.mxu0 %v1746
      %2095 = vmatpush1.msra.mxu0 %v1745
      %2096 = vmatprep.subr.mxu0 %v1754
      %2097 = vmatpush1.msra.mxu0 %v1753
      %2098 = vmatprep.subr.mxu0 %v1762
      %2099 = vmatpush1.msra.mxu0 %v1761
      %2100 = vmatprep.subr.mxu0 %v1770
      %2101 = vmatpush1.msra.mxu0 %v1769
      %2102 = vmatprep.mubr.f32.mxu0 %v532
      %2103 = vmatmul.mubr.f32.gmra.mrb[0].mxu0 %v531
      %v2104 = vpop.f32.mrb[0].mxu0
      %v2105 = vadd.f32 0.0, %v2104
      %v2106 = vpop.f32.mrb[0].mxu0
      %v2107 = vadd.f32 0.0, %v2106
      %2108 = vmatprep.mubr.f32.mxu0 %v534
      %2109 = vmatmul.mubr.f32.gmra.mrb[0].mxu0 %v533
      %v2110 = vpop.f32.mrb[0].mxu0
      %v2111 = vadd.f32 0.0, %v2110
      %v2112 = vpop.f32.mrb[0].mxu0
      %v2113 = vadd.f32 0.0, %v2112
      %2114 = vmatprep.mubr.f32.mxu0 %v536
      %2115 = vmatmul.mubr.f32.gmra.mrb[0].mxu0 %v535
      %v2116 = vpop.f32.mrb[0].mxu0
      %v2117 = vadd.f32 0.0, %v2116
      %v2118 = vpop.f32.mrb[0].mxu0
      %v2119 = vadd.f32 0.0, %v2118
      %2120 = vmatprep.mubr.f32.mxu0 %v538
      %2121 = vmatmul.mubr.f32.gmra.mrb[0].mxu0 %v537
      %v2122 = vpop.f32.mrb[0].mxu0
      %v2123 = vadd.f32 0.0, %v2122
      %v2124 = vpop.f32.mrb[0].mxu0
      %v2125 = vadd.f32 0.0, %v2124
      %2126 = vdwg.mxu0
      %v2127 = vadd.f32 %v1226, %v1838
      %v2128 = vadd.f32 %v1228, %v1840
      %v2129 = vadd.f32 %v1315, %v1927
      %v2130 = vadd.f32 %v1317, %v1929
      %v2131 = vadd.f32 %v1404, %v2016
      %v2132 = vadd.f32 %v1406, %v2018
      %v2133 = vadd.f32 %v1493, %v2105
      %v2134 = vadd.f32 %v1495, %v2107
      %v2135 = vadd.f32 %v1232, %v1844
      %v2136 = vadd.f32 %v1234, %v1846
      %v2137 = vadd.f32 %v1321, %v1933
      %v2138 = vadd.f32 %v1323, %v1935
      %v2139 = vadd.f32 %v1410, %v2022
      %v2140 = vadd.f32 %v1412, %v2024
      %v2141 = vadd.f32 %v1499, %v2111
      %v2142 = vadd.f32 %v1501, %v2113
      %v2143 = vadd.f32 %v1238, %v1850
      %v2144 = vadd.f32 %v1240, %v1852
      %v2145 = vadd.f32 %v1327, %v1939
      %v2146 = vadd.f32 %v1329, %v1941
      %v2147 = vadd.f32 %v1416, %v2028
      %v2148 = vadd.f32 %v1418, %v2030
      %v2149 = vadd.f32 %v1505, %v2117
      %v2150 = vadd.f32 %v1507, %v2119
      %v2151 = vadd.f32 %v1244, %v1856
      %v2152 = vadd.f32 %v1246, %v1858
      %v2153 = vadd.f32 %v1333, %v1945
      %v2154 = vadd.f32 %v1335, %v1947
      %v2155 = vadd.f32 %v1422, %v2034
      %v2156 = vadd.f32 %v1424, %v2036
      %v2157 = vadd.f32 %v1511, %v2123
      %v2158 = vadd.f32 %v1513, %v2125
      %v2159 = vld [vmem:[%s8] sm:$0xff]
      %v2161 = vlaneseq
      %v2162 = vshrl.u32 %v2161, 7
      %v2163 = vsub.s32 0, %v2162
      %v2164 = vrot.slane %v2159, %v2163
      %v2165 = vlaneseq
      %v2166 = vshrl.u32 %v2165, 7
      %v2167 = vsub.s32 1, %v2166
      %v2168 = vrot.slane %v2159, %v2167
      %v2169 = vlaneseq
      %v2170 = vshrl.u32 %v2169, 7
      %v2171 = vsub.s32 2, %v2170
      %v2172 = vrot.slane %v2159, %v2171
      %v2173 = vlaneseq
      %v2174 = vshrl.u32 %v2173, 7
      %v2175 = vsub.s32 3, %v2174
      %v2176 = vrot.slane %v2159, %v2175
      %v2177 = vlaneseq
      %v2178 = vshrl.u32 %v2177, 7
      %v2179 = vsub.s32 4, %v2178
      %v2180 = vrot.slane %v2159, %v2179
      %v2181 = vlaneseq
      %v2182 = vshrl.u32 %v2181, 7
      %v2183 = vsub.s32 5, %v2182
      %v2184 = vrot.slane %v2159, %v2183
      %v2185 = vlaneseq
      %v2186 = vshrl.u32 %v2185, 7
      %v2187 = vsub.s32 6, %v2186
      %v2188 = vrot.slane %v2159, %v2187
      %v2189 = vlaneseq
      %v2190 = vshrl.u32 %v2189, 7
      %v2191 = vsub.s32 7, %v2190
      %v2192 = vrot.slane %v2159, %v2191
      %v2201 = vadd.f32 %v2127, %v2164
      %v2202 = vadd.f32 %v2128, %v2168
      %v2203 = vadd.f32 %v2129, %v2172
      %v2204 = vadd.f32 %v2130, %v2176
      %v2205 = vadd.f32 %v2131, %v2180
      %v2206 = vadd.f32 %v2132, %v2184
      %v2207 = vadd.f32 %v2133, %v2188
      %v2208 = vadd.f32 %v2134, %v2192
      %v2209 = vadd.f32 %v2135, %v2164
      %v2210 = vadd.f32 %v2136, %v2168
      %v2211 = vadd.f32 %v2137, %v2172
      %v2212 = vadd.f32 %v2138, %v2176
      %v2213 = vadd.f32 %v2139, %v2180
      %v2214 = vadd.f32 %v2140, %v2184
      %v2215 = vadd.f32 %v2141, %v2188
      %v2216 = vadd.f32 %v2142, %v2192
      %v2217 = vadd.f32 %v2143, %v2164
      %v2218 = vadd.f32 %v2144, %v2168
      %v2219 = vadd.f32 %v2145, %v2172
      %v2220 = vadd.f32 %v2146, %v2176
      %v2221 = vadd.f32 %v2147, %v2180
      %v2222 = vadd.f32 %v2148, %v2184
      %v2223 = vadd.f32 %v2149, %v2188
      %v2224 = vadd.f32 %v2150, %v2192
      %v2225 = vadd.f32 %v2151, %v2164
      %v2226 = vadd.f32 %v2152, %v2168
      %v2227 = vadd.f32 %v2153, %v2172
      %v2228 = vadd.f32 %v2154, %v2176
      %v2229 = vadd.f32 %v2155, %v2180
      %v2230 = vadd.f32 %v2156, %v2184
      %v2231 = vadd.f32 %v2157, %v2188
      %v2232 = vadd.f32 %v2158, %v2192
      %v2233 = vmax.f32 %v2201, 0.0
      %v2234 = vmax.f32 %v2202, 0.0
      %v2235 = vmax.f32 %v2203, 0.0
      %v2236 = vmax.f32 %v2204, 0.0
      %v2237 = vmax.f32 %v2205, 0.0
      %v2238 = vmax.f32 %v2206, 0.0
      %v2239 = vmax.f32 %v2207, 0.0
      %v2240 = vmax.f32 %v2208, 0.0
      %v2241 = vmax.f32 %v2209, 0.0
      %v2242 = vmax.f32 %v2210, 0.0
      %v2243 = vmax.f32 %v2211, 0.0
      %v2244 = vmax.f32 %v2212, 0.0
      %v2245 = vmax.f32 %v2213, 0.0
      %v2246 = vmax.f32 %v2214, 0.0
      %v2247 = vmax.f32 %v2215, 0.0
      %v2248 = vmax.f32 %v2216, 0.0
      %v2249 = vmax.f32 %v2217, 0.0
      %v2250 = vmax.f32 %v2218, 0.0
      %v2251 = vmax.f32 %v2219, 0.0
      %v2252 = vmax.f32 %v2220, 0.0
      %v2253 = vmax.f32 %v2221, 0.0
      %v2254 = vmax.f32 %v2222, 0.0
      %v2255 = vmax.f32 %v2223, 0.0
      %v2256 = vmax.f32 %v2224, 0.0
      %v2257 = vmax.f32 %v2225, 0.0
      %v2258 = vmax.f32 %v2226, 0.0
      %v2259 = vmax.f32 %v2227, 0.0
      %v2260 = vmax.f32 %v2228, 0.0
      %v2261 = vmax.f32 %v2229, 0.0
      %v2262 = vmax.f32 %v2230, 0.0
      %v2263 = vmax.f32 %v2231, 0.0
      %v2264 = vmax.f32 %v2232, 0.0
      %2265 = vxpose.xlu0.b32.start [1/16] %v2233, 128
      %2266 = vxpose.xlu0.b32.cont [2/16] %v2241, 128
      %2267 = vxpose.xlu0.b32.cont [3/16] %v2249, 128
      %2268 = vxpose.xlu0.b32.cont [4/16] %v2257, 128
      %2269 = vxpose.xlu0.b32.cont [5/16] 0.0, 128
      %2270 = vxpose.xlu0.b32.cont [6/16] 0.0, 128
      %2271 = vxpose.xlu0.b32.cont [7/16] 0.0, 128
      %2272 = vxpose.xlu0.b32.cont [8/16] 0.0, 128
      %2273 = vxpose.xlu0.b32.cont [9/16] 0.0, 128
      %2274 = vxpose.xlu0.b32.cont [10/16] 0.0, 128
      %2275 = vxpose.xlu0.b32.cont [11/16] 0.0, 128
      %2276 = vxpose.xlu0.b32.cont [12/16] 0.0, 128
      %2277 = vxpose.xlu0.b32.cont [13/16] 0.0, 128
      %2278 = vxpose.xlu0.b32.cont [14/16] 0.0, 128
      %2279 = vxpose.xlu0.b32.cont [15/16] 0.0, 128
      %2280 = vxpose.xlu0.b32.end [16/16] 0.0, 128
      %v2281 = vpop.trf.xlu0
      %v2282 = vpop.trf.xlu0
      %v2283 = vpop.trf.xlu0
      %v2284 = vpop.trf.xlu0
      %v2285 = vpop.trf.xlu0
      %v2286 = vpop.trf.xlu0
      %v2287 = vpop.trf.xlu0
      %v2288 = vpop.trf.xlu0
      %v2289 = vpop.trf.xlu0
      %v2290 = vpop.trf.xlu0
      %v2291 = vpop.trf.xlu0
      %v2292 = vpop.trf.xlu0
      %v2293 = vpop.trf.xlu0
      %v2294 = vpop.trf.xlu0
      %v2295 = vpop.trf.xlu0
      %v2296 = vpop.trf.xlu0
      %2297 = vxpose.xlu0.b32.start [1/16] %v2234, 128
      %2298 = vxpose.xlu0.b32.cont [2/16] %v2242, 128
      %2299 = vxpose.xlu0.b32.cont [3/16] %v2250, 128
      %2300 = vxpose.xlu0.b32.cont [4/16] %v2258, 128
      %2301 = vxpose.xlu0.b32.cont [5/16] 0.0, 128
      %2302 = vxpose.xlu0.b32.cont [6/16] 0.0, 128
      %2303 = vxpose.xlu0.b32.cont [7/16] 0.0, 128
      %2304 = vxpose.xlu0.b32.cont [8/16] 0.0, 128
      %2305 = vxpose.xlu0.b32.cont [9/16] 0.0, 128
      %2306 = vxpose.xlu0.b32.cont [10/16] 0.0, 128
      %2307 = vxpose.xlu0.b32.cont [11/16] 0.0, 128
      %2308 = vxpose.xlu0.b32.cont [12/16] 0.0, 128
      %2309 = vxpose.xlu0.b32.cont [13/16] 0.0, 128
      %2310 = vxpose.xlu0.b32.cont [14/16] 0.0, 128
      %2311 = vxpose.xlu0.b32.cont [15/16] 0.0, 128
      %2312 = vxpose.xlu0.b32.end [16/16] 0.0, 128
      %v2313 = vpop.trf.xlu0
      %v2314 = vpop.trf.xlu0
      %v2315 = vpop.trf.xlu0
      %v2316 = vpop.trf.xlu0
      %v2317 = vpop.trf.xlu0
      %v2318 = vpop.trf.xlu0
      %v2319 = vpop.trf.xlu0
      %v2320 = vpop.trf.xlu0
      %v2321 = vpop.trf.xlu0
      %v2322 = vpop.trf.xlu0
      %v2323 = vpop.trf.xlu0
      %v2324 = vpop.trf.xlu0
      %v2325 = vpop.trf.xlu0
      %v2326 = vpop.trf.xlu0
      %v2327 = vpop.trf.xlu0
      %v2328 = vpop.trf.xlu0
      %2329 = vxpose.xlu0.b32.start [1/16] %v2235, 128
      %2330 = vxpose.xlu0.b32.cont [2/16] %v2243, 128
      %2331 = vxpose.xlu0.b32.cont [3/16] %v2251, 128
      %2332 = vxpose.xlu0.b32.cont [4/16] %v2259, 128
      %2333 = vxpose.xlu0.b32.cont [5/16] 0.0, 128
      %2334 = vxpose.xlu0.b32.cont [6/16] 0.0, 128
      %2335 = vxpose.xlu0.b32.cont [7/16] 0.0, 128
      %2336 = vxpose.xlu0.b32.cont [8/16] 0.0, 128
      %2337 = vxpose.xlu0.b32.cont [9/16] 0.0, 128
      %2338 = vxpose.xlu0.b32.cont [10/16] 0.0, 128
      %2339 = vxpose.xlu0.b32.cont [11/16] 0.0, 128
      %2340 = vxpose.xlu0.b32.cont [12/16] 0.0, 128
      %2341 = vxpose.xlu0.b32.cont [13/16] 0.0, 128
      %2342 = vxpose.xlu0.b32.cont [14/16] 0.0, 128
      %2343 = vxpose.xlu0.b32.cont [15/16] 0.0, 128
      %2344 = vxpose.xlu0.b32.end [16/16] 0.0, 128
      %v2345 = vpop.trf.xlu0
      %v2346 = vpop.trf.xlu0
      %v2347 = vpop.trf.xlu0
      %v2348 = vpop.trf.xlu0
      %v2349 = vpop.trf.xlu0
      %v2350 = vpop.trf.xlu0
      %v2351 = vpop.trf.xlu0
      %v2352 = vpop.trf.xlu0
      %v2353 = vpop.trf.xlu0
      %v2354 = vpop.trf.xlu0
      %v2355 = vpop.trf.xlu0
      %v2356 = vpop.trf.xlu0
      %v2357 = vpop.trf.xlu0
      %v2358 = vpop.trf.xlu0
      %v2359 = vpop.trf.xlu0
      %v2360 = vpop.trf.xlu0
      %2361 = vxpose.xlu0.b32.start [1/16] %v2236, 128
      %2362 = vxpose.xlu0.b32.cont [2/16] %v2244, 128
      %2363 = vxpose.xlu0.b32.cont [3/16] %v2252, 128
      %2364 = vxpose.xlu0.b32.cont [4/16] %v2260, 128
      %2365 = vxpose.xlu0.b32.cont [5/16] 0.0, 128
      %2366 = vxpose.xlu0.b32.cont [6/16] 0.0, 128
      %2367 = vxpose.xlu0.b32.cont [7/16] 0.0, 128
      %2368 = vxpose.xlu0.b32.cont [8/16] 0.0, 128
      %2369 = vxpose.xlu0.b32.cont [9/16] 0.0, 128
      %2370 = vxpose.xlu0.b32.cont [10/16] 0.0, 128
      %2371 = vxpose.xlu0.b32.cont [11/16] 0.0, 128
      %2372 = vxpose.xlu0.b32.cont [12/16] 0.0, 128
      %2373 = vxpose.xlu0.b32.cont [13/16] 0.0, 128
      %2374 = vxpose.xlu0.b32.cont [14/16] 0.0, 128
      %2375 = vxpose.xlu0.b32.cont [15/16] 0.0, 128
      %2376 = vxpose.xlu0.b32.end [16/16] 0.0, 128
      %v2377 = vpop.trf.xlu0
      %v2378 = vpop.trf.xlu0
      %v2379 = vpop.trf.xlu0
      %v2380 = vpop.trf.xlu0
      %v2381 = vpop.trf.xlu0
      %v2382 = vpop.trf.xlu0
      %v2383 = vpop.trf.xlu0
      %v2384 = vpop.trf.xlu0
      %v2385 = vpop.trf.xlu0
      %v2386 = vpop.trf.xlu0
      %v2387 = vpop.trf.xlu0
      %v2388 = vpop.trf.xlu0
      %v2389 = vpop.trf.xlu0
      %v2390 = vpop.trf.xlu0
      %v2391 = vpop.trf.xlu0
      %v2392 = vpop.trf.xlu0
      %2393 = vxpose.xlu0.b32.start [1/16] %v2237, 128
      %2394 = vxpose.xlu0.b32.cont [2/16] %v2245, 128
      %2395 = vxpose.xlu0.b32.cont [3/16] %v2253, 128
      %2396 = vxpose.xlu0.b32.cont [4/16] %v2261, 128
      %2397 = vxpose.xlu0.b32.cont [5/16] 0.0, 128
      %2398 = vxpose.xlu0.b32.cont [6/16] 0.0, 128
      %2399 = vxpose.xlu0.b32.cont [7/16] 0.0, 128
      %2400 = vxpose.xlu0.b32.cont [8/16] 0.0, 128
      %2401 = vxpose.xlu0.b32.cont [9/16] 0.0, 128
      %2402 = vxpose.xlu0.b32.cont [10/16] 0.0, 128
      %2403 = vxpose.xlu0.b32.cont [11/16] 0.0, 128
      %2404 = vxpose.xlu0.b32.cont [12/16] 0.0, 128
      %2405 = vxpose.xlu0.b32.cont [13/16] 0.0, 128
      %2406 = vxpose.xlu0.b32.cont [14/16] 0.0, 128
      %2407 = vxpose.xlu0.b32.cont [15/16] 0.0, 128
      %2408 = vxpose.xlu0.b32.end [16/16] 0.0, 128
      %v2409 = vpop.trf.xlu0
      %v2410 = vpop.trf.xlu0
      %v2411 = vpop.trf.xlu0
      %v2412 = vpop.trf.xlu0
      %v2413 = vpop.trf.xlu0
      %v2414 = vpop.trf.xlu0
      %v2415 = vpop.trf.xlu0
      %v2416 = vpop.trf.xlu0
      %v2417 = vpop.trf.xlu0
      %v2418 = vpop.trf.xlu0
      %v2419 = vpop.trf.xlu0
      %v2420 = vpop.trf.xlu0
      %v2421 = vpop.trf.xlu0
      %v2422 = vpop.trf.xlu0
      %v2423 = vpop.trf.xlu0
      %v2424 = vpop.trf.xlu0
      %2425 = vxpose.xlu0.b32.start [1/16] %v2238, 128
      %2426 = vxpose.xlu0.b32.cont [2/16] %v2246, 128
      %2427 = vxpose.xlu0.b32.cont [3/16] %v2254, 128
      %2428 = vxpose.xlu0.b32.cont [4/16] %v2262, 128
      %2429 = vxpose.xlu0.b32.cont [5/16] 0.0, 128
      %2430 = vxpose.xlu0.b32.cont [6/16] 0.0, 128
      %2431 = vxpose.xlu0.b32.cont [7/16] 0.0, 128
      %2432 = vxpose.xlu0.b32.cont [8/16] 0.0, 128
      %2433 = vxpose.xlu0.b32.cont [9/16] 0.0, 128
      %2434 = vxpose.xlu0.b32.cont [10/16] 0.0, 128
      %2435 = vxpose.xlu0.b32.cont [11/16] 0.0, 128
      %2436 = vxpose.xlu0.b32.cont [12/16] 0.0, 128
      %2437 = vxpose.xlu0.b32.cont [13/16] 0.0, 128
      %2438 = vxpose.xlu0.b32.cont [14/16] 0.0, 128
      %2439 = vxpose.xlu0.b32.cont [15/16] 0.0, 128
      %2440 = vxpose.xlu0.b32.end [16/16] 0.0, 128
      %v2441 = vpop.trf.xlu0
      %v2442 = vpop.trf.xlu0
      %v2443 = vpop.trf.xlu0
      %v2444 = vpop.trf.xlu0
      %v2445 = vpop.trf.xlu0
      %v2446 = vpop.trf.xlu0
      %v2447 = vpop.trf.xlu0
      %v2448 = vpop.trf.xlu0
      %v2449 = vpop.trf.xlu0
      %v2450 = vpop.trf.xlu0
      %v2451 = vpop.trf.xlu0
      %v2452 = vpop.trf.xlu0
      %v2453 = vpop.trf.xlu0
      %v2454 = vpop.trf.xlu0
      %v2455 = vpop.trf.xlu0
      %v2456 = vpop.trf.xlu0
      %2457 = vxpose.xlu0.b32.start [1/16] %v2239, 128
      %2458 = vxpose.xlu0.b32.cont [2/16] %v2247, 128
      %2459 = vxpose.xlu0.b32.cont [3/16] %v2255, 128
      %2460 = vxpose.xlu0.b32.cont [4/16] %v2263, 128
      %2461 = vxpose.xlu0.b32.cont [5/16] 0.0, 128
      %2462 = vxpose.xlu0.b32.cont [6/16] 0.0, 128
      %2463 = vxpose.xlu0.b32.cont [7/16] 0.0, 128
      %2464 = vxpose.xlu0.b32.cont [8/16] 0.0, 128
      %2465 = vxpose.xlu0.b32.cont [9/16] 0.0, 128
      %2466 = vxpose.xlu0.b32.cont [10/16] 0.0, 128
      %2467 = vxpose.xlu0.b32.cont [11/16] 0.0, 128
      %2468 = vxpose.xlu0.b32.cont [12/16] 0.0, 128
      %2469 = vxpose.xlu0.b32.cont [13/16] 0.0, 128
      %2470 = vxpose.xlu0.b32.cont [14/16] 0.0, 128
      %2471 = vxpose.xlu0.b32.cont [15/16] 0.0, 128
      %2472 = vxpose.xlu0.b32.end [16/16] 0.0, 128
      %v2473 = vpop.trf.xlu0
      %v2474 = vpop.trf.xlu0
      %v2475 = vpop.trf.xlu0
      %v2476 = vpop.trf.xlu0
      %v2477 = vpop.trf.xlu0
      %v2478 = vpop.trf.xlu0
      %v2479 = vpop.trf.xlu0
      %v2480 = vpop.trf.xlu0
      %v2481 = vpop.trf.xlu0
      %v2482 = vpop.trf.xlu0
      %v2483 = vpop.trf.xlu0
      %v2484 = vpop.trf.xlu0
      %v2485 = vpop.trf.xlu0
      %v2486 = vpop.trf.xlu0
      %v2487 = vpop.trf.xlu0
      %v2488 = vpop.trf.xlu0
      %2489 = vxpose.xlu0.b32.start [1/16] %v2240, 128
      %2490 = vxpose.xlu0.b32.cont [2/16] %v2248, 128
      %2491 = vxpose.xlu0.b32.cont [3/16] %v2256, 128
      %2492 = vxpose.xlu0.b32.cont [4/16] %v2264, 128
      %2493 = vxpose.xlu0.b32.cont [5/16] 0.0, 128
      %2494 = vxpose.xlu0.b32.cont [6/16] 0.0, 128
      %2495 = vxpose.xlu0.b32.cont [7/16] 0.0, 128
      %2496 = vxpose.xlu0.b32.cont [8/16] 0.0, 128
      %2497 = vxpose.xlu0.b32.cont [9/16] 0.0, 128
      %2498 = vxpose.xlu0.b32.cont [10/16] 0.0, 128
      %2499 = vxpose.xlu0.b32.cont [11/16] 0.0, 128
      %2500 = vxpose.xlu0.b32.cont [12/16] 0.0, 128
      %2501 = vxpose.xlu0.b32.cont [13/16] 0.0, 128
      %2502 = vxpose.xlu0.b32.cont [14/16] 0.0, 128
      %2503 = vxpose.xlu0.b32.cont [15/16] 0.0, 128
      %2504 = vxpose.xlu0.b32.end [16/16] 0.0, 128
      %v2505 = vpop.trf.xlu0
      %v2506 = vpop.trf.xlu0
      %v2507 = vpop.trf.xlu0
      %v2508 = vpop.trf.xlu0
      %v2509 = vpop.trf.xlu0
      %v2510 = vpop.trf.xlu0
      %v2511 = vpop.trf.xlu0
      %v2512 = vpop.trf.xlu0
      %v2513 = vpop.trf.xlu0
      %v2514 = vpop.trf.xlu0
      %v2515 = vpop.trf.xlu0
      %v2516 = vpop.trf.xlu0
      %v2517 = vpop.trf.xlu0
      %v2518 = vpop.trf.xlu0
      %v2519 = vpop.trf.xlu0
      %v2520 = vpop.trf.xlu0
      %vm2521 = vcmask 261120
      %2522 = vst.msk [vmem:[%s443] sm:$0xff] %vm2521, %v2281
      %2523 = vst.msk [vmem:[%s443 + $0x8] sm:$0xff] %vm2521, %v2282
      %2524 = vst.msk [vmem:[%s443 + $0x10] sm:$0xff] %vm2521, %v2283
      %2525 = vst.msk [vmem:[%s443 + $0x18] sm:$0xff] %vm2521, %v2284
      %2526 = vst.msk [vmem:[%s443 + $0x20] sm:$0xff] %vm2521, %v2285
      %2527 = vst.msk [vmem:[%s443 + $0x28] sm:$0xff] %vm2521, %v2286
      %2528 = vst.msk [vmem:[%s443 + $0x30] sm:$0xff] %vm2521, %v2287
      %2529 = vst.msk [vmem:[%s443 + $0x38] sm:$0xff] %vm2521, %v2288
      %2530 = vst.msk [vmem:[%s443 + $0x40] sm:$0xff] %vm2521, %v2289
      %2531 = vst.msk [vmem:[%s443 + $0x48] sm:$0xff] %vm2521, %v2290
      %2532 = vst.msk [vmem:[%s443 + $0x50] sm:$0xff] %vm2521, %v2291
      %2533 = vst.msk [vmem:[%s443 + $0x58] sm:$0xff] %vm2521, %v2292
      %2534 = vst.msk [vmem:[%s443 + $0x60] sm:$0xff] %vm2521, %v2293
      %2535 = vst.msk [vmem:[%s443 + $0x68] sm:$0xff] %vm2521, %v2294
      %2536 = vst.msk [vmem:[%s443 + $0x70] sm:$0xff] %vm2521, %v2295
      %2537 = vst.msk [vmem:[%s443 + $0x78] sm:$0xff] %vm2521, %v2296
      %2538 = vst.msk [vmem:[%s443 + $0x80] sm:$0xff] %vm2521, %v2313
      %2539 = vst.msk [vmem:[%s443 + $0x88] sm:$0xff] %vm2521, %v2314
      %2540 = vst.msk [vmem:[%s443 + $0x90] sm:$0xff] %vm2521, %v2315
      %2541 = vst.msk [vmem:[%s443 + $0x98] sm:$0xff] %vm2521, %v2316
      %2542 = vst.msk [vmem:[%s443 + $0xa0] sm:$0xff] %vm2521, %v2317
      %2543 = vst.msk [vmem:[%s443 + $0xa8] sm:$0xff] %vm2521, %v2318
      %2544 = vst.msk [vmem:[%s443 + $0xb0] sm:$0xff] %vm2521, %v2319
      %2545 = vst.msk [vmem:[%s443 + $0xb8] sm:$0xff] %vm2521, %v2320
      %2546 = vst.msk [vmem:[%s443 + $0xc0] sm:$0xff] %vm2521, %v2321
      %2547 = vst.msk [vmem:[%s443 + $0xc8] sm:$0xff] %vm2521, %v2322
      %2548 = vst.msk [vmem:[%s443 + $0xd0] sm:$0xff] %vm2521, %v2323
      %2549 = vst.msk [vmem:[%s443 + $0xd8] sm:$0xff] %vm2521, %v2324
      %2550 = vst.msk [vmem:[%s443 + $0xe0] sm:$0xff] %vm2521, %v2325
      %2551 = vst.msk [vmem:[%s443 + $0xe8] sm:$0xff] %vm2521, %v2326
      %2552 = vst.msk [vmem:[%s443 + $0xf0] sm:$0xff] %vm2521, %v2327
      %2553 = vst.msk [vmem:[%s443 + $0xf8] sm:$0xff] %vm2521, %v2328
      %2554 = vst.msk [vmem:[%s443 + $0x100] sm:$0xff] %vm2521, %v2345
      %2555 = vst.msk [vmem:[%s443 + $0x108] sm:$0xff] %vm2521, %v2346
      %2556 = vst.msk [vmem:[%s443 + $0x110] sm:$0xff] %vm2521, %v2347
      %2557 = vst.msk [vmem:[%s443 + $0x118] sm:$0xff] %vm2521, %v2348
      %2558 = vst.msk [vmem:[%s443 + $0x120] sm:$0xff] %vm2521, %v2349
      %2559 = vst.msk [vmem:[%s443 + $0x128] sm:$0xff] %vm2521, %v2350
      %2560 = vst.msk [vmem:[%s443 + $0x130] sm:$0xff] %vm2521, %v2351
      %2561 = vst.msk [vmem:[%s443 + $0x138] sm:$0xff] %vm2521, %v2352
      %2562 = vst.msk [vmem:[%s443 + $0x140] sm:$0xff] %vm2521, %v2353
      %2563 = vst.msk [vmem:[%s443 + $0x148] sm:$0xff] %vm2521, %v2354
      %2564 = vst.msk [vmem:[%s443 + $0x150] sm:$0xff] %vm2521, %v2355
      %2565 = vst.msk [vmem:[%s443 + $0x158] sm:$0xff] %vm2521, %v2356
      %2566 = vst.msk [vmem:[%s443 + $0x160] sm:$0xff] %vm2521, %v2357
      %2567 = vst.msk [vmem:[%s443 + $0x168] sm:$0xff] %vm2521, %v2358
      %2568 = vst.msk [vmem:[%s443 + $0x170] sm:$0xff] %vm2521, %v2359
      %2569 = vst.msk [vmem:[%s443 + $0x178] sm:$0xff] %vm2521, %v2360
      %2570 = vst.msk [vmem:[%s443 + $0x180] sm:$0xff] %vm2521, %v2377
      %2571 = vst.msk [vmem:[%s443 + $0x188] sm:$0xff] %vm2521, %v2378
      %2572 = vst.msk [vmem:[%s443 + $0x190] sm:$0xff] %vm2521, %v2379
      %2573 = vst.msk [vmem:[%s443 + $0x198] sm:$0xff] %vm2521, %v2380
      %2574 = vst.msk [vmem:[%s443 + $0x1a0] sm:$0xff] %vm2521, %v2381
      %2575 = vst.msk [vmem:[%s443 + $0x1a8] sm:$0xff] %vm2521, %v2382
      %2576 = vst.msk [vmem:[%s443 + $0x1b0] sm:$0xff] %vm2521, %v2383
      %2577 = vst.msk [vmem:[%s443 + $0x1b8] sm:$0xff] %vm2521, %v2384
      %2578 = vst.msk [vmem:[%s443 + $0x1c0] sm:$0xff] %vm2521, %v2385
      %2579 = vst.msk [vmem:[%s443 + $0x1c8] sm:$0xff] %vm2521, %v2386
      %2580 = vst.msk [vmem:[%s443 + $0x1d0] sm:$0xff] %vm2521, %v2387
      %2581 = vst.msk [vmem:[%s443 + $0x1d8] sm:$0xff] %vm2521, %v2388
      %2582 = vst.msk [vmem:[%s443 + $0x1e0] sm:$0xff] %vm2521, %v2389
      %2583 = vst.msk [vmem:[%s443 + $0x1e8] sm:$0xff] %vm2521, %v2390
      %2584 = vst.msk [vmem:[%s443 + $0x1f0] sm:$0xff] %vm2521, %v2391
      %2585 = vst.msk [vmem:[%s443 + $0x1f8] sm:$0xff] %vm2521, %v2392
      %2586 = vst.msk [vmem:[%s443 + $0x200] sm:$0xff] %vm2521, %v2409
      %2587 = vst.msk [vmem:[%s443 + $0x208] sm:$0xff] %vm2521, %v2410
      %2588 = vst.msk [vmem:[%s443 + $0x210] sm:$0xff] %vm2521, %v2411
      %2589 = vst.msk [vmem:[%s443 + $0x218] sm:$0xff] %vm2521, %v2412
      %2590 = vst.msk [vmem:[%s443 + $0x220] sm:$0xff] %vm2521, %v2413
      %2591 = vst.msk [vmem:[%s443 + $0x228] sm:$0xff] %vm2521, %v2414
      %2592 = vst.msk [vmem:[%s443 + $0x230] sm:$0xff] %vm2521, %v2415
      %2593 = vst.msk [vmem:[%s443 + $0x238] sm:$0xff] %vm2521, %v2416
      %2594 = vst.msk [vmem:[%s443 + $0x240] sm:$0xff] %vm2521, %v2417
      %2595 = vst.msk [vmem:[%s443 + $0x248] sm:$0xff] %vm2521, %v2418
      %2596 = vst.msk [vmem:[%s443 + $0x250] sm:$0xff] %vm2521, %v2419
      %2597 = vst.msk [vmem:[%s443 + $0x258] sm:$0xff] %vm2521, %v2420
      %2598 = vst.msk [vmem:[%s443 + $0x260] sm:$0xff] %vm2521, %v2421
      %2599 = vst.msk [vmem:[%s443 + $0x268] sm:$0xff] %vm2521, %v2422
      %2600 = vst.msk [vmem:[%s443 + $0x270] sm:$0xff] %vm2521, %v2423
      %2601 = vst.msk [vmem:[%s443 + $0x278] sm:$0xff] %vm2521, %v2424
      %2602 = vst.msk [vmem:[%s443 + $0x280] sm:$0xff] %vm2521, %v2441
      %2603 = vst.msk [vmem:[%s443 + $0x288] sm:$0xff] %vm2521, %v2442
      %2604 = vst.msk [vmem:[%s443 + $0x290] sm:$0xff] %vm2521, %v2443
      %2605 = vst.msk [vmem:[%s443 + $0x298] sm:$0xff] %vm2521, %v2444
      %2606 = vst.msk [vmem:[%s443 + $0x2a0] sm:$0xff] %vm2521, %v2445
      %2607 = vst.msk [vmem:[%s443 + $0x2a8] sm:$0xff] %vm2521, %v2446
      %2608 = vst.msk [vmem:[%s443 + $0x2b0] sm:$0xff] %vm2521, %v2447
      %2609 = vst.msk [vmem:[%s443 + $0x2b8] sm:$0xff] %vm2521, %v2448
      %2610 = vst.msk [vmem:[%s443 + $0x2c0] sm:$0xff] %vm2521, %v2449
      %2611 = vst.msk [vmem:[%s443 + $0x2c8] sm:$0xff] %vm2521, %v2450
      %2612 = vst.msk [vmem:[%s443 + $0x2d0] sm:$0xff] %vm2521, %v2451
      %2613 = vst.msk [vmem:[%s443 + $0x2d8] sm:$0xff] %vm2521, %v2452
      %2614 = vst.msk [vmem:[%s443 + $0x2e0] sm:$0xff] %vm2521, %v2453
      %2615 = vst.msk [vmem:[%s443 + $0x2e8] sm:$0xff] %vm2521, %v2454
      %2616 = vst.msk [vmem:[%s443 + $0x2f0] sm:$0xff] %vm2521, %v2455
      %2617 = vst.msk [vmem:[%s443 + $0x2f8] sm:$0xff] %vm2521, %v2456
      %2618 = vst.msk [vmem:[%s443 + $0x300] sm:$0xff] %vm2521, %v2473
      %2619 = vst.msk [vmem:[%s443 + $0x308] sm:$0xff] %vm2521, %v2474
      %2620 = vst.msk [vmem:[%s443 + $0x310] sm:$0xff] %vm2521, %v2475
      %2621 = vst.msk [vmem:[%s443 + $0x318] sm:$0xff] %vm2521, %v2476
      %2622 = vst.msk [vmem:[%s443 + $0x320] sm:$0xff] %vm2521, %v2477
      %2623 = vst.msk [vmem:[%s443 + $0x328] sm:$0xff] %vm2521, %v2478
      %2624 = vst.msk [vmem:[%s443 + $0x330] sm:$0xff] %vm2521, %v2479
      %2625 = vst.msk [vmem:[%s443 + $0x338] sm:$0xff] %vm2521, %v2480
      %2626 = vst.msk [vmem:[%s443 + $0x340] sm:$0xff] %vm2521, %v2481
      %2627 = vst.msk [vmem:[%s443 + $0x348] sm:$0xff] %vm2521, %v2482
      %2628 = vst.msk [vmem:[%s443 + $0x350] sm:$0xff] %vm2521, %v2483
      %2629 = vst.msk [vmem:[%s443 + $0x358] sm:$0xff] %vm2521, %v2484
      %2630 = vst.msk [vmem:[%s443 + $0x360] sm:$0xff] %vm2521, %v2485
      %2631 = vst.msk [vmem:[%s443 + $0x368] sm:$0xff] %vm2521, %v2486
      %2632 = vst.msk [vmem:[%s443 + $0x370] sm:$0xff] %vm2521, %v2487
      %2633 = vst.msk [vmem:[%s443 + $0x378] sm:$0xff] %vm2521, %v2488
      %2634 = vst.msk [vmem:[%s443 + $0x380] sm:$0xff] %vm2521, %v2505
      %2635 = vst.msk [vmem:[%s443 + $0x388] sm:$0xff] %vm2521, %v2506
      %2636 = vst.msk [vmem:[%s443 + $0x390] sm:$0xff] %vm2521, %v2507
      %2637 = vst.msk [vmem:[%s443 + $0x398] sm:$0xff] %vm2521, %v2508
      %2638 = vst.msk [vmem:[%s443 + $0x3a0] sm:$0xff] %vm2521, %v2509
      %2639 = vst.msk [vmem:[%s443 + $0x3a8] sm:$0xff] %vm2521, %v2510
      %2640 = vst.msk [vmem:[%s443 + $0x3b0] sm:$0xff] %vm2521, %v2511
      %2641 = vst.msk [vmem:[%s443 + $0x3b8] sm:$0xff] %vm2521, %v2512
      %2642 = vst.msk [vmem:[%s443 + $0x3c0] sm:$0xff] %vm2521, %v2513
      %2643 = vst.msk [vmem:[%s443 + $0x3c8] sm:$0xff] %vm2521, %v2514
      %2644 = vst.msk [vmem:[%s443 + $0x3d0] sm:$0xff] %vm2521, %v2515
      %2645 = vst.msk [vmem:[%s443 + $0x3d8] sm:$0xff] %vm2521, %v2516
      %2646 = vst.msk [vmem:[%s443 + $0x3e0] sm:$0xff] %vm2521, %v2517
      %2647 = vst.msk [vmem:[%s443 + $0x3e8] sm:$0xff] %vm2521, %v2518
      %2648 = vst.msk [vmem:[%s443 + $0x3f0] sm:$0xff] %vm2521, %v2519
      %2649 = vst.msk [vmem:[%s443 + $0x3f8] sm:$0xff] %vm2521, %v2520
      %p2650 = scmp.lt.s32.totalorder %s30, 1
      %s2651 = scalar_select %p2650, %s30, 1
      %p2652 = scmp.lt.s32.totalorder %s31, 0
      %s2653 = scalar_select %p2652, %s31, 0
      %s2654 = smul.addr %s2651, 128
      %s2655 = sadd.s32 %s2653, %s2654
      %s2656 = smul.addr %s2655, 8
      %s2657 = scalar_lea.vmem %s9, %s2656
      // Predicated region
      $region67: #{lpdnet_forward.9} parent=51 // pred_check
        %p2658 = pneg %p252
      $region68: #{lpdnet_forward.9} parent=51 // pred_check_branch
        %2660 = sbr.rel (%p2658) target = $region70
      $region69: #{lpdnet_forward.9} parent=51 // pred_region
        _
      $region70: #{lpdnet_forward.9} parent=51 // pred_fallthru
        _
    $region52: #{lpdnet_forward.9} parent=5 // pred_fallthru
      _
    %p2661 = scmp.le.s32.totalorder 2, %s21
    // Predicated region
    $region71: #{lpdnet_forward.9} parent=5 // pred_check
      %p2662 = pneg %p2661
    $region72: #{lpdnet_forward.9} parent=5 // pred_check_branch
      %2664 = sbr.rel (%p2662) target = $region74
    $region73: #{lpdnet_forward.9} parent=5 // pred_region
      %s2665 = ssub.s32 %s21, 2
      // Predicated region
      $region75: #{lpdnet_forward.9} parent=73 // pred_check
        %p2666 = pneg %p258
      $region76: #{lpdnet_forward.9} parent=73 // pred_check_branch
        %2668 = sbr.rel (%p2666) target = $region78
      $region77: #{lpdnet_forward.9} parent=73 // pred_region
        %p2669 = scmp.lt.s32.totalorder %s32, 1
        %s2670 = scalar_select %p2669, %s32, 1
        %p2671 = scmp.lt.s32.totalorder %s33, 0
        %s2672 = scalar_select %p2671, %s33, 0
        %s2673 = smul.addr %s2670, 128
        %s2674 = sadd.s32 %s2672, %s2673
        %s2675 = smul.addr %s2674, 8
        %s2676 = scalar_lea.vmem %s9, %s2675
      $region78: #{lpdnet_forward.9} parent=73 // pred_fallthru
        _
    $region74: #{lpdnet_forward.9} parent=5 // pred_fallthru
      _
  $region6: #{lpdnet_forward.9} parent=0 // loop_footer
    %s25 = sadd.s32 1, %s21
  $region7: #{lpdnet_forward.9} parent=0 // loop_footer_branch
    %20 = sbr.rel target = $region3
  $region8: #{lpdnet_forward.9} parent=0 // loop_exit
    _

</llo_original>
